<compile_context>
chip_gen: v7x
topology: tpu7x:2x2x1
jax: 0.10.0
libtpu: 0.0.40
codegen_flags: <defaults>
</compile_context>

<pallas_src>
import functools

import jax
import jax.numpy as jnp
from jax.experimental import pallas as pl
from jax.experimental.pallas import tpu as pltpu


# ---------------------------------------------------------------------------
# Kernel 1: fused student + teacher branches
# ---------------------------------------------------------------------------
def _mlp2(h_bf16, w1_ref, b1_ref, w2_ref, b2_ref):
    """Linear -> ReLU -> Linear, bf16 operands, f32 accumulation."""
    z = jnp.dot(h_bf16, w1_ref[...], preferred_element_type=jnp.float32) + b1_ref[...]
    z = jnp.maximum(z, 0.0).astype(jnp.bfloat16)
    return jnp.dot(z, w2_ref[...], preferred_element_type=jnp.float32) + b2_ref[...]


def branches_kernel(x_ref, bbw_ref, bbb_ref,
                    sw1_ref, sb1_ref, sw2_ref, sb2_ref,
                    tw1_ref, tb1_ref, tw2_ref, tb2_ref,
                    pw1_ref, pb1_ref, pw2_ref, pb2_ref,
                    sn_ref, tn_ref, acc_ref, *, feat_dim):
    d = pl.program_id(1)

    @pl.when(d == 0)
    def _init():
        acc_ref[...] = jnp.zeros_like(acc_ref)

    # accumulate x @ [s_bb_w | t_bb_w] over the (big) in_dim reduction axis
    acc_ref[...] += jnp.dot(x_ref[...], bbw_ref[...],
                            preferred_element_type=jnp.float32)

    @pl.when(d == pl.num_programs(1) - 1)
    def _finalize():
        feat = jnp.maximum(acc_ref[...] + bbb_ref[...], 0.0)          # (tm, 2F) f32
        s_feat = feat[:, :feat_dim].astype(jnp.bfloat16)
        t_feat = feat[:, feat_dim:].astype(jnp.bfloat16)

        s_emb = _mlp2(s_feat, sw1_ref, sb1_ref, sw2_ref, sb2_ref)      # student.fc
        t_proj = _mlp2(t_feat, tw1_ref, tb1_ref, tw2_ref, tb2_ref)     # teacher.fc
        t_emb = _mlp2(t_proj.astype(jnp.bfloat16),
                      pw1_ref, pb1_ref, pw2_ref, pb2_ref)              # predict_q

        # torch.nn.functional.normalize: x / max(||x||_2, 1e-12)
        s_n = jnp.maximum(jnp.sqrt(jnp.sum(s_emb * s_emb, axis=1, keepdims=True)), 1e-12)
        t_n = jnp.maximum(jnp.sqrt(jnp.sum(t_emb * t_emb, axis=1, keepdims=True)), 1e-12)
        sn_ref[...] = (s_emb / s_n).astype(sn_ref.dtype)
        tn_ref[...] = (t_emb / t_n).astype(tn_ref.dtype)


def run_branches(x, bbw_cat, bbb_cat, sfc, tfc, pq, *, feat_dim, proj_dim, tk=512):
    n, d_in = x.shape
    two_f = bbw_cat.shape[1]
    tm = n                              # toy batch -> one M tile (pattern generalizes)
    tk = min(tk, d_in)
    assert d_in % tk == 0, "in_dim must be divisible by the reduction tile"
    grid = (n // tm, d_in // tk)

    def full(shape):
        return pl.BlockSpec(shape, lambda m, d: (0, 0))

    in_specs = [
        pl.BlockSpec((tm, tk), lambda m, d: (m, d)),       # x tile
        pl.BlockSpec((tk, two_f), lambda m, d: (d, 0)),    # concatenated backbone weight
        full(bbb_cat.shape),
        full(sfc[0].shape), full(sfc[1].shape), full(sfc[2].shape), full(sfc[3].shape),
        full(tfc[0].shape), full(tfc[1].shape), full(tfc[2].shape), full(tfc[3].shape),
        full(pq[0].shape), full(pq[1].shape), full(pq[2].shape), full(pq[3].shape),
    ]
    out_specs = (pl.BlockSpec((tm, proj_dim), lambda m, d: (m, 0)),
                 pl.BlockSpec((tm, proj_dim), lambda m, d: (m, 0)))
    out_shape = (jax.ShapeDtypeStruct((n, proj_dim), jnp.float32),   # normalized student emb
                 jax.ShapeDtypeStruct((n, proj_dim), jnp.float32))   # normalized teacher emb

    return pl.pallas_call(
        functools.partial(branches_kernel, feat_dim=feat_dim),
        grid_spec=pltpu.PrefetchScalarGridSpec(
            num_scalar_prefetch=0,
            grid=grid,
            in_specs=in_specs,
            out_specs=out_specs,
            scratch_shapes=[pltpu.VMEM((tm, two_f), jnp.float32)]),
        out_shape=out_shape,
        compiler_params=pltpu.CompilerParams(
            dimension_semantics=("parallel", "arbitrary")),
    )(x, bbw_cat, bbb_cat, *sfc, *tfc, *pq)


# ---------------------------------------------------------------------------
# Kernel 2: stacked queue logits  [sn; tn] @ queue, tiled over K
# ---------------------------------------------------------------------------
def queue_logits_kernel(emb_ref, q_ref, out_ref):
    out_ref[...] = jnp.dot(emb_ref[...], q_ref[...],
                           preferred_element_type=jnp.float32)


def queue_logits(emb_stacked, queue, *, tkk=128):
    m, c = emb_stacked.shape
    k_total = queue.shape[1]
    tkk = min(tkk, k_total)
    assert k_total % tkk == 0
    return pl.pallas_call(
        queue_logits_kernel,
        grid_spec=pltpu.PrefetchScalarGridSpec(
            num_scalar_prefetch=0,
            grid=(k_total // tkk,),
            in_specs=[pl.BlockSpec((m, c), lambda j: (0, 0)),
                      pl.BlockSpec((c, tkk), lambda j: (0, j))],
            out_specs=pl.BlockSpec((m, tkk), lambda j: (0, j))),
        out_shape=jax.ShapeDtypeStruct((m, k_total), jnp.float32),
        compiler_params=pltpu.CompilerParams(dimension_semantics=("parallel",)),
    )(emb_stacked, queue)


# ---------------------------------------------------------------------------
# SEED forward (functional): returns (logit_stu, logit_tea, new_queue, new_ptr)
# ---------------------------------------------------------------------------
def seed_forward(params, image, queue, queue_ptr, *, t, temp, k):
    n = image.shape[0]
    bigk = queue.shape[1]
    proj_dim = queue.shape[0]
    feat_dim = params["s_fc_w1"].shape[0]

    x = image.reshape(n, -1).astype(jnp.bfloat16)

    # concatenate student/teacher backbone weights -> x is streamed once
    bbw_cat = jnp.concatenate([params["s_bb_w"], params["t_bb_w"]],
                              axis=1).astype(jnp.bfloat16)
    bbb_cat = jnp.concatenate([params["s_bb_b"], params["t_bb_b"]], axis=1)

    bf = lambda w: w.astype(jnp.bfloat16)
    sfc = (bf(params["s_fc_w1"]), params["s_fc_b1"], bf(params["s_fc_w2"]), params["s_fc_b2"])
    tfc = (bf(params["t_fc_w1"]), params["t_fc_b1"], bf(params["t_fc_w2"]), params["t_fc_b2"])
    pq = (bf(params["pq_w1"]), params["pq_b1"], bf(params["pq_w2"]), params["pq_b2"])

    sn, tn = run_branches(x, bbw_cat, bbb_cat, sfc, tfc, pq,
                          feat_dim=feat_dim, proj_dim=proj_dim)

    # one stacked (2N, c) matmul against the queue: queue streamed once for both branches
    stacked = jnp.concatenate([sn, tn], axis=0).astype(jnp.bfloat16)
    all_logits = queue_logits(stacked, queue.astype(jnp.bfloat16))
    logit_stu = all_logits[:n]
    logit_tea = all_logits[n:]

    # top-k (sorted descending, as torch.topk)
    # TODO(synk): top-k (sort) has no clean Pallas TPU primitive; done with lax.top_k.
    logit_stu, _ = jax.lax.top_k(logit_stu, k)
    logit_tea, _ = jax.lax.top_k(logit_tea, k)

    # positive logits: trivial per-row reductions -> plain jnp (avoids lane-1 Pallas stores)
    logit_s_p = jnp.sum(sn * tn, axis=1, keepdims=True)
    logit_t_p = jnp.sum(tn * tn, axis=1, keepdims=True)   # == 1 after normalize (kept for fidelity)

    logit_stu = jnp.concatenate([logit_s_p, logit_stu], axis=1) / t
    logit_tea = jnp.concatenate([logit_t_p, logit_tea], axis=1)
    logit_tea = jax.nn.softmax(logit_tea / temp, axis=1)

    # _dequeue_and_enqueue (functional circular-buffer update; K % batch == 0 enforced by caller)
    ptr = queue_ptr[0]
    new_queue = jax.lax.dynamic_update_slice(queue, tn.T, (0, ptr))
    new_ptr = jnp.array([(ptr + n) % bigk], dtype=jnp.int32)
    return logit_stu, logit_tea, new_queue, new_ptr


# ---------------------------------------------------------------------------
# deterministic parameter construction (synthetic backbones + SEED MLP heads)
# ---------------------------------------------------------------------------
def make_params(key, in_dim, feat_dim, hidden_dim, proj_dim):
    keys = jax.random.split(key, 8)
    sc = 0.05
    z = lambda d: jnp.zeros((1, d), jnp.float32)
    rnd = lambda kk, a, b: sc * jax.random.normal(kk, (a, b), jnp.float32)
    return {
        "s_bb_w": rnd(keys[0], in_dim, feat_dim), "s_bb_b": z(feat_dim),
        "t_bb_w": rnd(keys[1], in_dim, feat_dim), "t_bb_b": z(feat_dim),
        # student.fc = get_mlp(feat_dim, hidden_dim, proj_dim)
        "s_fc_w1": rnd(keys[2], feat_dim, hidden_dim), "s_fc_b1": z(hidden_dim),
        "s_fc_w2": rnd(keys[3], hidden_dim, proj_dim), "s_fc_b2": z(proj_dim),
        # teacher.fc
        "t_fc_w1": rnd(keys[4], feat_dim, hidden_dim), "t_fc_b1": z(hidden_dim),
        "t_fc_w2": rnd(keys[5], hidden_dim, proj_dim), "t_fc_b2": z(proj_dim),
        # predict_q = get_mlp(proj_dim, hidden_dim, proj_dim)
        "pq_w1": rnd(keys[6], proj_dim, hidden_dim), "pq_b1": z(hidden_dim),
        "pq_w2": rnd(keys[7], hidden_dim, proj_dim), "pq_b2": z(proj_dim),
    }


if __name__ == "__main__":
    # small-but-lane-dense shapes consistent with the module
    N, C, H, W = 2, 4, 16, 16
    in_dim = C * H * W            # 1024
    feat_dim = 512                # -> hidden = 1024, proj = 128 (all 128-multiples)
    hidden_dim = feat_dim * 2
    proj_dim = feat_dim // 4
    K = 256                       # queue size
    k = 32                        # top-k
    t = 0.07
    temp = 0.0001
    assert K % N == 0             # circular-queue invariant from the reference

    key = jax.random.PRNGKey(0)
    key, k_img, k_queue = jax.random.split(key, 3)
    params = make_params(key, in_dim, feat_dim, hidden_dim, proj_dim)

    image = jax.random.normal(k_img, (N, C, H, W), jnp.float32)

    # register_buffer('queue', randn(proj_dim, K)) followed by normalize(dim=0)
    queue = jax.random.normal(k_queue, (proj_dim, K), jnp.float32)
    queue = queue / jnp.maximum(
        jnp.sqrt(jnp.sum(queue * queue, axis=0, keepdims=True)), 1e-12)
    queue_ptr = jnp.zeros((1,), jnp.int32)

    fwd = jax.jit(functools.partial(seed_forward, t=t, temp=temp, k=k))
    logit_stu, logit_tea, new_queue, new_ptr = fwd(params, image, queue, queue_ptr)
    jax.block_until_ready((logit_stu, logit_tea, new_queue, new_ptr))

    assert logit_stu.shape == (N, k + 1)
    assert logit_tea.shape == (N, k + 1)
    assert new_queue.shape == (proj_dim, K)
    assert int(new_ptr[0]) == N % K
    print("KERNEL_OK")
</pallas_src>

<mosaic_0001>
module attributes {stable_mosaic.version = 11 : i64} {
  func.func @branches_kernel(%arg0: i32, %arg1: i32, %arg2: memref<2x512xbf16, #tpu.memory_space<vmem>>, %arg3: memref<512x1024xbf16, #tpu.memory_space<vmem>>, %arg4: memref<1x1024xf32, #tpu.memory_space<vmem>>, %arg5: memref<512x1024xbf16, #tpu.memory_space<vmem>>, %arg6: memref<1x1024xf32, #tpu.memory_space<vmem>>, %arg7: memref<1024x128xbf16, #tpu.memory_space<vmem>>, %arg8: memref<1x128xf32, #tpu.memory_space<vmem>>, %arg9: memref<512x1024xbf16, #tpu.memory_space<vmem>>, %arg10: memref<1x1024xf32, #tpu.memory_space<vmem>>, %arg11: memref<1024x128xbf16, #tpu.memory_space<vmem>>, %arg12: memref<1x128xf32, #tpu.memory_space<vmem>>, %arg13: memref<128x1024xbf16, #tpu.memory_space<vmem>>, %arg14: memref<1x1024xf32, #tpu.memory_space<vmem>>, %arg15: memref<1024x128xbf16, #tpu.memory_space<vmem>>, %arg16: memref<1x128xf32, #tpu.memory_space<vmem>>, %arg17: memref<2x128xf32, #tpu.memory_space<vmem>>, %arg18: memref<2x128xf32, #tpu.memory_space<vmem>>, %arg19: memref<2x1024xf32, #tpu.memory_space<vmem>>) attributes {dimension_semantics = [#tpu.dimension_semantics<parallel>, #tpu.dimension_semantics<arbitrary>], iteration_bounds = array<i64: 1, 2>, scalar_prefetch = 0 : i64, scratch_operands = 1 : i64, tpu.core_type = #tpu.core_type<tc>, window_params = [{transform_indices = @transform_0, window_bounds = array<i64: 2, 512>}, {transform_indices = @transform_1, window_bounds = array<i64: 512, 1024>}, {pipeline_mode = #tpu.pipeline_mode<synchronous>, transform_indices = @transform_2, window_bounds = array<i64: 1, 1024>}, {pipeline_mode = #tpu.pipeline_mode<synchronous>, transform_indices = @transform_3, window_bounds = array<i64: 512, 1024>}, {pipeline_mode = #tpu.pipeline_mode<synchronous>, transform_indices = @transform_4, window_bounds = array<i64: 1, 1024>}, {pipeline_mode = #tpu.pipeline_mode<synchronous>, transform_indices = @transform_5, window_bounds = array<i64: 1024, 128>}, {pipeline_mode = #tpu.pipeline_mode<synchronous>, transform_indices = @transform_6, window_bounds = array<i64: 1, 128>}, {pipeline_mode = #tpu.pipeline_mode<synchronous>, transform_indices = @transform_7, window_bounds = array<i64: 512, 1024>}, {pipeline_mode = #tpu.pipeline_mode<synchronous>, transform_indices = @transform_8, window_bounds = array<i64: 1, 1024>}, {pipeline_mode = #tpu.pipeline_mode<synchronous>, transform_indices = @transform_9, window_bounds = array<i64: 1024, 128>}, {pipeline_mode = #tpu.pipeline_mode<synchronous>, transform_indices = @transform_10, window_bounds = array<i64: 1, 128>}, {pipeline_mode = #tpu.pipeline_mode<synchronous>, transform_indices = @transform_11, window_bounds = array<i64: 128, 1024>}, {pipeline_mode = #tpu.pipeline_mode<synchronous>, transform_indices = @transform_12, window_bounds = array<i64: 1, 1024>}, {pipeline_mode = #tpu.pipeline_mode<synchronous>, transform_indices = @transform_13, window_bounds = array<i64: 1024, 128>}, {pipeline_mode = #tpu.pipeline_mode<synchronous>, transform_indices = @transform_14, window_bounds = array<i64: 1, 128>}, {transform_indices = @transform_15, window_bounds = array<i64: 2, 128>}, {transform_indices = @transform_16, window_bounds = array<i64: 2, 128>}]} {
    %c0_i32 = arith.constant 0 : i32
    %0 = arith.cmpi eq, %arg1, %c0_i32 : i32
    %1 = arith.extui %0 : i1 to i32
    %c0_i32_0 = arith.constant 0 : i32
    %2 = arith.cmpi ne, %1, %c0_i32_0 : i32
    scf.if %2 {
      %cst_9 = arith.constant 0.000000e+00 : f32
      %12 = vector.broadcast %cst_9 : f32 to vector<2x1024xf32>
      %c0_10 = arith.constant 0 : index
      %c0_11 = arith.constant 0 : index
      %13 = vector.load %arg19[%c0_10, %c0_11] : memref<2x1024xf32, #tpu.memory_space<vmem>>, vector<2x1024xf32>
      tpu.vector_store %arg19[%c0_10, %c0_11], %12 {strides = array<i32>} : memref<2x1024xf32, #tpu.memory_space<vmem>>, vector<2x1024xf32>,
    } else {
    }
    %c0 = arith.constant 0 : index
    %c0_1 = arith.constant 0 : index
    %3 = vector.load %arg19[%c0, %c0_1] : memref<2x1024xf32, #tpu.memory_space<vmem>>, vector<2x1024xf32>
    %c0_2 = arith.constant 0 : index
    %c0_3 = arith.constant 0 : index
    %4 = vector.load %arg2[%c0_2, %c0_3] : memref<2x512xbf16, #tpu.memory_space<vmem>>, vector<2x512xbf16>
    %c0_4 = arith.constant 0 : index
    %c0_5 = arith.constant 0 : index
    %5 = vector.load %arg3[%c0_4, %c0_5] : memref<512x1024xbf16, #tpu.memory_space<vmem>>, vector<512x1024xbf16>
    %cst = arith.constant dense<0.000000e+00> : vector<2x1024xf32>
    %6 = tpu.matmul %4, %5, %cst {dimension_numbers = #tpu.dot_dimension_numbers<[1], [0], [0], [1], [0, 0, 1, 1], [], []>} : vector<2x512xbf16>, vector<512x1024xbf16>, vector<2x1024xf32> -> vector<2x1024xf32>
    %7 = arith.addf %3, %6 : vector<2x1024xf32>
    %c0_6 = arith.constant 0 : index
    %c0_7 = arith.constant 0 : index
    %8 = vector.load %arg19[%c0_6, %c0_7] : memref<2x1024xf32, #tpu.memory_space<vmem>>, vector<2x1024xf32>
    tpu.vector_store %arg19[%c0_6, %c0_7], %7 {strides = array<i32>} : memref<2x1024xf32, #tpu.memory_space<vmem>>, vector<2x1024xf32>,
    %c1_i32 = arith.constant 1 : i32
    %9 = arith.cmpi eq, %arg1, %c1_i32 : i32
    %10 = arith.extui %9 : i1 to i32
    %c0_i32_8 = arith.constant 0 : i32
    %11 = arith.cmpi ne, %10, %c0_i32_8 : i32
    scf.if %11 {
      %c0_9 = arith.constant 0 : index
      %c0_10 = arith.constant 0 : index
      %12 = vector.load %arg19[%c0_9, %c0_10] : memref<2x1024xf32, #tpu.memory_space<vmem>>, vector<2x1024xf32>
      %c0_11 = arith.constant 0 : index
      %c0_12 = arith.constant 0 : index
      %13 = vector.load %arg4[%c0_11, %c0_12] : memref<1x1024xf32, #tpu.memory_space<vmem>>, vector<1x1024xf32>
      %14 = vector.broadcast %13 : vector<1x1024xf32> to vector<2x1024xf32>
      %15 = arith.addf %12, %14 : vector<2x1024xf32>
      %cst_13 = arith.constant 0.000000e+00 : f32
      %16 = vector.broadcast %cst_13 : f32 to vector<2x1024xf32>
      %17 = arith.maximumf %15, %16 : vector<2x1024xf32>
      %18 = vector.extract_strided_slice %17 {offsets = [0, 0], sizes = [2, 512], strides = [1, 1]} : vector<2x1024xf32> to vector<2x512xf32>
      %19 = arith.truncf %18 : vector<2x512xf32> to vector<2x512xbf16>
      %20 = vector.extract_strided_slice %17 {offsets = [0, 512], sizes = [2, 512], strides = [1, 1]} : vector<2x1024xf32> to vector<2x512xf32>
      %21 = arith.truncf %20 : vector<2x512xf32> to vector<2x512xbf16>
      %c0_14 = arith.constant 0 : index
      %c0_15 = arith.constant 0 : index
      %22 = vector.load %arg5[%c0_14, %c0_15] : memref<512x1024xbf16, #tpu.memory_space<vmem>>, vector<512x1024xbf16>
      %cst_16 = arith.constant dense<0.000000e+00> : vector<2x1024xf32>
      %23 = tpu.matmul %19, %22, %cst_16 {dimension_numbers = #tpu.dot_dimension_numbers<[1], [0], [0], [1], [0, 0, 1, 1], [], []>} : vector<2x512xbf16>, vector<512x1024xbf16>, vector<2x1024xf32> -> vector<2x1024xf32>
      %c0_17 = arith.constant 0 : index
      %c0_18 = arith.constant 0 : index
      %24 = vector.load %arg6[%c0_17, %c0_18] : memref<1x1024xf32, #tpu.memory_space<vmem>>, vector<1x1024xf32>
      %25 = vector.broadcast %24 : vector<1x1024xf32> to vector<2x1024xf32>
      %26 = arith.addf %23, %25 : vector<2x1024xf32>
      %cst_19 = arith.constant 0.000000e+00 : f32
      %27 = vector.broadcast %cst_19 : f32 to vector<2x1024xf32>
      %28 = arith.maximumf %26, %27 : vector<2x1024xf32>
      %29 = arith.truncf %28 : vector<2x1024xf32> to vector<2x1024xbf16>
      %c0_20 = arith.constant 0 : index
      %c0_21 = arith.constant 0 : index
      %30 = vector.load %arg7[%c0_20, %c0_21] : memref<1024x128xbf16, #tpu.memory_space<vmem>>, vector<1024x128xbf16>
      %cst_22 = arith.constant dense<0.000000e+00> : vector<2x128xf32>
      %31 = tpu.matmul %29, %30, %cst_22 {dimension_numbers = #tpu.dot_dimension_numbers<[1], [0], [0], [1], [0, 0, 1, 1], [], []>} : vector<2x1024xbf16>, vector<1024x128xbf16>, vector<2x128xf32> -> vector<2x128xf32>
      %c0_23 = arith.constant 0 : index
      %c0_24 = arith.constant 0 : index
      %32 = vector.load %arg8[%c0_23, %c0_24] : memref<1x128xf32, #tpu.memory_space<vmem>>, vector<1x128xf32>
      %33 = vector.broadcast %32 : vector<1x128xf32> to vector<2x128xf32>
      %34 = arith.addf %31, %33 : vector<2x128xf32>
      %c0_25 = arith.constant 0 : index
      %c0_26 = arith.constant 0 : index
      %35 = vector.load %arg9[%c0_25, %c0_26] : memref<512x1024xbf16, #tpu.memory_space<vmem>>, vector<512x1024xbf16>
      %cst_27 = arith.constant dense<0.000000e+00> : vector<2x1024xf32>
      %36 = tpu.matmul %21, %35, %cst_27 {dimension_numbers = #tpu.dot_dimension_numbers<[1], [0], [0], [1], [0, 0, 1, 1], [], []>} : vector<2x512xbf16>, vector<512x1024xbf16>, vector<2x1024xf32> -> vector<2x1024xf32>
      %c0_28 = arith.constant 0 : index
      %c0_29 = arith.constant 0 : index
      %37 = vector.load %arg10[%c0_28, %c0_29] : memref<1x1024xf32, #tpu.memory_space<vmem>>, vector<1x1024xf32>
      %38 = vector.broadcast %37 : vector<1x1024xf32> to vector<2x1024xf32>
      %39 = arith.addf %36, %38 : vector<2x1024xf32>
      %cst_30 = arith.constant 0.000000e+00 : f32
      %40 = vector.broadcast %cst_30 : f32 to vector<2x1024xf32>
      %41 = arith.maximumf %39, %40 : vector<2x1024xf32>
      %42 = arith.truncf %41 : vector<2x1024xf32> to vector<2x1024xbf16>
      %c0_31 = arith.constant 0 : index
      %c0_32 = arith.constant 0 : index
      %43 = vector.load %arg11[%c0_31, %c0_32] : memref<1024x128xbf16, #tpu.memory_space<vmem>>, vector<1024x128xbf16>
      %cst_33 = arith.constant dense<0.000000e+00> : vector<2x128xf32>
      %44 = tpu.matmul %42, %43, %cst_33 {dimension_numbers = #tpu.dot_dimension_numbers<[1], [0], [0], [1], [0, 0, 1, 1], [], []>} : vector<2x1024xbf16>, vector<1024x128xbf16>, vector<2x128xf32> -> vector<2x128xf32>
      %c0_34 = arith.constant 0 : index
      %c0_35 = arith.constant 0 : index
      %45 = vector.load %arg12[%c0_34, %c0_35] : memref<1x128xf32, #tpu.memory_space<vmem>>, vector<1x128xf32>
      %46 = vector.broadcast %45 : vector<1x128xf32> to vector<2x128xf32>
      %47 = arith.addf %44, %46 : vector<2x128xf32>
      %48 = arith.truncf %47 : vector<2x128xf32> to vector<2x128xbf16>
      %c0_36 = arith.constant 0 : index
      %c0_37 = arith.constant 0 : index
      %49 = vector.load %arg13[%c0_36, %c0_37] : memref<128x1024xbf16, #tpu.memory_space<vmem>>, vector<128x1024xbf16>
      %cst_38 = arith.constant dense<0.000000e+00> : vector<2x1024xf32>
      %50 = tpu.matmul %48, %49, %cst_38 {dimension_numbers = #tpu.dot_dimension_numbers<[1], [0], [0], [1], [0, 0, 1, 1], [], []>} : vector<2x128xbf16>, vector<128x1024xbf16>, vector<2x1024xf32> -> vector<2x1024xf32>
      %c0_39 = arith.constant 0 : index
      %c0_40 = arith.constant 0 : index
      %51 = vector.load %arg14[%c0_39, %c0_40] : memref<1x1024xf32, #tpu.memory_space<vmem>>, vector<1x1024xf32>
      %52 = vector.broadcast %51 : vector<1x1024xf32> to vector<2x1024xf32>
      %53 = arith.addf %50, %52 : vector<2x1024xf32>
      %cst_41 = arith.constant 0.000000e+00 : f32
      %54 = vector.broadcast %cst_41 : f32 to vector<2x1024xf32>
      %55 = arith.maximumf %53, %54 : vector<2x1024xf32>
      %56 = arith.truncf %55 : vector<2x1024xf32> to vector<2x1024xbf16>
      %c0_42 = arith.constant 0 : index
      %c0_43 = arith.constant 0 : index
      %57 = vector.load %arg15[%c0_42, %c0_43] : memref<1024x128xbf16, #tpu.memory_space<vmem>>, vector<1024x128xbf16>
      %cst_44 = arith.constant dense<0.000000e+00> : vector<2x128xf32>
      %58 = tpu.matmul %56, %57, %cst_44 {dimension_numbers = #tpu.dot_dimension_numbers<[1], [0], [0], [1], [0, 0, 1, 1], [], []>} : vector<2x1024xbf16>, vector<1024x128xbf16>, vector<2x128xf32> -> vector<2x128xf32>
      %c0_45 = arith.constant 0 : index
      %c0_46 = arith.constant 0 : index
      %59 = vector.load %arg16[%c0_45, %c0_46] : memref<1x128xf32, #tpu.memory_space<vmem>>, vector<1x128xf32>
      %60 = vector.broadcast %59 : vector<1x128xf32> to vector<2x128xf32>
      %61 = arith.addf %58, %60 : vector<2x128xf32>
      %62 = arith.mulf %34, %34 : vector<2x128xf32>
      %cst_47 = arith.constant dense<0.000000e+00> : vector<2xf32>
      %63 = vector.multi_reduction <add>, %62, %cst_47 [1] : vector<2x128xf32> to vector<2xf32>
      %64 = vector.shape_cast %63 : vector<2xf32> to vector<2x1xf32>
      %65 = math.sqrt %64 : vector<2x1xf32>
      %cst_48 = arith.constant 9.99999996E-13 : f32
      %66 = vector.broadcast %cst_48 : f32 to vector<2x1xf32>
      %67 = arith.maximumf %65, %66 : vector<2x1xf32>
      %68 = arith.mulf %61, %61 : vector<2x128xf32>
      %cst_49 = arith.constant dense<0.000000e+00> : vector<2xf32>
      %69 = vector.multi_reduction <add>, %68, %cst_49 [1] : vector<2x128xf32> to vector<2xf32>
      %70 = vector.shape_cast %69 : vector<2xf32> to vector<2x1xf32>
      %71 = math.sqrt %70 : vector<2x1xf32>
      %cst_50 = arith.constant 9.99999996E-13 : f32
      %72 = vector.broadcast %cst_50 : f32 to vector<2x1xf32>
      %73 = arith.maximumf %71, %72 : vector<2x1xf32>
      %74 = vector.broadcast %67 : vector<2x1xf32> to vector<2x128xf32>
      %75 = arith.divf %34, %74 : vector<2x128xf32>
      %c0_51 = arith.constant 0 : index
      %c0_52 = arith.constant 0 : index
      %76 = vector.load %arg17[%c0_51, %c0_52] : memref<2x128xf32, #tpu.memory_space<vmem>>, vector<2x128xf32>
      tpu.vector_store %arg17[%c0_51, %c0_52], %75 {strides = array<i32>} : memref<2x128xf32, #tpu.memory_space<vmem>>, vector<2x128xf32>,
      %77 = vector.broadcast %73 : vector<2x1xf32> to vector<2x128xf32>
      %78 = arith.divf %61, %77 : vector<2x128xf32>
      %c0_53 = arith.constant 0 : index
      %c0_54 = arith.constant 0 : index
      %79 = vector.load %arg18[%c0_53, %c0_54] : memref<2x128xf32, #tpu.memory_space<vmem>>, vector<2x128xf32>
      tpu.vector_store %arg18[%c0_53, %c0_54], %78 {strides = array<i32>} : memref<2x128xf32, #tpu.memory_space<vmem>>, vector<2x128xf32>,
    } else {
    }
    return
  }
  func.func @transform_0(%arg0: i32, %arg1: i32) -> (i32, i32) {
    %c0_i32 = arith.constant 0 : i32
    return %arg0, %arg1 : i32, i32
  }
  func.func @transform_1(%arg0: i32, %arg1: i32) -> (i32, i32) {
    %c0_i32 = arith.constant 0 : i32
    %c0_i32_0 = arith.constant 0 : i32
    return %arg1, %c0_i32 : i32, i32
  }
  func.func @transform_2(%arg0: i32, %arg1: i32) -> (i32, i32) {
    %c0_i32 = arith.constant 0 : i32
    %c0_i32_0 = arith.constant 0 : i32
    %c0_i32_1 = arith.constant 0 : i32
    return %c0_i32, %c0_i32_0 : i32, i32
  }
  func.func @transform_3(%arg0: i32, %arg1: i32) -> (i32, i32) {
    %c0_i32 = arith.constant 0 : i32
    %c0_i32_0 = arith.constant 0 : i32
    %c0_i32_1 = arith.constant 0 : i32
    return %c0_i32, %c0_i32_0 : i32, i32
  }
  func.func @transform_4(%arg0: i32, %arg1: i32) -> (i32, i32) {
    %c0_i32 = arith.constant 0 : i32
    %c0_i32_0 = arith.constant 0 : i32
    %c0_i32_1 = arith.constant 0 : i32
    return %c0_i32, %c0_i32_0 : i32, i32
  }
  func.func @transform_5(%arg0: i32, %arg1: i32) -> (i32, i32) {
    %c0_i32 = arith.constant 0 : i32
    %c0_i32_0 = arith.constant 0 : i32
    %c0_i32_1 = arith.constant 0 : i32
    return %c0_i32, %c0_i32_0 : i32, i32
  }
  func.func @transform_6(%arg0: i32, %arg1: i32) -> (i32, i32) {
    %c0_i32 = arith.constant 0 : i32
    %c0_i32_0 = arith.constant 0 : i32
    %c0_i32_1 = arith.constant 0 : i32
    return %c0_i32, %c0_i32_0 : i32, i32
  }
  func.func @transform_7(%arg0: i32, %arg1: i32) -> (i32, i32) {
    %c0_i32 = arith.constant 0 : i32
    %c0_i32_0 = arith.constant 0 : i32
    %c0_i32_1 = arith.constant 0 : i32
    return %c0_i32, %c0_i32_0 : i32, i32
  }
  func.func @transform_8(%arg0: i32, %arg1: i32) -> (i32, i32) {
    %c0_i32 = arith.constant 0 : i32
    %c0_i32_0 = arith.constant 0 : i32
    %c0_i32_1 = arith.constant 0 : i32
    return %c0_i32, %c0_i32_0 : i32, i32
  }
  func.func @transform_9(%arg0: i32, %arg1: i32) -> (i32, i32) {
    %c0_i32 = arith.constant 0 : i32
    %c0_i32_0 = arith.constant 0 : i32
    %c0_i32_1 = arith.constant 0 : i32
    return %c0_i32, %c0_i32_0 : i32, i32
  }
  func.func @transform_10(%arg0: i32, %arg1: i32) -> (i32, i32) {
    %c0_i32 = arith.constant 0 : i32
    %c0_i32_0 = arith.constant 0 : i32
    %c0_i32_1 = arith.constant 0 : i32
    return %c0_i32, %c0_i32_0 : i32, i32
  }
  func.func @transform_11(%arg0: i32, %arg1: i32) -> (i32, i32) {
    %c0_i32 = arith.constant 0 : i32
    %c0_i32_0 = arith.constant 0 : i32
    %c0_i32_1 = arith.constant 0 : i32
    return %c0_i32, %c0_i32_0 : i32, i32
  }
  func.func @transform_12(%arg0: i32, %arg1: i32) -> (i32, i32) {
    %c0_i32 = arith.constant 0 : i32
    %c0_i32_0 = arith.constant 0 : i32
    %c0_i32_1 = arith.constant 0 : i32
    return %c0_i32, %c0_i32_0 : i32, i32
  }
  func.func @transform_13(%arg0: i32, %arg1: i32) -> (i32, i32) {
    %c0_i32 = arith.constant 0 : i32
    %c0_i32_0 = arith.constant 0 : i32
    %c0_i32_1 = arith.constant 0 : i32
    return %c0_i32, %c0_i32_0 : i32, i32
  }
  func.func @transform_14(%arg0: i32, %arg1: i32) -> (i32, i32) {
    %c0_i32 = arith.constant 0 : i32
    %c0_i32_0 = arith.constant 0 : i32
    %c0_i32_1 = arith.constant 0 : i32
    return %c0_i32, %c0_i32_0 : i32, i32
  }
  func.func @transform_15(%arg0: i32, %arg1: i32) -> (i32, i32) {
    %c0_i32 = arith.constant 0 : i32
    %c0_i32_0 = arith.constant 0 : i32
    return %arg0, %c0_i32 : i32, i32
  }
  func.func @transform_16(%arg0: i32, %arg1: i32) -> (i32, i32) {
    %c0_i32 = arith.constant 0 : i32
    %c0_i32_0 = arith.constant 0 : i32
    return %arg0, %c0_i32 : i32, i32
  }
}

module attributes {stable_mosaic.version = 11 : i64} {
  func.func @queue_logits_kernel(%arg0: i32, %arg1: memref<4x128xbf16, #tpu.memory_space<vmem>>, %arg2: memref<128x128xbf16, #tpu.memory_space<vmem>>, %arg3: memref<4x128xf32, #tpu.memory_space<vmem>>) attributes {dimension_semantics = [#tpu.dimension_semantics<parallel>], iteration_bounds = array<i64: 2>, scalar_prefetch = 0 : i64, scratch_operands = 0 : i64, tpu.core_type = #tpu.core_type<tc>, window_params = [{pipeline_mode = #tpu.pipeline_mode<synchronous>, transform_indices = @transform_0, window_bounds = array<i64: 4, 128>}, {transform_indices = @transform_1, window_bounds = array<i64: 128, 128>}, {transform_indices = @transform_2, window_bounds = array<i64: 4, 128>}]} {
    %c0 = arith.constant 0 : index
    %c0_0 = arith.constant 0 : index
    %0 = vector.load %arg1[%c0, %c0_0] : memref<4x128xbf16, #tpu.memory_space<vmem>>, vector<4x128xbf16>
    %c0_1 = arith.constant 0 : index
    %c0_2 = arith.constant 0 : index
    %1 = vector.load %arg2[%c0_1, %c0_2] : memref<128x128xbf16, #tpu.memory_space<vmem>>, vector<128x128xbf16>
    %cst = arith.constant dense<0.000000e+00> : vector<4x128xf32>
    %2 = tpu.matmul %0, %1, %cst {dimension_numbers = #tpu.dot_dimension_numbers<[1], [0], [0], [1], [0, 0, 1, 1], [], []>} : vector<4x128xbf16>, vector<128x128xbf16>, vector<4x128xf32> -> vector<4x128xf32>
    %c0_3 = arith.constant 0 : index
    %c0_4 = arith.constant 0 : index
    %3 = vector.load %arg3[%c0_3, %c0_4] : memref<4x128xf32, #tpu.memory_space<vmem>>, vector<4x128xf32>
    tpu.vector_store %arg3[%c0_3, %c0_4], %2 {strides = array<i32>} : memref<4x128xf32, #tpu.memory_space<vmem>>, vector<4x128xf32>,
    return
  }
  func.func @transform_0(%arg0: i32) -> (i32, i32) {
    %c0_i32 = arith.constant 0 : i32
    %c0_i32_0 = arith.constant 0 : i32
    %c0_i32_1 = arith.constant 0 : i32
    return %c0_i32, %c0_i32_0 : i32, i32
  }
  func.func @transform_1(%arg0: i32) -> (i32, i32) {
    %c0_i32 = arith.constant 0 : i32
    %c0_i32_0 = arith.constant 0 : i32
    return %c0_i32, %arg0 : i32, i32
  }
  func.func @transform_2(%arg0: i32) -> (i32, i32) {
    %c0_i32 = arith.constant 0 : i32
    %c0_i32_0 = arith.constant 0 : i32
    return %c0_i32, %arg0 : i32, i32
  }
}

</mosaic_0001>

<llo_original>
// kernel: seed_forward.3
$region0: #{seed_forward.3}
  #allocation0 [shape = 'u32[]', space=smem, size = 0x4, offset = 0x4, fixed_abs, tag = 'smem constant byte address 0x4 - core index']
  #allocation1 [shape = 'u32[144,128]{1,0:T(1,128)}', space=vmem, size = 0x12000, scoped, tag = 'internal scratch']
  %s0 = inlined_call_operand.vmem [shape: bf16[4,128], index: 0, kind: input, shape index: {}]
  %s1 = inlined_call_operand.vmem [shape: bf16[128,256], index: 1, kind: input, shape index: {}]
  %s2 = inlined_call_operand.vmem [shape: f32[4,256], index: 2, kind: output, shape index: {}]
  %s3 = sld [smem:[#allocation0]]
  $region82: #{seed_forward.3} parent=0
    _
  %s5 = ssub.s32 1, %s3
  %s6 = scalar_select 0, %s5, %s3
  $region1: #{seed_forward.3} parent=0
    #allocation2 [shape = 'u8[65536]{0}', space=vmem, size = 0x10000, scoped, tag = 'input window, operand 1']
    loop: start=0, step=1, limit=4
    $region2: #{seed_forward.3} parent=1 // loop_pre_header
      _
    $region3: #{seed_forward.3} parent=1 // loop_header
      %s8 = sphi 0, %s12
      %p9 = scmp.ge.s32.totalorder %s8, 4
      %s16 = sphi 0, %s16
      %s18 = sphi 0, %s16
      %s19 = sphi 0, %s18
      %s33 = sphi 0, %s19
      %s39 = sphi 0, %s41
      %s42 = sphi 0, %s39
      %s43 = sphi 0, %s42
      %s59 = sphi 0, %s43
      %s65 = sphi 0, %s67
      %s68 = sphi 0, %s65
      %s69 = sphi 0, %s68
      %s85 = sphi 0, %s69
    $region4: #{seed_forward.3} parent=1 // loop_header_branch
      %11 = sbr.rel (%p9) target = $region8
    $region5: #{seed_forward.3} parent=1 // loop_body
      %s13 = ssub.s32 %s8, 1
      %s14 = ssub.s32 %s8, 2
      %s15 = sadd.s32 %s8, 1
      %s17 = sadd.s32 %s16, 1
      %p20 = scmp.eq.s32.totalorder %s8, 1
      %p21 = scmp.ne.s32.totalorder %s16, %s18
      %p22 = scmp.eq.s32.totalorder %s8, 0
      %p23 = por %p21, %p22
      %p24 = scmp.ne.s32.totalorder %s16, %s18
      %p25 = scmp.eq.s32.totalorder %s13, 1
      %p26 = por %p24, %p25
      %p27 = scmp.ne.s32.totalorder %s18, %s19
      %p28 = scmp.eq.s32.totalorder %s13, 0
      %p29 = por %p27, %p28
      %p30 = scmp.ne.s32.totalorder %s18, %s19
      %p31 = scmp.eq.s32.totalorder %s14, 1
      %p32 = por %p30, %p31
      %p34 = scmp.ne.s32.totalorder %s19, %s33
      %p35 = scmp.eq.s32.totalorder %s14, 0
      %p36 = por %p34, %p35
      %s37 = ssub.s32 %s8, %s15
      %p38 = scmp.eq.s32.totalorder %s37, 0
      %s40 = sadd.s32 %s39, 1
      %s41 = scalar_select %p38, %s39, %s40
      %p44 = pneg %p38
      %p45 = scmp.eq.s32.totalorder %s8, 1
      %p46 = por %p44, %p45
      %p47 = scmp.ne.s32.totalorder %s39, %s42
      %p48 = scmp.eq.s32.totalorder %s8, 0
      %p49 = por %p47, %p48
      %p50 = scmp.ne.s32.totalorder %s39, %s42
      %p51 = scmp.eq.s32.totalorder %s13, 1
      %p52 = por %p50, %p51
      %p53 = scmp.ne.s32.totalorder %s42, %s43
      %p54 = scmp.eq.s32.totalorder %s13, 0
      %p55 = por %p53, %p54
      %p56 = scmp.ne.s32.totalorder %s42, %s43
      %p57 = scmp.eq.s32.totalorder %s14, 1
      %p58 = por %p56, %p57
      %p60 = scmp.ne.s32.totalorder %s43, %s59
      %p61 = scmp.eq.s32.totalorder %s14, 0
      %p62 = por %p60, %p61
      %s63 = ssub.s32 %s8, %s15
      %p64 = scmp.eq.s32.totalorder %s63, 0
      %s66 = sadd.s32 %s65, 1
      %s67 = scalar_select %p64, %s65, %s66
      %p70 = pneg %p64
      %p71 = scmp.eq.s32.totalorder %s8, 1
      %p72 = por %p70, %p71
      %p73 = scmp.ne.s32.totalorder %s65, %s68
      %p74 = scmp.eq.s32.totalorder %s8, 0
      %p75 = por %p73, %p74
      %p76 = scmp.ne.s32.totalorder %s65, %s68
      %p77 = scmp.eq.s32.totalorder %s13, 1
      %p78 = por %p76, %p77
      %p79 = scmp.ne.s32.totalorder %s68, %s69
      %p80 = scmp.eq.s32.totalorder %s13, 0
      %p81 = por %p79, %p80
      %p82 = scmp.ne.s32.totalorder %s68, %s69
      %p83 = scmp.eq.s32.totalorder %s14, 1
      %p84 = por %p82, %p83
      %p86 = scmp.ne.s32.totalorder %s69, %s85
      %p87 = scmp.eq.s32.totalorder %s14, 0
      %p88 = por %p86, %p87
      %p89 = scmp.le.s32.totalorder 1, %s8
      %p90 = scmp.lt.s32.totalorder %s8, 3
      %p91 = pnand %p89, %p90
      %p92 = pneg %p91
      // Predicated region
      $region9: #{seed_forward.3} parent=5 // pred_check
        _
      $region10: #{seed_forward.3} parent=5 // pred_check_branch
        %94 = sbr.rel (%p91) target = $region12
      $region11: #{seed_forward.3} parent=5 // pred_region
        %s95 = ssub.s32 %s8, 1
        // Predicated region
        $region13: #{seed_forward.3} parent=11 // pred_check
          %p96 = pneg %p29
        $region14: #{seed_forward.3} parent=11 // pred_check_branch
          %98 = sbr.rel (%p96) target = $region16
        $region15: #{seed_forward.3} parent=11 // pred_region
          _
        $region16: #{seed_forward.3} parent=11 // pred_fallthru
          _
      $region12: #{seed_forward.3} parent=5 // pred_fallthru
        _
      %p99 = scmp.lt.s32.totalorder %s8, 2
      // Predicated region
      $region17: #{seed_forward.3} parent=5 // pred_check
        %p100 = pneg %p99
      $region18: #{seed_forward.3} parent=5 // pred_check_branch
        %102 = sbr.rel (%p100) target = $region20
      $region19: #{seed_forward.3} parent=5 // pred_region
        // Predicated region
        $region21: #{seed_forward.3} parent=19 // pred_check
          %p103 = pneg %p49
        $region22: #{seed_forward.3} parent=19 // pred_check_branch
          %105 = sbr.rel (%p103) target = $region24
        $region23: #{seed_forward.3} parent=19 // pred_region
          %s106 = sand.u32 %s39, 1
          %s107 = sand.u32 %s39, 1
          %s108 = smul.addr %s107, 64
          %s109 = scalar_lea.vmem [#allocation2], %s108
          %s110 = smul.addr %s8, 4
          %s111 = scalar_lea.vmem %s1, %s110
          // Predicated region
          $region25: #{seed_forward.3} parent=23 // pred_check
            _
          $region26: #{seed_forward.3} parent=23 // pred_check_branch
            %113 = sbr.rel (0) target = $region28
          $region27: #{seed_forward.3} parent=23 // pred_region
            // Predicated region
            $region29: #{seed_forward.3} parent=27 // pred_check
              _
            $region30: #{seed_forward.3} parent=27 // pred_check_branch
              %115 = sbr.rel target = $region32
            $region31: #{seed_forward.3} parent=27 // pred_region
              // Predicated region
              $region44: #{seed_forward.3} parent=31 // pred_check
                _
              $region45: #{seed_forward.3} parent=31 // pred_check_branch
                %160 = sbr.rel (0) target = $region47
              $region46: #{seed_forward.3} parent=31 // pred_region
                loop: start=0, step=1, limit=1
                $region48: #{seed_forward.3} parent=46 // loop_pre_header
                  _
                $region49: #{seed_forward.3} parent=46 // loop_header
                  %s162 = sphi 0, %s166
                  %p163 = scmp.ge.s32.totalorder %s162, 1
                  %s167 = sphi %s111, %s111
                  %s168 = sphi %s109, %s109
                $region50: #{seed_forward.3} parent=46 // loop_header_branch
                  %165 = sbr.rel (%p163) target = $region54
                $region51: #{seed_forward.3} parent=46 // loop_body
                  _
                $region52: #{seed_forward.3} parent=46 // loop_footer
                  %s166 = sadd.s32 1, %s162
                $region53: #{seed_forward.3} parent=46 // loop_footer_branch
                  %161 = sbr.rel target = $region49
                $region54: #{seed_forward.3} parent=46 // loop_exit
                  _
                loop: start=0, step=1, limit=1
                $region55: #{seed_forward.3} parent=46 // loop_pre_header
                  _
                $region56: #{seed_forward.3} parent=46 // loop_header
                  %s171 = sphi 0, %s175
                  %p172 = scmp.ge.s32.totalorder %s171, 1
                  %s176 = sphi %s111, %s111
                  %s177 = sphi %s109, %s109
                $region57: #{seed_forward.3} parent=46 // loop_header_branch
                  %174 = sbr.rel (%p172) target = $region61
                $region58: #{seed_forward.3} parent=46 // loop_body
                  %v178 = vld [vmem:[%s176] sm:$0xf]
                  %179 = vst [vmem:[%s177] sm:$0xf] %v178
                  %v180 = vld [vmem:[%s176 + $0x8] sm:$0xf]
                  %181 = vst [vmem:[%s177 + $0x4] sm:$0xf] %v180
                  %v182 = vld [vmem:[%s176 + $0x10] sm:$0xf]
                  %183 = vst [vmem:[%s177 + $0x8] sm:$0xf] %v182
                  %v184 = vld [vmem:[%s176 + $0x18] sm:$0xf]
                  %185 = vst [vmem:[%s177 + $0xc] sm:$0xf] %v184
                  %v186 = vld [vmem:[%s176 + $0x20] sm:$0xf]
                  %187 = vst [vmem:[%s177 + $0x10] sm:$0xf] %v186
                  %v188 = vld [vmem:[%s176 + $0x28] sm:$0xf]
                  %189 = vst [vmem:[%s177 + $0x14] sm:$0xf] %v188
                  %v190 = vld [vmem:[%s176 + $0x30] sm:$0xf]
                  %191 = vst [vmem:[%s177 + $0x18] sm:$0xf] %v190
                  %v192 = vld [vmem:[%s176 + $0x38] sm:$0xf]
                  %193 = vst [vmem:[%s177 + $0x1c] sm:$0xf] %v192
                  %v194 = vld [vmem:[%s176 + $0x40] sm:$0xf]
                  %195 = vst [vmem:[%s177 + $0x20] sm:$0xf] %v194
                  %v196 = vld [vmem:[%s176 + $0x48] sm:$0xf]
                  %197 = vst [vmem:[%s177 + $0x24] sm:$0xf] %v196
                  %v198 = vld [vmem:[%s176 + $0x50] sm:$0xf]
                  %199 = vst [vmem:[%s177 + $0x28] sm:$0xf] %v198
                  %v200 = vld [vmem:[%s176 + $0x58] sm:$0xf]
                  %201 = vst [vmem:[%s177 + $0x2c] sm:$0xf] %v200
                  %v202 = vld [vmem:[%s176 + $0x60] sm:$0xf]
                  %203 = vst [vmem:[%s177 + $0x30] sm:$0xf] %v202
                  %v204 = vld [vmem:[%s176 + $0x68] sm:$0xf]
                  %205 = vst [vmem:[%s177 + $0x34] sm:$0xf] %v204
                  %v206 = vld [vmem:[%s176 + $0x70] sm:$0xf]
                  %207 = vst [vmem:[%s177 + $0x38] sm:$0xf] %v206
                  %v208 = vld [vmem:[%s176 + $0x78] sm:$0xf]
                  %209 = vst [vmem:[%s177 + $0x3c] sm:$0xf] %v208
                $region59: #{seed_forward.3} parent=46 // loop_footer
                  %s175 = sadd.s32 1, %s171
                $region60: #{seed_forward.3} parent=46 // loop_footer_branch
                  %170 = sbr.rel target = $region56
                $region61: #{seed_forward.3} parent=46 // loop_exit
                  _
              $region47: #{seed_forward.3} parent=31 // pred_fallthru
                _
            $region32: #{seed_forward.3} parent=27 // pred_fallthru
              _
            // Predicated region
            $region33: #{seed_forward.3} parent=27 // pred_check
              _
            $region34: #{seed_forward.3} parent=27 // pred_check_branch
              %117 = sbr.rel (0) target = $region36
            $region35: #{seed_forward.3} parent=27 // pred_region
              loop: start=0, step=1, limit=1
              $region37: #{seed_forward.3} parent=35 // loop_pre_header
                _
              $region38: #{seed_forward.3} parent=35 // loop_header
                %s120 = sphi 0, %s124
                %p121 = scmp.ge.s32.totalorder %s120, 1
                %s125 = sphi %s111, %s111
                %s126 = sphi %s109, %s109
              $region39: #{seed_forward.3} parent=35 // loop_header_branch
                %123 = sbr.rel (%p121) target = $region43
              $region40: #{seed_forward.3} parent=35 // loop_body
                %v127 = vld [vmem:[%s125] sm:$0xf]
                %128 = vst [vmem:[%s126] sm:$0xf] %v127
                %v129 = vld [vmem:[%s125 + $0x8] sm:$0xf]
                %130 = vst [vmem:[%s126 + $0x4] sm:$0xf] %v129
                %v131 = vld [vmem:[%s125 + $0x10] sm:$0xf]
                %132 = vst [vmem:[%s126 + $0x8] sm:$0xf] %v131
                %v133 = vld [vmem:[%s125 + $0x18] sm:$0xf]
                %134 = vst [vmem:[%s126 + $0xc] sm:$0xf] %v133
                %v135 = vld [vmem:[%s125 + $0x20] sm:$0xf]
                %136 = vst [vmem:[%s126 + $0x10] sm:$0xf] %v135
                %v137 = vld [vmem:[%s125 + $0x28] sm:$0xf]
                %138 = vst [vmem:[%s126 + $0x14] sm:$0xf] %v137
                %v139 = vld [vmem:[%s125 + $0x30] sm:$0xf]
                %140 = vst [vmem:[%s126 + $0x18] sm:$0xf] %v139
                %v141 = vld [vmem:[%s125 + $0x38] sm:$0xf]
                %142 = vst [vmem:[%s126 + $0x1c] sm:$0xf] %v141
                %v143 = vld [vmem:[%s125 + $0x40] sm:$0xf]
                %144 = vst [vmem:[%s126 + $0x20] sm:$0xf] %v143
                %v145 = vld [vmem:[%s125 + $0x48] sm:$0xf]
                %146 = vst [vmem:[%s126 + $0x24] sm:$0xf] %v145
                %v147 = vld [vmem:[%s125 + $0x50] sm:$0xf]
                %148 = vst [vmem:[%s126 + $0x28] sm:$0xf] %v147
                %v149 = vld [vmem:[%s125 + $0x58] sm:$0xf]
                %150 = vst [vmem:[%s126 + $0x2c] sm:$0xf] %v149
                %v151 = vld [vmem:[%s125 + $0x60] sm:$0xf]
                %152 = vst [vmem:[%s126 + $0x30] sm:$0xf] %v151
                %v153 = vld [vmem:[%s125 + $0x68] sm:$0xf]
                %154 = vst [vmem:[%s126 + $0x34] sm:$0xf] %v153
                %v155 = vld [vmem:[%s125 + $0x70] sm:$0xf]
                %156 = vst [vmem:[%s126 + $0x38] sm:$0xf] %v155
                %v157 = vld [vmem:[%s125 + $0x78] sm:$0xf]
                %158 = vst [vmem:[%s126 + $0x3c] sm:$0xf] %v157
              $region41: #{seed_forward.3} parent=35 // loop_footer
                %s124 = sadd.s32 1, %s120
              $region42: #{seed_forward.3} parent=35 // loop_footer_branch
                %119 = sbr.rel target = $region38
              $region43: #{seed_forward.3} parent=35 // loop_exit
                _
            $region36: #{seed_forward.3} parent=27 // pred_fallthru
              _
          $region28: #{seed_forward.3} parent=23 // pred_fallthru
            _
          %210 = vnop
        $region24: #{seed_forward.3} parent=19 // pred_fallthru
          _
      $region20: #{seed_forward.3} parent=5 // pred_fallthru
        _
      %p211 = scmp.le.s32.totalorder 1, %s8
      %p212 = scmp.lt.s32.totalorder %s8, 3
      %p213 = pnand %p211, %p212
      %p214 = pneg %p213
      // Predicated region
      $region62: #{seed_forward.3} parent=5 // pred_check
        _
      $region63: #{seed_forward.3} parent=5 // pred_check_branch
        %216 = sbr.rel (%p213) target = $region65
      $region64: #{seed_forward.3} parent=5 // pred_region
        %s217 = ssub.s32 %s8, 1
        %s218 = sand.u32 %s42, 1
        %s219 = sand.u32 %s42, 1
        %s220 = smul.addr %s219, 64
        %s221 = scalar_lea.vmem [#allocation2], %s220
        // Predicated region
        $region66: #{seed_forward.3} parent=64 // pred_check
          %p222 = pneg %p55
        $region67: #{seed_forward.3} parent=64 // pred_check_branch
          %224 = sbr.rel (%p222) target = $region69
        $region68: #{seed_forward.3} parent=64 // pred_region
          _
        $region69: #{seed_forward.3} parent=64 // pred_fallthru
          _
        %p225 = pneg %p29
        %p226 = pneg %p26
        %s227 = sand.u32 %s42, 1
        %s228 = sand.u32 %s42, 1
        %s229 = smul.addr %s228, 64
        %s230 = scalar_lea.vmem [#allocation2], %s229
        %p231 = pneg %p55
        %p232 = pneg %p52
        %p233 = pneg %p81
        %p234 = pneg %p78
        %p235 = scmp.lt.s32.totalorder %s13, 1
        %s236 = scalar_select %p235, %s13, 1
        %s237 = smul.addr %s236, 4
        %s238 = scalar_lea.vmem %s2, %s237
        %p239 = scmp.lt.s32.totalorder %s13, 1
        %s240 = scalar_select %p239, %s13, 1
        %s241 = smul.addr %s240, 4
        %s242 = scalar_lea.vmem %s2, %s241
        %v244 = vld [vmem:[%s0] sm:$0x3]
        %v245 = vld [vmem:[%s221] sm:$0xf]
        %v246 = vld [vmem:[%s221 + $0x4] sm:$0xf]
        %v247 = vld [vmem:[%s221 + $0x8] sm:$0xf]
        %v248 = vld [vmem:[%s221 + $0xc] sm:$0xf]
        %v249 = vld [vmem:[%s221 + $0x10] sm:$0xf]
        %v250 = vld [vmem:[%s221 + $0x14] sm:$0xf]
        %v251 = vld [vmem:[%s221 + $0x18] sm:$0xf]
        %v252 = vld [vmem:[%s221 + $0x1c] sm:$0xf]
        %v253 = vld [vmem:[%s221 + $0x20] sm:$0xf]
        %v254 = vld [vmem:[%s221 + $0x24] sm:$0xf]
        %v255 = vld [vmem:[%s221 + $0x28] sm:$0xf]
        %v256 = vld [vmem:[%s221 + $0x2c] sm:$0xf]
        %v257 = vld [vmem:[%s221 + $0x30] sm:$0xf]
        %v258 = vld [vmem:[%s221 + $0x34] sm:$0xf]
        %v259 = vld [vmem:[%s221 + $0x38] sm:$0xf]
        %v260 = vld [vmem:[%s221 + $0x3c] sm:$0xf]
        %v277 = vunpack.c.l.b16 %v245
        %v278 = vunpack.c.l.b16 %v246
        %v279 = vunpack.c.l.b16 %v247
        %v280 = vunpack.c.l.b16 %v248
        %v281 = vunpack.c.l.b16 %v249
        %v282 = vunpack.c.l.b16 %v250
        %v283 = vunpack.c.l.b16 %v251
        %v284 = vunpack.c.l.b16 %v252
        %v285 = vunpack.c.l.b16 %v253
        %v286 = vunpack.c.l.b16 %v254
        %v287 = vunpack.c.l.b16 %v255
        %v288 = vunpack.c.l.b16 %v256
        %v289 = vunpack.c.l.b16 %v257
        %v290 = vunpack.c.l.b16 %v258
        %v291 = vunpack.c.l.b16 %v259
        %v292 = vunpack.c.l.b16 %v260
        %v293 = vpack.c.b16 %v278, %v277
        %v294 = vpack.c.b16 %v280, %v279
        %v295 = vpack.c.b16 %v282, %v281
        %v296 = vpack.c.b16 %v284, %v283
        %v297 = vpack.c.b16 %v286, %v285
        %v298 = vpack.c.b16 %v288, %v287
        %v299 = vpack.c.b16 %v290, %v289
        %v300 = vpack.c.b16 %v292, %v291
        %309 = vmatprep.subr.bf16.mxu0 0
        %310 = vmatpush1.bf16.msra.mxu0 %v293
        %311 = vmatprep.subr.bf16.mxu0 0
        %312 = vmatpush1.bf16.msra.mxu0 %v294
        %313 = vmatprep.subr.bf16.mxu0 0
        %314 = vmatpush1.bf16.msra.mxu0 %v295
        %315 = vmatprep.subr.bf16.mxu0 0
        %316 = vmatpush1.bf16.msra.mxu0 %v296
        %317 = vmatprep.subr.bf16.mxu0 0
        %318 = vmatpush1.bf16.msra.mxu0 %v297
        %319 = vmatprep.subr.bf16.mxu0 0
        %320 = vmatpush1.bf16.msra.mxu0 %v298
        %321 = vmatprep.subr.bf16.mxu0 0
        %322 = vmatpush1.bf16.msra.mxu0 %v299
        %323 = vmatprep.subr.bf16.mxu0 0
        %324 = vmatpush1.bf16.msra.mxu0 %v300
        %325 = vmatprep.subr.bf16.mxu0 0
        %326 = vmatpush1.bf16.msra.mxu0 0
        %327 = vmatprep.subr.bf16.mxu0 0
        %328 = vmatpush1.bf16.msra.mxu0 0
        %329 = vmatprep.subr.bf16.mxu0 0
        %330 = vmatpush1.bf16.msra.mxu0 0
        %331 = vmatprep.subr.bf16.mxu0 0
        %332 = vmatpush1.bf16.msra.mxu0 0
        %333 = vmatprep.subr.bf16.mxu0 0
        %334 = vmatpush1.bf16.msra.mxu0 0
        %335 = vmatprep.subr.bf16.mxu0 0
        %336 = vmatpush1.bf16.msra.mxu0 0
        %337 = vmatprep.subr.bf16.mxu0 0
        %338 = vmatpush1.bf16.msra.mxu0 0
        %339 = vmatprep.subr.bf16.mxu0 0
        %340 = vmatpush1.bf16.msra.mxu0 0
        %341 = vmatprep.mubr.bf16.mxu0 0
        %342 = vmatmul.mubr.bf16.gmra.mrb[0].mxu0 %v244
        %v343 = vpop.f32.mrb[0].mxu0
        %v344 = vadd.f32 0.0, %v343
        %v345 = vpop.f32.mrb[0].mxu0
        %v346 = vpop.f32.mrb[0].mxu0
        %v347 = vpop.f32.mrb[0].mxu0
        %348 = vdwg.mxu0
        %349 = vst [vmem:[%s242] sm:$0xf] %v344
        %p350 = scmp.lt.s32.totalorder %s13, 1
        %s351 = scalar_select %p350, %s13, 1
        %s352 = smul.addr %s351, 4
        %s353 = scalar_lea.vmem %s2, %s352
        // Predicated region
        $region70: #{seed_forward.3} parent=64 // pred_check
          %p354 = pneg %p78
        $region71: #{seed_forward.3} parent=64 // pred_check_branch
          %356 = sbr.rel (%p354) target = $region73
        $region72: #{seed_forward.3} parent=64 // pred_region
          _
        $region73: #{seed_forward.3} parent=64 // pred_fallthru
          _
      $region65: #{seed_forward.3} parent=5 // pred_fallthru
        _
      %p357 = scmp.le.s32.totalorder 2, %s8
      // Predicated region
      $region74: #{seed_forward.3} parent=5 // pred_check
        %p358 = pneg %p357
      $region75: #{seed_forward.3} parent=5 // pred_check_branch
        %360 = sbr.rel (%p358) target = $region77
      $region76: #{seed_forward.3} parent=5 // pred_region
        %s361 = ssub.s32 %s8, 2
        // Predicated region
        $region78: #{seed_forward.3} parent=76 // pred_check
          %p362 = pneg %p84
        $region79: #{seed_forward.3} parent=76 // pred_check_branch
          %364 = sbr.rel (%p362) target = $region81
        $region80: #{seed_forward.3} parent=76 // pred_region
          %p365 = scmp.lt.s32.totalorder %s14, 1
          %s366 = scalar_select %p365, %s14, 1
          %s367 = smul.addr %s366, 4
          %s368 = scalar_lea.vmem %s2, %s367
        $region81: #{seed_forward.3} parent=76 // pred_fallthru
          _
      $region77: #{seed_forward.3} parent=5 // pred_fallthru
        _
    $region6: #{seed_forward.3} parent=1 // loop_footer
      %s12 = sadd.s32 1, %s8
    $region7: #{seed_forward.3} parent=1 // loop_footer_branch
      %7 = sbr.rel target = $region3
    $region8: #{seed_forward.3} parent=1 // loop_exit
      _

// kernel: seed_forward.2
$region0: #{seed_forward.2}
  #allocation0 [shape = 'u32[]', space=smem, size = 0x4, offset = 0x4, fixed_abs, tag = 'smem constant byte address 0x4 - core index']
  #allocation1 [shape = 'u32[144,128]{1,0:T(1,128)}', space=vmem, size = 0x12000, scoped, tag = 'internal scratch']
  #allocation2 [shape = 'f32[2,1024]{1,0:T(2,128)}', space=vmem, size = 0x2000, scoped, tag = 'scratch operand']
  %s0 = inlined_call_operand.vmem [shape: bf16[2,1024], index: 0, kind: input, shape index: {}]
  %s1 = inlined_call_operand.vmem [shape: bf16[1024,1024], index: 1, kind: input, shape index: {}]
  %s2 = inlined_call_operand.vmem [shape: f32[1,1024], index: 2, kind: input, shape index: {}]
  %s3 = inlined_call_operand.vmem [shape: bf16[512,1024], index: 3, kind: input, shape index: {}]
  %s4 = inlined_call_operand.vmem [shape: f32[1,1024], index: 4, kind: input, shape index: {}]
  %s5 = inlined_call_operand.vmem [shape: bf16[1024,128], index: 5, kind: input, shape index: {}]
  %s6 = inlined_call_operand.vmem [shape: f32[1,128], index: 6, kind: input, shape index: {}]
  %s7 = inlined_call_operand.vmem [shape: bf16[512,1024], index: 7, kind: input, shape index: {}]
  %s8 = inlined_call_operand.vmem [shape: f32[1,1024], index: 8, kind: input, shape index: {}]
  %s9 = inlined_call_operand.vmem [shape: bf16[1024,128], index: 9, kind: input, shape index: {}]
  %s10 = inlined_call_operand.vmem [shape: f32[1,128], index: 10, kind: input, shape index: {}]
  %s11 = inlined_call_operand.vmem [shape: bf16[128,1024], index: 11, kind: input, shape index: {}]
  %s12 = inlined_call_operand.vmem [shape: f32[1,1024], index: 12, kind: input, shape index: {}]
  %s13 = inlined_call_operand.vmem [shape: bf16[1024,128], index: 13, kind: input, shape index: {}]
  %s14 = inlined_call_operand.vmem [shape: f32[1,128], index: 14, kind: input, shape index: {}]
  %s15 = inlined_call_operand.vmem [shape: f32[2,128], index: 15, kind: output, shape index: {0}]
  %s16 = inlined_call_operand.vmem [shape: f32[2,128], index: 16, kind: output, shape index: {1}]
  %17 = xla_tuple %s15, %s16
  %s18 = sld [smem:[#allocation0]]
  $region109: #{seed_forward.2} parent=0
    _
  %s20 = ssub.s32 1, %s18
  %s21 = scalar_select 0, %s20, %s18
  loop: start=0, step=1, limit=4
  $region2: #{seed_forward.2} parent=0 // loop_pre_header
    _
  $region3: #{seed_forward.2} parent=0 // loop_header
    %s23 = sphi 0, %s27
    %p24 = scmp.ge.s32.totalorder %s23, 4
    %s30 = sphi 0, %s42
    %s31 = sphi 0, %s38
    %s32 = sphi 0, %s30
    %s33 = sphi 0, %s31
    %s34 = sphi 0, %s32
    %s35 = sphi 0, %s33
    %s47 = sphi 0, %s49
    %s50 = sphi 0, %s47
    %s51 = sphi 0, %s50
    %s67 = sphi 0, %s51
    %s73 = sphi 0, %s75
    %s76 = sphi 0, %s73
    %s77 = sphi 0, %s76
    %s93 = sphi 0, %s77
    %s97 = sphi 0, %s97
    %s99 = sphi 0, %s97
    %s100 = sphi 0, %s99
    %s114 = sphi 0, %s100
    %s118 = sphi 0, %s118
    %s120 = sphi 0, %s118
    %s121 = sphi 0, %s120
    %s135 = sphi 0, %s121
    %s139 = sphi 0, %s139
    %s141 = sphi 0, %s139
    %s142 = sphi 0, %s141
    %s156 = sphi 0, %s142
    %s160 = sphi 0, %s160
    %s162 = sphi 0, %s160
    %s163 = sphi 0, %s162
    %s177 = sphi 0, %s163
    %s181 = sphi 0, %s181
    %s183 = sphi 0, %s181
    %s184 = sphi 0, %s183
    %s198 = sphi 0, %s184
    %s202 = sphi 0, %s202
    %s204 = sphi 0, %s202
    %s205 = sphi 0, %s204
    %s219 = sphi 0, %s205
    %s223 = sphi 0, %s223
    %s225 = sphi 0, %s223
    %s226 = sphi 0, %s225
    %s240 = sphi 0, %s226
    %s244 = sphi 0, %s244
    %s246 = sphi 0, %s244
    %s247 = sphi 0, %s246
    %s261 = sphi 0, %s247
    %s265 = sphi 0, %s265
    %s267 = sphi 0, %s265
    %s268 = sphi 0, %s267
    %s282 = sphi 0, %s268
    %s286 = sphi 0, %s286
    %s288 = sphi 0, %s286
    %s289 = sphi 0, %s288
    %s303 = sphi 0, %s289
    %s307 = sphi 0, %s307
    %s309 = sphi 0, %s307
    %s310 = sphi 0, %s309
    %s324 = sphi 0, %s310
    %s328 = sphi 0, %s328
    %s330 = sphi 0, %s328
    %s331 = sphi 0, %s330
    %s345 = sphi 0, %s331
    %s349 = sphi 0, %s349
    %s351 = sphi 0, %s349
    %s352 = sphi 0, %s351
    %s366 = sphi 0, %s352
    %s372 = sphi 0, %s374
    %s375 = sphi 0, %s372
    %s376 = sphi 0, %s375
    %s392 = sphi 0, %s376
    %s398 = sphi 0, %s400
    %s401 = sphi 0, %s398
    %s402 = sphi 0, %s401
    %s418 = sphi 0, %s402
  $region4: #{seed_forward.2} parent=0 // loop_header_branch
    %26 = sbr.rel (%p24) target = $region8
  $region5: #{seed_forward.2} parent=0 // loop_body
    %s28 = ssub.s32 %s23, 1
    %s29 = ssub.s32 %s23, 2
    %s36 = sadd.s32 1, %s31
    %p37 = scmp.ge.s32.totalorder %s36, 2
    %s38 = scalar_select %p37, 0, %s36
    %s39 = sadd.s32 1, %s30
    %s40 = scalar_select %p37, %s39, %s30
    %p41 = scmp.ge.s32.totalorder %s40, 1
    %s42 = scalar_select %p41, 0, %s40
    %s43 = ssub.s32 %s30, %s42
    %s44 = ssub.s32 %s31, %s38
    %s45 = sor.u32 %s43, %s44
    %p46 = scmp.eq.s32.totalorder %s45, 0
    %s48 = sadd.s32 %s47, 1
    %s49 = scalar_select %p46, %s47, %s48
    %p52 = pneg %p46
    %p53 = scmp.eq.s32.totalorder %s23, 1
    %p54 = por %p52, %p53
    %p55 = scmp.ne.s32.totalorder %s47, %s50
    %p56 = scmp.eq.s32.totalorder %s23, 0
    %p57 = por %p55, %p56
    %p58 = scmp.ne.s32.totalorder %s47, %s50
    %p59 = scmp.eq.s32.totalorder %s28, 1
    %p60 = por %p58, %p59
    %p61 = scmp.ne.s32.totalorder %s50, %s51
    %p62 = scmp.eq.s32.totalorder %s28, 0
    %p63 = por %p61, %p62
    %p64 = scmp.ne.s32.totalorder %s50, %s51
    %p65 = scmp.eq.s32.totalorder %s29, 1
    %p66 = por %p64, %p65
    %p68 = scmp.ne.s32.totalorder %s51, %s67
    %p69 = scmp.eq.s32.totalorder %s29, 0
    %p70 = por %p68, %p69
    %s71 = ssub.s32 %s31, %s38
    %p72 = scmp.eq.s32.totalorder %s71, 0
    %s74 = sadd.s32 %s73, 1
    %s75 = scalar_select %p72, %s73, %s74
    %p78 = pneg %p72
    %p79 = scmp.eq.s32.totalorder %s23, 1
    %p80 = por %p78, %p79
    %p81 = scmp.ne.s32.totalorder %s73, %s76
    %p82 = scmp.eq.s32.totalorder %s23, 0
    %p83 = por %p81, %p82
    %p84 = scmp.ne.s32.totalorder %s73, %s76
    %p85 = scmp.eq.s32.totalorder %s28, 1
    %p86 = por %p84, %p85
    %p87 = scmp.ne.s32.totalorder %s76, %s77
    %p88 = scmp.eq.s32.totalorder %s28, 0
    %p89 = por %p87, %p88
    %p90 = scmp.ne.s32.totalorder %s76, %s77
    %p91 = scmp.eq.s32.totalorder %s29, 1
    %p92 = por %p90, %p91
    %p94 = scmp.ne.s32.totalorder %s77, %s93
    %p95 = scmp.eq.s32.totalorder %s29, 0
    %p96 = por %p94, %p95
    %s98 = sadd.s32 %s97, 1
    %p101 = scmp.eq.s32.totalorder %s23, 1
    %p102 = scmp.ne.s32.totalorder %s97, %s99
    %p103 = scmp.eq.s32.totalorder %s23, 0
    %p104 = por %p102, %p103
    %p105 = scmp.ne.s32.totalorder %s97, %s99
    %p106 = scmp.eq.s32.totalorder %s28, 1
    %p107 = por %p105, %p106
    %p108 = scmp.ne.s32.totalorder %s99, %s100
    %p109 = scmp.eq.s32.totalorder %s28, 0
    %p110 = por %p108, %p109
    %p111 = scmp.ne.s32.totalorder %s99, %s100
    %p112 = scmp.eq.s32.totalorder %s29, 1
    %p113 = por %p111, %p112
    %p115 = scmp.ne.s32.totalorder %s100, %s114
    %p116 = scmp.eq.s32.totalorder %s29, 0
    %p117 = por %p115, %p116
    %s119 = sadd.s32 %s118, 1
    %p122 = scmp.eq.s32.totalorder %s23, 1
    %p123 = scmp.ne.s32.totalorder %s118, %s120
    %p124 = scmp.eq.s32.totalorder %s23, 0
    %p125 = por %p123, %p124
    %p126 = scmp.ne.s32.totalorder %s118, %s120
    %p127 = scmp.eq.s32.totalorder %s28, 1
    %p128 = por %p126, %p127
    %p129 = scmp.ne.s32.totalorder %s120, %s121
    %p130 = scmp.eq.s32.totalorder %s28, 0
    %p131 = por %p129, %p130
    %p132 = scmp.ne.s32.totalorder %s120, %s121
    %p133 = scmp.eq.s32.totalorder %s29, 1
    %p134 = por %p132, %p133
    %p136 = scmp.ne.s32.totalorder %s121, %s135
    %p137 = scmp.eq.s32.totalorder %s29, 0
    %p138 = por %p136, %p137
    %s140 = sadd.s32 %s139, 1
    %p143 = scmp.eq.s32.totalorder %s23, 1
    %p144 = scmp.ne.s32.totalorder %s139, %s141
    %p145 = scmp.eq.s32.totalorder %s23, 0
    %p146 = por %p144, %p145
    %p147 = scmp.ne.s32.totalorder %s139, %s141
    %p148 = scmp.eq.s32.totalorder %s28, 1
    %p149 = por %p147, %p148
    %p150 = scmp.ne.s32.totalorder %s141, %s142
    %p151 = scmp.eq.s32.totalorder %s28, 0
    %p152 = por %p150, %p151
    %p153 = scmp.ne.s32.totalorder %s141, %s142
    %p154 = scmp.eq.s32.totalorder %s29, 1
    %p155 = por %p153, %p154
    %p157 = scmp.ne.s32.totalorder %s142, %s156
    %p158 = scmp.eq.s32.totalorder %s29, 0
    %p159 = por %p157, %p158
    %s161 = sadd.s32 %s160, 1
    %p164 = scmp.eq.s32.totalorder %s23, 1
    %p165 = scmp.ne.s32.totalorder %s160, %s162
    %p166 = scmp.eq.s32.totalorder %s23, 0
    %p167 = por %p165, %p166
    %p168 = scmp.ne.s32.totalorder %s160, %s162
    %p169 = scmp.eq.s32.totalorder %s28, 1
    %p170 = por %p168, %p169
    %p171 = scmp.ne.s32.totalorder %s162, %s163
    %p172 = scmp.eq.s32.totalorder %s28, 0
    %p173 = por %p171, %p172
    %p174 = scmp.ne.s32.totalorder %s162, %s163
    %p175 = scmp.eq.s32.totalorder %s29, 1
    %p176 = por %p174, %p175
    %p178 = scmp.ne.s32.totalorder %s163, %s177
    %p179 = scmp.eq.s32.totalorder %s29, 0
    %p180 = por %p178, %p179
    %s182 = sadd.s32 %s181, 1
    %p185 = scmp.eq.s32.totalorder %s23, 1
    %p186 = scmp.ne.s32.totalorder %s181, %s183
    %p187 = scmp.eq.s32.totalorder %s23, 0
    %p188 = por %p186, %p187
    %p189 = scmp.ne.s32.totalorder %s181, %s183
    %p190 = scmp.eq.s32.totalorder %s28, 1
    %p191 = por %p189, %p190
    %p192 = scmp.ne.s32.totalorder %s183, %s184
    %p193 = scmp.eq.s32.totalorder %s28, 0
    %p194 = por %p192, %p193
    %p195 = scmp.ne.s32.totalorder %s183, %s184
    %p196 = scmp.eq.s32.totalorder %s29, 1
    %p197 = por %p195, %p196
    %p199 = scmp.ne.s32.totalorder %s184, %s198
    %p200 = scmp.eq.s32.totalorder %s29, 0
    %p201 = por %p199, %p200
    %s203 = sadd.s32 %s202, 1
    %p206 = scmp.eq.s32.totalorder %s23, 1
    %p207 = scmp.ne.s32.totalorder %s202, %s204
    %p208 = scmp.eq.s32.totalorder %s23, 0
    %p209 = por %p207, %p208
    %p210 = scmp.ne.s32.totalorder %s202, %s204
    %p211 = scmp.eq.s32.totalorder %s28, 1
    %p212 = por %p210, %p211
    %p213 = scmp.ne.s32.totalorder %s204, %s205
    %p214 = scmp.eq.s32.totalorder %s28, 0
    %p215 = por %p213, %p214
    %p216 = scmp.ne.s32.totalorder %s204, %s205
    %p217 = scmp.eq.s32.totalorder %s29, 1
    %p218 = por %p216, %p217
    %p220 = scmp.ne.s32.totalorder %s205, %s219
    %p221 = scmp.eq.s32.totalorder %s29, 0
    %p222 = por %p220, %p221
    %s224 = sadd.s32 %s223, 1
    %p227 = scmp.eq.s32.totalorder %s23, 1
    %p228 = scmp.ne.s32.totalorder %s223, %s225
    %p229 = scmp.eq.s32.totalorder %s23, 0
    %p230 = por %p228, %p229
    %p231 = scmp.ne.s32.totalorder %s223, %s225
    %p232 = scmp.eq.s32.totalorder %s28, 1
    %p233 = por %p231, %p232
    %p234 = scmp.ne.s32.totalorder %s225, %s226
    %p235 = scmp.eq.s32.totalorder %s28, 0
    %p236 = por %p234, %p235
    %p237 = scmp.ne.s32.totalorder %s225, %s226
    %p238 = scmp.eq.s32.totalorder %s29, 1
    %p239 = por %p237, %p238
    %p241 = scmp.ne.s32.totalorder %s226, %s240
    %p242 = scmp.eq.s32.totalorder %s29, 0
    %p243 = por %p241, %p242
    %s245 = sadd.s32 %s244, 1
    %p248 = scmp.eq.s32.totalorder %s23, 1
    %p249 = scmp.ne.s32.totalorder %s244, %s246
    %p250 = scmp.eq.s32.totalorder %s23, 0
    %p251 = por %p249, %p250
    %p252 = scmp.ne.s32.totalorder %s244, %s246
    %p253 = scmp.eq.s32.totalorder %s28, 1
    %p254 = por %p252, %p253
    %p255 = scmp.ne.s32.totalorder %s246, %s247
    %p256 = scmp.eq.s32.totalorder %s28, 0
    %p257 = por %p255, %p256
    %p258 = scmp.ne.s32.totalorder %s246, %s247
    %p259 = scmp.eq.s32.totalorder %s29, 1
    %p260 = por %p258, %p259
    %p262 = scmp.ne.s32.totalorder %s247, %s261
    %p263 = scmp.eq.s32.totalorder %s29, 0
    %p264 = por %p262, %p263
    %s266 = sadd.s32 %s265, 1
    %p269 = scmp.eq.s32.totalorder %s23, 1
    %p270 = scmp.ne.s32.totalorder %s265, %s267
    %p271 = scmp.eq.s32.totalorder %s23, 0
    %p272 = por %p270, %p271
    %p273 = scmp.ne.s32.totalorder %s265, %s267
    %p274 = scmp.eq.s32.totalorder %s28, 1
    %p275 = por %p273, %p274
    %p276 = scmp.ne.s32.totalorder %s267, %s268
    %p277 = scmp.eq.s32.totalorder %s28, 0
    %p278 = por %p276, %p277
    %p279 = scmp.ne.s32.totalorder %s267, %s268
    %p280 = scmp.eq.s32.totalorder %s29, 1
    %p281 = por %p279, %p280
    %p283 = scmp.ne.s32.totalorder %s268, %s282
    %p284 = scmp.eq.s32.totalorder %s29, 0
    %p285 = por %p283, %p284
    %s287 = sadd.s32 %s286, 1
    %p290 = scmp.eq.s32.totalorder %s23, 1
    %p291 = scmp.ne.s32.totalorder %s286, %s288
    %p292 = scmp.eq.s32.totalorder %s23, 0
    %p293 = por %p291, %p292
    %p294 = scmp.ne.s32.totalorder %s286, %s288
    %p295 = scmp.eq.s32.totalorder %s28, 1
    %p296 = por %p294, %p295
    %p297 = scmp.ne.s32.totalorder %s288, %s289
    %p298 = scmp.eq.s32.totalorder %s28, 0
    %p299 = por %p297, %p298
    %p300 = scmp.ne.s32.totalorder %s288, %s289
    %p301 = scmp.eq.s32.totalorder %s29, 1
    %p302 = por %p300, %p301
    %p304 = scmp.ne.s32.totalorder %s289, %s303
    %p305 = scmp.eq.s32.totalorder %s29, 0
    %p306 = por %p304, %p305
    %s308 = sadd.s32 %s307, 1
    %p311 = scmp.eq.s32.totalorder %s23, 1
    %p312 = scmp.ne.s32.totalorder %s307, %s309
    %p313 = scmp.eq.s32.totalorder %s23, 0
    %p314 = por %p312, %p313
    %p315 = scmp.ne.s32.totalorder %s307, %s309
    %p316 = scmp.eq.s32.totalorder %s28, 1
    %p317 = por %p315, %p316
    %p318 = scmp.ne.s32.totalorder %s309, %s310
    %p319 = scmp.eq.s32.totalorder %s28, 0
    %p320 = por %p318, %p319
    %p321 = scmp.ne.s32.totalorder %s309, %s310
    %p322 = scmp.eq.s32.totalorder %s29, 1
    %p323 = por %p321, %p322
    %p325 = scmp.ne.s32.totalorder %s310, %s324
    %p326 = scmp.eq.s32.totalorder %s29, 0
    %p327 = por %p325, %p326
    %s329 = sadd.s32 %s328, 1
    %p332 = scmp.eq.s32.totalorder %s23, 1
    %p333 = scmp.ne.s32.totalorder %s328, %s330
    %p334 = scmp.eq.s32.totalorder %s23, 0
    %p335 = por %p333, %p334
    %p336 = scmp.ne.s32.totalorder %s328, %s330
    %p337 = scmp.eq.s32.totalorder %s28, 1
    %p338 = por %p336, %p337
    %p339 = scmp.ne.s32.totalorder %s330, %s331
    %p340 = scmp.eq.s32.totalorder %s28, 0
    %p341 = por %p339, %p340
    %p342 = scmp.ne.s32.totalorder %s330, %s331
    %p343 = scmp.eq.s32.totalorder %s29, 1
    %p344 = por %p342, %p343
    %p346 = scmp.ne.s32.totalorder %s331, %s345
    %p347 = scmp.eq.s32.totalorder %s29, 0
    %p348 = por %p346, %p347
    %s350 = sadd.s32 %s349, 1
    %p353 = scmp.eq.s32.totalorder %s23, 1
    %p354 = scmp.ne.s32.totalorder %s349, %s351
    %p355 = scmp.eq.s32.totalorder %s23, 0
    %p356 = por %p354, %p355
    %p357 = scmp.ne.s32.totalorder %s349, %s351
    %p358 = scmp.eq.s32.totalorder %s28, 1
    %p359 = por %p357, %p358
    %p360 = scmp.ne.s32.totalorder %s351, %s352
    %p361 = scmp.eq.s32.totalorder %s28, 0
    %p362 = por %p360, %p361
    %p363 = scmp.ne.s32.totalorder %s351, %s352
    %p364 = scmp.eq.s32.totalorder %s29, 1
    %p365 = por %p363, %p364
    %p367 = scmp.ne.s32.totalorder %s352, %s366
    %p368 = scmp.eq.s32.totalorder %s29, 0
    %p369 = por %p367, %p368
    %s370 = ssub.s32 %s30, %s42
    %p371 = scmp.eq.s32.totalorder %s370, 0
    %s373 = sadd.s32 %s372, 1
    %s374 = scalar_select %p371, %s372, %s373
    %p377 = pneg %p371
    %p378 = scmp.eq.s32.totalorder %s23, 1
    %p379 = por %p377, %p378
    %p380 = scmp.ne.s32.totalorder %s372, %s375
    %p381 = scmp.eq.s32.totalorder %s23, 0
    %p382 = por %p380, %p381
    %p383 = scmp.ne.s32.totalorder %s372, %s375
    %p384 = scmp.eq.s32.totalorder %s28, 1
    %p385 = por %p383, %p384
    %p386 = scmp.ne.s32.totalorder %s375, %s376
    %p387 = scmp.eq.s32.totalorder %s28, 0
    %p388 = por %p386, %p387
    %p389 = scmp.ne.s32.totalorder %s375, %s376
    %p390 = scmp.eq.s32.totalorder %s29, 1
    %p391 = por %p389, %p390
    %p393 = scmp.ne.s32.totalorder %s376, %s392
    %p394 = scmp.eq.s32.totalorder %s29, 0
    %p395 = por %p393, %p394
    %s396 = ssub.s32 %s30, %s42
    %p397 = scmp.eq.s32.totalorder %s396, 0
    %s399 = sadd.s32 %s398, 1
    %s400 = scalar_select %p397, %s398, %s399
    %p403 = pneg %p397
    %p404 = scmp.eq.s32.totalorder %s23, 1
    %p405 = por %p403, %p404
    %p406 = scmp.ne.s32.totalorder %s398, %s401
    %p407 = scmp.eq.s32.totalorder %s23, 0
    %p408 = por %p406, %p407
    %p409 = scmp.ne.s32.totalorder %s398, %s401
    %p410 = scmp.eq.s32.totalorder %s28, 1
    %p411 = por %p409, %p410
    %p412 = scmp.ne.s32.totalorder %s401, %s402
    %p413 = scmp.eq.s32.totalorder %s28, 0
    %p414 = por %p412, %p413
    %p415 = scmp.ne.s32.totalorder %s401, %s402
    %p416 = scmp.eq.s32.totalorder %s29, 1
    %p417 = por %p415, %p416
    %p419 = scmp.ne.s32.totalorder %s402, %s418
    %p420 = scmp.eq.s32.totalorder %s29, 0
    %p421 = por %p419, %p420
    %p422 = scmp.le.s32.totalorder 1, %s23
    %p423 = scmp.lt.s32.totalorder %s23, 3
    %p424 = pnand %p422, %p423
    %p425 = pneg %p424
    // Predicated region
    $region9: #{seed_forward.2} parent=5 // pred_check
      _
    $region10: #{seed_forward.2} parent=5 // pred_check_branch
      %427 = sbr.rel (%p424) target = $region12
    $region11: #{seed_forward.2} parent=5 // pred_region
      %s428 = ssub.s32 %s23, 1
      // Predicated region
      $region13: #{seed_forward.2} parent=11 // pred_check
        %p429 = pneg %p110
      $region14: #{seed_forward.2} parent=11 // pred_check_branch
        %431 = sbr.rel (%p429) target = $region16
      $region15: #{seed_forward.2} parent=11 // pred_region
        _
      $region16: #{seed_forward.2} parent=11 // pred_fallthru
        _
      // Predicated region
      $region17: #{seed_forward.2} parent=11 // pred_check
        %p432 = pneg %p131
      $region18: #{seed_forward.2} parent=11 // pred_check_branch
        %434 = sbr.rel (%p432) target = $region20
      $region19: #{seed_forward.2} parent=11 // pred_region
        _
      $region20: #{seed_forward.2} parent=11 // pred_fallthru
        _
      // Predicated region
      $region21: #{seed_forward.2} parent=11 // pred_check
        %p435 = pneg %p152
      $region22: #{seed_forward.2} parent=11 // pred_check_branch
        %437 = sbr.rel (%p435) target = $region24
      $region23: #{seed_forward.2} parent=11 // pred_region
        _
      $region24: #{seed_forward.2} parent=11 // pred_fallthru
        _
      // Predicated region
      $region25: #{seed_forward.2} parent=11 // pred_check
        %p438 = pneg %p173
      $region26: #{seed_forward.2} parent=11 // pred_check_branch
        %440 = sbr.rel (%p438) target = $region28
      $region27: #{seed_forward.2} parent=11 // pred_region
        _
      $region28: #{seed_forward.2} parent=11 // pred_fallthru
        _
      // Predicated region
      $region29: #{seed_forward.2} parent=11 // pred_check
        %p441 = pneg %p194
      $region30: #{seed_forward.2} parent=11 // pred_check_branch
        %443 = sbr.rel (%p441) target = $region32
      $region31: #{seed_forward.2} parent=11 // pred_region
        _
      $region32: #{seed_forward.2} parent=11 // pred_fallthru
        _
      // Predicated region
      $region33: #{seed_forward.2} parent=11 // pred_check
        %p444 = pneg %p215
      $region34: #{seed_forward.2} parent=11 // pred_check_branch
        %446 = sbr.rel (%p444) target = $region36
      $region35: #{seed_forward.2} parent=11 // pred_region
        _
      $region36: #{seed_forward.2} parent=11 // pred_fallthru
        _
      // Predicated region
      $region37: #{seed_forward.2} parent=11 // pred_check
        %p447 = pneg %p236
      $region38: #{seed_forward.2} parent=11 // pred_check_branch
        %449 = sbr.rel (%p447) target = $region40
      $region39: #{seed_forward.2} parent=11 // pred_region
        _
      $region40: #{seed_forward.2} parent=11 // pred_fallthru
        _
      // Predicated region
      $region41: #{seed_forward.2} parent=11 // pred_check
        %p450 = pneg %p257
      $region42: #{seed_forward.2} parent=11 // pred_check_branch
        %452 = sbr.rel (%p450) target = $region44
      $region43: #{seed_forward.2} parent=11 // pred_region
        _
      $region44: #{seed_forward.2} parent=11 // pred_fallthru
        _
      // Predicated region
      $region45: #{seed_forward.2} parent=11 // pred_check
        %p453 = pneg %p278
      $region46: #{seed_forward.2} parent=11 // pred_check_branch
        %455 = sbr.rel (%p453) target = $region48
      $region47: #{seed_forward.2} parent=11 // pred_region
        _
      $region48: #{seed_forward.2} parent=11 // pred_fallthru
        _
      // Predicated region
      $region49: #{seed_forward.2} parent=11 // pred_check
        %p456 = pneg %p299
      $region50: #{seed_forward.2} parent=11 // pred_check_branch
        %458 = sbr.rel (%p456) target = $region52
      $region51: #{seed_forward.2} parent=11 // pred_region
        _
      $region52: #{seed_forward.2} parent=11 // pred_fallthru
        _
      // Predicated region
      $region53: #{seed_forward.2} parent=11 // pred_check
        %p459 = pneg %p320
      $region54: #{seed_forward.2} parent=11 // pred_check_branch
        %461 = sbr.rel (%p459) target = $region56
      $region55: #{seed_forward.2} parent=11 // pred_region
        _
      $region56: #{seed_forward.2} parent=11 // pred_fallthru
        _
      // Predicated region
      $region57: #{seed_forward.2} parent=11 // pred_check
        %p462 = pneg %p341
      $region58: #{seed_forward.2} parent=11 // pred_check_branch
        %464 = sbr.rel (%p462) target = $region60
      $region59: #{seed_forward.2} parent=11 // pred_region
        _
      $region60: #{seed_forward.2} parent=11 // pred_fallthru
        _
      // Predicated region
      $region61: #{seed_forward.2} parent=11 // pred_check
        %p465 = pneg %p362
      $region62: #{seed_forward.2} parent=11 // pred_check_branch
        %467 = sbr.rel (%p465) target = $region64
      $region63: #{seed_forward.2} parent=11 // pred_region
        _
      $region64: #{seed_forward.2} parent=11 // pred_fallthru
        _
    $region12: #{seed_forward.2} parent=5 // pred_fallthru
      _
    %p468 = scmp.lt.s32.totalorder %s23, 2
    // Predicated region
    $region65: #{seed_forward.2} parent=5 // pred_check
      %p469 = pneg %p468
    $region66: #{seed_forward.2} parent=5 // pred_check_branch
      %471 = sbr.rel (%p469) target = $region68
    $region67: #{seed_forward.2} parent=5 // pred_region
      // Predicated region
      $region69: #{seed_forward.2} parent=67 // pred_check
        %p472 = pneg %p57
      $region70: #{seed_forward.2} parent=67 // pred_check_branch
        %474 = sbr.rel (%p472) target = $region72
      $region71: #{seed_forward.2} parent=67 // pred_region
        %s475 = smul.u32 4, %s31
        %p476 = scmp.lt.s32.totalorder %s30, 0
        %s477 = scalar_select %p476, %s30, 0
        %p478 = scmp.lt.s32.totalorder %s475, 7
        %s479 = scalar_select %p478, %s475, 7
        %s480 = smul.addr %s477, 8
        %s481 = sadd.s32 %s479, %s480
        %s482 = scalar_lea.vmem %s0, %s481
        %s483 = smul.u32 4, %s31
      $region72: #{seed_forward.2} parent=67 // pred_fallthru
        _
      // Predicated region
      $region73: #{seed_forward.2} parent=67 // pred_check
        %p484 = pneg %p83
      $region74: #{seed_forward.2} parent=67 // pred_check_branch
        %486 = sbr.rel (%p484) target = $region76
      $region75: #{seed_forward.2} parent=67 // pred_region
        %s487 = smul.u32 64, %s31
        %p488 = scmp.lt.s32.totalorder %s487, 127
        %s489 = scalar_select %p488, %s487, 127
        %s490 = smul.addr %s489, 8
        %s491 = smul.addr %s490, 4
        %s492 = scalar_lea.vmem %s1, %s491
        %s493 = smul.u32 64, %s31
      $region76: #{seed_forward.2} parent=67 // pred_fallthru
        _
    $region68: #{seed_forward.2} parent=5 // pred_fallthru
      _
    %p494 = scmp.le.s32.totalorder 1, %s23
    %p495 = scmp.lt.s32.totalorder %s23, 3
    %p496 = pnand %p494, %p495
    %p497 = pneg %p496
    // Predicated region
    $region77: #{seed_forward.2} parent=5 // pred_check
      _
    $region78: #{seed_forward.2} parent=5 // pred_check_branch
      %499 = sbr.rel (%p496) target = $region80
    $region79: #{seed_forward.2} parent=5 // pred_region
      %s500 = ssub.s32 %s23, 1
      %s501 = smul.u32 4, %s33
      %p502 = scmp.lt.s32.totalorder %s32, 0
      %s503 = scalar_select %p502, %s32, 0
      %p504 = scmp.lt.s32.totalorder %s501, 7
      %s505 = scalar_select %p504, %s501, 7
      %s506 = smul.addr %s503, 8
      %s507 = sadd.s32 %s505, %s506
      %s508 = scalar_lea.vmem %s0, %s507
      %p509 = pneg %p63
      %p510 = pneg %p60
      %s511 = smul.u32 64, %s33
      %p512 = scmp.lt.s32.totalorder %s511, 127
      %s513 = scalar_select %p512, %s511, 127
      %s514 = smul.addr %s513, 8
      %s515 = smul.addr %s514, 4
      %s516 = scalar_lea.vmem %s1, %s515
      %p517 = pneg %p89
      %p518 = pneg %p86
      %p519 = pneg %p110
      %p520 = pneg %p107
      %p521 = pneg %p131
      %p522 = pneg %p128
      %p523 = pneg %p152
      %p524 = pneg %p149
      %p525 = pneg %p173
      %p526 = pneg %p170
      %p527 = pneg %p194
      %p528 = pneg %p191
      %p529 = pneg %p215
      %p530 = pneg %p212
      %p531 = pneg %p236
      %p532 = pneg %p233
      %p533 = pneg %p257
      %p534 = pneg %p254
      %p535 = pneg %p278
      %p536 = pneg %p275
      %p537 = pneg %p299
      %p538 = pneg %p296
      %p539 = pneg %p320
      %p540 = pneg %p317
      %p541 = pneg %p341
      %p542 = pneg %p338
      %p543 = pneg %p362
      %p544 = pneg %p359
      %p545 = pneg %p388
      %p546 = pneg %p385
      %p547 = scmp.lt.s32.totalorder %s32, 0
      %s548 = scalar_select %p547, %s32, 0
      %s549 = smul.addr %s548, 2
      %s550 = scalar_lea.vmem %s15, %s549
      %p551 = pneg %p414
      %p552 = pneg %p411
      %p553 = scmp.lt.s32.totalorder %s32, 0
      %s554 = scalar_select %p553, %s32, 0
      %s555 = smul.addr %s554, 2
      %s556 = scalar_lea.vmem %s16, %s555
      %s557 = smul.u32 4, %s33
      %p558 = scmp.lt.s32.totalorder %s32, 0
      %s559 = scalar_select %p558, %s32, 0
      %p560 = scmp.lt.s32.totalorder %s557, 7
      %s561 = scalar_select %p560, %s557, 7
      %s562 = smul.addr %s559, 8
      %s563 = sadd.s32 %s561, %s562
      %s564 = scalar_lea.vmem %s0, %s563
      %s565 = smul.u32 4, %s33
      %s566 = smul.u32 64, %s33
      %p567 = scmp.lt.s32.totalorder %s566, 127
      %s568 = scalar_select %p567, %s566, 127
      %s569 = smul.addr %s568, 8
      %s570 = smul.addr %s569, 4
      %s571 = scalar_lea.vmem %s1, %s570
      %s572 = smul.u32 64, %s33
      %p573 = scmp.lt.s32.totalorder %s32, 0
      %s574 = scalar_select %p573, %s32, 0
      %s575 = smul.addr %s574, 2
      %s576 = scalar_lea.vmem %s15, %s575
      %p577 = scmp.lt.s32.totalorder %s32, 0
      %s578 = scalar_select %p577, %s32, 0
      %s579 = smul.addr %s578, 2
      %s580 = scalar_lea.vmem %s16, %s579
      %p582 = scmp.eq.s32.totalorder %s33, 0
      // Predicated region
      $region81: #{seed_forward.2} parent=79 // pred_check
        %p583 = pneg %p582
      $region82: #{seed_forward.2} parent=79 // pred_check_branch
        %585 = sbr.rel (%p583) target = $region84
      $region83: #{seed_forward.2} parent=79 // pred_region
        %586 = vst [vmem:[#allocation2] sm:$0xff] 0.0
        %587 = vst [vmem:[#allocation2 + $0x8] sm:$0xff] 0.0
      $region84: #{seed_forward.2} parent=79 // pred_fallthru
        _
      %v588 = vld [vmem:[#allocation2] sm:$0xff]
      %v589 = vld [vmem:[#allocation2 + $0x8] sm:$0xff]
      %v590 = vld [vmem:[%s564] sm:$0xf]
      %v591 = vld [vmem:[%s571] sm:$0xff]
      %v592 = vld [vmem:[%s571 + $0x8] sm:$0xff]
      %v593 = vld [vmem:[%s571 + $0x10] sm:$0xff]
      %v594 = vld [vmem:[%s571 + $0x18] sm:$0xff]
      %v595 = vld [vmem:[%s571 + $0x20] sm:$0xff]
      %v596 = vld [vmem:[%s571 + $0x28] sm:$0xff]
      %v597 = vld [vmem:[%s571 + $0x30] sm:$0xff]
      %v598 = vld [vmem:[%s571 + $0x38] sm:$0xff]
      %v599 = vld [vmem:[%s571 + $0x40] sm:$0xff]
      %v600 = vld [vmem:[%s571 + $0x48] sm:$0xff]
      %v601 = vld [vmem:[%s571 + $0x50] sm:$0xff]
      %v602 = vld [vmem:[%s571 + $0x58] sm:$0xff]
      %v603 = vld [vmem:[%s571 + $0x60] sm:$0xff]
      %v604 = vld [vmem:[%s571 + $0x68] sm:$0xff]
      %v605 = vld [vmem:[%s571 + $0x70] sm:$0xff]
      %v606 = vld [vmem:[%s571 + $0x78] sm:$0xff]
      %v607 = vld [vmem:[%s571 + $0x80] sm:$0xff]
      %v608 = vld [vmem:[%s571 + $0x88] sm:$0xff]
      %v609 = vld [vmem:[%s571 + $0x90] sm:$0xff]
      %v610 = vld [vmem:[%s571 + $0x98] sm:$0xff]
      %v611 = vld [vmem:[%s571 + $0xa0] sm:$0xff]
      %v612 = vld [vmem:[%s571 + $0xa8] sm:$0xff]
      %v613 = vld [vmem:[%s571 + $0xb0] sm:$0xff]
      %v614 = vld [vmem:[%s571 + $0xb8] sm:$0xff]
      %v615 = vld [vmem:[%s571 + $0xc0] sm:$0xff]
      %v616 = vld [vmem:[%s571 + $0xc8] sm:$0xff]
      %v617 = vld [vmem:[%s571 + $0xd0] sm:$0xff]
      %v618 = vld [vmem:[%s571 + $0xd8] sm:$0xff]
      %v619 = vld [vmem:[%s571 + $0xe0] sm:$0xff]
      %v620 = vld [vmem:[%s571 + $0xe8] sm:$0xff]
      %v621 = vld [vmem:[%s571 + $0xf0] sm:$0xff]
      %v622 = vld [vmem:[%s571 + $0xf8] sm:$0xff]
      %v623 = vld [vmem:[%s571 + $0x100] sm:$0xff]
      %v624 = vld [vmem:[%s571 + $0x108] sm:$0xff]
      %v625 = vld [vmem:[%s571 + $0x110] sm:$0xff]
      %v626 = vld [vmem:[%s571 + $0x118] sm:$0xff]
      %v627 = vld [vmem:[%s571 + $0x120] sm:$0xff]
      %v628 = vld [vmem:[%s571 + $0x128] sm:$0xff]
      %v629 = vld [vmem:[%s571 + $0x130] sm:$0xff]
      %v630 = vld [vmem:[%s571 + $0x138] sm:$0xff]
      %v631 = vld [vmem:[%s571 + $0x140] sm:$0xff]
      %v632 = vld [vmem:[%s571 + $0x148] sm:$0xff]
      %v633 = vld [vmem:[%s571 + $0x150] sm:$0xff]
      %v634 = vld [vmem:[%s571 + $0x158] sm:$0xff]
      %v635 = vld [vmem:[%s571 + $0x160] sm:$0xff]
      %v636 = vld [vmem:[%s571 + $0x168] sm:$0xff]
      %v637 = vld [vmem:[%s571 + $0x170] sm:$0xff]
      %v638 = vld [vmem:[%s571 + $0x178] sm:$0xff]
      %v639 = vld [vmem:[%s571 + $0x180] sm:$0xff]
      %v640 = vld [vmem:[%s571 + $0x188] sm:$0xff]
      %v641 = vld [vmem:[%s571 + $0x190] sm:$0xff]
      %v642 = vld [vmem:[%s571 + $0x198] sm:$0xff]
      %v643 = vld [vmem:[%s571 + $0x1a0] sm:$0xff]
      %v644 = vld [vmem:[%s571 + $0x1a8] sm:$0xff]
      %v645 = vld [vmem:[%s571 + $0x1b0] sm:$0xff]
      %v646 = vld [vmem:[%s571 + $0x1b8] sm:$0xff]
      %v647 = vld [vmem:[%s571 + $0x1c0] sm:$0xff]
      %v648 = vld [vmem:[%s571 + $0x1c8] sm:$0xff]
      %v649 = vld [vmem:[%s571 + $0x1d0] sm:$0xff]
      %v650 = vld [vmem:[%s571 + $0x1d8] sm:$0xff]
      %v651 = vld [vmem:[%s571 + $0x1e0] sm:$0xff]
      %v652 = vld [vmem:[%s571 + $0x1e8] sm:$0xff]
      %v653 = vld [vmem:[%s571 + $0x1f0] sm:$0xff]
      %v654 = vld [vmem:[%s571 + $0x1f8] sm:$0xff]
      %v655 = vld [vmem:[%s571 + $0x200] sm:$0xff]
      %v656 = vld [vmem:[%s571 + $0x208] sm:$0xff]
      %v657 = vld [vmem:[%s571 + $0x210] sm:$0xff]
      %v658 = vld [vmem:[%s571 + $0x218] sm:$0xff]
      %v659 = vld [vmem:[%s571 + $0x220] sm:$0xff]
      %v660 = vld [vmem:[%s571 + $0x228] sm:$0xff]
      %v661 = vld [vmem:[%s571 + $0x230] sm:$0xff]
      %v662 = vld [vmem:[%s571 + $0x238] sm:$0xff]
      %v663 = vld [vmem:[%s571 + $0x240] sm:$0xff]
      %v664 = vld [vmem:[%s571 + $0x248] sm:$0xff]
      %v665 = vld [vmem:[%s571 + $0x250] sm:$0xff]
      %v666 = vld [vmem:[%s571 + $0x258] sm:$0xff]
      %v667 = vld [vmem:[%s571 + $0x260] sm:$0xff]
      %v668 = vld [vmem:[%s571 + $0x268] sm:$0xff]
      %v669 = vld [vmem:[%s571 + $0x270] sm:$0xff]
      %v670 = vld [vmem:[%s571 + $0x278] sm:$0xff]
      %v671 = vld [vmem:[%s571 + $0x280] sm:$0xff]
      %v672 = vld [vmem:[%s571 + $0x288] sm:$0xff]
      %v673 = vld [vmem:[%s571 + $0x290] sm:$0xff]
      %v674 = vld [vmem:[%s571 + $0x298] sm:$0xff]
      %v675 = vld [vmem:[%s571 + $0x2a0] sm:$0xff]
      %v676 = vld [vmem:[%s571 + $0x2a8] sm:$0xff]
      %v677 = vld [vmem:[%s571 + $0x2b0] sm:$0xff]
      %v678 = vld [vmem:[%s571 + $0x2b8] sm:$0xff]
      %v679 = vld [vmem:[%s571 + $0x2c0] sm:$0xff]
      %v680 = vld [vmem:[%s571 + $0x2c8] sm:$0xff]
      %v681 = vld [vmem:[%s571 + $0x2d0] sm:$0xff]
      %v682 = vld [vmem:[%s571 + $0x2d8] sm:$0xff]
      %v683 = vld [vmem:[%s571 + $0x2e0] sm:$0xff]
      %v684 = vld [vmem:[%s571 + $0x2e8] sm:$0xff]
      %v685 = vld [vmem:[%s571 + $0x2f0] sm:$0xff]
      %v686 = vld [vmem:[%s571 + $0x2f8] sm:$0xff]
      %v687 = vld [vmem:[%s571 + $0x300] sm:$0xff]
      %v688 = vld [vmem:[%s571 + $0x308] sm:$0xff]
      %v689 = vld [vmem:[%s571 + $0x310] sm:$0xff]
      %v690 = vld [vmem:[%s571 + $0x318] sm:$0xff]
      %v691 = vld [vmem:[%s571 + $0x320] sm:$0xff]
      %v692 = vld [vmem:[%s571 + $0x328] sm:$0xff]
      %v693 = vld [vmem:[%s571 + $0x330] sm:$0xff]
      %v694 = vld [vmem:[%s571 + $0x338] sm:$0xff]
      %v695 = vld [vmem:[%s571 + $0x340] sm:$0xff]
      %v696 = vld [vmem:[%s571 + $0x348] sm:$0xff]
      %v697 = vld [vmem:[%s571 + $0x350] sm:$0xff]
      %v698 = vld [vmem:[%s571 + $0x358] sm:$0xff]
      %v699 = vld [vmem:[%s571 + $0x360] sm:$0xff]
      %v700 = vld [vmem:[%s571 + $0x368] sm:$0xff]
      %v701 = vld [vmem:[%s571 + $0x370] sm:$0xff]
      %v702 = vld [vmem:[%s571 + $0x378] sm:$0xff]
      %v703 = vld [vmem:[%s571 + $0x380] sm:$0xff]
      %v704 = vld [vmem:[%s571 + $0x388] sm:$0xff]
      %v705 = vld [vmem:[%s571 + $0x390] sm:$0xff]
      %v706 = vld [vmem:[%s571 + $0x398] sm:$0xff]
      %v707 = vld [vmem:[%s571 + $0x3a0] sm:$0xff]
      %v708 = vld [vmem:[%s571 + $0x3a8] sm:$0xff]
      %v709 = vld [vmem:[%s571 + $0x3b0] sm:$0xff]
      %v710 = vld [vmem:[%s571 + $0x3b8] sm:$0xff]
      %v711 = vld [vmem:[%s571 + $0x3c0] sm:$0xff]
      %v712 = vld [vmem:[%s571 + $0x3c8] sm:$0xff]
      %v713 = vld [vmem:[%s571 + $0x3d0] sm:$0xff]
      %v714 = vld [vmem:[%s571 + $0x3d8] sm:$0xff]
      %v715 = vld [vmem:[%s571 + $0x3e0] sm:$0xff]
      %v716 = vld [vmem:[%s571 + $0x3e8] sm:$0xff]
      %v717 = vld [vmem:[%s571 + $0x3f0] sm:$0xff]
      %v718 = vld [vmem:[%s571 + $0x3f8] sm:$0xff]
      %v719 = vld [vmem:[%s571 + $0x400] sm:$0xff]
      %v720 = vld [vmem:[%s571 + $0x408] sm:$0xff]
      %v721 = vld [vmem:[%s571 + $0x410] sm:$0xff]
      %v722 = vld [vmem:[%s571 + $0x418] sm:$0xff]
      %v723 = vld [vmem:[%s571 + $0x420] sm:$0xff]
      %v724 = vld [vmem:[%s571 + $0x428] sm:$0xff]
      %v725 = vld [vmem:[%s571 + $0x430] sm:$0xff]
      %v726 = vld [vmem:[%s571 + $0x438] sm:$0xff]
      %v727 = vld [vmem:[%s571 + $0x440] sm:$0xff]
      %v728 = vld [vmem:[%s571 + $0x448] sm:$0xff]
      %v729 = vld [vmem:[%s571 + $0x450] sm:$0xff]
      %v730 = vld [vmem:[%s571 + $0x458] sm:$0xff]
      %v731 = vld [vmem:[%s571 + $0x460] sm:$0xff]
      %v732 = vld [vmem:[%s571 + $0x468] sm:$0xff]
      %v733 = vld [vmem:[%s571 + $0x470] sm:$0xff]
      %v734 = vld [vmem:[%s571 + $0x478] sm:$0xff]
      %v735 = vld [vmem:[%s571 + $0x480] sm:$0xff]
      %v736 = vld [vmem:[%s571 + $0x488] sm:$0xff]
      %v737 = vld [vmem:[%s571 + $0x490] sm:$0xff]
      %v738 = vld [vmem:[%s571 + $0x498] sm:$0xff]
      %v739 = vld [vmem:[%s571 + $0x4a0] sm:$0xff]
      %v740 = vld [vmem:[%s571 + $0x4a8] sm:$0xff]
      %v741 = vld [vmem:[%s571 + $0x4b0] sm:$0xff]
      %v742 = vld [vmem:[%s571 + $0x4b8] sm:$0xff]
      %v743 = vld [vmem:[%s571 + $0x4c0] sm:$0xff]
      %v744 = vld [vmem:[%s571 + $0x4c8] sm:$0xff]
      %v745 = vld [vmem:[%s571 + $0x4d0] sm:$0xff]
      %v746 = vld [vmem:[%s571 + $0x4d8] sm:$0xff]
      %v747 = vld [vmem:[%s571 + $0x4e0] sm:$0xff]
      %v748 = vld [vmem:[%s571 + $0x4e8] sm:$0xff]
      %v749 = vld [vmem:[%s571 + $0x4f0] sm:$0xff]
      %v750 = vld [vmem:[%s571 + $0x4f8] sm:$0xff]
      %v751 = vld [vmem:[%s571 + $0x500] sm:$0xff]
      %v752 = vld [vmem:[%s571 + $0x508] sm:$0xff]
      %v753 = vld [vmem:[%s571 + $0x510] sm:$0xff]
      %v754 = vld [vmem:[%s571 + $0x518] sm:$0xff]
      %v755 = vld [vmem:[%s571 + $0x520] sm:$0xff]
      %v756 = vld [vmem:[%s571 + $0x528] sm:$0xff]
      %v757 = vld [vmem:[%s571 + $0x530] sm:$0xff]
      %v758 = vld [vmem:[%s571 + $0x538] sm:$0xff]
      %v759 = vld [vmem:[%s571 + $0x540] sm:$0xff]
      %v760 = vld [vmem:[%s571 + $0x548] sm:$0xff]
      %v761 = vld [vmem:[%s571 + $0x550] sm:$0xff]
      %v762 = vld [vmem:[%s571 + $0x558] sm:$0xff]
      %v763 = vld [vmem:[%s571 + $0x560] sm:$0xff]
      %v764 = vld [vmem:[%s571 + $0x568] sm:$0xff]
      %v765 = vld [vmem:[%s571 + $0x570] sm:$0xff]
      %v766 = vld [vmem:[%s571 + $0x578] sm:$0xff]
      %v767 = vld [vmem:[%s571 + $0x580] sm:$0xff]
      %v768 = vld [vmem:[%s571 + $0x588] sm:$0xff]
      %v769 = vld [vmem:[%s571 + $0x590] sm:$0xff]
      %v770 = vld [vmem:[%s571 + $0x598] sm:$0xff]
      %v771 = vld [vmem:[%s571 + $0x5a0] sm:$0xff]
      %v772 = vld [vmem:[%s571 + $0x5a8] sm:$0xff]
      %v773 = vld [vmem:[%s571 + $0x5b0] sm:$0xff]
      %v774 = vld [vmem:[%s571 + $0x5b8] sm:$0xff]
      %v775 = vld [vmem:[%s571 + $0x5c0] sm:$0xff]
      %v776 = vld [vmem:[%s571 + $0x5c8] sm:$0xff]
      %v777 = vld [vmem:[%s571 + $0x5d0] sm:$0xff]
      %v778 = vld [vmem:[%s571 + $0x5d8] sm:$0xff]
      %v779 = vld [vmem:[%s571 + $0x5e0] sm:$0xff]
      %v780 = vld [vmem:[%s571 + $0x5e8] sm:$0xff]
      %v781 = vld [vmem:[%s571 + $0x5f0] sm:$0xff]
      %v782 = vld [vmem:[%s571 + $0x5f8] sm:$0xff]
      %v783 = vld [vmem:[%s571 + $0x600] sm:$0xff]
      %v784 = vld [vmem:[%s571 + $0x608] sm:$0xff]
      %v785 = vld [vmem:[%s571 + $0x610] sm:$0xff]
      %v786 = vld [vmem:[%s571 + $0x618] sm:$0xff]
      %v787 = vld [vmem:[%s571 + $0x620] sm:$0xff]
      %v788 = vld [vmem:[%s571 + $0x628] sm:$0xff]
      %v789 = vld [vmem:[%s571 + $0x630] sm:$0xff]
      %v790 = vld [vmem:[%s571 + $0x638] sm:$0xff]
      %v791 = vld [vmem:[%s571 + $0x640] sm:$0xff]
      %v792 = vld [vmem:[%s571 + $0x648] sm:$0xff]
      %v793 = vld [vmem:[%s571 + $0x650] sm:$0xff]
      %v794 = vld [vmem:[%s571 + $0x658] sm:$0xff]
      %v795 = vld [vmem:[%s571 + $0x660] sm:$0xff]
      %v796 = vld [vmem:[%s571 + $0x668] sm:$0xff]
      %v797 = vld [vmem:[%s571 + $0x670] sm:$0xff]
      %v798 = vld [vmem:[%s571 + $0x678] sm:$0xff]
      %v799 = vld [vmem:[%s571 + $0x680] sm:$0xff]
      %v800 = vld [vmem:[%s571 + $0x688] sm:$0xff]
      %v801 = vld [vmem:[%s571 + $0x690] sm:$0xff]
      %v802 = vld [vmem:[%s571 + $0x698] sm:$0xff]
      %v803 = vld [vmem:[%s571 + $0x6a0] sm:$0xff]
      %v804 = vld [vmem:[%s571 + $0x6a8] sm:$0xff]
      %v805 = vld [vmem:[%s571 + $0x6b0] sm:$0xff]
      %v806 = vld [vmem:[%s571 + $0x6b8] sm:$0xff]
      %v807 = vld [vmem:[%s571 + $0x6c0] sm:$0xff]
      %v808 = vld [vmem:[%s571 + $0x6c8] sm:$0xff]
      %v809 = vld [vmem:[%s571 + $0x6d0] sm:$0xff]
      %v810 = vld [vmem:[%s571 + $0x6d8] sm:$0xff]
      %v811 = vld [vmem:[%s571 + $0x6e0] sm:$0xff]
      %v812 = vld [vmem:[%s571 + $0x6e8] sm:$0xff]
      %v813 = vld [vmem:[%s571 + $0x6f0] sm:$0xff]
      %v814 = vld [vmem:[%s571 + $0x6f8] sm:$0xff]
      %v815 = vld [vmem:[%s571 + $0x700] sm:$0xff]
      %v816 = vld [vmem:[%s571 + $0x708] sm:$0xff]
      %v817 = vld [vmem:[%s571 + $0x710] sm:$0xff]
      %v818 = vld [vmem:[%s571 + $0x718] sm:$0xff]
      %v819 = vld [vmem:[%s571 + $0x720] sm:$0xff]
      %v820 = vld [vmem:[%s571 + $0x728] sm:$0xff]
      %v821 = vld [vmem:[%s571 + $0x730] sm:$0xff]
      %v822 = vld [vmem:[%s571 + $0x738] sm:$0xff]
      %v823 = vld [vmem:[%s571 + $0x740] sm:$0xff]
      %v824 = vld [vmem:[%s571 + $0x748] sm:$0xff]
      %v825 = vld [vmem:[%s571 + $0x750] sm:$0xff]
      %v826 = vld [vmem:[%s571 + $0x758] sm:$0xff]
      %v827 = vld [vmem:[%s571 + $0x760] sm:$0xff]
      %v828 = vld [vmem:[%s571 + $0x768] sm:$0xff]
      %v829 = vld [vmem:[%s571 + $0x770] sm:$0xff]
      %v830 = vld [vmem:[%s571 + $0x778] sm:$0xff]
      %v831 = vld [vmem:[%s571 + $0x780] sm:$0xff]
      %v832 = vld [vmem:[%s571 + $0x788] sm:$0xff]
      %v833 = vld [vmem:[%s571 + $0x790] sm:$0xff]
      %v834 = vld [vmem:[%s571 + $0x798] sm:$0xff]
      %v835 = vld [vmem:[%s571 + $0x7a0] sm:$0xff]
      %v836 = vld [vmem:[%s571 + $0x7a8] sm:$0xff]
      %v837 = vld [vmem:[%s571 + $0x7b0] sm:$0xff]
      %v838 = vld [vmem:[%s571 + $0x7b8] sm:$0xff]
      %v839 = vld [vmem:[%s571 + $0x7c0] sm:$0xff]
      %v840 = vld [vmem:[%s571 + $0x7c8] sm:$0xff]
      %v841 = vld [vmem:[%s571 + $0x7d0] sm:$0xff]
      %v842 = vld [vmem:[%s571 + $0x7d8] sm:$0xff]
      %v843 = vld [vmem:[%s571 + $0x7e0] sm:$0xff]
      %v844 = vld [vmem:[%s571 + $0x7e8] sm:$0xff]
      %v845 = vld [vmem:[%s571 + $0x7f0] sm:$0xff]
      %v846 = vld [vmem:[%s571 + $0x7f8] sm:$0xff]
      %v849 = vunpack.c.l.s4 1966171168
      %v850 = vunpack.c.0.s8 %v849
      %v851 = vlaneseq
      %v852 = vshrl.u32 %v851, 7
      %v853 = vsub.s32 %v850, %v852
      %v854 = vrot.slane %v590, %v853
      %v855 = vcombine.high %v854, %v854
      %v857 = vunpack.c.l.s4 1966171168
      %v858 = vunpack.c.0.s8 %v857
      %v859 = vlaneseq
      %v860 = vshrl.u32 %v859, 7
      %v861 = vsub.s32 %v858, %v860
      %v862 = vrot.slane %v854, %v861
      %v864 = vunpack.c.l.s4 1966171168
      %v865 = vunpack.c.0.s8 %v864
      %v866 = vlaneseq
      %v867 = vshrl.u32 %v866, 7
      %v868 = vsub.s32 %v865, %v867
      %v869 = vrot.slane %v855, %v868
      %v870 = vcombine.high %v862, %v862
      %v871 = vcombine.high %v869, %v869
      %v1132 = vunpack.c.l.b16 %v591
      %v1133 = vunpack.c.h.b16 %v591
      %v1134 = vunpack.c.l.b16 %v592
      %v1135 = vunpack.c.h.b16 %v592
      %v1136 = vunpack.c.l.b16 %v593
      %v1137 = vunpack.c.h.b16 %v593
      %v1138 = vunpack.c.l.b16 %v594
      %v1139 = vunpack.c.h.b16 %v594
      %v1140 = vunpack.c.l.b16 %v595
      %v1141 = vunpack.c.h.b16 %v595
      %v1142 = vunpack.c.l.b16 %v596
      %v1143 = vunpack.c.h.b16 %v596
      %v1144 = vunpack.c.l.b16 %v597
      %v1145 = vunpack.c.h.b16 %v597
      %v1146 = vunpack.c.l.b16 %v598
      %v1147 = vunpack.c.h.b16 %v598
      %v1148 = vunpack.c.l.b16 %v599
      %v1149 = vunpack.c.h.b16 %v599
      %v1150 = vunpack.c.l.b16 %v600
      %v1151 = vunpack.c.h.b16 %v600
      %v1152 = vunpack.c.l.b16 %v601
      %v1153 = vunpack.c.h.b16 %v601
      %v1154 = vunpack.c.l.b16 %v602
      %v1155 = vunpack.c.h.b16 %v602
      %v1156 = vunpack.c.l.b16 %v603
      %v1157 = vunpack.c.h.b16 %v603
      %v1158 = vunpack.c.l.b16 %v604
      %v1159 = vunpack.c.h.b16 %v604
      %v1160 = vunpack.c.l.b16 %v605
      %v1161 = vunpack.c.h.b16 %v605
      %v1162 = vunpack.c.l.b16 %v606
      %v1163 = vunpack.c.h.b16 %v606
      %v1164 = vunpack.c.l.b16 %v607
      %v1165 = vunpack.c.h.b16 %v607
      %v1166 = vunpack.c.l.b16 %v608
      %v1167 = vunpack.c.h.b16 %v608
      %v1168 = vunpack.c.l.b16 %v609
      %v1169 = vunpack.c.h.b16 %v609
      %v1170 = vunpack.c.l.b16 %v610
      %v1171 = vunpack.c.h.b16 %v610
      %v1172 = vunpack.c.l.b16 %v611
      %v1173 = vunpack.c.h.b16 %v611
      %v1174 = vunpack.c.l.b16 %v612
      %v1175 = vunpack.c.h.b16 %v612
      %v1176 = vunpack.c.l.b16 %v613
      %v1177 = vunpack.c.h.b16 %v613
      %v1178 = vunpack.c.l.b16 %v614
      %v1179 = vunpack.c.h.b16 %v614
      %v1180 = vunpack.c.l.b16 %v615
      %v1181 = vunpack.c.h.b16 %v615
      %v1182 = vunpack.c.l.b16 %v616
      %v1183 = vunpack.c.h.b16 %v616
      %v1184 = vunpack.c.l.b16 %v617
      %v1185 = vunpack.c.h.b16 %v617
      %v1186 = vunpack.c.l.b16 %v618
      %v1187 = vunpack.c.h.b16 %v618
      %v1188 = vunpack.c.l.b16 %v619
      %v1189 = vunpack.c.h.b16 %v619
      %v1190 = vunpack.c.l.b16 %v620
      %v1191 = vunpack.c.h.b16 %v620
      %v1192 = vunpack.c.l.b16 %v621
      %v1193 = vunpack.c.h.b16 %v621
      %v1194 = vunpack.c.l.b16 %v622
      %v1195 = vunpack.c.h.b16 %v622
      %v1196 = vunpack.c.l.b16 %v623
      %v1197 = vunpack.c.h.b16 %v623
      %v1198 = vunpack.c.l.b16 %v624
      %v1199 = vunpack.c.h.b16 %v624
      %v1200 = vunpack.c.l.b16 %v625
      %v1201 = vunpack.c.h.b16 %v625
      %v1202 = vunpack.c.l.b16 %v626
      %v1203 = vunpack.c.h.b16 %v626
      %v1204 = vunpack.c.l.b16 %v627
      %v1205 = vunpack.c.h.b16 %v627
      %v1206 = vunpack.c.l.b16 %v628
      %v1207 = vunpack.c.h.b16 %v628
      %v1208 = vunpack.c.l.b16 %v629
      %v1209 = vunpack.c.h.b16 %v629
      %v1210 = vunpack.c.l.b16 %v630
      %v1211 = vunpack.c.h.b16 %v630
      %v1212 = vunpack.c.l.b16 %v631
      %v1213 = vunpack.c.h.b16 %v631
      %v1214 = vunpack.c.l.b16 %v632
      %v1215 = vunpack.c.h.b16 %v632
      %v1216 = vunpack.c.l.b16 %v633
      %v1217 = vunpack.c.h.b16 %v633
      %v1218 = vunpack.c.l.b16 %v634
      %v1219 = vunpack.c.h.b16 %v634
      %v1220 = vunpack.c.l.b16 %v635
      %v1221 = vunpack.c.h.b16 %v635
      %v1222 = vunpack.c.l.b16 %v636
      %v1223 = vunpack.c.h.b16 %v636
      %v1224 = vunpack.c.l.b16 %v637
      %v1225 = vunpack.c.h.b16 %v637
      %v1226 = vunpack.c.l.b16 %v638
      %v1227 = vunpack.c.h.b16 %v638
      %v1228 = vunpack.c.l.b16 %v639
      %v1229 = vunpack.c.h.b16 %v639
      %v1230 = vunpack.c.l.b16 %v640
      %v1231 = vunpack.c.h.b16 %v640
      %v1232 = vunpack.c.l.b16 %v641
      %v1233 = vunpack.c.h.b16 %v641
      %v1234 = vunpack.c.l.b16 %v642
      %v1235 = vunpack.c.h.b16 %v642
      %v1236 = vunpack.c.l.b16 %v643
      %v1237 = vunpack.c.h.b16 %v643
      %v1238 = vunpack.c.l.b16 %v644
      %v1239 = vunpack.c.h.b16 %v644
      %v1240 = vunpack.c.l.b16 %v645
      %v1241 = vunpack.c.h.b16 %v645
      %v1242 = vunpack.c.l.b16 %v646
      %v1243 = vunpack.c.h.b16 %v646
      %v1244 = vunpack.c.l.b16 %v647
      %v1245 = vunpack.c.h.b16 %v647
      %v1246 = vunpack.c.l.b16 %v648
      %v1247 = vunpack.c.h.b16 %v648
      %v1248 = vunpack.c.l.b16 %v649
      %v1249 = vunpack.c.h.b16 %v649
      %v1250 = vunpack.c.l.b16 %v650
      %v1251 = vunpack.c.h.b16 %v650
      %v1252 = vunpack.c.l.b16 %v651
      %v1253 = vunpack.c.h.b16 %v651
      %v1254 = vunpack.c.l.b16 %v652
      %v1255 = vunpack.c.h.b16 %v652
      %v1256 = vunpack.c.l.b16 %v653
      %v1257 = vunpack.c.h.b16 %v653
      %v1258 = vunpack.c.l.b16 %v654
      %v1259 = vunpack.c.h.b16 %v654
      %v1260 = vunpack.c.l.b16 %v655
      %v1261 = vunpack.c.h.b16 %v655
      %v1262 = vunpack.c.l.b16 %v656
      %v1263 = vunpack.c.h.b16 %v656
      %v1264 = vunpack.c.l.b16 %v657
      %v1265 = vunpack.c.h.b16 %v657
      %v1266 = vunpack.c.l.b16 %v658
      %v1267 = vunpack.c.h.b16 %v658
      %v1268 = vunpack.c.l.b16 %v659
      %v1269 = vunpack.c.h.b16 %v659
      %v1270 = vunpack.c.l.b16 %v660
      %v1271 = vunpack.c.h.b16 %v660
      %v1272 = vunpack.c.l.b16 %v661
      %v1273 = vunpack.c.h.b16 %v661
      %v1274 = vunpack.c.l.b16 %v662
      %v1275 = vunpack.c.h.b16 %v662
      %v1276 = vunpack.c.l.b16 %v663
      %v1277 = vunpack.c.h.b16 %v663
      %v1278 = vunpack.c.l.b16 %v664
      %v1279 = vunpack.c.h.b16 %v664
      %v1280 = vunpack.c.l.b16 %v665
      %v1281 = vunpack.c.h.b16 %v665
      %v1282 = vunpack.c.l.b16 %v666
      %v1283 = vunpack.c.h.b16 %v666
      %v1284 = vunpack.c.l.b16 %v667
      %v1285 = vunpack.c.h.b16 %v667
      %v1286 = vunpack.c.l.b16 %v668
      %v1287 = vunpack.c.h.b16 %v668
      %v1288 = vunpack.c.l.b16 %v669
      %v1289 = vunpack.c.h.b16 %v669
      %v1290 = vunpack.c.l.b16 %v670
      %v1291 = vunpack.c.h.b16 %v670
      %v1292 = vunpack.c.l.b16 %v671
      %v1293 = vunpack.c.h.b16 %v671
      %v1294 = vunpack.c.l.b16 %v672
      %v1295 = vunpack.c.h.b16 %v672
      %v1296 = vunpack.c.l.b16 %v673
      %v1297 = vunpack.c.h.b16 %v673
      %v1298 = vunpack.c.l.b16 %v674
      %v1299 = vunpack.c.h.b16 %v674
      %v1300 = vunpack.c.l.b16 %v675
      %v1301 = vunpack.c.h.b16 %v675
      %v1302 = vunpack.c.l.b16 %v676
      %v1303 = vunpack.c.h.b16 %v676
      %v1304 = vunpack.c.l.b16 %v677
      %v1305 = vunpack.c.h.b16 %v677
      %v1306 = vunpack.c.l.b16 %v678
      %v1307 = vunpack.c.h.b16 %v678
      %v1308 = vunpack.c.l.b16 %v679
      %v1309 = vunpack.c.h.b16 %v679
      %v1310 = vunpack.c.l.b16 %v680
      %v1311 = vunpack.c.h.b16 %v680
      %v1312 = vunpack.c.l.b16 %v681
      %v1313 = vunpack.c.h.b16 %v681
      %v1314 = vunpack.c.l.b16 %v682
      %v1315 = vunpack.c.h.b16 %v682
      %v1316 = vunpack.c.l.b16 %v683
      %v1317 = vunpack.c.h.b16 %v683
      %v1318 = vunpack.c.l.b16 %v684
      %v1319 = vunpack.c.h.b16 %v684
      %v1320 = vunpack.c.l.b16 %v685
      %v1321 = vunpack.c.h.b16 %v685
      %v1322 = vunpack.c.l.b16 %v686
      %v1323 = vunpack.c.h.b16 %v686
      %v1324 = vunpack.c.l.b16 %v687
      %v1325 = vunpack.c.h.b16 %v687
      %v1326 = vunpack.c.l.b16 %v688
      %v1327 = vunpack.c.h.b16 %v688
      %v1328 = vunpack.c.l.b16 %v689
      %v1329 = vunpack.c.h.b16 %v689
      %v1330 = vunpack.c.l.b16 %v690
      %v1331 = vunpack.c.h.b16 %v690
      %v1332 = vunpack.c.l.b16 %v691
      %v1333 = vunpack.c.h.b16 %v691
      %v1334 = vunpack.c.l.b16 %v692
      %v1335 = vunpack.c.h.b16 %v692
      %v1336 = vunpack.c.l.b16 %v693
      %v1337 = vunpack.c.h.b16 %v693
      %v1338 = vunpack.c.l.b16 %v694
      %v1339 = vunpack.c.h.b16 %v694
      %v1340 = vunpack.c.l.b16 %v695
      %v1341 = vunpack.c.h.b16 %v695
      %v1342 = vunpack.c.l.b16 %v696
      %v1343 = vunpack.c.h.b16 %v696
      %v1344 = vunpack.c.l.b16 %v697
      %v1345 = vunpack.c.h.b16 %v697
      %v1346 = vunpack.c.l.b16 %v698
      %v1347 = vunpack.c.h.b16 %v698
      %v1348 = vunpack.c.l.b16 %v699
      %v1349 = vunpack.c.h.b16 %v699
      %v1350 = vunpack.c.l.b16 %v700
      %v1351 = vunpack.c.h.b16 %v700
      %v1352 = vunpack.c.l.b16 %v701
      %v1353 = vunpack.c.h.b16 %v701
      %v1354 = vunpack.c.l.b16 %v702
      %v1355 = vunpack.c.h.b16 %v702
      %v1356 = vunpack.c.l.b16 %v703
      %v1357 = vunpack.c.h.b16 %v703
      %v1358 = vunpack.c.l.b16 %v704
      %v1359 = vunpack.c.h.b16 %v704
      %v1360 = vunpack.c.l.b16 %v705
      %v1361 = vunpack.c.h.b16 %v705
      %v1362 = vunpack.c.l.b16 %v706
      %v1363 = vunpack.c.h.b16 %v706
      %v1364 = vunpack.c.l.b16 %v707
      %v1365 = vunpack.c.h.b16 %v707
      %v1366 = vunpack.c.l.b16 %v708
      %v1367 = vunpack.c.h.b16 %v708
      %v1368 = vunpack.c.l.b16 %v709
      %v1369 = vunpack.c.h.b16 %v709
      %v1370 = vunpack.c.l.b16 %v710
      %v1371 = vunpack.c.h.b16 %v710
      %v1372 = vunpack.c.l.b16 %v711
      %v1373 = vunpack.c.h.b16 %v711
      %v1374 = vunpack.c.l.b16 %v712
      %v1375 = vunpack.c.h.b16 %v712
      %v1376 = vunpack.c.l.b16 %v713
      %v1377 = vunpack.c.h.b16 %v713
      %v1378 = vunpack.c.l.b16 %v714
      %v1379 = vunpack.c.h.b16 %v714
      %v1380 = vunpack.c.l.b16 %v715
      %v1381 = vunpack.c.h.b16 %v715
      %v1382 = vunpack.c.l.b16 %v716
      %v1383 = vunpack.c.h.b16 %v716
      %v1384 = vunpack.c.l.b16 %v717
      %v1385 = vunpack.c.h.b16 %v717
      %v1386 = vunpack.c.l.b16 %v718
      %v1387 = vunpack.c.h.b16 %v718
      %v1388 = vunpack.c.l.b16 %v719
      %v1389 = vunpack.c.h.b16 %v719
      %v1390 = vunpack.c.l.b16 %v720
      %v1391 = vunpack.c.h.b16 %v720
      %v1392 = vunpack.c.l.b16 %v721
      %v1393 = vunpack.c.h.b16 %v721
      %v1394 = vunpack.c.l.b16 %v722
      %v1395 = vunpack.c.h.b16 %v722
      %v1396 = vunpack.c.l.b16 %v723
      %v1397 = vunpack.c.h.b16 %v723
      %v1398 = vunpack.c.l.b16 %v724
      %v1399 = vunpack.c.h.b16 %v724
      %v1400 = vunpack.c.l.b16 %v725
      %v1401 = vunpack.c.h.b16 %v725
      %v1402 = vunpack.c.l.b16 %v726
      %v1403 = vunpack.c.h.b16 %v726
      %v1404 = vunpack.c.l.b16 %v727
      %v1405 = vunpack.c.h.b16 %v727
      %v1406 = vunpack.c.l.b16 %v728
      %v1407 = vunpack.c.h.b16 %v728
      %v1408 = vunpack.c.l.b16 %v729
      %v1409 = vunpack.c.h.b16 %v729
      %v1410 = vunpack.c.l.b16 %v730
      %v1411 = vunpack.c.h.b16 %v730
      %v1412 = vunpack.c.l.b16 %v731
      %v1413 = vunpack.c.h.b16 %v731
      %v1414 = vunpack.c.l.b16 %v732
      %v1415 = vunpack.c.h.b16 %v732
      %v1416 = vunpack.c.l.b16 %v733
      %v1417 = vunpack.c.h.b16 %v733
      %v1418 = vunpack.c.l.b16 %v734
      %v1419 = vunpack.c.h.b16 %v734
      %v1420 = vunpack.c.l.b16 %v735
      %v1421 = vunpack.c.h.b16 %v735
      %v1422 = vunpack.c.l.b16 %v736
      %v1423 = vunpack.c.h.b16 %v736
      %v1424 = vunpack.c.l.b16 %v737
      %v1425 = vunpack.c.h.b16 %v737
      %v1426 = vunpack.c.l.b16 %v738
      %v1427 = vunpack.c.h.b16 %v738
      %v1428 = vunpack.c.l.b16 %v739
      %v1429 = vunpack.c.h.b16 %v739
      %v1430 = vunpack.c.l.b16 %v740
      %v1431 = vunpack.c.h.b16 %v740
      %v1432 = vunpack.c.l.b16 %v741
      %v1433 = vunpack.c.h.b16 %v741
      %v1434 = vunpack.c.l.b16 %v742
      %v1435 = vunpack.c.h.b16 %v742
      %v1436 = vunpack.c.l.b16 %v743
      %v1437 = vunpack.c.h.b16 %v743
      %v1438 = vunpack.c.l.b16 %v744
      %v1439 = vunpack.c.h.b16 %v744
      %v1440 = vunpack.c.l.b16 %v745
      %v1441 = vunpack.c.h.b16 %v745
      %v1442 = vunpack.c.l.b16 %v746
      %v1443 = vunpack.c.h.b16 %v746
      %v1444 = vunpack.c.l.b16 %v747
      %v1445 = vunpack.c.h.b16 %v747
      %v1446 = vunpack.c.l.b16 %v748
      %v1447 = vunpack.c.h.b16 %v748
      %v1448 = vunpack.c.l.b16 %v749
      %v1449 = vunpack.c.h.b16 %v749
      %v1450 = vunpack.c.l.b16 %v750
      %v1451 = vunpack.c.h.b16 %v750
      %v1452 = vunpack.c.l.b16 %v751
      %v1453 = vunpack.c.h.b16 %v751
      %v1454 = vunpack.c.l.b16 %v752
      %v1455 = vunpack.c.h.b16 %v752
      %v1456 = vunpack.c.l.b16 %v753
      %v1457 = vunpack.c.h.b16 %v753
      %v1458 = vunpack.c.l.b16 %v754
      %v1459 = vunpack.c.h.b16 %v754
      %v1460 = vunpack.c.l.b16 %v755
      %v1461 = vunpack.c.h.b16 %v755
      %v1462 = vunpack.c.l.b16 %v756
      %v1463 = vunpack.c.h.b16 %v756
      %v1464 = vunpack.c.l.b16 %v757
      %v1465 = vunpack.c.h.b16 %v757
      %v1466 = vunpack.c.l.b16 %v758
      %v1467 = vunpack.c.h.b16 %v758
      %v1468 = vunpack.c.l.b16 %v759
      %v1469 = vunpack.c.h.b16 %v759
      %v1470 = vunpack.c.l.b16 %v760
      %v1471 = vunpack.c.h.b16 %v760
      %v1472 = vunpack.c.l.b16 %v761
      %v1473 = vunpack.c.h.b16 %v761
      %v1474 = vunpack.c.l.b16 %v762
      %v1475 = vunpack.c.h.b16 %v762
      %v1476 = vunpack.c.l.b16 %v763
      %v1477 = vunpack.c.h.b16 %v763
      %v1478 = vunpack.c.l.b16 %v764
      %v1479 = vunpack.c.h.b16 %v764
      %v1480 = vunpack.c.l.b16 %v765
      %v1481 = vunpack.c.h.b16 %v765
      %v1482 = vunpack.c.l.b16 %v766
      %v1483 = vunpack.c.h.b16 %v766
      %v1484 = vunpack.c.l.b16 %v767
      %v1485 = vunpack.c.h.b16 %v767
      %v1486 = vunpack.c.l.b16 %v768
      %v1487 = vunpack.c.h.b16 %v768
      %v1488 = vunpack.c.l.b16 %v769
      %v1489 = vunpack.c.h.b16 %v769
      %v1490 = vunpack.c.l.b16 %v770
      %v1491 = vunpack.c.h.b16 %v770
      %v1492 = vunpack.c.l.b16 %v771
      %v1493 = vunpack.c.h.b16 %v771
      %v1494 = vunpack.c.l.b16 %v772
      %v1495 = vunpack.c.h.b16 %v772
      %v1496 = vunpack.c.l.b16 %v773
      %v1497 = vunpack.c.h.b16 %v773
      %v1498 = vunpack.c.l.b16 %v774
      %v1499 = vunpack.c.h.b16 %v774
      %v1500 = vunpack.c.l.b16 %v775
      %v1501 = vunpack.c.h.b16 %v775
      %v1502 = vunpack.c.l.b16 %v776
      %v1503 = vunpack.c.h.b16 %v776
      %v1504 = vunpack.c.l.b16 %v777
      %v1505 = vunpack.c.h.b16 %v777
      %v1506 = vunpack.c.l.b16 %v778
      %v1507 = vunpack.c.h.b16 %v778
      %v1508 = vunpack.c.l.b16 %v779
      %v1509 = vunpack.c.h.b16 %v779
      %v1510 = vunpack.c.l.b16 %v780
      %v1511 = vunpack.c.h.b16 %v780
      %v1512 = vunpack.c.l.b16 %v781
      %v1513 = vunpack.c.h.b16 %v781
      %v1514 = vunpack.c.l.b16 %v782
      %v1515 = vunpack.c.h.b16 %v782
      %v1516 = vunpack.c.l.b16 %v783
      %v1517 = vunpack.c.h.b16 %v783
      %v1518 = vunpack.c.l.b16 %v784
      %v1519 = vunpack.c.h.b16 %v784
      %v1520 = vunpack.c.l.b16 %v785
      %v1521 = vunpack.c.h.b16 %v785
      %v1522 = vunpack.c.l.b16 %v786
      %v1523 = vunpack.c.h.b16 %v786
      %v1524 = vunpack.c.l.b16 %v787
      %v1525 = vunpack.c.h.b16 %v787
      %v1526 = vunpack.c.l.b16 %v788
      %v1527 = vunpack.c.h.b16 %v788
      %v1528 = vunpack.c.l.b16 %v789
      %v1529 = vunpack.c.h.b16 %v789
      %v1530 = vunpack.c.l.b16 %v790
      %v1531 = vunpack.c.h.b16 %v790
      %v1532 = vunpack.c.l.b16 %v791
      %v1533 = vunpack.c.h.b16 %v791
      %v1534 = vunpack.c.l.b16 %v792
      %v1535 = vunpack.c.h.b16 %v792
      %v1536 = vunpack.c.l.b16 %v793
      %v1537 = vunpack.c.h.b16 %v793
      %v1538 = vunpack.c.l.b16 %v794
      %v1539 = vunpack.c.h.b16 %v794
      %v1540 = vunpack.c.l.b16 %v795
      %v1541 = vunpack.c.h.b16 %v795
      %v1542 = vunpack.c.l.b16 %v796
      %v1543 = vunpack.c.h.b16 %v796
      %v1544 = vunpack.c.l.b16 %v797
      %v1545 = vunpack.c.h.b16 %v797
      %v1546 = vunpack.c.l.b16 %v798
      %v1547 = vunpack.c.h.b16 %v798
      %v1548 = vunpack.c.l.b16 %v799
      %v1549 = vunpack.c.h.b16 %v799
      %v1550 = vunpack.c.l.b16 %v800
      %v1551 = vunpack.c.h.b16 %v800
      %v1552 = vunpack.c.l.b16 %v801
      %v1553 = vunpack.c.h.b16 %v801
      %v1554 = vunpack.c.l.b16 %v802
      %v1555 = vunpack.c.h.b16 %v802
      %v1556 = vunpack.c.l.b16 %v803
      %v1557 = vunpack.c.h.b16 %v803
      %v1558 = vunpack.c.l.b16 %v804
      %v1559 = vunpack.c.h.b16 %v804
      %v1560 = vunpack.c.l.b16 %v805
      %v1561 = vunpack.c.h.b16 %v805
      %v1562 = vunpack.c.l.b16 %v806
      %v1563 = vunpack.c.h.b16 %v806
      %v1564 = vunpack.c.l.b16 %v807
      %v1565 = vunpack.c.h.b16 %v807
      %v1566 = vunpack.c.l.b16 %v808
      %v1567 = vunpack.c.h.b16 %v808
      %v1568 = vunpack.c.l.b16 %v809
      %v1569 = vunpack.c.h.b16 %v809
      %v1570 = vunpack.c.l.b16 %v810
      %v1571 = vunpack.c.h.b16 %v810
      %v1572 = vunpack.c.l.b16 %v811
      %v1573 = vunpack.c.h.b16 %v811
      %v1574 = vunpack.c.l.b16 %v812
      %v1575 = vunpack.c.h.b16 %v812
      %v1576 = vunpack.c.l.b16 %v813
      %v1577 = vunpack.c.h.b16 %v813
      %v1578 = vunpack.c.l.b16 %v814
      %v1579 = vunpack.c.h.b16 %v814
      %v1580 = vunpack.c.l.b16 %v815
      %v1581 = vunpack.c.h.b16 %v815
      %v1582 = vunpack.c.l.b16 %v816
      %v1583 = vunpack.c.h.b16 %v816
      %v1584 = vunpack.c.l.b16 %v817
      %v1585 = vunpack.c.h.b16 %v817
      %v1586 = vunpack.c.l.b16 %v818
      %v1587 = vunpack.c.h.b16 %v818
      %v1588 = vunpack.c.l.b16 %v819
      %v1589 = vunpack.c.h.b16 %v819
      %v1590 = vunpack.c.l.b16 %v820
      %v1591 = vunpack.c.h.b16 %v820
      %v1592 = vunpack.c.l.b16 %v821
      %v1593 = vunpack.c.h.b16 %v821
      %v1594 = vunpack.c.l.b16 %v822
      %v1595 = vunpack.c.h.b16 %v822
      %v1596 = vunpack.c.l.b16 %v823
      %v1597 = vunpack.c.h.b16 %v823
      %v1598 = vunpack.c.l.b16 %v824
      %v1599 = vunpack.c.h.b16 %v824
      %v1600 = vunpack.c.l.b16 %v825
      %v1601 = vunpack.c.h.b16 %v825
      %v1602 = vunpack.c.l.b16 %v826
      %v1603 = vunpack.c.h.b16 %v826
      %v1604 = vunpack.c.l.b16 %v827
      %v1605 = vunpack.c.h.b16 %v827
      %v1606 = vunpack.c.l.b16 %v828
      %v1607 = vunpack.c.h.b16 %v828
      %v1608 = vunpack.c.l.b16 %v829
      %v1609 = vunpack.c.h.b16 %v829
      %v1610 = vunpack.c.l.b16 %v830
      %v1611 = vunpack.c.h.b16 %v830
      %v1612 = vunpack.c.l.b16 %v831
      %v1613 = vunpack.c.h.b16 %v831
      %v1614 = vunpack.c.l.b16 %v832
      %v1615 = vunpack.c.h.b16 %v832
      %v1616 = vunpack.c.l.b16 %v833
      %v1617 = vunpack.c.h.b16 %v833
      %v1618 = vunpack.c.l.b16 %v834
      %v1619 = vunpack.c.h.b16 %v834
      %v1620 = vunpack.c.l.b16 %v835
      %v1621 = vunpack.c.h.b16 %v835
      %v1622 = vunpack.c.l.b16 %v836
      %v1623 = vunpack.c.h.b16 %v836
      %v1624 = vunpack.c.l.b16 %v837
      %v1625 = vunpack.c.h.b16 %v837
      %v1626 = vunpack.c.l.b16 %v838
      %v1627 = vunpack.c.h.b16 %v838
      %v1628 = vunpack.c.l.b16 %v839
      %v1629 = vunpack.c.h.b16 %v839
      %v1630 = vunpack.c.l.b16 %v840
      %v1631 = vunpack.c.h.b16 %v840
      %v1632 = vunpack.c.l.b16 %v841
      %v1633 = vunpack.c.h.b16 %v841
      %v1634 = vunpack.c.l.b16 %v842
      %v1635 = vunpack.c.h.b16 %v842
      %v1636 = vunpack.c.l.b16 %v843
      %v1637 = vunpack.c.h.b16 %v843
      %v1638 = vunpack.c.l.b16 %v844
      %v1639 = vunpack.c.h.b16 %v844
      %v1640 = vunpack.c.l.b16 %v845
      %v1641 = vunpack.c.h.b16 %v845
      %v1642 = vunpack.c.l.b16 %v846
      %v1643 = vunpack.c.h.b16 %v846
      %v1644 = vpack.c.b16 %v1140, %v1132
      %v1645 = vpack.c.b16 %v1141, %v1133
      %v1646 = vpack.c.b16 %v1142, %v1134
      %v1647 = vpack.c.b16 %v1143, %v1135
      %v1648 = vpack.c.b16 %v1144, %v1136
      %v1649 = vpack.c.b16 %v1145, %v1137
      %v1650 = vpack.c.b16 %v1146, %v1138
      %v1651 = vpack.c.b16 %v1147, %v1139
      %v1652 = vpack.c.b16 %v1156, %v1148
      %v1653 = vpack.c.b16 %v1157, %v1149
      %v1654 = vpack.c.b16 %v1158, %v1150
      %v1655 = vpack.c.b16 %v1159, %v1151
      %v1656 = vpack.c.b16 %v1160, %v1152
      %v1657 = vpack.c.b16 %v1161, %v1153
      %v1658 = vpack.c.b16 %v1162, %v1154
      %v1659 = vpack.c.b16 %v1163, %v1155
      %v1660 = vpack.c.b16 %v1172, %v1164
      %v1661 = vpack.c.b16 %v1173, %v1165
      %v1662 = vpack.c.b16 %v1174, %v1166
      %v1663 = vpack.c.b16 %v1175, %v1167
      %v1664 = vpack.c.b16 %v1176, %v1168
      %v1665 = vpack.c.b16 %v1177, %v1169
      %v1666 = vpack.c.b16 %v1178, %v1170
      %v1667 = vpack.c.b16 %v1179, %v1171
      %v1668 = vpack.c.b16 %v1188, %v1180
      %v1669 = vpack.c.b16 %v1189, %v1181
      %v1670 = vpack.c.b16 %v1190, %v1182
      %v1671 = vpack.c.b16 %v1191, %v1183
      %v1672 = vpack.c.b16 %v1192, %v1184
      %v1673 = vpack.c.b16 %v1193, %v1185
      %v1674 = vpack.c.b16 %v1194, %v1186
      %v1675 = vpack.c.b16 %v1195, %v1187
      %v1676 = vpack.c.b16 %v1204, %v1196
      %v1677 = vpack.c.b16 %v1205, %v1197
      %v1678 = vpack.c.b16 %v1206, %v1198
      %v1679 = vpack.c.b16 %v1207, %v1199
      %v1680 = vpack.c.b16 %v1208, %v1200
      %v1681 = vpack.c.b16 %v1209, %v1201
      %v1682 = vpack.c.b16 %v1210, %v1202
      %v1683 = vpack.c.b16 %v1211, %v1203
      %v1684 = vpack.c.b16 %v1220, %v1212
      %v1685 = vpack.c.b16 %v1221, %v1213
      %v1686 = vpack.c.b16 %v1222, %v1214
      %v1687 = vpack.c.b16 %v1223, %v1215
      %v1688 = vpack.c.b16 %v1224, %v1216
      %v1689 = vpack.c.b16 %v1225, %v1217
      %v1690 = vpack.c.b16 %v1226, %v1218
      %v1691 = vpack.c.b16 %v1227, %v1219
      %v1692 = vpack.c.b16 %v1236, %v1228
      %v1693 = vpack.c.b16 %v1237, %v1229
      %v1694 = vpack.c.b16 %v1238, %v1230
      %v1695 = vpack.c.b16 %v1239, %v1231
      %v1696 = vpack.c.b16 %v1240, %v1232
      %v1697 = vpack.c.b16 %v1241, %v1233
      %v1698 = vpack.c.b16 %v1242, %v1234
      %v1699 = vpack.c.b16 %v1243, %v1235
      %v1700 = vpack.c.b16 %v1252, %v1244
      %v1701 = vpack.c.b16 %v1253, %v1245
      %v1702 = vpack.c.b16 %v1254, %v1246
      %v1703 = vpack.c.b16 %v1255, %v1247
      %v1704 = vpack.c.b16 %v1256, %v1248
      %v1705 = vpack.c.b16 %v1257, %v1249
      %v1706 = vpack.c.b16 %v1258, %v1250
      %v1707 = vpack.c.b16 %v1259, %v1251
      %v1708 = vpack.c.b16 %v1268, %v1260
      %v1709 = vpack.c.b16 %v1269, %v1261
      %v1710 = vpack.c.b16 %v1270, %v1262
      %v1711 = vpack.c.b16 %v1271, %v1263
      %v1712 = vpack.c.b16 %v1272, %v1264
      %v1713 = vpack.c.b16 %v1273, %v1265
      %v1714 = vpack.c.b16 %v1274, %v1266
      %v1715 = vpack.c.b16 %v1275, %v1267
      %v1716 = vpack.c.b16 %v1284, %v1276
      %v1717 = vpack.c.b16 %v1285, %v1277
      %v1718 = vpack.c.b16 %v1286, %v1278
      %v1719 = vpack.c.b16 %v1287, %v1279
      %v1720 = vpack.c.b16 %v1288, %v1280
      %v1721 = vpack.c.b16 %v1289, %v1281
      %v1722 = vpack.c.b16 %v1290, %v1282
      %v1723 = vpack.c.b16 %v1291, %v1283
      %v1724 = vpack.c.b16 %v1300, %v1292
      %v1725 = vpack.c.b16 %v1301, %v1293
      %v1726 = vpack.c.b16 %v1302, %v1294
      %v1727 = vpack.c.b16 %v1303, %v1295
      %v1728 = vpack.c.b16 %v1304, %v1296
      %v1729 = vpack.c.b16 %v1305, %v1297
      %v1730 = vpack.c.b16 %v1306, %v1298
      %v1731 = vpack.c.b16 %v1307, %v1299
      %v1732 = vpack.c.b16 %v1316, %v1308
      %v1733 = vpack.c.b16 %v1317, %v1309
      %v1734 = vpack.c.b16 %v1318, %v1310
      %v1735 = vpack.c.b16 %v1319, %v1311
      %v1736 = vpack.c.b16 %v1320, %v1312
      %v1737 = vpack.c.b16 %v1321, %v1313
      %v1738 = vpack.c.b16 %v1322, %v1314
      %v1739 = vpack.c.b16 %v1323, %v1315
      %v1740 = vpack.c.b16 %v1332, %v1324
      %v1741 = vpack.c.b16 %v1333, %v1325
      %v1742 = vpack.c.b16 %v1334, %v1326
      %v1743 = vpack.c.b16 %v1335, %v1327
      %v1744 = vpack.c.b16 %v1336, %v1328
      %v1745 = vpack.c.b16 %v1337, %v1329
      %v1746 = vpack.c.b16 %v1338, %v1330
      %v1747 = vpack.c.b16 %v1339, %v1331
      %v1748 = vpack.c.b16 %v1348, %v1340
      %v1749 = vpack.c.b16 %v1349, %v1341
      %v1750 = vpack.c.b16 %v1350, %v1342
      %v1751 = vpack.c.b16 %v1351, %v1343
      %v1752 = vpack.c.b16 %v1352, %v1344
      %v1753 = vpack.c.b16 %v1353, %v1345
      %v1754 = vpack.c.b16 %v1354, %v1346
      %v1755 = vpack.c.b16 %v1355, %v1347
      %v1756 = vpack.c.b16 %v1364, %v1356
      %v1757 = vpack.c.b16 %v1365, %v1357
      %v1758 = vpack.c.b16 %v1366, %v1358
      %v1759 = vpack.c.b16 %v1367, %v1359
      %v1760 = vpack.c.b16 %v1368, %v1360
      %v1761 = vpack.c.b16 %v1369, %v1361
      %v1762 = vpack.c.b16 %v1370, %v1362
      %v1763 = vpack.c.b16 %v1371, %v1363
      %v1764 = vpack.c.b16 %v1380, %v1372
      %v1765 = vpack.c.b16 %v1381, %v1373
      %v1766 = vpack.c.b16 %v1382, %v1374
      %v1767 = vpack.c.b16 %v1383, %v1375
      %v1768 = vpack.c.b16 %v1384, %v1376
      %v1769 = vpack.c.b16 %v1385, %v1377
      %v1770 = vpack.c.b16 %v1386, %v1378
      %v1771 = vpack.c.b16 %v1387, %v1379
      %v1772 = vpack.c.b16 %v1396, %v1388
      %v1773 = vpack.c.b16 %v1397, %v1389
      %v1774 = vpack.c.b16 %v1398, %v1390
      %v1775 = vpack.c.b16 %v1399, %v1391
      %v1776 = vpack.c.b16 %v1400, %v1392
      %v1777 = vpack.c.b16 %v1401, %v1393
      %v1778 = vpack.c.b16 %v1402, %v1394
      %v1779 = vpack.c.b16 %v1403, %v1395
      %v1780 = vpack.c.b16 %v1412, %v1404
      %v1781 = vpack.c.b16 %v1413, %v1405
      %v1782 = vpack.c.b16 %v1414, %v1406
      %v1783 = vpack.c.b16 %v1415, %v1407
      %v1784 = vpack.c.b16 %v1416, %v1408
      %v1785 = vpack.c.b16 %v1417, %v1409
      %v1786 = vpack.c.b16 %v1418, %v1410
      %v1787 = vpack.c.b16 %v1419, %v1411
      %v1788 = vpack.c.b16 %v1428, %v1420
      %v1789 = vpack.c.b16 %v1429, %v1421
      %v1790 = vpack.c.b16 %v1430, %v1422
      %v1791 = vpack.c.b16 %v1431, %v1423
      %v1792 = vpack.c.b16 %v1432, %v1424
      %v1793 = vpack.c.b16 %v1433, %v1425
      %v1794 = vpack.c.b16 %v1434, %v1426
      %v1795 = vpack.c.b16 %v1435, %v1427
      %v1796 = vpack.c.b16 %v1444, %v1436
      %v1797 = vpack.c.b16 %v1445, %v1437
      %v1798 = vpack.c.b16 %v1446, %v1438
      %v1799 = vpack.c.b16 %v1447, %v1439
      %v1800 = vpack.c.b16 %v1448, %v1440
      %v1801 = vpack.c.b16 %v1449, %v1441
      %v1802 = vpack.c.b16 %v1450, %v1442
      %v1803 = vpack.c.b16 %v1451, %v1443
      %v1804 = vpack.c.b16 %v1460, %v1452
      %v1805 = vpack.c.b16 %v1461, %v1453
      %v1806 = vpack.c.b16 %v1462, %v1454
      %v1807 = vpack.c.b16 %v1463, %v1455
      %v1808 = vpack.c.b16 %v1464, %v1456
      %v1809 = vpack.c.b16 %v1465, %v1457
      %v1810 = vpack.c.b16 %v1466, %v1458
      %v1811 = vpack.c.b16 %v1467, %v1459
      %v1812 = vpack.c.b16 %v1476, %v1468
      %v1813 = vpack.c.b16 %v1477, %v1469
      %v1814 = vpack.c.b16 %v1478, %v1470
      %v1815 = vpack.c.b16 %v1479, %v1471
      %v1816 = vpack.c.b16 %v1480, %v1472
      %v1817 = vpack.c.b16 %v1481, %v1473
      %v1818 = vpack.c.b16 %v1482, %v1474
      %v1819 = vpack.c.b16 %v1483, %v1475
      %v1820 = vpack.c.b16 %v1492, %v1484
      %v1821 = vpack.c.b16 %v1493, %v1485
      %v1822 = vpack.c.b16 %v1494, %v1486
      %v1823 = vpack.c.b16 %v1495, %v1487
      %v1824 = vpack.c.b16 %v1496, %v1488
      %v1825 = vpack.c.b16 %v1497, %v1489
      %v1826 = vpack.c.b16 %v1498, %v1490
      %v1827 = vpack.c.b16 %v1499, %v1491
      %v1828 = vpack.c.b16 %v1508, %v1500
      %v1829 = vpack.c.b16 %v1509, %v1501
      %v1830 = vpack.c.b16 %v1510, %v1502
      %v1831 = vpack.c.b16 %v1511, %v1503
      %v1832 = vpack.c.b16 %v1512, %v1504
      %v1833 = vpack.c.b16 %v1513, %v1505
      %v1834 = vpack.c.b16 %v1514, %v1506
      %v1835 = vpack.c.b16 %v1515, %v1507
      %v1836 = vpack.c.b16 %v1524, %v1516
      %v1837 = vpack.c.b16 %v1525, %v1517
      %v1838 = vpack.c.b16 %v1526, %v1518
      %v1839 = vpack.c.b16 %v1527, %v1519
      %v1840 = vpack.c.b16 %v1528, %v1520
      %v1841 = vpack.c.b16 %v1529, %v1521
      %v1842 = vpack.c.b16 %v1530, %v1522
      %v1843 = vpack.c.b16 %v1531, %v1523
      %v1844 = vpack.c.b16 %v1540, %v1532
      %v1845 = vpack.c.b16 %v1541, %v1533
      %v1846 = vpack.c.b16 %v1542, %v1534
      %v1847 = vpack.c.b16 %v1543, %v1535
      %v1848 = vpack.c.b16 %v1544, %v1536
      %v1849 = vpack.c.b16 %v1545, %v1537
      %v1850 = vpack.c.b16 %v1546, %v1538
      %v1851 = vpack.c.b16 %v1547, %v1539
      %v1852 = vpack.c.b16 %v1556, %v1548
      %v1853 = vpack.c.b16 %v1557, %v1549
      %v1854 = vpack.c.b16 %v1558, %v1550
      %v1855 = vpack.c.b16 %v1559, %v1551
      %v1856 = vpack.c.b16 %v1560, %v1552
      %v1857 = vpack.c.b16 %v1561, %v1553
      %v1858 = vpack.c.b16 %v1562, %v1554
      %v1859 = vpack.c.b16 %v1563, %v1555
      %v1860 = vpack.c.b16 %v1572, %v1564
      %v1861 = vpack.c.b16 %v1573, %v1565
      %v1862 = vpack.c.b16 %v1574, %v1566
      %v1863 = vpack.c.b16 %v1575, %v1567
      %v1864 = vpack.c.b16 %v1576, %v1568
      %v1865 = vpack.c.b16 %v1577, %v1569
      %v1866 = vpack.c.b16 %v1578, %v1570
      %v1867 = vpack.c.b16 %v1579, %v1571
      %v1868 = vpack.c.b16 %v1588, %v1580
      %v1869 = vpack.c.b16 %v1589, %v1581
      %v1870 = vpack.c.b16 %v1590, %v1582
      %v1871 = vpack.c.b16 %v1591, %v1583
      %v1872 = vpack.c.b16 %v1592, %v1584
      %v1873 = vpack.c.b16 %v1593, %v1585
      %v1874 = vpack.c.b16 %v1594, %v1586
      %v1875 = vpack.c.b16 %v1595, %v1587
      %v1876 = vpack.c.b16 %v1604, %v1596
      %v1877 = vpack.c.b16 %v1605, %v1597
      %v1878 = vpack.c.b16 %v1606, %v1598
      %v1879 = vpack.c.b16 %v1607, %v1599
      %v1880 = vpack.c.b16 %v1608, %v1600
      %v1881 = vpack.c.b16 %v1609, %v1601
      %v1882 = vpack.c.b16 %v1610, %v1602
      %v1883 = vpack.c.b16 %v1611, %v1603
      %v1884 = vpack.c.b16 %v1620, %v1612
      %v1885 = vpack.c.b16 %v1621, %v1613
      %v1886 = vpack.c.b16 %v1622, %v1614
      %v1887 = vpack.c.b16 %v1623, %v1615
      %v1888 = vpack.c.b16 %v1624, %v1616
      %v1889 = vpack.c.b16 %v1625, %v1617
      %v1890 = vpack.c.b16 %v1626, %v1618
      %v1891 = vpack.c.b16 %v1627, %v1619
      %v1892 = vpack.c.b16 %v1636, %v1628
      %v1893 = vpack.c.b16 %v1637, %v1629
      %v1894 = vpack.c.b16 %v1638, %v1630
      %v1895 = vpack.c.b16 %v1639, %v1631
      %v1896 = vpack.c.b16 %v1640, %v1632
      %v1897 = vpack.c.b16 %v1641, %v1633
      %v1898 = vpack.c.b16 %v1642, %v1634
      %v1899 = vpack.c.b16 %v1643, %v1635
      %2156 = vmatprep.subr.bf16.mxu0 %v1645
      %2157 = vmatpush1.bf16.msra.mxu0 %v1644
      %2158 = vmatprep.subr.bf16.mxu0 %v1653
      %2159 = vmatpush1.bf16.msra.mxu0 %v1652
      %2160 = vmatprep.subr.bf16.mxu0 %v1661
      %2161 = vmatpush1.bf16.msra.mxu0 %v1660
      %2162 = vmatprep.subr.bf16.mxu0 %v1669
      %2163 = vmatpush1.bf16.msra.mxu0 %v1668
      %2164 = vmatprep.subr.bf16.mxu0 %v1677
      %2165 = vmatpush1.bf16.msra.mxu0 %v1676
      %2166 = vmatprep.subr.bf16.mxu0 %v1685
      %2167 = vmatpush1.bf16.msra.mxu0 %v1684
      %2168 = vmatprep.subr.bf16.mxu0 %v1693
      %2169 = vmatpush1.bf16.msra.mxu0 %v1692
      %2170 = vmatprep.subr.bf16.mxu0 %v1701
      %2171 = vmatpush1.bf16.msra.mxu0 %v1700
      %2172 = vmatprep.subr.bf16.mxu0 %v1709
      %2173 = vmatpush1.bf16.msra.mxu0 %v1708
      %2174 = vmatprep.subr.bf16.mxu0 %v1717
      %2175 = vmatpush1.bf16.msra.mxu0 %v1716
      %2176 = vmatprep.subr.bf16.mxu0 %v1725
      %2177 = vmatpush1.bf16.msra.mxu0 %v1724
      %2178 = vmatprep.subr.bf16.mxu0 %v1733
      %2179 = vmatpush1.bf16.msra.mxu0 %v1732
      %2180 = vmatprep.subr.bf16.mxu0 %v1741
      %2181 = vmatpush1.bf16.msra.mxu0 %v1740
      %2182 = vmatprep.subr.bf16.mxu0 %v1749
      %2183 = vmatpush1.bf16.msra.mxu0 %v1748
      %2184 = vmatprep.subr.bf16.mxu0 %v1757
      %2185 = vmatpush1.bf16.msra.mxu0 %v1756
      %2186 = vmatprep.subr.bf16.mxu0 %v1765
      %2187 = vmatpush1.bf16.msra.mxu0 %v1764
      %2188 = vmatprep.mubr.bf16.mxu0 %v869
      %2189 = vmatmul.mubr.bf16.gmra.mrb[0].mxu0 %v862
      %v2190 = vpop.f32.mrb[0].mxu0
      %v2191 = vadd.f32 0.0, %v2190
      %v2192 = vpop.f32.mrb[0].mxu0
      %v2193 = vadd.f32 0.0, %v2192
      %v2194 = vpop.f32.mrb[0].mxu0
      %v2195 = vpop.f32.mrb[0].mxu0
      %2196 = vdwg.mxu0
      %2197 = vmatprep.subr.bf16.mxu0 %v1773
      %2198 = vmatpush1.bf16.msra.mxu0 %v1772
      %2199 = vmatprep.subr.bf16.mxu0 %v1781
      %2200 = vmatpush1.bf16.msra.mxu0 %v1780
      %2201 = vmatprep.subr.bf16.mxu0 %v1789
      %2202 = vmatpush1.bf16.msra.mxu0 %v1788
      %2203 = vmatprep.subr.bf16.mxu0 %v1797
      %2204 = vmatpush1.bf16.msra.mxu0 %v1796
      %2205 = vmatprep.subr.bf16.mxu0 %v1805
      %2206 = vmatpush1.bf16.msra.mxu0 %v1804
      %2207 = vmatprep.subr.bf16.mxu0 %v1813
      %2208 = vmatpush1.bf16.msra.mxu0 %v1812
      %2209 = vmatprep.subr.bf16.mxu0 %v1821
      %2210 = vmatpush1.bf16.msra.mxu0 %v1820
      %2211 = vmatprep.subr.bf16.mxu0 %v1829
      %2212 = vmatpush1.bf16.msra.mxu0 %v1828
      %2213 = vmatprep.subr.bf16.mxu0 %v1837
      %2214 = vmatpush1.bf16.msra.mxu0 %v1836
      %2215 = vmatprep.subr.bf16.mxu0 %v1845
      %2216 = vmatpush1.bf16.msra.mxu0 %v1844
      %2217 = vmatprep.subr.bf16.mxu0 %v1853
      %2218 = vmatpush1.bf16.msra.mxu0 %v1852
      %2219 = vmatprep.subr.bf16.mxu0 %v1861
      %2220 = vmatpush1.bf16.msra.mxu0 %v1860
      %2221 = vmatprep.subr.bf16.mxu0 %v1869
      %2222 = vmatpush1.bf16.msra.mxu0 %v1868
      %2223 = vmatprep.subr.bf16.mxu0 %v1877
      %2224 = vmatpush1.bf16.msra.mxu0 %v1876
      %2225 = vmatprep.subr.bf16.mxu0 %v1885
      %2226 = vmatpush1.bf16.msra.mxu0 %v1884
      %2227 = vmatprep.subr.bf16.mxu0 %v1893
      %2228 = vmatpush1.bf16.msra.mxu0 %v1892
      %2229 = vmatprep.mubr.bf16.mxu0 %v871
      %2230 = vmatmul.mubr.bf16.gmra.mrb[0].mxu0 %v870
      %v2231 = vpop.f32.mrb[0].mxu0
      %v2232 = vadd.f32 %v2191, %v2231
      %v2233 = vpop.f32.mrb[0].mxu0
      %v2234 = vadd.f32 %v2193, %v2233
      %v2235 = vpop.f32.mrb[0].mxu0
      %v2236 = vpop.f32.mrb[0].mxu0
      %2237 = vdwg.mxu0
      %2238 = vmatprep.subr.bf16.mxu0 %v1647
      %2239 = vmatpush1.bf16.msra.mxu0 %v1646
      %2240 = vmatprep.subr.bf16.mxu0 %v1655
      %2241 = vmatpush1.bf16.msra.mxu0 %v1654
      %2242 = vmatprep.subr.bf16.mxu0 %v1663
      %2243 = vmatpush1.bf16.msra.mxu0 %v1662
      %2244 = vmatprep.subr.bf16.mxu0 %v1671
      %2245 = vmatpush1.bf16.msra.mxu0 %v1670
      %2246 = vmatprep.subr.bf16.mxu0 %v1679
      %2247 = vmatpush1.bf16.msra.mxu0 %v1678
      %2248 = vmatprep.subr.bf16.mxu0 %v1687
      %2249 = vmatpush1.bf16.msra.mxu0 %v1686
      %2250 = vmatprep.subr.bf16.mxu0 %v1695
      %2251 = vmatpush1.bf16.msra.mxu0 %v1694
      %2252 = vmatprep.subr.bf16.mxu0 %v1703
      %2253 = vmatpush1.bf16.msra.mxu0 %v1702
      %2254 = vmatprep.subr.bf16.mxu0 %v1711
      %2255 = vmatpush1.bf16.msra.mxu0 %v1710
      %2256 = vmatprep.subr.bf16.mxu0 %v1719
      %2257 = vmatpush1.bf16.msra.mxu0 %v1718
      %2258 = vmatprep.subr.bf16.mxu0 %v1727
      %2259 = vmatpush1.bf16.msra.mxu0 %v1726
      %2260 = vmatprep.subr.bf16.mxu0 %v1735
      %2261 = vmatpush1.bf16.msra.mxu0 %v1734
      %2262 = vmatprep.subr.bf16.mxu0 %v1743
      %2263 = vmatpush1.bf16.msra.mxu0 %v1742
      %2264 = vmatprep.subr.bf16.mxu0 %v1751
      %2265 = vmatpush1.bf16.msra.mxu0 %v1750
      %2266 = vmatprep.subr.bf16.mxu0 %v1759
      %2267 = vmatpush1.bf16.msra.mxu0 %v1758
      %2268 = vmatprep.subr.bf16.mxu0 %v1767
      %2269 = vmatpush1.bf16.msra.mxu0 %v1766
      %2270 = vmatprep.mubr.bf16.mxu0 %v869
      %2271 = vmatmul.mubr.bf16.gmra.mrb[0].mxu0 %v862
      %v2272 = vpop.f32.mrb[0].mxu0
      %v2273 = vadd.f32 0.0, %v2272
      %v2274 = vpop.f32.mrb[0].mxu0
      %v2275 = vadd.f32 0.0, %v2274
      %v2276 = vpop.f32.mrb[0].mxu0
      %v2277 = vpop.f32.mrb[0].mxu0
      %2278 = vdwg.mxu0
      %2279 = vmatprep.subr.bf16.mxu0 %v1775
      %2280 = vmatpush1.bf16.msra.mxu0 %v1774
      %2281 = vmatprep.subr.bf16.mxu0 %v1783
      %2282 = vmatpush1.bf16.msra.mxu0 %v1782
      %2283 = vmatprep.subr.bf16.mxu0 %v1791
      %2284 = vmatpush1.bf16.msra.mxu0 %v1790
      %2285 = vmatprep.subr.bf16.mxu0 %v1799
      %2286 = vmatpush1.bf16.msra.mxu0 %v1798
      %2287 = vmatprep.subr.bf16.mxu0 %v1807
      %2288 = vmatpush1.bf16.msra.mxu0 %v1806
      %2289 = vmatprep.subr.bf16.mxu0 %v1815
      %2290 = vmatpush1.bf16.msra.mxu0 %v1814
      %2291 = vmatprep.subr.bf16.mxu0 %v1823
      %2292 = vmatpush1.bf16.msra.mxu0 %v1822
      %2293 = vmatprep.subr.bf16.mxu0 %v1831
      %2294 = vmatpush1.bf16.msra.mxu0 %v1830
      %2295 = vmatprep.subr.bf16.mxu0 %v1839
      %2296 = vmatpush1.bf16.msra.mxu0 %v1838
      %2297 = vmatprep.subr.bf16.mxu0 %v1847
      %2298 = vmatpush1.bf16.msra.mxu0 %v1846
      %2299 = vmatprep.subr.bf16.mxu0 %v1855
      %2300 = vmatpush1.bf16.msra.mxu0 %v1854
      %2301 = vmatprep.subr.bf16.mxu0 %v1863
      %2302 = vmatpush1.bf16.msra.mxu0 %v1862
      %2303 = vmatprep.subr.bf16.mxu0 %v1871
      %2304 = vmatpush1.bf16.msra.mxu0 %v1870
      %2305 = vmatprep.subr.bf16.mxu0 %v1879
      %2306 = vmatpush1.bf16.msra.mxu0 %v1878
      %2307 = vmatprep.subr.bf16.mxu0 %v1887
      %2308 = vmatpush1.bf16.msra.mxu0 %v1886
      %2309 = vmatprep.subr.bf16.mxu0 %v1895
      %2310 = vmatpush1.bf16.msra.mxu0 %v1894
      %2311 = vmatprep.mubr.bf16.mxu0 %v871
      %2312 = vmatmul.mubr.bf16.gmra.mrb[0].mxu0 %v870
      %v2313 = vpop.f32.mrb[0].mxu0
      %v2314 = vadd.f32 %v2273, %v2313
      %v2315 = vpop.f32.mrb[0].mxu0
      %v2316 = vadd.f32 %v2275, %v2315
      %v2317 = vpop.f32.mrb[0].mxu0
      %v2318 = vpop.f32.mrb[0].mxu0
      %2319 = vdwg.mxu0
      %2320 = vmatprep.subr.bf16.mxu0 %v1649
      %2321 = vmatpush1.bf16.msra.mxu0 %v1648
      %2322 = vmatprep.subr.bf16.mxu0 %v1657
      %2323 = vmatpush1.bf16.msra.mxu0 %v1656
      %2324 = vmatprep.subr.bf16.mxu0 %v1665
      %2325 = vmatpush1.bf16.msra.mxu0 %v1664
      %2326 = vmatprep.subr.bf16.mxu0 %v1673
      %2327 = vmatpush1.bf16.msra.mxu0 %v1672
      %2328 = vmatprep.subr.bf16.mxu0 %v1681
      %2329 = vmatpush1.bf16.msra.mxu0 %v1680
      %2330 = vmatprep.subr.bf16.mxu0 %v1689
      %2331 = vmatpush1.bf16.msra.mxu0 %v1688
      %2332 = vmatprep.subr.bf16.mxu0 %v1697
      %2333 = vmatpush1.bf16.msra.mxu0 %v1696
      %2334 = vmatprep.subr.bf16.mxu0 %v1705
      %2335 = vmatpush1.bf16.msra.mxu0 %v1704
      %2336 = vmatprep.subr.bf16.mxu0 %v1713
      %2337 = vmatpush1.bf16.msra.mxu0 %v1712
      %2338 = vmatprep.subr.bf16.mxu0 %v1721
      %2339 = vmatpush1.bf16.msra.mxu0 %v1720
      %2340 = vmatprep.subr.bf16.mxu0 %v1729
      %2341 = vmatpush1.bf16.msra.mxu0 %v1728
      %2342 = vmatprep.subr.bf16.mxu0 %v1737
      %2343 = vmatpush1.bf16.msra.mxu0 %v1736
      %2344 = vmatprep.subr.bf16.mxu0 %v1745
      %2345 = vmatpush1.bf16.msra.mxu0 %v1744
      %2346 = vmatprep.subr.bf16.mxu0 %v1753
      %2347 = vmatpush1.bf16.msra.mxu0 %v1752
      %2348 = vmatprep.subr.bf16.mxu0 %v1761
      %2349 = vmatpush1.bf16.msra.mxu0 %v1760
      %2350 = vmatprep.subr.bf16.mxu0 %v1769
      %2351 = vmatpush1.bf16.msra.mxu0 %v1768
      %2352 = vmatprep.mubr.bf16.mxu0 %v869
      %2353 = vmatmul.mubr.bf16.gmra.mrb[0].mxu0 %v862
      %v2354 = vpop.f32.mrb[0].mxu0
      %v2355 = vadd.f32 0.0, %v2354
      %v2356 = vpop.f32.mrb[0].mxu0
      %v2357 = vadd.f32 0.0, %v2356
      %v2358 = vpop.f32.mrb[0].mxu0
      %v2359 = vpop.f32.mrb[0].mxu0
      %2360 = vdwg.mxu0
      %2361 = vmatprep.subr.bf16.mxu0 %v1777
      %2362 = vmatpush1.bf16.msra.mxu0 %v1776
      %2363 = vmatprep.subr.bf16.mxu0 %v1785
      %2364 = vmatpush1.bf16.msra.mxu0 %v1784
      %2365 = vmatprep.subr.bf16.mxu0 %v1793
      %2366 = vmatpush1.bf16.msra.mxu0 %v1792
      %2367 = vmatprep.subr.bf16.mxu0 %v1801
      %2368 = vmatpush1.bf16.msra.mxu0 %v1800
      %2369 = vmatprep.subr.bf16.mxu0 %v1809
      %2370 = vmatpush1.bf16.msra.mxu0 %v1808
      %2371 = vmatprep.subr.bf16.mxu0 %v1817
      %2372 = vmatpush1.bf16.msra.mxu0 %v1816
      %2373 = vmatprep.subr.bf16.mxu0 %v1825
      %2374 = vmatpush1.bf16.msra.mxu0 %v1824
      %2375 = vmatprep.subr.bf16.mxu0 %v1833
      %2376 = vmatpush1.bf16.msra.mxu0 %v1832
      %2377 = vmatprep.subr.bf16.mxu0 %v1841
      %2378 = vmatpush1.bf16.msra.mxu0 %v1840
      %2379 = vmatprep.subr.bf16.mxu0 %v1849
      %2380 = vmatpush1.bf16.msra.mxu0 %v1848
      %2381 = vmatprep.subr.bf16.mxu0 %v1857
      %2382 = vmatpush1.bf16.msra.mxu0 %v1856
      %2383 = vmatprep.subr.bf16.mxu0 %v1865
      %2384 = vmatpush1.bf16.msra.mxu0 %v1864
      %2385 = vmatprep.subr.bf16.mxu0 %v1873
      %2386 = vmatpush1.bf16.msra.mxu0 %v1872
      %2387 = vmatprep.subr.bf16.mxu0 %v1881
      %2388 = vmatpush1.bf16.msra.mxu0 %v1880
      %2389 = vmatprep.subr.bf16.mxu0 %v1889
      %2390 = vmatpush1.bf16.msra.mxu0 %v1888
      %2391 = vmatprep.subr.bf16.mxu0 %v1897
      %2392 = vmatpush1.bf16.msra.mxu0 %v1896
      %2393 = vmatprep.mubr.bf16.mxu0 %v871
      %2394 = vmatmul.mubr.bf16.gmra.mrb[0].mxu0 %v870
      %v2395 = vpop.f32.mrb[0].mxu0
      %v2396 = vadd.f32 %v2355, %v2395
      %v2397 = vpop.f32.mrb[0].mxu0
      %v2398 = vadd.f32 %v2357, %v2397
      %v2399 = vpop.f32.mrb[0].mxu0
      %v2400 = vpop.f32.mrb[0].mxu0
      %2401 = vdwg.mxu0
      %2402 = vmatprep.subr.bf16.mxu0 %v1651
      %2403 = vmatpush1.bf16.msra.mxu0 %v1650
      %2404 = vmatprep.subr.bf16.mxu0 %v1659
      %2405 = vmatpush1.bf16.msra.mxu0 %v1658
      %2406 = vmatprep.subr.bf16.mxu0 %v1667
      %2407 = vmatpush1.bf16.msra.mxu0 %v1666
      %2408 = vmatprep.subr.bf16.mxu0 %v1675
      %2409 = vmatpush1.bf16.msra.mxu0 %v1674
      %2410 = vmatprep.subr.bf16.mxu0 %v1683
      %2411 = vmatpush1.bf16.msra.mxu0 %v1682
      %2412 = vmatprep.subr.bf16.mxu0 %v1691
      %2413 = vmatpush1.bf16.msra.mxu0 %v1690
      %2414 = vmatprep.subr.bf16.mxu0 %v1699
      %2415 = vmatpush1.bf16.msra.mxu0 %v1698
      %2416 = vmatprep.subr.bf16.mxu0 %v1707
      %2417 = vmatpush1.bf16.msra.mxu0 %v1706
      %2418 = vmatprep.subr.bf16.mxu0 %v1715
      %2419 = vmatpush1.bf16.msra.mxu0 %v1714
      %2420 = vmatprep.subr.bf16.mxu0 %v1723
      %2421 = vmatpush1.bf16.msra.mxu0 %v1722
      %2422 = vmatprep.subr.bf16.mxu0 %v1731
      %2423 = vmatpush1.bf16.msra.mxu0 %v1730
      %2424 = vmatprep.subr.bf16.mxu0 %v1739
      %2425 = vmatpush1.bf16.msra.mxu0 %v1738
      %2426 = vmatprep.subr.bf16.mxu0 %v1747
      %2427 = vmatpush1.bf16.msra.mxu0 %v1746
      %2428 = vmatprep.subr.bf16.mxu0 %v1755
      %2429 = vmatpush1.bf16.msra.mxu0 %v1754
      %2430 = vmatprep.subr.bf16.mxu0 %v1763
      %2431 = vmatpush1.bf16.msra.mxu0 %v1762
      %2432 = vmatprep.subr.bf16.mxu0 %v1771
      %2433 = vmatpush1.bf16.msra.mxu0 %v1770
      %2434 = vmatprep.mubr.bf16.mxu0 %v869
      %2435 = vmatmul.mubr.bf16.gmra.mrb[0].mxu0 %v862
      %v2436 = vpop.f32.mrb[0].mxu0
      %v2437 = vadd.f32 0.0, %v2436
      %v2438 = vpop.f32.mrb[0].mxu0
      %v2439 = vadd.f32 0.0, %v2438
      %v2440 = vpop.f32.mrb[0].mxu0
      %v2441 = vpop.f32.mrb[0].mxu0
      %2442 = vdwg.mxu0
      %2443 = vmatprep.subr.bf16.mxu0 %v1779
      %2444 = vmatpush1.bf16.msra.mxu0 %v1778
      %2445 = vmatprep.subr.bf16.mxu0 %v1787
      %2446 = vmatpush1.bf16.msra.mxu0 %v1786
      %2447 = vmatprep.subr.bf16.mxu0 %v1795
      %2448 = vmatpush1.bf16.msra.mxu0 %v1794
      %2449 = vmatprep.subr.bf16.mxu0 %v1803
      %2450 = vmatpush1.bf16.msra.mxu0 %v1802
      %2451 = vmatprep.subr.bf16.mxu0 %v1811
      %2452 = vmatpush1.bf16.msra.mxu0 %v1810
      %2453 = vmatprep.subr.bf16.mxu0 %v1819
      %2454 = vmatpush1.bf16.msra.mxu0 %v1818
      %2455 = vmatprep.subr.bf16.mxu0 %v1827
      %2456 = vmatpush1.bf16.msra.mxu0 %v1826
      %2457 = vmatprep.subr.bf16.mxu0 %v1835
      %2458 = vmatpush1.bf16.msra.mxu0 %v1834
      %2459 = vmatprep.subr.bf16.mxu0 %v1843
      %2460 = vmatpush1.bf16.msra.mxu0 %v1842
      %2461 = vmatprep.subr.bf16.mxu0 %v1851
      %2462 = vmatpush1.bf16.msra.mxu0 %v1850
      %2463 = vmatprep.subr.bf16.mxu0 %v1859
      %2464 = vmatpush1.bf16.msra.mxu0 %v1858
      %2465 = vmatprep.subr.bf16.mxu0 %v1867
      %2466 = vmatpush1.bf16.msra.mxu0 %v1866
      %2467 = vmatprep.subr.bf16.mxu0 %v1875
      %2468 = vmatpush1.bf16.msra.mxu0 %v1874
      %2469 = vmatprep.subr.bf16.mxu0 %v1883
      %2470 = vmatpush1.bf16.msra.mxu0 %v1882
      %2471 = vmatprep.subr.bf16.mxu0 %v1891
      %2472 = vmatpush1.bf16.msra.mxu0 %v1890
      %2473 = vmatprep.subr.bf16.mxu0 %v1899
      %2474 = vmatpush1.bf16.msra.mxu0 %v1898
      %2475 = vmatprep.mubr.bf16.mxu0 %v871
      %2476 = vmatmul.mubr.bf16.gmra.mrb[0].mxu0 %v870
      %v2477 = vpop.f32.mrb[0].mxu0
      %v2478 = vadd.f32 %v2437, %v2477
      %v2479 = vpop.f32.mrb[0].mxu0
      %v2480 = vadd.f32 %v2439, %v2479
      %v2481 = vpop.f32.mrb[0].mxu0
      %v2482 = vpop.f32.mrb[0].mxu0
      %2483 = vdwg.mxu0
      %v2492 = vcombine.low %v2232, %v2234
      %v2493 = vcombine.low %v2314, %v2316
      %v2495 = vunpack.c.l.s4 1983009808
      %v2496 = vunpack.c.0.s8 %v2495
      %v2497 = vlaneseq
      %v2498 = vshrl.u32 %v2497, 7
      %v2499 = vsub.s32 %v2496, %v2498
      %v2500 = vrot.slane %v2492, %v2499
      %v2502 = vunpack.c.l.s4 1983009808
      %v2503 = vunpack.c.0.s8 %v2502
      %v2504 = vlaneseq
      %v2505 = vshrl.u32 %v2504, 7
      %v2506 = vsub.s32 %v2503, %v2505
      %v2507 = vrot.slane %v2493, %v2506
      %v2508 = vcombine.low %v2500, %v2507
      %v2509 = vcombine.low %v2396, %v2398
      %v2510 = vcombine.low %v2478, %v2480
      %v2512 = vunpack.c.l.s4 1983009808
      %v2513 = vunpack.c.0.s8 %v2512
      %v2514 = vlaneseq
      %v2515 = vshrl.u32 %v2514, 7
      %v2516 = vsub.s32 %v2513, %v2515
      %v2517 = vrot.slane %v2509, %v2516
      %v2519 = vunpack.c.l.s4 1983009808
      %v2520 = vunpack.c.0.s8 %v2519
      %v2521 = vlaneseq
      %v2522 = vshrl.u32 %v2521, 7
      %v2523 = vsub.s32 %v2520, %v2522
      %v2524 = vrot.slane %v2510, %v2523
      %v2525 = vcombine.low %v2517, %v2524
      %v2528 = vadd.f32 %v588, %v2508
      %v2529 = vadd.f32 %v589, %v2525
      %2530 = vst [vmem:[#allocation2] sm:$0xff] %v2528
      %2531 = vst [vmem:[#allocation2 + $0x8] sm:$0xff] %v2529
      %p2532 = scmp.eq.s32.totalorder %s33, 1
      // Predicated region
      $region85: #{seed_forward.2} parent=79 // pred_check
        %p2533 = pneg %p2532
      $region86: #{seed_forward.2} parent=79 // pred_check_branch
        %2535 = sbr.rel (%p2533) target = $region88
      $region87: #{seed_forward.2} parent=79 // pred_region
        %v2536 = vld [vmem:[#allocation2] sm:$0xff]
        %v2537 = vld [vmem:[#allocation2 + $0x8] sm:$0xff]
        %v2538 = vld [vmem:[%s2] sm:$0xff]
        %v2540 = vlaneseq
        %v2541 = vshrl.u32 %v2540, 7
        %v2542 = vsub.s32 0, %v2541
        %v2543 = vrot.slane %v2538, %v2542
        %v2544 = vlaneseq
        %v2545 = vshrl.u32 %v2544, 7
        %v2546 = vsub.s32 1, %v2545
        %v2547 = vrot.slane %v2538, %v2546
        %v2548 = vlaneseq
        %v2549 = vshrl.u32 %v2548, 7
        %v2550 = vsub.s32 2, %v2549
        %v2551 = vrot.slane %v2538, %v2550
        %v2552 = vlaneseq
        %v2553 = vshrl.u32 %v2552, 7
        %v2554 = vsub.s32 3, %v2553
        %v2555 = vrot.slane %v2538, %v2554
        %v2556 = vlaneseq
        %v2557 = vshrl.u32 %v2556, 7
        %v2558 = vsub.s32 4, %v2557
        %v2559 = vrot.slane %v2538, %v2558
        %v2560 = vlaneseq
        %v2561 = vshrl.u32 %v2560, 7
        %v2562 = vsub.s32 5, %v2561
        %v2563 = vrot.slane %v2538, %v2562
        %v2564 = vlaneseq
        %v2565 = vshrl.u32 %v2564, 7
        %v2566 = vsub.s32 6, %v2565
        %v2567 = vrot.slane %v2538, %v2566
        %v2568 = vlaneseq
        %v2569 = vshrl.u32 %v2568, 7
        %v2570 = vsub.s32 7, %v2569
        %v2571 = vrot.slane %v2538, %v2570
        %v2572 = vcombine.low %v2543, %v2547
        %v2573 = vcombine.low %v2551, %v2555
        %v2575 = vunpack.c.l.s4 1983009808
        %v2576 = vunpack.c.0.s8 %v2575
        %v2577 = vlaneseq
        %v2578 = vshrl.u32 %v2577, 7
        %v2579 = vsub.s32 %v2576, %v2578
        %v2580 = vrot.slane %v2572, %v2579
        %v2582 = vunpack.c.l.s4 1983009808
        %v2583 = vunpack.c.0.s8 %v2582
        %v2584 = vlaneseq
        %v2585 = vshrl.u32 %v2584, 7
        %v2586 = vsub.s32 %v2583, %v2585
        %v2587 = vrot.slane %v2573, %v2586
        %v2588 = vcombine.low %v2580, %v2587
        %v2589 = vcombine.low %v2559, %v2563
        %v2590 = vcombine.low %v2567, %v2571
        %v2592 = vunpack.c.l.s4 1983009808
        %v2593 = vunpack.c.0.s8 %v2592
        %v2594 = vlaneseq
        %v2595 = vshrl.u32 %v2594, 7
        %v2596 = vsub.s32 %v2593, %v2595
        %v2597 = vrot.slane %v2589, %v2596
        %v2599 = vunpack.c.l.s4 1983009808
        %v2600 = vunpack.c.0.s8 %v2599
        %v2601 = vlaneseq
        %v2602 = vshrl.u32 %v2601, 7
        %v2603 = vsub.s32 %v2600, %v2602
        %v2604 = vrot.slane %v2590, %v2603
        %v2605 = vcombine.low %v2597, %v2604
        %v2608 = vadd.f32 %v2536, %v2588
        %v2609 = vadd.f32 %v2537, %v2605
        %v2610 = vmax.f32 %v2608, 0.0
        %v2611 = vmax.f32 %v2609, 0.0
        %v2613 = vcombine.high %v2610, %v2610
        %v2615 = vunpack.c.l.s4 1983009808
        %v2616 = vunpack.c.0.s8 %v2615
        %v2617 = vlaneseq
        %v2618 = vshrl.u32 %v2617, 7
        %v2619 = vsub.s32 %v2616, %v2618
        %v2620 = vrot.slane %v2610, %v2619
        %v2622 = vunpack.c.l.s4 1983009808
        %v2623 = vunpack.c.0.s8 %v2622
        %v2624 = vlaneseq
        %v2625 = vshrl.u32 %v2624, 7
        %v2626 = vsub.s32 %v2623, %v2625
        %v2627 = vrot.slane %v2613, %v2626
        %v2628 = vcombine.high %v2620, %v2620
        %v2629 = vcombine.high %v2627, %v2627
        %v2634 = vpack.c.bf16 %v2620, %v2620
        %v2635 = vpack.c.bf16 %v2628, %v2628
        %v2636 = vpack.c.bf16 %v2627, %v2627
        %v2637 = vpack.c.bf16 %v2629, %v2629
        %v2639 = vcombine.high %v2611, %v2611
        %v2641 = vunpack.c.l.s4 1983009808
        %v2642 = vunpack.c.0.s8 %v2641
        %v2643 = vlaneseq
        %v2644 = vshrl.u32 %v2643, 7
        %v2645 = vsub.s32 %v2642, %v2644
        %v2646 = vrot.slane %v2611, %v2645
        %v2648 = vunpack.c.l.s4 1983009808
        %v2649 = vunpack.c.0.s8 %v2648
        %v2650 = vlaneseq
        %v2651 = vshrl.u32 %v2650, 7
        %v2652 = vsub.s32 %v2649, %v2651
        %v2653 = vrot.slane %v2639, %v2652
        %v2654 = vcombine.high %v2646, %v2646
        %v2655 = vcombine.high %v2653, %v2653
        %v2660 = vpack.c.bf16 %v2646, %v2646
        %v2661 = vpack.c.bf16 %v2654, %v2654
        %v2662 = vpack.c.bf16 %v2653, %v2653
        %v2663 = vpack.c.bf16 %v2655, %v2655
        %v2664 = vld [vmem:[%s3] sm:$0xff]
        %v2665 = vld [vmem:[%s3 + $0x8] sm:$0xff]
        %v2666 = vld [vmem:[%s3 + $0x10] sm:$0xff]
        %v2667 = vld [vmem:[%s3 + $0x18] sm:$0xff]
        %v2668 = vld [vmem:[%s3 + $0x20] sm:$0xff]
        %v2669 = vld [vmem:[%s3 + $0x28] sm:$0xff]
        %v2670 = vld [vmem:[%s3 + $0x30] sm:$0xff]
        %v2671 = vld [vmem:[%s3 + $0x38] sm:$0xff]
        %v2672 = vld [vmem:[%s3 + $0x40] sm:$0xff]
        %v2673 = vld [vmem:[%s3 + $0x48] sm:$0xff]
        %v2674 = vld [vmem:[%s3 + $0x50] sm:$0xff]
        %v2675 = vld [vmem:[%s3 + $0x58] sm:$0xff]
        %v2676 = vld [vmem:[%s3 + $0x60] sm:$0xff]
        %v2677 = vld [vmem:[%s3 + $0x68] sm:$0xff]
        %v2678 = vld [vmem:[%s3 + $0x70] sm:$0xff]
        %v2679 = vld [vmem:[%s3 + $0x78] sm:$0xff]
        %v2680 = vld [vmem:[%s3 + $0x80] sm:$0xff]
        %v2681 = vld [vmem:[%s3 + $0x88] sm:$0xff]
        %v2682 = vld [vmem:[%s3 + $0x90] sm:$0xff]
        %v2683 = vld [vmem:[%s3 + $0x98] sm:$0xff]
        %v2684 = vld [vmem:[%s3 + $0xa0] sm:$0xff]
        %v2685 = vld [vmem:[%s3 + $0xa8] sm:$0xff]
        %v2686 = vld [vmem:[%s3 + $0xb0] sm:$0xff]
        %v2687 = vld [vmem:[%s3 + $0xb8] sm:$0xff]
        %v2688 = vld [vmem:[%s3 + $0xc0] sm:$0xff]
        %v2689 = vld [vmem:[%s3 + $0xc8] sm:$0xff]
        %v2690 = vld [vmem:[%s3 + $0xd0] sm:$0xff]
        %v2691 = vld [vmem:[%s3 + $0xd8] sm:$0xff]
        %v2692 = vld [vmem:[%s3 + $0xe0] sm:$0xff]
        %v2693 = vld [vmem:[%s3 + $0xe8] sm:$0xff]
        %v2694 = vld [vmem:[%s3 + $0xf0] sm:$0xff]
        %v2695 = vld [vmem:[%s3 + $0xf8] sm:$0xff]
        %v2696 = vld [vmem:[%s3 + $0x100] sm:$0xff]
        %v2697 = vld [vmem:[%s3 + $0x108] sm:$0xff]
        %v2698 = vld [vmem:[%s3 + $0x110] sm:$0xff]
        %v2699 = vld [vmem:[%s3 + $0x118] sm:$0xff]
        %v2700 = vld [vmem:[%s3 + $0x120] sm:$0xff]
        %v2701 = vld [vmem:[%s3 + $0x128] sm:$0xff]
        %v2702 = vld [vmem:[%s3 + $0x130] sm:$0xff]
        %v2703 = vld [vmem:[%s3 + $0x138] sm:$0xff]
        %v2704 = vld [vmem:[%s3 + $0x140] sm:$0xff]
        %v2705 = vld [vmem:[%s3 + $0x148] sm:$0xff]
        %v2706 = vld [vmem:[%s3 + $0x150] sm:$0xff]
        %v2707 = vld [vmem:[%s3 + $0x158] sm:$0xff]
        %v2708 = vld [vmem:[%s3 + $0x160] sm:$0xff]
        %v2709 = vld [vmem:[%s3 + $0x168] sm:$0xff]
        %v2710 = vld [vmem:[%s3 + $0x170] sm:$0xff]
        %v2711 = vld [vmem:[%s3 + $0x178] sm:$0xff]
        %v2712 = vld [vmem:[%s3 + $0x180] sm:$0xff]
        %v2713 = vld [vmem:[%s3 + $0x188] sm:$0xff]
        %v2714 = vld [vmem:[%s3 + $0x190] sm:$0xff]
        %v2715 = vld [vmem:[%s3 + $0x198] sm:$0xff]
        %v2716 = vld [vmem:[%s3 + $0x1a0] sm:$0xff]
        %v2717 = vld [vmem:[%s3 + $0x1a8] sm:$0xff]
        %v2718 = vld [vmem:[%s3 + $0x1b0] sm:$0xff]
        %v2719 = vld [vmem:[%s3 + $0x1b8] sm:$0xff]
        %v2720 = vld [vmem:[%s3 + $0x1c0] sm:$0xff]
        %v2721 = vld [vmem:[%s3 + $0x1c8] sm:$0xff]
        %v2722 = vld [vmem:[%s3 + $0x1d0] sm:$0xff]
        %v2723 = vld [vmem:[%s3 + $0x1d8] sm:$0xff]
        %v2724 = vld [vmem:[%s3 + $0x1e0] sm:$0xff]
        %v2725 = vld [vmem:[%s3 + $0x1e8] sm:$0xff]
        %v2726 = vld [vmem:[%s3 + $0x1f0] sm:$0xff]
        %v2727 = vld [vmem:[%s3 + $0x1f8] sm:$0xff]
        %v2728 = vld [vmem:[%s3 + $0x200] sm:$0xff]
        %v2729 = vld [vmem:[%s3 + $0x208] sm:$0xff]
        %v2730 = vld [vmem:[%s3 + $0x210] sm:$0xff]
        %v2731 = vld [vmem:[%s3 + $0x218] sm:$0xff]
        %v2732 = vld [vmem:[%s3 + $0x220] sm:$0xff]
        %v2733 = vld [vmem:[%s3 + $0x228] sm:$0xff]
        %v2734 = vld [vmem:[%s3 + $0x230] sm:$0xff]
        %v2735 = vld [vmem:[%s3 + $0x238] sm:$0xff]
        %v2736 = vld [vmem:[%s3 + $0x240] sm:$0xff]
        %v2737 = vld [vmem:[%s3 + $0x248] sm:$0xff]
        %v2738 = vld [vmem:[%s3 + $0x250] sm:$0xff]
        %v2739 = vld [vmem:[%s3 + $0x258] sm:$0xff]
        %v2740 = vld [vmem:[%s3 + $0x260] sm:$0xff]
        %v2741 = vld [vmem:[%s3 + $0x268] sm:$0xff]
        %v2742 = vld [vmem:[%s3 + $0x270] sm:$0xff]
        %v2743 = vld [vmem:[%s3 + $0x278] sm:$0xff]
        %v2744 = vld [vmem:[%s3 + $0x280] sm:$0xff]
        %v2745 = vld [vmem:[%s3 + $0x288] sm:$0xff]
        %v2746 = vld [vmem:[%s3 + $0x290] sm:$0xff]
        %v2747 = vld [vmem:[%s3 + $0x298] sm:$0xff]
        %v2748 = vld [vmem:[%s3 + $0x2a0] sm:$0xff]
        %v2749 = vld [vmem:[%s3 + $0x2a8] sm:$0xff]
        %v2750 = vld [vmem:[%s3 + $0x2b0] sm:$0xff]
        %v2751 = vld [vmem:[%s3 + $0x2b8] sm:$0xff]
        %v2752 = vld [vmem:[%s3 + $0x2c0] sm:$0xff]
        %v2753 = vld [vmem:[%s3 + $0x2c8] sm:$0xff]
        %v2754 = vld [vmem:[%s3 + $0x2d0] sm:$0xff]
        %v2755 = vld [vmem:[%s3 + $0x2d8] sm:$0xff]
        %v2756 = vld [vmem:[%s3 + $0x2e0] sm:$0xff]
        %v2757 = vld [vmem:[%s3 + $0x2e8] sm:$0xff]
        %v2758 = vld [vmem:[%s3 + $0x2f0] sm:$0xff]
        %v2759 = vld [vmem:[%s3 + $0x2f8] sm:$0xff]
        %v2760 = vld [vmem:[%s3 + $0x300] sm:$0xff]
        %v2761 = vld [vmem:[%s3 + $0x308] sm:$0xff]
        %v2762 = vld [vmem:[%s3 + $0x310] sm:$0xff]
        %v2763 = vld [vmem:[%s3 + $0x318] sm:$0xff]
        %v2764 = vld [vmem:[%s3 + $0x320] sm:$0xff]
        %v2765 = vld [vmem:[%s3 + $0x328] sm:$0xff]
        %v2766 = vld [vmem:[%s3 + $0x330] sm:$0xff]
        %v2767 = vld [vmem:[%s3 + $0x338] sm:$0xff]
        %v2768 = vld [vmem:[%s3 + $0x340] sm:$0xff]
        %v2769 = vld [vmem:[%s3 + $0x348] sm:$0xff]
        %v2770 = vld [vmem:[%s3 + $0x350] sm:$0xff]
        %v2771 = vld [vmem:[%s3 + $0x358] sm:$0xff]
        %v2772 = vld [vmem:[%s3 + $0x360] sm:$0xff]
        %v2773 = vld [vmem:[%s3 + $0x368] sm:$0xff]
        %v2774 = vld [vmem:[%s3 + $0x370] sm:$0xff]
        %v2775 = vld [vmem:[%s3 + $0x378] sm:$0xff]
        %v2776 = vld [vmem:[%s3 + $0x380] sm:$0xff]
        %v2777 = vld [vmem:[%s3 + $0x388] sm:$0xff]
        %v2778 = vld [vmem:[%s3 + $0x390] sm:$0xff]
        %v2779 = vld [vmem:[%s3 + $0x398] sm:$0xff]
        %v2780 = vld [vmem:[%s3 + $0x3a0] sm:$0xff]
        %v2781 = vld [vmem:[%s3 + $0x3a8] sm:$0xff]
        %v2782 = vld [vmem:[%s3 + $0x3b0] sm:$0xff]
        %v2783 = vld [vmem:[%s3 + $0x3b8] sm:$0xff]
        %v2784 = vld [vmem:[%s3 + $0x3c0] sm:$0xff]
        %v2785 = vld [vmem:[%s3 + $0x3c8] sm:$0xff]
        %v2786 = vld [vmem:[%s3 + $0x3d0] sm:$0xff]
        %v2787 = vld [vmem:[%s3 + $0x3d8] sm:$0xff]
        %v2788 = vld [vmem:[%s3 + $0x3e0] sm:$0xff]
        %v2789 = vld [vmem:[%s3 + $0x3e8] sm:$0xff]
        %v2790 = vld [vmem:[%s3 + $0x3f0] sm:$0xff]
        %v2791 = vld [vmem:[%s3 + $0x3f8] sm:$0xff]
        %v2792 = vld [vmem:[%s3 + $0x400] sm:$0xff]
        %v2793 = vld [vmem:[%s3 + $0x408] sm:$0xff]
        %v2794 = vld [vmem:[%s3 + $0x410] sm:$0xff]
        %v2795 = vld [vmem:[%s3 + $0x418] sm:$0xff]
        %v2796 = vld [vmem:[%s3 + $0x420] sm:$0xff]
        %v2797 = vld [vmem:[%s3 + $0x428] sm:$0xff]
        %v2798 = vld [vmem:[%s3 + $0x430] sm:$0xff]
        %v2799 = vld [vmem:[%s3 + $0x438] sm:$0xff]
        %v2800 = vld [vmem:[%s3 + $0x440] sm:$0xff]
        %v2801 = vld [vmem:[%s3 + $0x448] sm:$0xff]
        %v2802 = vld [vmem:[%s3 + $0x450] sm:$0xff]
        %v2803 = vld [vmem:[%s3 + $0x458] sm:$0xff]
        %v2804 = vld [vmem:[%s3 + $0x460] sm:$0xff]
        %v2805 = vld [vmem:[%s3 + $0x468] sm:$0xff]
        %v2806 = vld [vmem:[%s3 + $0x470] sm:$0xff]
        %v2807 = vld [vmem:[%s3 + $0x478] sm:$0xff]
        %v2808 = vld [vmem:[%s3 + $0x480] sm:$0xff]
        %v2809 = vld [vmem:[%s3 + $0x488] sm:$0xff]
        %v2810 = vld [vmem:[%s3 + $0x490] sm:$0xff]
        %v2811 = vld [vmem:[%s3 + $0x498] sm:$0xff]
        %v2812 = vld [vmem:[%s3 + $0x4a0] sm:$0xff]
        %v2813 = vld [vmem:[%s3 + $0x4a8] sm:$0xff]
        %v2814 = vld [vmem:[%s3 + $0x4b0] sm:$0xff]
        %v2815 = vld [vmem:[%s3 + $0x4b8] sm:$0xff]
        %v2816 = vld [vmem:[%s3 + $0x4c0] sm:$0xff]
        %v2817 = vld [vmem:[%s3 + $0x4c8] sm:$0xff]
        %v2818 = vld [vmem:[%s3 + $0x4d0] sm:$0xff]
        %v2819 = vld [vmem:[%s3 + $0x4d8] sm:$0xff]
        %v2820 = vld [vmem:[%s3 + $0x4e0] sm:$0xff]
        %v2821 = vld [vmem:[%s3 + $0x4e8] sm:$0xff]
        %v2822 = vld [vmem:[%s3 + $0x4f0] sm:$0xff]
        %v2823 = vld [vmem:[%s3 + $0x4f8] sm:$0xff]
        %v2824 = vld [vmem:[%s3 + $0x500] sm:$0xff]
        %v2825 = vld [vmem:[%s3 + $0x508] sm:$0xff]
        %v2826 = vld [vmem:[%s3 + $0x510] sm:$0xff]
        %v2827 = vld [vmem:[%s3 + $0x518] sm:$0xff]
        %v2828 = vld [vmem:[%s3 + $0x520] sm:$0xff]
        %v2829 = vld [vmem:[%s3 + $0x528] sm:$0xff]
        %v2830 = vld [vmem:[%s3 + $0x530] sm:$0xff]
        %v2831 = vld [vmem:[%s3 + $0x538] sm:$0xff]
        %v2832 = vld [vmem:[%s3 + $0x540] sm:$0xff]
        %v2833 = vld [vmem:[%s3 + $0x548] sm:$0xff]
        %v2834 = vld [vmem:[%s3 + $0x550] sm:$0xff]
        %v2835 = vld [vmem:[%s3 + $0x558] sm:$0xff]
        %v2836 = vld [vmem:[%s3 + $0x560] sm:$0xff]
        %v2837 = vld [vmem:[%s3 + $0x568] sm:$0xff]
        %v2838 = vld [vmem:[%s3 + $0x570] sm:$0xff]
        %v2839 = vld [vmem:[%s3 + $0x578] sm:$0xff]
        %v2840 = vld [vmem:[%s3 + $0x580] sm:$0xff]
        %v2841 = vld [vmem:[%s3 + $0x588] sm:$0xff]
        %v2842 = vld [vmem:[%s3 + $0x590] sm:$0xff]
        %v2843 = vld [vmem:[%s3 + $0x598] sm:$0xff]
        %v2844 = vld [vmem:[%s3 + $0x5a0] sm:$0xff]
        %v2845 = vld [vmem:[%s3 + $0x5a8] sm:$0xff]
        %v2846 = vld [vmem:[%s3 + $0x5b0] sm:$0xff]
        %v2847 = vld [vmem:[%s3 + $0x5b8] sm:$0xff]
        %v2848 = vld [vmem:[%s3 + $0x5c0] sm:$0xff]
        %v2849 = vld [vmem:[%s3 + $0x5c8] sm:$0xff]
        %v2850 = vld [vmem:[%s3 + $0x5d0] sm:$0xff]
        %v2851 = vld [vmem:[%s3 + $0x5d8] sm:$0xff]
        %v2852 = vld [vmem:[%s3 + $0x5e0] sm:$0xff]
        %v2853 = vld [vmem:[%s3 + $0x5e8] sm:$0xff]
        %v2854 = vld [vmem:[%s3 + $0x5f0] sm:$0xff]
        %v2855 = vld [vmem:[%s3 + $0x5f8] sm:$0xff]
        %v2856 = vld [vmem:[%s3 + $0x600] sm:$0xff]
        %v2857 = vld [vmem:[%s3 + $0x608] sm:$0xff]
        %v2858 = vld [vmem:[%s3 + $0x610] sm:$0xff]
        %v2859 = vld [vmem:[%s3 + $0x618] sm:$0xff]
        %v2860 = vld [vmem:[%s3 + $0x620] sm:$0xff]
        %v2861 = vld [vmem:[%s3 + $0x628] sm:$0xff]
        %v2862 = vld [vmem:[%s3 + $0x630] sm:$0xff]
        %v2863 = vld [vmem:[%s3 + $0x638] sm:$0xff]
        %v2864 = vld [vmem:[%s3 + $0x640] sm:$0xff]
        %v2865 = vld [vmem:[%s3 + $0x648] sm:$0xff]
        %v2866 = vld [vmem:[%s3 + $0x650] sm:$0xff]
        %v2867 = vld [vmem:[%s3 + $0x658] sm:$0xff]
        %v2868 = vld [vmem:[%s3 + $0x660] sm:$0xff]
        %v2869 = vld [vmem:[%s3 + $0x668] sm:$0xff]
        %v2870 = vld [vmem:[%s3 + $0x670] sm:$0xff]
        %v2871 = vld [vmem:[%s3 + $0x678] sm:$0xff]
        %v2872 = vld [vmem:[%s3 + $0x680] sm:$0xff]
        %v2873 = vld [vmem:[%s3 + $0x688] sm:$0xff]
        %v2874 = vld [vmem:[%s3 + $0x690] sm:$0xff]
        %v2875 = vld [vmem:[%s3 + $0x698] sm:$0xff]
        %v2876 = vld [vmem:[%s3 + $0x6a0] sm:$0xff]
        %v2877 = vld [vmem:[%s3 + $0x6a8] sm:$0xff]
        %v2878 = vld [vmem:[%s3 + $0x6b0] sm:$0xff]
        %v2879 = vld [vmem:[%s3 + $0x6b8] sm:$0xff]
        %v2880 = vld [vmem:[%s3 + $0x6c0] sm:$0xff]
        %v2881 = vld [vmem:[%s3 + $0x6c8] sm:$0xff]
        %v2882 = vld [vmem:[%s3 + $0x6d0] sm:$0xff]
        %v2883 = vld [vmem:[%s3 + $0x6d8] sm:$0xff]
        %v2884 = vld [vmem:[%s3 + $0x6e0] sm:$0xff]
        %v2885 = vld [vmem:[%s3 + $0x6e8] sm:$0xff]
        %v2886 = vld [vmem:[%s3 + $0x6f0] sm:$0xff]
        %v2887 = vld [vmem:[%s3 + $0x6f8] sm:$0xff]
        %v2888 = vld [vmem:[%s3 + $0x700] sm:$0xff]
        %v2889 = vld [vmem:[%s3 + $0x708] sm:$0xff]
        %v2890 = vld [vmem:[%s3 + $0x710] sm:$0xff]
        %v2891 = vld [vmem:[%s3 + $0x718] sm:$0xff]
        %v2892 = vld [vmem:[%s3 + $0x720] sm:$0xff]
        %v2893 = vld [vmem:[%s3 + $0x728] sm:$0xff]
        %v2894 = vld [vmem:[%s3 + $0x730] sm:$0xff]
        %v2895 = vld [vmem:[%s3 + $0x738] sm:$0xff]
        %v2896 = vld [vmem:[%s3 + $0x740] sm:$0xff]
        %v2897 = vld [vmem:[%s3 + $0x748] sm:$0xff]
        %v2898 = vld [vmem:[%s3 + $0x750] sm:$0xff]
        %v2899 = vld [vmem:[%s3 + $0x758] sm:$0xff]
        %v2900 = vld [vmem:[%s3 + $0x760] sm:$0xff]
        %v2901 = vld [vmem:[%s3 + $0x768] sm:$0xff]
        %v2902 = vld [vmem:[%s3 + $0x770] sm:$0xff]
        %v2903 = vld [vmem:[%s3 + $0x778] sm:$0xff]
        %v2904 = vld [vmem:[%s3 + $0x780] sm:$0xff]
        %v2905 = vld [vmem:[%s3 + $0x788] sm:$0xff]
        %v2906 = vld [vmem:[%s3 + $0x790] sm:$0xff]
        %v2907 = vld [vmem:[%s3 + $0x798] sm:$0xff]
        %v2908 = vld [vmem:[%s3 + $0x7a0] sm:$0xff]
        %v2909 = vld [vmem:[%s3 + $0x7a8] sm:$0xff]
        %v2910 = vld [vmem:[%s3 + $0x7b0] sm:$0xff]
        %v2911 = vld [vmem:[%s3 + $0x7b8] sm:$0xff]
        %v2912 = vld [vmem:[%s3 + $0x7c0] sm:$0xff]
        %v2913 = vld [vmem:[%s3 + $0x7c8] sm:$0xff]
        %v2914 = vld [vmem:[%s3 + $0x7d0] sm:$0xff]
        %v2915 = vld [vmem:[%s3 + $0x7d8] sm:$0xff]
        %v2916 = vld [vmem:[%s3 + $0x7e0] sm:$0xff]
        %v2917 = vld [vmem:[%s3 + $0x7e8] sm:$0xff]
        %v2918 = vld [vmem:[%s3 + $0x7f0] sm:$0xff]
        %v2919 = vld [vmem:[%s3 + $0x7f8] sm:$0xff]
        %v2920 = vld [vmem:[%s4] sm:$0xff]
        %v2922 = vlaneseq
        %v2923 = vshrl.u32 %v2922, 7
        %v2924 = vsub.s32 0, %v2923
        %v2925 = vrot.slane %v2920, %v2924
        %v2926 = vlaneseq
        %v2927 = vshrl.u32 %v2926, 7
        %v2928 = vsub.s32 1, %v2927
        %v2929 = vrot.slane %v2920, %v2928
        %v2930 = vlaneseq
        %v2931 = vshrl.u32 %v2930, 7
        %v2932 = vsub.s32 2, %v2931
        %v2933 = vrot.slane %v2920, %v2932
        %v2934 = vlaneseq
        %v2935 = vshrl.u32 %v2934, 7
        %v2936 = vsub.s32 3, %v2935
        %v2937 = vrot.slane %v2920, %v2936
        %v2938 = vlaneseq
        %v2939 = vshrl.u32 %v2938, 7
        %v2940 = vsub.s32 4, %v2939
        %v2941 = vrot.slane %v2920, %v2940
        %v2942 = vlaneseq
        %v2943 = vshrl.u32 %v2942, 7
        %v2944 = vsub.s32 5, %v2943
        %v2945 = vrot.slane %v2920, %v2944
        %v2946 = vlaneseq
        %v2947 = vshrl.u32 %v2946, 7
        %v2948 = vsub.s32 6, %v2947
        %v2949 = vrot.slane %v2920, %v2948
        %v2950 = vlaneseq
        %v2951 = vshrl.u32 %v2950, 7
        %v2952 = vsub.s32 7, %v2951
        %v2953 = vrot.slane %v2920, %v2952
        %v3218 = vunpack.c.l.b16 %v2664
        %v3219 = vunpack.c.h.b16 %v2664
        %v3220 = vunpack.c.l.b16 %v2665
        %v3221 = vunpack.c.h.b16 %v2665
        %v3222 = vunpack.c.l.b16 %v2666
        %v3223 = vunpack.c.h.b16 %v2666
        %v3224 = vunpack.c.l.b16 %v2667
        %v3225 = vunpack.c.h.b16 %v2667
        %v3226 = vunpack.c.l.b16 %v2668
        %v3227 = vunpack.c.h.b16 %v2668
        %v3228 = vunpack.c.l.b16 %v2669
        %v3229 = vunpack.c.h.b16 %v2669
        %v3230 = vunpack.c.l.b16 %v2670
        %v3231 = vunpack.c.h.b16 %v2670
        %v3232 = vunpack.c.l.b16 %v2671
        %v3233 = vunpack.c.h.b16 %v2671
        %v3234 = vunpack.c.l.b16 %v2672
        %v3235 = vunpack.c.h.b16 %v2672
        %v3236 = vunpack.c.l.b16 %v2673
        %v3237 = vunpack.c.h.b16 %v2673
        %v3238 = vunpack.c.l.b16 %v2674
        %v3239 = vunpack.c.h.b16 %v2674
        %v3240 = vunpack.c.l.b16 %v2675
        %v3241 = vunpack.c.h.b16 %v2675
        %v3242 = vunpack.c.l.b16 %v2676
        %v3243 = vunpack.c.h.b16 %v2676
        %v3244 = vunpack.c.l.b16 %v2677
        %v3245 = vunpack.c.h.b16 %v2677
        %v3246 = vunpack.c.l.b16 %v2678
        %v3247 = vunpack.c.h.b16 %v2678
        %v3248 = vunpack.c.l.b16 %v2679
        %v3249 = vunpack.c.h.b16 %v2679
        %v3250 = vunpack.c.l.b16 %v2680
        %v3251 = vunpack.c.h.b16 %v2680
        %v3252 = vunpack.c.l.b16 %v2681
        %v3253 = vunpack.c.h.b16 %v2681
        %v3254 = vunpack.c.l.b16 %v2682
        %v3255 = vunpack.c.h.b16 %v2682
        %v3256 = vunpack.c.l.b16 %v2683
        %v3257 = vunpack.c.h.b16 %v2683
        %v3258 = vunpack.c.l.b16 %v2684
        %v3259 = vunpack.c.h.b16 %v2684
        %v3260 = vunpack.c.l.b16 %v2685
        %v3261 = vunpack.c.h.b16 %v2685
        %v3262 = vunpack.c.l.b16 %v2686
        %v3263 = vunpack.c.h.b16 %v2686
        %v3264 = vunpack.c.l.b16 %v2687
        %v3265 = vunpack.c.h.b16 %v2687
        %v3266 = vunpack.c.l.b16 %v2688
        %v3267 = vunpack.c.h.b16 %v2688
        %v3268 = vunpack.c.l.b16 %v2689
        %v3269 = vunpack.c.h.b16 %v2689
        %v3270 = vunpack.c.l.b16 %v2690
        %v3271 = vunpack.c.h.b16 %v2690
        %v3272 = vunpack.c.l.b16 %v2691
        %v3273 = vunpack.c.h.b16 %v2691
        %v3274 = vunpack.c.l.b16 %v2692
        %v3275 = vunpack.c.h.b16 %v2692
        %v3276 = vunpack.c.l.b16 %v2693
        %v3277 = vunpack.c.h.b16 %v2693
        %v3278 = vunpack.c.l.b16 %v2694
        %v3279 = vunpack.c.h.b16 %v2694
        %v3280 = vunpack.c.l.b16 %v2695
        %v3281 = vunpack.c.h.b16 %v2695
        %v3282 = vunpack.c.l.b16 %v2696
        %v3283 = vunpack.c.h.b16 %v2696
        %v3284 = vunpack.c.l.b16 %v2697
        %v3285 = vunpack.c.h.b16 %v2697
        %v3286 = vunpack.c.l.b16 %v2698
        %v3287 = vunpack.c.h.b16 %v2698
        %v3288 = vunpack.c.l.b16 %v2699
        %v3289 = vunpack.c.h.b16 %v2699
        %v3290 = vunpack.c.l.b16 %v2700
        %v3291 = vunpack.c.h.b16 %v2700
        %v3292 = vunpack.c.l.b16 %v2701
        %v3293 = vunpack.c.h.b16 %v2701
        %v3294 = vunpack.c.l.b16 %v2702
        %v3295 = vunpack.c.h.b16 %v2702
        %v3296 = vunpack.c.l.b16 %v2703
        %v3297 = vunpack.c.h.b16 %v2703
        %v3298 = vunpack.c.l.b16 %v2704
        %v3299 = vunpack.c.h.b16 %v2704
        %v3300 = vunpack.c.l.b16 %v2705
        %v3301 = vunpack.c.h.b16 %v2705
        %v3302 = vunpack.c.l.b16 %v2706
        %v3303 = vunpack.c.h.b16 %v2706
        %v3304 = vunpack.c.l.b16 %v2707
        %v3305 = vunpack.c.h.b16 %v2707
        %v3306 = vunpack.c.l.b16 %v2708
        %v3307 = vunpack.c.h.b16 %v2708
        %v3308 = vunpack.c.l.b16 %v2709
        %v3309 = vunpack.c.h.b16 %v2709
        %v3310 = vunpack.c.l.b16 %v2710
        %v3311 = vunpack.c.h.b16 %v2710
        %v3312 = vunpack.c.l.b16 %v2711
        %v3313 = vunpack.c.h.b16 %v2711
        %v3314 = vunpack.c.l.b16 %v2712
        %v3315 = vunpack.c.h.b16 %v2712
        %v3316 = vunpack.c.l.b16 %v2713
        %v3317 = vunpack.c.h.b16 %v2713
        %v3318 = vunpack.c.l.b16 %v2714
        %v3319 = vunpack.c.h.b16 %v2714
        %v3320 = vunpack.c.l.b16 %v2715
        %v3321 = vunpack.c.h.b16 %v2715
        %v3322 = vunpack.c.l.b16 %v2716
        %v3323 = vunpack.c.h.b16 %v2716
        %v3324 = vunpack.c.l.b16 %v2717
        %v3325 = vunpack.c.h.b16 %v2717
        %v3326 = vunpack.c.l.b16 %v2718
        %v3327 = vunpack.c.h.b16 %v2718
        %v3328 = vunpack.c.l.b16 %v2719
        %v3329 = vunpack.c.h.b16 %v2719
        %v3330 = vunpack.c.l.b16 %v2720
        %v3331 = vunpack.c.h.b16 %v2720
        %v3332 = vunpack.c.l.b16 %v2721
        %v3333 = vunpack.c.h.b16 %v2721
        %v3334 = vunpack.c.l.b16 %v2722
        %v3335 = vunpack.c.h.b16 %v2722
        %v3336 = vunpack.c.l.b16 %v2723
        %v3337 = vunpack.c.h.b16 %v2723
        %v3338 = vunpack.c.l.b16 %v2724
        %v3339 = vunpack.c.h.b16 %v2724
        %v3340 = vunpack.c.l.b16 %v2725
        %v3341 = vunpack.c.h.b16 %v2725
        %v3342 = vunpack.c.l.b16 %v2726
        %v3343 = vunpack.c.h.b16 %v2726
        %v3344 = vunpack.c.l.b16 %v2727
        %v3345 = vunpack.c.h.b16 %v2727
        %v3346 = vunpack.c.l.b16 %v2728
        %v3347 = vunpack.c.h.b16 %v2728
        %v3348 = vunpack.c.l.b16 %v2729
        %v3349 = vunpack.c.h.b16 %v2729
        %v3350 = vunpack.c.l.b16 %v2730
        %v3351 = vunpack.c.h.b16 %v2730
        %v3352 = vunpack.c.l.b16 %v2731
        %v3353 = vunpack.c.h.b16 %v2731
        %v3354 = vunpack.c.l.b16 %v2732
        %v3355 = vunpack.c.h.b16 %v2732
        %v3356 = vunpack.c.l.b16 %v2733
        %v3357 = vunpack.c.h.b16 %v2733
        %v3358 = vunpack.c.l.b16 %v2734
        %v3359 = vunpack.c.h.b16 %v2734
        %v3360 = vunpack.c.l.b16 %v2735
        %v3361 = vunpack.c.h.b16 %v2735
        %v3362 = vunpack.c.l.b16 %v2736
        %v3363 = vunpack.c.h.b16 %v2736
        %v3364 = vunpack.c.l.b16 %v2737
        %v3365 = vunpack.c.h.b16 %v2737
        %v3366 = vunpack.c.l.b16 %v2738
        %v3367 = vunpack.c.h.b16 %v2738
        %v3368 = vunpack.c.l.b16 %v2739
        %v3369 = vunpack.c.h.b16 %v2739
        %v3370 = vunpack.c.l.b16 %v2740
        %v3371 = vunpack.c.h.b16 %v2740
        %v3372 = vunpack.c.l.b16 %v2741
        %v3373 = vunpack.c.h.b16 %v2741
        %v3374 = vunpack.c.l.b16 %v2742
        %v3375 = vunpack.c.h.b16 %v2742
        %v3376 = vunpack.c.l.b16 %v2743
        %v3377 = vunpack.c.h.b16 %v2743
        %v3378 = vunpack.c.l.b16 %v2744
        %v3379 = vunpack.c.h.b16 %v2744
        %v3380 = vunpack.c.l.b16 %v2745
        %v3381 = vunpack.c.h.b16 %v2745
        %v3382 = vunpack.c.l.b16 %v2746
        %v3383 = vunpack.c.h.b16 %v2746
        %v3384 = vunpack.c.l.b16 %v2747
        %v3385 = vunpack.c.h.b16 %v2747
        %v3386 = vunpack.c.l.b16 %v2748
        %v3387 = vunpack.c.h.b16 %v2748
        %v3388 = vunpack.c.l.b16 %v2749
        %v3389 = vunpack.c.h.b16 %v2749
        %v3390 = vunpack.c.l.b16 %v2750
        %v3391 = vunpack.c.h.b16 %v2750
        %v3392 = vunpack.c.l.b16 %v2751
        %v3393 = vunpack.c.h.b16 %v2751
        %v3394 = vunpack.c.l.b16 %v2752
        %v3395 = vunpack.c.h.b16 %v2752
        %v3396 = vunpack.c.l.b16 %v2753
        %v3397 = vunpack.c.h.b16 %v2753
        %v3398 = vunpack.c.l.b16 %v2754
        %v3399 = vunpack.c.h.b16 %v2754
        %v3400 = vunpack.c.l.b16 %v2755
        %v3401 = vunpack.c.h.b16 %v2755
        %v3402 = vunpack.c.l.b16 %v2756
        %v3403 = vunpack.c.h.b16 %v2756
        %v3404 = vunpack.c.l.b16 %v2757
        %v3405 = vunpack.c.h.b16 %v2757
        %v3406 = vunpack.c.l.b16 %v2758
        %v3407 = vunpack.c.h.b16 %v2758
        %v3408 = vunpack.c.l.b16 %v2759
        %v3409 = vunpack.c.h.b16 %v2759
        %v3410 = vunpack.c.l.b16 %v2760
        %v3411 = vunpack.c.h.b16 %v2760
        %v3412 = vunpack.c.l.b16 %v2761
        %v3413 = vunpack.c.h.b16 %v2761
        %v3414 = vunpack.c.l.b16 %v2762
        %v3415 = vunpack.c.h.b16 %v2762
        %v3416 = vunpack.c.l.b16 %v2763
        %v3417 = vunpack.c.h.b16 %v2763
        %v3418 = vunpack.c.l.b16 %v2764
        %v3419 = vunpack.c.h.b16 %v2764
        %v3420 = vunpack.c.l.b16 %v2765
        %v3421 = vunpack.c.h.b16 %v2765
        %v3422 = vunpack.c.l.b16 %v2766
        %v3423 = vunpack.c.h.b16 %v2766
        %v3424 = vunpack.c.l.b16 %v2767
        %v3425 = vunpack.c.h.b16 %v2767
        %v3426 = vunpack.c.l.b16 %v2768
        %v3427 = vunpack.c.h.b16 %v2768
        %v3428 = vunpack.c.l.b16 %v2769
        %v3429 = vunpack.c.h.b16 %v2769
        %v3430 = vunpack.c.l.b16 %v2770
        %v3431 = vunpack.c.h.b16 %v2770
        %v3432 = vunpack.c.l.b16 %v2771
        %v3433 = vunpack.c.h.b16 %v2771
        %v3434 = vunpack.c.l.b16 %v2772
        %v3435 = vunpack.c.h.b16 %v2772
        %v3436 = vunpack.c.l.b16 %v2773
        %v3437 = vunpack.c.h.b16 %v2773
        %v3438 = vunpack.c.l.b16 %v2774
        %v3439 = vunpack.c.h.b16 %v2774
        %v3440 = vunpack.c.l.b16 %v2775
        %v3441 = vunpack.c.h.b16 %v2775
        %v3442 = vunpack.c.l.b16 %v2776
        %v3443 = vunpack.c.h.b16 %v2776
        %v3444 = vunpack.c.l.b16 %v2777
        %v3445 = vunpack.c.h.b16 %v2777
        %v3446 = vunpack.c.l.b16 %v2778
        %v3447 = vunpack.c.h.b16 %v2778
        %v3448 = vunpack.c.l.b16 %v2779
        %v3449 = vunpack.c.h.b16 %v2779
        %v3450 = vunpack.c.l.b16 %v2780
        %v3451 = vunpack.c.h.b16 %v2780
        %v3452 = vunpack.c.l.b16 %v2781
        %v3453 = vunpack.c.h.b16 %v2781
        %v3454 = vunpack.c.l.b16 %v2782
        %v3455 = vunpack.c.h.b16 %v2782
        %v3456 = vunpack.c.l.b16 %v2783
        %v3457 = vunpack.c.h.b16 %v2783
        %v3458 = vunpack.c.l.b16 %v2784
        %v3459 = vunpack.c.h.b16 %v2784
        %v3460 = vunpack.c.l.b16 %v2785
        %v3461 = vunpack.c.h.b16 %v2785
        %v3462 = vunpack.c.l.b16 %v2786
        %v3463 = vunpack.c.h.b16 %v2786
        %v3464 = vunpack.c.l.b16 %v2787
        %v3465 = vunpack.c.h.b16 %v2787
        %v3466 = vunpack.c.l.b16 %v2788
        %v3467 = vunpack.c.h.b16 %v2788
        %v3468 = vunpack.c.l.b16 %v2789
        %v3469 = vunpack.c.h.b16 %v2789
        %v3470 = vunpack.c.l.b16 %v2790
        %v3471 = vunpack.c.h.b16 %v2790
        %v3472 = vunpack.c.l.b16 %v2791
        %v3473 = vunpack.c.h.b16 %v2791
        %v3474 = vunpack.c.l.b16 %v2792
        %v3475 = vunpack.c.h.b16 %v2792
        %v3476 = vunpack.c.l.b16 %v2793
        %v3477 = vunpack.c.h.b16 %v2793
        %v3478 = vunpack.c.l.b16 %v2794
        %v3479 = vunpack.c.h.b16 %v2794
        %v3480 = vunpack.c.l.b16 %v2795
        %v3481 = vunpack.c.h.b16 %v2795
        %v3482 = vunpack.c.l.b16 %v2796
        %v3483 = vunpack.c.h.b16 %v2796
        %v3484 = vunpack.c.l.b16 %v2797
        %v3485 = vunpack.c.h.b16 %v2797
        %v3486 = vunpack.c.l.b16 %v2798
        %v3487 = vunpack.c.h.b16 %v2798
        %v3488 = vunpack.c.l.b16 %v2799
        %v3489 = vunpack.c.h.b16 %v2799
        %v3490 = vunpack.c.l.b16 %v2800
        %v3491 = vunpack.c.h.b16 %v2800
        %v3492 = vunpack.c.l.b16 %v2801
        %v3493 = vunpack.c.h.b16 %v2801
        %v3494 = vunpack.c.l.b16 %v2802
        %v3495 = vunpack.c.h.b16 %v2802
        %v3496 = vunpack.c.l.b16 %v2803
        %v3497 = vunpack.c.h.b16 %v2803
        %v3498 = vunpack.c.l.b16 %v2804
        %v3499 = vunpack.c.h.b16 %v2804
        %v3500 = vunpack.c.l.b16 %v2805
        %v3501 = vunpack.c.h.b16 %v2805
        %v3502 = vunpack.c.l.b16 %v2806
        %v3503 = vunpack.c.h.b16 %v2806
        %v3504 = vunpack.c.l.b16 %v2807
        %v3505 = vunpack.c.h.b16 %v2807
        %v3506 = vunpack.c.l.b16 %v2808
        %v3507 = vunpack.c.h.b16 %v2808
        %v3508 = vunpack.c.l.b16 %v2809
        %v3509 = vunpack.c.h.b16 %v2809
        %v3510 = vunpack.c.l.b16 %v2810
        %v3511 = vunpack.c.h.b16 %v2810
        %v3512 = vunpack.c.l.b16 %v2811
        %v3513 = vunpack.c.h.b16 %v2811
        %v3514 = vunpack.c.l.b16 %v2812
        %v3515 = vunpack.c.h.b16 %v2812
        %v3516 = vunpack.c.l.b16 %v2813
        %v3517 = vunpack.c.h.b16 %v2813
        %v3518 = vunpack.c.l.b16 %v2814
        %v3519 = vunpack.c.h.b16 %v2814
        %v3520 = vunpack.c.l.b16 %v2815
        %v3521 = vunpack.c.h.b16 %v2815
        %v3522 = vunpack.c.l.b16 %v2816
        %v3523 = vunpack.c.h.b16 %v2816
        %v3524 = vunpack.c.l.b16 %v2817
        %v3525 = vunpack.c.h.b16 %v2817
        %v3526 = vunpack.c.l.b16 %v2818
        %v3527 = vunpack.c.h.b16 %v2818
        %v3528 = vunpack.c.l.b16 %v2819
        %v3529 = vunpack.c.h.b16 %v2819
        %v3530 = vunpack.c.l.b16 %v2820
        %v3531 = vunpack.c.h.b16 %v2820
        %v3532 = vunpack.c.l.b16 %v2821
        %v3533 = vunpack.c.h.b16 %v2821
        %v3534 = vunpack.c.l.b16 %v2822
        %v3535 = vunpack.c.h.b16 %v2822
        %v3536 = vunpack.c.l.b16 %v2823
        %v3537 = vunpack.c.h.b16 %v2823
        %v3538 = vunpack.c.l.b16 %v2824
        %v3539 = vunpack.c.h.b16 %v2824
        %v3540 = vunpack.c.l.b16 %v2825
        %v3541 = vunpack.c.h.b16 %v2825
        %v3542 = vunpack.c.l.b16 %v2826
        %v3543 = vunpack.c.h.b16 %v2826
        %v3544 = vunpack.c.l.b16 %v2827
        %v3545 = vunpack.c.h.b16 %v2827
        %v3546 = vunpack.c.l.b16 %v2828
        %v3547 = vunpack.c.h.b16 %v2828
        %v3548 = vunpack.c.l.b16 %v2829
        %v3549 = vunpack.c.h.b16 %v2829
        %v3550 = vunpack.c.l.b16 %v2830
        %v3551 = vunpack.c.h.b16 %v2830
        %v3552 = vunpack.c.l.b16 %v2831
        %v3553 = vunpack.c.h.b16 %v2831
        %v3554 = vunpack.c.l.b16 %v2832
        %v3555 = vunpack.c.h.b16 %v2832
        %v3556 = vunpack.c.l.b16 %v2833
        %v3557 = vunpack.c.h.b16 %v2833
        %v3558 = vunpack.c.l.b16 %v2834
        %v3559 = vunpack.c.h.b16 %v2834
        %v3560 = vunpack.c.l.b16 %v2835
        %v3561 = vunpack.c.h.b16 %v2835
        %v3562 = vunpack.c.l.b16 %v2836
        %v3563 = vunpack.c.h.b16 %v2836
        %v3564 = vunpack.c.l.b16 %v2837
        %v3565 = vunpack.c.h.b16 %v2837
        %v3566 = vunpack.c.l.b16 %v2838
        %v3567 = vunpack.c.h.b16 %v2838
        %v3568 = vunpack.c.l.b16 %v2839
        %v3569 = vunpack.c.h.b16 %v2839
        %v3570 = vunpack.c.l.b16 %v2840
        %v3571 = vunpack.c.h.b16 %v2840
        %v3572 = vunpack.c.l.b16 %v2841
        %v3573 = vunpack.c.h.b16 %v2841
        %v3574 = vunpack.c.l.b16 %v2842
        %v3575 = vunpack.c.h.b16 %v2842
        %v3576 = vunpack.c.l.b16 %v2843
        %v3577 = vunpack.c.h.b16 %v2843
        %v3578 = vunpack.c.l.b16 %v2844
        %v3579 = vunpack.c.h.b16 %v2844
        %v3580 = vunpack.c.l.b16 %v2845
        %v3581 = vunpack.c.h.b16 %v2845
        %v3582 = vunpack.c.l.b16 %v2846
        %v3583 = vunpack.c.h.b16 %v2846
        %v3584 = vunpack.c.l.b16 %v2847
        %v3585 = vunpack.c.h.b16 %v2847
        %v3586 = vunpack.c.l.b16 %v2848
        %v3587 = vunpack.c.h.b16 %v2848
        %v3588 = vunpack.c.l.b16 %v2849
        %v3589 = vunpack.c.h.b16 %v2849
        %v3590 = vunpack.c.l.b16 %v2850
        %v3591 = vunpack.c.h.b16 %v2850
        %v3592 = vunpack.c.l.b16 %v2851
        %v3593 = vunpack.c.h.b16 %v2851
        %v3594 = vunpack.c.l.b16 %v2852
        %v3595 = vunpack.c.h.b16 %v2852
        %v3596 = vunpack.c.l.b16 %v2853
        %v3597 = vunpack.c.h.b16 %v2853
        %v3598 = vunpack.c.l.b16 %v2854
        %v3599 = vunpack.c.h.b16 %v2854
        %v3600 = vunpack.c.l.b16 %v2855
        %v3601 = vunpack.c.h.b16 %v2855
        %v3602 = vunpack.c.l.b16 %v2856
        %v3603 = vunpack.c.h.b16 %v2856
        %v3604 = vunpack.c.l.b16 %v2857
        %v3605 = vunpack.c.h.b16 %v2857
        %v3606 = vunpack.c.l.b16 %v2858
        %v3607 = vunpack.c.h.b16 %v2858
        %v3608 = vunpack.c.l.b16 %v2859
        %v3609 = vunpack.c.h.b16 %v2859
        %v3610 = vunpack.c.l.b16 %v2860
        %v3611 = vunpack.c.h.b16 %v2860
        %v3612 = vunpack.c.l.b16 %v2861
        %v3613 = vunpack.c.h.b16 %v2861
        %v3614 = vunpack.c.l.b16 %v2862
        %v3615 = vunpack.c.h.b16 %v2862
        %v3616 = vunpack.c.l.b16 %v2863
        %v3617 = vunpack.c.h.b16 %v2863
        %v3618 = vunpack.c.l.b16 %v2864
        %v3619 = vunpack.c.h.b16 %v2864
        %v3620 = vunpack.c.l.b16 %v2865
        %v3621 = vunpack.c.h.b16 %v2865
        %v3622 = vunpack.c.l.b16 %v2866
        %v3623 = vunpack.c.h.b16 %v2866
        %v3624 = vunpack.c.l.b16 %v2867
        %v3625 = vunpack.c.h.b16 %v2867
        %v3626 = vunpack.c.l.b16 %v2868
        %v3627 = vunpack.c.h.b16 %v2868
        %v3628 = vunpack.c.l.b16 %v2869
        %v3629 = vunpack.c.h.b16 %v2869
        %v3630 = vunpack.c.l.b16 %v2870
        %v3631 = vunpack.c.h.b16 %v2870
        %v3632 = vunpack.c.l.b16 %v2871
        %v3633 = vunpack.c.h.b16 %v2871
        %v3634 = vunpack.c.l.b16 %v2872
        %v3635 = vunpack.c.h.b16 %v2872
        %v3636 = vunpack.c.l.b16 %v2873
        %v3637 = vunpack.c.h.b16 %v2873
        %v3638 = vunpack.c.l.b16 %v2874
        %v3639 = vunpack.c.h.b16 %v2874
        %v3640 = vunpack.c.l.b16 %v2875
        %v3641 = vunpack.c.h.b16 %v2875
        %v3642 = vunpack.c.l.b16 %v2876
        %v3643 = vunpack.c.h.b16 %v2876
        %v3644 = vunpack.c.l.b16 %v2877
        %v3645 = vunpack.c.h.b16 %v2877
        %v3646 = vunpack.c.l.b16 %v2878
        %v3647 = vunpack.c.h.b16 %v2878
        %v3648 = vunpack.c.l.b16 %v2879
        %v3649 = vunpack.c.h.b16 %v2879
        %v3650 = vunpack.c.l.b16 %v2880
        %v3651 = vunpack.c.h.b16 %v2880
        %v3652 = vunpack.c.l.b16 %v2881
        %v3653 = vunpack.c.h.b16 %v2881
        %v3654 = vunpack.c.l.b16 %v2882
        %v3655 = vunpack.c.h.b16 %v2882
        %v3656 = vunpack.c.l.b16 %v2883
        %v3657 = vunpack.c.h.b16 %v2883
        %v3658 = vunpack.c.l.b16 %v2884
        %v3659 = vunpack.c.h.b16 %v2884
        %v3660 = vunpack.c.l.b16 %v2885
        %v3661 = vunpack.c.h.b16 %v2885
        %v3662 = vunpack.c.l.b16 %v2886
        %v3663 = vunpack.c.h.b16 %v2886
        %v3664 = vunpack.c.l.b16 %v2887
        %v3665 = vunpack.c.h.b16 %v2887
        %v3666 = vunpack.c.l.b16 %v2888
        %v3667 = vunpack.c.h.b16 %v2888
        %v3668 = vunpack.c.l.b16 %v2889
        %v3669 = vunpack.c.h.b16 %v2889
        %v3670 = vunpack.c.l.b16 %v2890
        %v3671 = vunpack.c.h.b16 %v2890
        %v3672 = vunpack.c.l.b16 %v2891
        %v3673 = vunpack.c.h.b16 %v2891
        %v3674 = vunpack.c.l.b16 %v2892
        %v3675 = vunpack.c.h.b16 %v2892
        %v3676 = vunpack.c.l.b16 %v2893
        %v3677 = vunpack.c.h.b16 %v2893
        %v3678 = vunpack.c.l.b16 %v2894
        %v3679 = vunpack.c.h.b16 %v2894
        %v3680 = vunpack.c.l.b16 %v2895
        %v3681 = vunpack.c.h.b16 %v2895
        %v3682 = vunpack.c.l.b16 %v2896
        %v3683 = vunpack.c.h.b16 %v2896
        %v3684 = vunpack.c.l.b16 %v2897
        %v3685 = vunpack.c.h.b16 %v2897
        %v3686 = vunpack.c.l.b16 %v2898
        %v3687 = vunpack.c.h.b16 %v2898
        %v3688 = vunpack.c.l.b16 %v2899
        %v3689 = vunpack.c.h.b16 %v2899
        %v3690 = vunpack.c.l.b16 %v2900
        %v3691 = vunpack.c.h.b16 %v2900
        %v3692 = vunpack.c.l.b16 %v2901
        %v3693 = vunpack.c.h.b16 %v2901
        %v3694 = vunpack.c.l.b16 %v2902
        %v3695 = vunpack.c.h.b16 %v2902
        %v3696 = vunpack.c.l.b16 %v2903
        %v3697 = vunpack.c.h.b16 %v2903
        %v3698 = vunpack.c.l.b16 %v2904
        %v3699 = vunpack.c.h.b16 %v2904
        %v3700 = vunpack.c.l.b16 %v2905
        %v3701 = vunpack.c.h.b16 %v2905
        %v3702 = vunpack.c.l.b16 %v2906
        %v3703 = vunpack.c.h.b16 %v2906
        %v3704 = vunpack.c.l.b16 %v2907
        %v3705 = vunpack.c.h.b16 %v2907
        %v3706 = vunpack.c.l.b16 %v2908
        %v3707 = vunpack.c.h.b16 %v2908
        %v3708 = vunpack.c.l.b16 %v2909
        %v3709 = vunpack.c.h.b16 %v2909
        %v3710 = vunpack.c.l.b16 %v2910
        %v3711 = vunpack.c.h.b16 %v2910
        %v3712 = vunpack.c.l.b16 %v2911
        %v3713 = vunpack.c.h.b16 %v2911
        %v3714 = vunpack.c.l.b16 %v2912
        %v3715 = vunpack.c.h.b16 %v2912
        %v3716 = vunpack.c.l.b16 %v2913
        %v3717 = vunpack.c.h.b16 %v2913
        %v3718 = vunpack.c.l.b16 %v2914
        %v3719 = vunpack.c.h.b16 %v2914
        %v3720 = vunpack.c.l.b16 %v2915
        %v3721 = vunpack.c.h.b16 %v2915
        %v3722 = vunpack.c.l.b16 %v2916
        %v3723 = vunpack.c.h.b16 %v2916
        %v3724 = vunpack.c.l.b16 %v2917
        %v3725 = vunpack.c.h.b16 %v2917
        %v3726 = vunpack.c.l.b16 %v2918
        %v3727 = vunpack.c.h.b16 %v2918
        %v3728 = vunpack.c.l.b16 %v2919
        %v3729 = vunpack.c.h.b16 %v2919
        %v3730 = vpack.c.b16 %v3226, %v3218
        %v3731 = vpack.c.b16 %v3227, %v3219
        %v3732 = vpack.c.b16 %v3228, %v3220
        %v3733 = vpack.c.b16 %v3229, %v3221
        %v3734 = vpack.c.b16 %v3230, %v3222
        %v3735 = vpack.c.b16 %v3231, %v3223
        %v3736 = vpack.c.b16 %v3232, %v3224
        %v3737 = vpack.c.b16 %v3233, %v3225
        %v3738 = vpack.c.b16 %v3242, %v3234
        %v3739 = vpack.c.b16 %v3243, %v3235
        %v3740 = vpack.c.b16 %v3244, %v3236
        %v3741 = vpack.c.b16 %v3245, %v3237
        %v3742 = vpack.c.b16 %v3246, %v3238
        %v3743 = vpack.c.b16 %v3247, %v3239
        %v3744 = vpack.c.b16 %v3248, %v3240
        %v3745 = vpack.c.b16 %v3249, %v3241
        %v3746 = vpack.c.b16 %v3258, %v3250
        %v3747 = vpack.c.b16 %v3259, %v3251
        %v3748 = vpack.c.b16 %v3260, %v3252
        %v3749 = vpack.c.b16 %v3261, %v3253
        %v3750 = vpack.c.b16 %v3262, %v3254
        %v3751 = vpack.c.b16 %v3263, %v3255
        %v3752 = vpack.c.b16 %v3264, %v3256
        %v3753 = vpack.c.b16 %v3265, %v3257
        %v3754 = vpack.c.b16 %v3274, %v3266
        %v3755 = vpack.c.b16 %v3275, %v3267
        %v3756 = vpack.c.b16 %v3276, %v3268
        %v3757 = vpack.c.b16 %v3277, %v3269
        %v3758 = vpack.c.b16 %v3278, %v3270
        %v3759 = vpack.c.b16 %v3279, %v3271
        %v3760 = vpack.c.b16 %v3280, %v3272
        %v3761 = vpack.c.b16 %v3281, %v3273
        %v3762 = vpack.c.b16 %v3290, %v3282
        %v3763 = vpack.c.b16 %v3291, %v3283
        %v3764 = vpack.c.b16 %v3292, %v3284
        %v3765 = vpack.c.b16 %v3293, %v3285
        %v3766 = vpack.c.b16 %v3294, %v3286
        %v3767 = vpack.c.b16 %v3295, %v3287
        %v3768 = vpack.c.b16 %v3296, %v3288
        %v3769 = vpack.c.b16 %v3297, %v3289
        %v3770 = vpack.c.b16 %v3306, %v3298
        %v3771 = vpack.c.b16 %v3307, %v3299
        %v3772 = vpack.c.b16 %v3308, %v3300
        %v3773 = vpack.c.b16 %v3309, %v3301
        %v3774 = vpack.c.b16 %v3310, %v3302
        %v3775 = vpack.c.b16 %v3311, %v3303
        %v3776 = vpack.c.b16 %v3312, %v3304
        %v3777 = vpack.c.b16 %v3313, %v3305
        %v3778 = vpack.c.b16 %v3322, %v3314
        %v3779 = vpack.c.b16 %v3323, %v3315
        %v3780 = vpack.c.b16 %v3324, %v3316
        %v3781 = vpack.c.b16 %v3325, %v3317
        %v3782 = vpack.c.b16 %v3326, %v3318
        %v3783 = vpack.c.b16 %v3327, %v3319
        %v3784 = vpack.c.b16 %v3328, %v3320
        %v3785 = vpack.c.b16 %v3329, %v3321
        %v3786 = vpack.c.b16 %v3338, %v3330
        %v3787 = vpack.c.b16 %v3339, %v3331
        %v3788 = vpack.c.b16 %v3340, %v3332
        %v3789 = vpack.c.b16 %v3341, %v3333
        %v3790 = vpack.c.b16 %v3342, %v3334
        %v3791 = vpack.c.b16 %v3343, %v3335
        %v3792 = vpack.c.b16 %v3344, %v3336
        %v3793 = vpack.c.b16 %v3345, %v3337
        %v3794 = vpack.c.b16 %v3354, %v3346
        %v3795 = vpack.c.b16 %v3355, %v3347
        %v3796 = vpack.c.b16 %v3356, %v3348
        %v3797 = vpack.c.b16 %v3357, %v3349
        %v3798 = vpack.c.b16 %v3358, %v3350
        %v3799 = vpack.c.b16 %v3359, %v3351
        %v3800 = vpack.c.b16 %v3360, %v3352
        %v3801 = vpack.c.b16 %v3361, %v3353
        %v3802 = vpack.c.b16 %v3370, %v3362
        %v3803 = vpack.c.b16 %v3371, %v3363
        %v3804 = vpack.c.b16 %v3372, %v3364
        %v3805 = vpack.c.b16 %v3373, %v3365
        %v3806 = vpack.c.b16 %v3374, %v3366
        %v3807 = vpack.c.b16 %v3375, %v3367
        %v3808 = vpack.c.b16 %v3376, %v3368
        %v3809 = vpack.c.b16 %v3377, %v3369
        %v3810 = vpack.c.b16 %v3386, %v3378
        %v3811 = vpack.c.b16 %v3387, %v3379
        %v3812 = vpack.c.b16 %v3388, %v3380
        %v3813 = vpack.c.b16 %v3389, %v3381
        %v3814 = vpack.c.b16 %v3390, %v3382
        %v3815 = vpack.c.b16 %v3391, %v3383
        %v3816 = vpack.c.b16 %v3392, %v3384
        %v3817 = vpack.c.b16 %v3393, %v3385
        %v3818 = vpack.c.b16 %v3402, %v3394
        %v3819 = vpack.c.b16 %v3403, %v3395
        %v3820 = vpack.c.b16 %v3404, %v3396
        %v3821 = vpack.c.b16 %v3405, %v3397
        %v3822 = vpack.c.b16 %v3406, %v3398
        %v3823 = vpack.c.b16 %v3407, %v3399
        %v3824 = vpack.c.b16 %v3408, %v3400
        %v3825 = vpack.c.b16 %v3409, %v3401
        %v3826 = vpack.c.b16 %v3418, %v3410
        %v3827 = vpack.c.b16 %v3419, %v3411
        %v3828 = vpack.c.b16 %v3420, %v3412
        %v3829 = vpack.c.b16 %v3421, %v3413
        %v3830 = vpack.c.b16 %v3422, %v3414
        %v3831 = vpack.c.b16 %v3423, %v3415
        %v3832 = vpack.c.b16 %v3424, %v3416
        %v3833 = vpack.c.b16 %v3425, %v3417
        %v3834 = vpack.c.b16 %v3434, %v3426
        %v3835 = vpack.c.b16 %v3435, %v3427
        %v3836 = vpack.c.b16 %v3436, %v3428
        %v3837 = vpack.c.b16 %v3437, %v3429
        %v3838 = vpack.c.b16 %v3438, %v3430
        %v3839 = vpack.c.b16 %v3439, %v3431
        %v3840 = vpack.c.b16 %v3440, %v3432
        %v3841 = vpack.c.b16 %v3441, %v3433
        %v3842 = vpack.c.b16 %v3450, %v3442
        %v3843 = vpack.c.b16 %v3451, %v3443
        %v3844 = vpack.c.b16 %v3452, %v3444
        %v3845 = vpack.c.b16 %v3453, %v3445
        %v3846 = vpack.c.b16 %v3454, %v3446
        %v3847 = vpack.c.b16 %v3455, %v3447
        %v3848 = vpack.c.b16 %v3456, %v3448
        %v3849 = vpack.c.b16 %v3457, %v3449
        %v3850 = vpack.c.b16 %v3466, %v3458
        %v3851 = vpack.c.b16 %v3467, %v3459
        %v3852 = vpack.c.b16 %v3468, %v3460
        %v3853 = vpack.c.b16 %v3469, %v3461
        %v3854 = vpack.c.b16 %v3470, %v3462
        %v3855 = vpack.c.b16 %v3471, %v3463
        %v3856 = vpack.c.b16 %v3472, %v3464
        %v3857 = vpack.c.b16 %v3473, %v3465
        %v3858 = vpack.c.b16 %v3482, %v3474
        %v3859 = vpack.c.b16 %v3483, %v3475
        %v3860 = vpack.c.b16 %v3484, %v3476
        %v3861 = vpack.c.b16 %v3485, %v3477
        %v3862 = vpack.c.b16 %v3486, %v3478
        %v3863 = vpack.c.b16 %v3487, %v3479
        %v3864 = vpack.c.b16 %v3488, %v3480
        %v3865 = vpack.c.b16 %v3489, %v3481
        %v3866 = vpack.c.b16 %v3498, %v3490
        %v3867 = vpack.c.b16 %v3499, %v3491
        %v3868 = vpack.c.b16 %v3500, %v3492
        %v3869 = vpack.c.b16 %v3501, %v3493
        %v3870 = vpack.c.b16 %v3502, %v3494
        %v3871 = vpack.c.b16 %v3503, %v3495
        %v3872 = vpack.c.b16 %v3504, %v3496
        %v3873 = vpack.c.b16 %v3505, %v3497
        %v3874 = vpack.c.b16 %v3514, %v3506
        %v3875 = vpack.c.b16 %v3515, %v3507
        %v3876 = vpack.c.b16 %v3516, %v3508
        %v3877 = vpack.c.b16 %v3517, %v3509
        %v3878 = vpack.c.b16 %v3518, %v3510
        %v3879 = vpack.c.b16 %v3519, %v3511
        %v3880 = vpack.c.b16 %v3520, %v3512
        %v3881 = vpack.c.b16 %v3521, %v3513
        %v3882 = vpack.c.b16 %v3530, %v3522
        %v3883 = vpack.c.b16 %v3531, %v3523
        %v3884 = vpack.c.b16 %v3532, %v3524
        %v3885 = vpack.c.b16 %v3533, %v3525
        %v3886 = vpack.c.b16 %v3534, %v3526
        %v3887 = vpack.c.b16 %v3535, %v3527
        %v3888 = vpack.c.b16 %v3536, %v3528
        %v3889 = vpack.c.b16 %v3537, %v3529
        %v3890 = vpack.c.b16 %v3546, %v3538
        %v3891 = vpack.c.b16 %v3547, %v3539
        %v3892 = vpack.c.b16 %v3548, %v3540
        %v3893 = vpack.c.b16 %v3549, %v3541
        %v3894 = vpack.c.b16 %v3550, %v3542
        %v3895 = vpack.c.b16 %v3551, %v3543
        %v3896 = vpack.c.b16 %v3552, %v3544
        %v3897 = vpack.c.b16 %v3553, %v3545
        %v3898 = vpack.c.b16 %v3562, %v3554
        %v3899 = vpack.c.b16 %v3563, %v3555
        %v3900 = vpack.c.b16 %v3564, %v3556
        %v3901 = vpack.c.b16 %v3565, %v3557
        %v3902 = vpack.c.b16 %v3566, %v3558
        %v3903 = vpack.c.b16 %v3567, %v3559
        %v3904 = vpack.c.b16 %v3568, %v3560
        %v3905 = vpack.c.b16 %v3569, %v3561
        %v3906 = vpack.c.b16 %v3578, %v3570
        %v3907 = vpack.c.b16 %v3579, %v3571
        %v3908 = vpack.c.b16 %v3580, %v3572
        %v3909 = vpack.c.b16 %v3581, %v3573
        %v3910 = vpack.c.b16 %v3582, %v3574
        %v3911 = vpack.c.b16 %v3583, %v3575
        %v3912 = vpack.c.b16 %v3584, %v3576
        %v3913 = vpack.c.b16 %v3585, %v3577
        %v3914 = vpack.c.b16 %v3594, %v3586
        %v3915 = vpack.c.b16 %v3595, %v3587
        %v3916 = vpack.c.b16 %v3596, %v3588
        %v3917 = vpack.c.b16 %v3597, %v3589
        %v3918 = vpack.c.b16 %v3598, %v3590
        %v3919 = vpack.c.b16 %v3599, %v3591
        %v3920 = vpack.c.b16 %v3600, %v3592
        %v3921 = vpack.c.b16 %v3601, %v3593
        %v3922 = vpack.c.b16 %v3610, %v3602
        %v3923 = vpack.c.b16 %v3611, %v3603
        %v3924 = vpack.c.b16 %v3612, %v3604
        %v3925 = vpack.c.b16 %v3613, %v3605
        %v3926 = vpack.c.b16 %v3614, %v3606
        %v3927 = vpack.c.b16 %v3615, %v3607
        %v3928 = vpack.c.b16 %v3616, %v3608
        %v3929 = vpack.c.b16 %v3617, %v3609
        %v3930 = vpack.c.b16 %v3626, %v3618
        %v3931 = vpack.c.b16 %v3627, %v3619
        %v3932 = vpack.c.b16 %v3628, %v3620
        %v3933 = vpack.c.b16 %v3629, %v3621
        %v3934 = vpack.c.b16 %v3630, %v3622
        %v3935 = vpack.c.b16 %v3631, %v3623
        %v3936 = vpack.c.b16 %v3632, %v3624
        %v3937 = vpack.c.b16 %v3633, %v3625
        %v3938 = vpack.c.b16 %v3642, %v3634
        %v3939 = vpack.c.b16 %v3643, %v3635
        %v3940 = vpack.c.b16 %v3644, %v3636
        %v3941 = vpack.c.b16 %v3645, %v3637
        %v3942 = vpack.c.b16 %v3646, %v3638
        %v3943 = vpack.c.b16 %v3647, %v3639
        %v3944 = vpack.c.b16 %v3648, %v3640
        %v3945 = vpack.c.b16 %v3649, %v3641
        %v3946 = vpack.c.b16 %v3658, %v3650
        %v3947 = vpack.c.b16 %v3659, %v3651
        %v3948 = vpack.c.b16 %v3660, %v3652
        %v3949 = vpack.c.b16 %v3661, %v3653
        %v3950 = vpack.c.b16 %v3662, %v3654
        %v3951 = vpack.c.b16 %v3663, %v3655
        %v3952 = vpack.c.b16 %v3664, %v3656
        %v3953 = vpack.c.b16 %v3665, %v3657
        %v3954 = vpack.c.b16 %v3674, %v3666
        %v3955 = vpack.c.b16 %v3675, %v3667
        %v3956 = vpack.c.b16 %v3676, %v3668
        %v3957 = vpack.c.b16 %v3677, %v3669
        %v3958 = vpack.c.b16 %v3678, %v3670
        %v3959 = vpack.c.b16 %v3679, %v3671
        %v3960 = vpack.c.b16 %v3680, %v3672
        %v3961 = vpack.c.b16 %v3681, %v3673
        %v3962 = vpack.c.b16 %v3690, %v3682
        %v3963 = vpack.c.b16 %v3691, %v3683
        %v3964 = vpack.c.b16 %v3692, %v3684
        %v3965 = vpack.c.b16 %v3693, %v3685
        %v3966 = vpack.c.b16 %v3694, %v3686
        %v3967 = vpack.c.b16 %v3695, %v3687
        %v3968 = vpack.c.b16 %v3696, %v3688
        %v3969 = vpack.c.b16 %v3697, %v3689
        %v3970 = vpack.c.b16 %v3706, %v3698
        %v3971 = vpack.c.b16 %v3707, %v3699
        %v3972 = vpack.c.b16 %v3708, %v3700
        %v3973 = vpack.c.b16 %v3709, %v3701
        %v3974 = vpack.c.b16 %v3710, %v3702
        %v3975 = vpack.c.b16 %v3711, %v3703
        %v3976 = vpack.c.b16 %v3712, %v3704
        %v3977 = vpack.c.b16 %v3713, %v3705
        %v3978 = vpack.c.b16 %v3722, %v3714
        %v3979 = vpack.c.b16 %v3723, %v3715
        %v3980 = vpack.c.b16 %v3724, %v3716
        %v3981 = vpack.c.b16 %v3725, %v3717
        %v3982 = vpack.c.b16 %v3726, %v3718
        %v3983 = vpack.c.b16 %v3727, %v3719
        %v3984 = vpack.c.b16 %v3728, %v3720
        %v3985 = vpack.c.b16 %v3729, %v3721
        %4242 = vmatprep.subr.bf16.mxu0 %v3731
        %4243 = vmatpush1.bf16.msra.mxu0 %v3730
        %4244 = vmatprep.subr.bf16.mxu0 %v3739
        %4245 = vmatpush1.bf16.msra.mxu0 %v3738
        %4246 = vmatprep.subr.bf16.mxu0 %v3747
        %4247 = vmatpush1.bf16.msra.mxu0 %v3746
        %4248 = vmatprep.subr.bf16.mxu0 %v3755
        %4249 = vmatpush1.bf16.msra.mxu0 %v3754
        %4250 = vmatprep.subr.bf16.mxu0 %v3763
        %4251 = vmatpush1.bf16.msra.mxu0 %v3762
        %4252 = vmatprep.subr.bf16.mxu0 %v3771
        %4253 = vmatpush1.bf16.msra.mxu0 %v3770
        %4254 = vmatprep.subr.bf16.mxu0 %v3779
        %4255 = vmatpush1.bf16.msra.mxu0 %v3778
        %4256 = vmatprep.subr.bf16.mxu0 %v3787
        %4257 = vmatpush1.bf16.msra.mxu0 %v3786
        %4258 = vmatprep.subr.bf16.mxu0 %v3795
        %4259 = vmatpush1.bf16.msra.mxu0 %v3794
        %4260 = vmatprep.subr.bf16.mxu0 %v3803
        %4261 = vmatpush1.bf16.msra.mxu0 %v3802
        %4262 = vmatprep.subr.bf16.mxu0 %v3811
        %4263 = vmatpush1.bf16.msra.mxu0 %v3810
        %4264 = vmatprep.subr.bf16.mxu0 %v3819
        %4265 = vmatpush1.bf16.msra.mxu0 %v3818
        %4266 = vmatprep.subr.bf16.mxu0 %v3827
        %4267 = vmatpush1.bf16.msra.mxu0 %v3826
        %4268 = vmatprep.subr.bf16.mxu0 %v3835
        %4269 = vmatpush1.bf16.msra.mxu0 %v3834
        %4270 = vmatprep.subr.bf16.mxu0 %v3843
        %4271 = vmatpush1.bf16.msra.mxu0 %v3842
        %4272 = vmatprep.subr.bf16.mxu0 %v3851
        %4273 = vmatpush1.bf16.msra.mxu0 %v3850
        %4274 = vmatprep.mubr.bf16.mxu0 %v2635
        %4275 = vmatmul.mubr.bf16.gmra.mrb[0].mxu0 %v2634
        %v4276 = vpop.f32.mrb[0].mxu0
        %v4277 = vadd.f32 %v2925, %v4276
        %v4278 = vpop.f32.mrb[0].mxu0
        %v4279 = vadd.f32 %v2929, %v4278
        %v4280 = vpop.f32.mrb[0].mxu0
        %v4281 = vpop.f32.mrb[0].mxu0
        %4282 = vdwg.mxu0
        %4283 = vmatprep.subr.bf16.mxu0 %v3859
        %4284 = vmatpush1.bf16.msra.mxu0 %v3858
        %4285 = vmatprep.subr.bf16.mxu0 %v3867
        %4286 = vmatpush1.bf16.msra.mxu0 %v3866
        %4287 = vmatprep.subr.bf16.mxu0 %v3875
        %4288 = vmatpush1.bf16.msra.mxu0 %v3874
        %4289 = vmatprep.subr.bf16.mxu0 %v3883
        %4290 = vmatpush1.bf16.msra.mxu0 %v3882
        %4291 = vmatprep.subr.bf16.mxu0 %v3891
        %4292 = vmatpush1.bf16.msra.mxu0 %v3890
        %4293 = vmatprep.subr.bf16.mxu0 %v3899
        %4294 = vmatpush1.bf16.msra.mxu0 %v3898
        %4295 = vmatprep.subr.bf16.mxu0 %v3907
        %4296 = vmatpush1.bf16.msra.mxu0 %v3906
        %4297 = vmatprep.subr.bf16.mxu0 %v3915
        %4298 = vmatpush1.bf16.msra.mxu0 %v3914
        %4299 = vmatprep.subr.bf16.mxu0 %v3923
        %4300 = vmatpush1.bf16.msra.mxu0 %v3922
        %4301 = vmatprep.subr.bf16.mxu0 %v3931
        %4302 = vmatpush1.bf16.msra.mxu0 %v3930
        %4303 = vmatprep.subr.bf16.mxu0 %v3939
        %4304 = vmatpush1.bf16.msra.mxu0 %v3938
        %4305 = vmatprep.subr.bf16.mxu0 %v3947
        %4306 = vmatpush1.bf16.msra.mxu0 %v3946
        %4307 = vmatprep.subr.bf16.mxu0 %v3955
        %4308 = vmatpush1.bf16.msra.mxu0 %v3954
        %4309 = vmatprep.subr.bf16.mxu0 %v3963
        %4310 = vmatpush1.bf16.msra.mxu0 %v3962
        %4311 = vmatprep.subr.bf16.mxu0 %v3971
        %4312 = vmatpush1.bf16.msra.mxu0 %v3970
        %4313 = vmatprep.subr.bf16.mxu0 %v3979
        %4314 = vmatpush1.bf16.msra.mxu0 %v3978
        %4315 = vmatprep.mubr.bf16.mxu0 %v2637
        %4316 = vmatmul.mubr.bf16.gmra.mrb[0].mxu0 %v2636
        %v4317 = vpop.f32.mrb[0].mxu0
        %v4318 = vadd.f32 %v4277, %v4317
        %v4319 = vpop.f32.mrb[0].mxu0
        %v4320 = vadd.f32 %v4279, %v4319
        %v4321 = vpop.f32.mrb[0].mxu0
        %v4322 = vpop.f32.mrb[0].mxu0
        %4323 = vdwg.mxu0
        %4324 = vmatprep.subr.bf16.mxu0 %v3733
        %4325 = vmatpush1.bf16.msra.mxu0 %v3732
        %4326 = vmatprep.subr.bf16.mxu0 %v3741
        %4327 = vmatpush1.bf16.msra.mxu0 %v3740
        %4328 = vmatprep.subr.bf16.mxu0 %v3749
        %4329 = vmatpush1.bf16.msra.mxu0 %v3748
        %4330 = vmatprep.subr.bf16.mxu0 %v3757
        %4331 = vmatpush1.bf16.msra.mxu0 %v3756
        %4332 = vmatprep.subr.bf16.mxu0 %v3765
        %4333 = vmatpush1.bf16.msra.mxu0 %v3764
        %4334 = vmatprep.subr.bf16.mxu0 %v3773
        %4335 = vmatpush1.bf16.msra.mxu0 %v3772
        %4336 = vmatprep.subr.bf16.mxu0 %v3781
        %4337 = vmatpush1.bf16.msra.mxu0 %v3780
        %4338 = vmatprep.subr.bf16.mxu0 %v3789
        %4339 = vmatpush1.bf16.msra.mxu0 %v3788
        %4340 = vmatprep.subr.bf16.mxu0 %v3797
        %4341 = vmatpush1.bf16.msra.mxu0 %v3796
        %4342 = vmatprep.subr.bf16.mxu0 %v3805
        %4343 = vmatpush1.bf16.msra.mxu0 %v3804
        %4344 = vmatprep.subr.bf16.mxu0 %v3813
        %4345 = vmatpush1.bf16.msra.mxu0 %v3812
        %4346 = vmatprep.subr.bf16.mxu0 %v3821
        %4347 = vmatpush1.bf16.msra.mxu0 %v3820
        %4348 = vmatprep.subr.bf16.mxu0 %v3829
        %4349 = vmatpush1.bf16.msra.mxu0 %v3828
        %4350 = vmatprep.subr.bf16.mxu0 %v3837
        %4351 = vmatpush1.bf16.msra.mxu0 %v3836
        %4352 = vmatprep.subr.bf16.mxu0 %v3845
        %4353 = vmatpush1.bf16.msra.mxu0 %v3844
        %4354 = vmatprep.subr.bf16.mxu0 %v3853
        %4355 = vmatpush1.bf16.msra.mxu0 %v3852
        %4356 = vmatprep.mubr.bf16.mxu0 %v2635
        %4357 = vmatmul.mubr.bf16.gmra.mrb[0].mxu0 %v2634
        %v4358 = vpop.f32.mrb[0].mxu0
        %v4359 = vadd.f32 %v2933, %v4358
        %v4360 = vpop.f32.mrb[0].mxu0
        %v4361 = vadd.f32 %v2937, %v4360
        %v4362 = vpop.f32.mrb[0].mxu0
        %v4363 = vpop.f32.mrb[0].mxu0
        %4364 = vdwg.mxu0
        %4365 = vmatprep.subr.bf16.mxu0 %v3861
        %4366 = vmatpush1.bf16.msra.mxu0 %v3860
        %4367 = vmatprep.subr.bf16.mxu0 %v3869
        %4368 = vmatpush1.bf16.msra.mxu0 %v3868
        %4369 = vmatprep.subr.bf16.mxu0 %v3877
        %4370 = vmatpush1.bf16.msra.mxu0 %v3876
        %4371 = vmatprep.subr.bf16.mxu0 %v3885
        %4372 = vmatpush1.bf16.msra.mxu0 %v3884
        %4373 = vmatprep.subr.bf16.mxu0 %v3893
        %4374 = vmatpush1.bf16.msra.mxu0 %v3892
        %4375 = vmatprep.subr.bf16.mxu0 %v3901
        %4376 = vmatpush1.bf16.msra.mxu0 %v3900
        %4377 = vmatprep.subr.bf16.mxu0 %v3909
        %4378 = vmatpush1.bf16.msra.mxu0 %v3908
        %4379 = vmatprep.subr.bf16.mxu0 %v3917
        %4380 = vmatpush1.bf16.msra.mxu0 %v3916
        %4381 = vmatprep.subr.bf16.mxu0 %v3925
        %4382 = vmatpush1.bf16.msra.mxu0 %v3924
        %4383 = vmatprep.subr.bf16.mxu0 %v3933
        %4384 = vmatpush1.bf16.msra.mxu0 %v3932
        %4385 = vmatprep.subr.bf16.mxu0 %v3941
        %4386 = vmatpush1.bf16.msra.mxu0 %v3940
        %4387 = vmatprep.subr.bf16.mxu0 %v3949
        %4388 = vmatpush1.bf16.msra.mxu0 %v3948
        %4389 = vmatprep.subr.bf16.mxu0 %v3957
        %4390 = vmatpush1.bf16.msra.mxu0 %v3956
        %4391 = vmatprep.subr.bf16.mxu0 %v3965
        %4392 = vmatpush1.bf16.msra.mxu0 %v3964
        %4393 = vmatprep.subr.bf16.mxu0 %v3973
        %4394 = vmatpush1.bf16.msra.mxu0 %v3972
        %4395 = vmatprep.subr.bf16.mxu0 %v3981
        %4396 = vmatpush1.bf16.msra.mxu0 %v3980
        %4397 = vmatprep.mubr.bf16.mxu0 %v2637
        %4398 = vmatmul.mubr.bf16.gmra.mrb[0].mxu0 %v2636
        %v4399 = vpop.f32.mrb[0].mxu0
        %v4400 = vadd.f32 %v4359, %v4399
        %v4401 = vpop.f32.mrb[0].mxu0
        %v4402 = vadd.f32 %v4361, %v4401
        %v4403 = vpop.f32.mrb[0].mxu0
        %v4404 = vpop.f32.mrb[0].mxu0
        %4405 = vdwg.mxu0
        %4406 = vmatprep.subr.bf16.mxu0 %v3735
        %4407 = vmatpush1.bf16.msra.mxu0 %v3734
        %4408 = vmatprep.subr.bf16.mxu0 %v3743
        %4409 = vmatpush1.bf16.msra.mxu0 %v3742
        %4410 = vmatprep.subr.bf16.mxu0 %v3751
        %4411 = vmatpush1.bf16.msra.mxu0 %v3750
        %4412 = vmatprep.subr.bf16.mxu0 %v3759
        %4413 = vmatpush1.bf16.msra.mxu0 %v3758
        %4414 = vmatprep.subr.bf16.mxu0 %v3767
        %4415 = vmatpush1.bf16.msra.mxu0 %v3766
        %4416 = vmatprep.subr.bf16.mxu0 %v3775
        %4417 = vmatpush1.bf16.msra.mxu0 %v3774
        %4418 = vmatprep.subr.bf16.mxu0 %v3783
        %4419 = vmatpush1.bf16.msra.mxu0 %v3782
        %4420 = vmatprep.subr.bf16.mxu0 %v3791
        %4421 = vmatpush1.bf16.msra.mxu0 %v3790
        %4422 = vmatprep.subr.bf16.mxu0 %v3799
        %4423 = vmatpush1.bf16.msra.mxu0 %v3798
        %4424 = vmatprep.subr.bf16.mxu0 %v3807
        %4425 = vmatpush1.bf16.msra.mxu0 %v3806
        %4426 = vmatprep.subr.bf16.mxu0 %v3815
        %4427 = vmatpush1.bf16.msra.mxu0 %v3814
        %4428 = vmatprep.subr.bf16.mxu0 %v3823
        %4429 = vmatpush1.bf16.msra.mxu0 %v3822
        %4430 = vmatprep.subr.bf16.mxu0 %v3831
        %4431 = vmatpush1.bf16.msra.mxu0 %v3830
        %4432 = vmatprep.subr.bf16.mxu0 %v3839
        %4433 = vmatpush1.bf16.msra.mxu0 %v3838
        %4434 = vmatprep.subr.bf16.mxu0 %v3847
        %4435 = vmatpush1.bf16.msra.mxu0 %v3846
        %4436 = vmatprep.subr.bf16.mxu0 %v3855
        %4437 = vmatpush1.bf16.msra.mxu0 %v3854
        %4438 = vmatprep.mubr.bf16.mxu0 %v2635
        %4439 = vmatmul.mubr.bf16.gmra.mrb[0].mxu0 %v2634
        %v4440 = vpop.f32.mrb[0].mxu0
        %v4441 = vadd.f32 %v2941, %v4440
        %v4442 = vpop.f32.mrb[0].mxu0
        %v4443 = vadd.f32 %v2945, %v4442
        %v4444 = vpop.f32.mrb[0].mxu0
        %v4445 = vpop.f32.mrb[0].mxu0
        %4446 = vdwg.mxu0
        %4447 = vmatprep.subr.bf16.mxu0 %v3863
        %4448 = vmatpush1.bf16.msra.mxu0 %v3862
        %4449 = vmatprep.subr.bf16.mxu0 %v3871
        %4450 = vmatpush1.bf16.msra.mxu0 %v3870
        %4451 = vmatprep.subr.bf16.mxu0 %v3879
        %4452 = vmatpush1.bf16.msra.mxu0 %v3878
        %4453 = vmatprep.subr.bf16.mxu0 %v3887
        %4454 = vmatpush1.bf16.msra.mxu0 %v3886
        %4455 = vmatprep.subr.bf16.mxu0 %v3895
        %4456 = vmatpush1.bf16.msra.mxu0 %v3894
        %4457 = vmatprep.subr.bf16.mxu0 %v3903
        %4458 = vmatpush1.bf16.msra.mxu0 %v3902
        %4459 = vmatprep.subr.bf16.mxu0 %v3911
        %4460 = vmatpush1.bf16.msra.mxu0 %v3910
        %4461 = vmatprep.subr.bf16.mxu0 %v3919
        %4462 = vmatpush1.bf16.msra.mxu0 %v3918
        %4463 = vmatprep.subr.bf16.mxu0 %v3927
        %4464 = vmatpush1.bf16.msra.mxu0 %v3926
        %4465 = vmatprep.subr.bf16.mxu0 %v3935
        %4466 = vmatpush1.bf16.msra.mxu0 %v3934
        %4467 = vmatprep.subr.bf16.mxu0 %v3943
        %4468 = vmatpush1.bf16.msra.mxu0 %v3942
        %4469 = vmatprep.subr.bf16.mxu0 %v3951
        %4470 = vmatpush1.bf16.msra.mxu0 %v3950
        %4471 = vmatprep.subr.bf16.mxu0 %v3959
        %4472 = vmatpush1.bf16.msra.mxu0 %v3958
        %4473 = vmatprep.subr.bf16.mxu0 %v3967
        %4474 = vmatpush1.bf16.msra.mxu0 %v3966
        %4475 = vmatprep.subr.bf16.mxu0 %v3975
        %4476 = vmatpush1.bf16.msra.mxu0 %v3974
        %4477 = vmatprep.subr.bf16.mxu0 %v3983
        %4478 = vmatpush1.bf16.msra.mxu0 %v3982
        %4479 = vmatprep.mubr.bf16.mxu0 %v2637
        %4480 = vmatmul.mubr.bf16.gmra.mrb[0].mxu0 %v2636
        %v4481 = vpop.f32.mrb[0].mxu0
        %v4482 = vadd.f32 %v4441, %v4481
        %v4483 = vpop.f32.mrb[0].mxu0
        %v4484 = vadd.f32 %v4443, %v4483
        %v4485 = vpop.f32.mrb[0].mxu0
        %v4486 = vpop.f32.mrb[0].mxu0
        %4487 = vdwg.mxu0
        %4488 = vmatprep.subr.bf16.mxu0 %v3737
        %4489 = vmatpush1.bf16.msra.mxu0 %v3736
        %4490 = vmatprep.subr.bf16.mxu0 %v3745
        %4491 = vmatpush1.bf16.msra.mxu0 %v3744
        %4492 = vmatprep.subr.bf16.mxu0 %v3753
        %4493 = vmatpush1.bf16.msra.mxu0 %v3752
        %4494 = vmatprep.subr.bf16.mxu0 %v3761
        %4495 = vmatpush1.bf16.msra.mxu0 %v3760
        %4496 = vmatprep.subr.bf16.mxu0 %v3769
        %4497 = vmatpush1.bf16.msra.mxu0 %v3768
        %4498 = vmatprep.subr.bf16.mxu0 %v3777
        %4499 = vmatpush1.bf16.msra.mxu0 %v3776
        %4500 = vmatprep.subr.bf16.mxu0 %v3785
        %4501 = vmatpush1.bf16.msra.mxu0 %v3784
        %4502 = vmatprep.subr.bf16.mxu0 %v3793
        %4503 = vmatpush1.bf16.msra.mxu0 %v3792
        %4504 = vmatprep.subr.bf16.mxu0 %v3801
        %4505 = vmatpush1.bf16.msra.mxu0 %v3800
        %4506 = vmatprep.subr.bf16.mxu0 %v3809
        %4507 = vmatpush1.bf16.msra.mxu0 %v3808
        %4508 = vmatprep.subr.bf16.mxu0 %v3817
        %4509 = vmatpush1.bf16.msra.mxu0 %v3816
        %4510 = vmatprep.subr.bf16.mxu0 %v3825
        %4511 = vmatpush1.bf16.msra.mxu0 %v3824
        %4512 = vmatprep.subr.bf16.mxu0 %v3833
        %4513 = vmatpush1.bf16.msra.mxu0 %v3832
        %4514 = vmatprep.subr.bf16.mxu0 %v3841
        %4515 = vmatpush1.bf16.msra.mxu0 %v3840
        %4516 = vmatprep.subr.bf16.mxu0 %v3849
        %4517 = vmatpush1.bf16.msra.mxu0 %v3848
        %4518 = vmatprep.subr.bf16.mxu0 %v3857
        %4519 = vmatpush1.bf16.msra.mxu0 %v3856
        %4520 = vmatprep.mubr.bf16.mxu0 %v2635
        %4521 = vmatmul.mubr.bf16.gmra.mrb[0].mxu0 %v2634
        %v4522 = vpop.f32.mrb[0].mxu0
        %v4523 = vadd.f32 %v2949, %v4522
        %v4524 = vpop.f32.mrb[0].mxu0
        %v4525 = vadd.f32 %v2953, %v4524
        %v4526 = vpop.f32.mrb[0].mxu0
        %v4527 = vpop.f32.mrb[0].mxu0
        %4528 = vdwg.mxu0
        %4529 = vmatprep.subr.bf16.mxu0 %v3865
        %4530 = vmatpush1.bf16.msra.mxu0 %v3864
        %4531 = vmatprep.subr.bf16.mxu0 %v3873
        %4532 = vmatpush1.bf16.msra.mxu0 %v3872
        %4533 = vmatprep.subr.bf16.mxu0 %v3881
        %4534 = vmatpush1.bf16.msra.mxu0 %v3880
        %4535 = vmatprep.subr.bf16.mxu0 %v3889
        %4536 = vmatpush1.bf16.msra.mxu0 %v3888
        %4537 = vmatprep.subr.bf16.mxu0 %v3897
        %4538 = vmatpush1.bf16.msra.mxu0 %v3896
        %4539 = vmatprep.subr.bf16.mxu0 %v3905
        %4540 = vmatpush1.bf16.msra.mxu0 %v3904
        %4541 = vmatprep.subr.bf16.mxu0 %v3913
        %4542 = vmatpush1.bf16.msra.mxu0 %v3912
        %4543 = vmatprep.subr.bf16.mxu0 %v3921
        %4544 = vmatpush1.bf16.msra.mxu0 %v3920
        %4545 = vmatprep.subr.bf16.mxu0 %v3929
        %4546 = vmatpush1.bf16.msra.mxu0 %v3928
        %4547 = vmatprep.subr.bf16.mxu0 %v3937
        %4548 = vmatpush1.bf16.msra.mxu0 %v3936
        %4549 = vmatprep.subr.bf16.mxu0 %v3945
        %4550 = vmatpush1.bf16.msra.mxu0 %v3944
        %4551 = vmatprep.subr.bf16.mxu0 %v3953
        %4552 = vmatpush1.bf16.msra.mxu0 %v3952
        %4553 = vmatprep.subr.bf16.mxu0 %v3961
        %4554 = vmatpush1.bf16.msra.mxu0 %v3960
        %4555 = vmatprep.subr.bf16.mxu0 %v3969
        %4556 = vmatpush1.bf16.msra.mxu0 %v3968
        %4557 = vmatprep.subr.bf16.mxu0 %v3977
        %4558 = vmatpush1.bf16.msra.mxu0 %v3976
        %4559 = vmatprep.subr.bf16.mxu0 %v3985
        %4560 = vmatpush1.bf16.msra.mxu0 %v3984
        %4561 = vmatprep.mubr.bf16.mxu0 %v2637
        %4562 = vmatmul.mubr.bf16.gmra.mrb[0].mxu0 %v2636
        %v4563 = vpop.f32.mrb[0].mxu0
        %v4564 = vadd.f32 %v4523, %v4563
        %v4565 = vpop.f32.mrb[0].mxu0
        %v4566 = vadd.f32 %v4525, %v4565
        %v4567 = vpop.f32.mrb[0].mxu0
        %v4568 = vpop.f32.mrb[0].mxu0
        %4569 = vdwg.mxu0
        %v4570 = vmax.f32 %v4318, 0.0
        %v4571 = vmax.f32 %v4320, 0.0
        %v4572 = vmax.f32 %v4400, 0.0
        %v4573 = vmax.f32 %v4402, 0.0
        %v4574 = vmax.f32 %v4482, 0.0
        %v4575 = vmax.f32 %v4484, 0.0
        %v4576 = vmax.f32 %v4564, 0.0
        %v4577 = vmax.f32 %v4566, 0.0
        %v4578 = vpack.c.bf16 %v4570, %v4570
        %v4579 = vpack.c.bf16 %v4571, %v4571
        %v4580 = vpack.c.bf16 %v4572, %v4572
        %v4581 = vpack.c.bf16 %v4573, %v4573
        %v4582 = vpack.c.bf16 %v4574, %v4574
        %v4583 = vpack.c.bf16 %v4575, %v4575
        %v4584 = vpack.c.bf16 %v4576, %v4576
        %v4585 = vpack.c.bf16 %v4577, %v4577
        %v4586 = vld [vmem:[%s5] sm:$0xf]
        %v4587 = vld [vmem:[%s5 + $0x4] sm:$0xf]
        %v4588 = vld [vmem:[%s5 + $0x8] sm:$0xf]
        %v4589 = vld [vmem:[%s5 + $0xc] sm:$0xf]
        %v4590 = vld [vmem:[%s5 + $0x10] sm:$0xf]
        %v4591 = vld [vmem:[%s5 + $0x14] sm:$0xf]
        %v4592 = vld [vmem:[%s5 + $0x18] sm:$0xf]
        %v4593 = vld [vmem:[%s5 + $0x1c] sm:$0xf]
        %v4594 = vld [vmem:[%s5 + $0x20] sm:$0xf]
        %v4595 = vld [vmem:[%s5 + $0x24] sm:$0xf]
        %v4596 = vld [vmem:[%s5 + $0x28] sm:$0xf]
        %v4597 = vld [vmem:[%s5 + $0x2c] sm:$0xf]
        %v4598 = vld [vmem:[%s5 + $0x30] sm:$0xf]
        %v4599 = vld [vmem:[%s5 + $0x34] sm:$0xf]
        %v4600 = vld [vmem:[%s5 + $0x38] sm:$0xf]
        %v4601 = vld [vmem:[%s5 + $0x3c] sm:$0xf]
        %v4602 = vld [vmem:[%s5 + $0x40] sm:$0xf]
        %v4603 = vld [vmem:[%s5 + $0x44] sm:$0xf]
        %v4604 = vld [vmem:[%s5 + $0x48] sm:$0xf]
        %v4605 = vld [vmem:[%s5 + $0x4c] sm:$0xf]
        %v4606 = vld [vmem:[%s5 + $0x50] sm:$0xf]
        %v4607 = vld [vmem:[%s5 + $0x54] sm:$0xf]
        %v4608 = vld [vmem:[%s5 + $0x58] sm:$0xf]
        %v4609 = vld [vmem:[%s5 + $0x5c] sm:$0xf]
        %v4610 = vld [vmem:[%s5 + $0x60] sm:$0xf]
        %v4611 = vld [vmem:[%s5 + $0x64] sm:$0xf]
        %v4612 = vld [vmem:[%s5 + $0x68] sm:$0xf]
        %v4613 = vld [vmem:[%s5 + $0x6c] sm:$0xf]
        %v4614 = vld [vmem:[%s5 + $0x70] sm:$0xf]
        %v4615 = vld [vmem:[%s5 + $0x74] sm:$0xf]
        %v4616 = vld [vmem:[%s5 + $0x78] sm:$0xf]
        %v4617 = vld [vmem:[%s5 + $0x7c] sm:$0xf]
        %v4618 = vld [vmem:[%s5 + $0x80] sm:$0xf]
        %v4619 = vld [vmem:[%s5 + $0x84] sm:$0xf]
        %v4620 = vld [vmem:[%s5 + $0x88] sm:$0xf]
        %v4621 = vld [vmem:[%s5 + $0x8c] sm:$0xf]
        %v4622 = vld [vmem:[%s5 + $0x90] sm:$0xf]
        %v4623 = vld [vmem:[%s5 + $0x94] sm:$0xf]
        %v4624 = vld [vmem:[%s5 + $0x98] sm:$0xf]
        %v4625 = vld [vmem:[%s5 + $0x9c] sm:$0xf]
        %v4626 = vld [vmem:[%s5 + $0xa0] sm:$0xf]
        %v4627 = vld [vmem:[%s5 + $0xa4] sm:$0xf]
        %v4628 = vld [vmem:[%s5 + $0xa8] sm:$0xf]
        %v4629 = vld [vmem:[%s5 + $0xac] sm:$0xf]
        %v4630 = vld [vmem:[%s5 + $0xb0] sm:$0xf]
        %v4631 = vld [vmem:[%s5 + $0xb4] sm:$0xf]
        %v4632 = vld [vmem:[%s5 + $0xb8] sm:$0xf]
        %v4633 = vld [vmem:[%s5 + $0xbc] sm:$0xf]
        %v4634 = vld [vmem:[%s5 + $0xc0] sm:$0xf]
        %v4635 = vld [vmem:[%s5 + $0xc4] sm:$0xf]
        %v4636 = vld [vmem:[%s5 + $0xc8] sm:$0xf]
        %v4637 = vld [vmem:[%s5 + $0xcc] sm:$0xf]
        %v4638 = vld [vmem:[%s5 + $0xd0] sm:$0xf]
        %v4639 = vld [vmem:[%s5 + $0xd4] sm:$0xf]
        %v4640 = vld [vmem:[%s5 + $0xd8] sm:$0xf]
        %v4641 = vld [vmem:[%s5 + $0xdc] sm:$0xf]
        %v4642 = vld [vmem:[%s5 + $0xe0] sm:$0xf]
        %v4643 = vld [vmem:[%s5 + $0xe4] sm:$0xf]
        %v4644 = vld [vmem:[%s5 + $0xe8] sm:$0xf]
        %v4645 = vld [vmem:[%s5 + $0xec] sm:$0xf]
        %v4646 = vld [vmem:[%s5 + $0xf0] sm:$0xf]
        %v4647 = vld [vmem:[%s5 + $0xf4] sm:$0xf]
        %v4648 = vld [vmem:[%s5 + $0xf8] sm:$0xf]
        %v4649 = vld [vmem:[%s5 + $0xfc] sm:$0xf]
        %v4650 = vld [vmem:[%s5 + $0x100] sm:$0xf]
        %v4651 = vld [vmem:[%s5 + $0x104] sm:$0xf]
        %v4652 = vld [vmem:[%s5 + $0x108] sm:$0xf]
        %v4653 = vld [vmem:[%s5 + $0x10c] sm:$0xf]
        %v4654 = vld [vmem:[%s5 + $0x110] sm:$0xf]
        %v4655 = vld [vmem:[%s5 + $0x114] sm:$0xf]
        %v4656 = vld [vmem:[%s5 + $0x118] sm:$0xf]
        %v4657 = vld [vmem:[%s5 + $0x11c] sm:$0xf]
        %v4658 = vld [vmem:[%s5 + $0x120] sm:$0xf]
        %v4659 = vld [vmem:[%s5 + $0x124] sm:$0xf]
        %v4660 = vld [vmem:[%s5 + $0x128] sm:$0xf]
        %v4661 = vld [vmem:[%s5 + $0x12c] sm:$0xf]
        %v4662 = vld [vmem:[%s5 + $0x130] sm:$0xf]
        %v4663 = vld [vmem:[%s5 + $0x134] sm:$0xf]
        %v4664 = vld [vmem:[%s5 + $0x138] sm:$0xf]
        %v4665 = vld [vmem:[%s5 + $0x13c] sm:$0xf]
        %v4666 = vld [vmem:[%s5 + $0x140] sm:$0xf]
        %v4667 = vld [vmem:[%s5 + $0x144] sm:$0xf]
        %v4668 = vld [vmem:[%s5 + $0x148] sm:$0xf]
        %v4669 = vld [vmem:[%s5 + $0x14c] sm:$0xf]
        %v4670 = vld [vmem:[%s5 + $0x150] sm:$0xf]
        %v4671 = vld [vmem:[%s5 + $0x154] sm:$0xf]
        %v4672 = vld [vmem:[%s5 + $0x158] sm:$0xf]
        %v4673 = vld [vmem:[%s5 + $0x15c] sm:$0xf]
        %v4674 = vld [vmem:[%s5 + $0x160] sm:$0xf]
        %v4675 = vld [vmem:[%s5 + $0x164] sm:$0xf]
        %v4676 = vld [vmem:[%s5 + $0x168] sm:$0xf]
        %v4677 = vld [vmem:[%s5 + $0x16c] sm:$0xf]
        %v4678 = vld [vmem:[%s5 + $0x170] sm:$0xf]
        %v4679 = vld [vmem:[%s5 + $0x174] sm:$0xf]
        %v4680 = vld [vmem:[%s5 + $0x178] sm:$0xf]
        %v4681 = vld [vmem:[%s5 + $0x17c] sm:$0xf]
        %v4682 = vld [vmem:[%s5 + $0x180] sm:$0xf]
        %v4683 = vld [vmem:[%s5 + $0x184] sm:$0xf]
        %v4684 = vld [vmem:[%s5 + $0x188] sm:$0xf]
        %v4685 = vld [vmem:[%s5 + $0x18c] sm:$0xf]
        %v4686 = vld [vmem:[%s5 + $0x190] sm:$0xf]
        %v4687 = vld [vmem:[%s5 + $0x194] sm:$0xf]
        %v4688 = vld [vmem:[%s5 + $0x198] sm:$0xf]
        %v4689 = vld [vmem:[%s5 + $0x19c] sm:$0xf]
        %v4690 = vld [vmem:[%s5 + $0x1a0] sm:$0xf]
        %v4691 = vld [vmem:[%s5 + $0x1a4] sm:$0xf]
        %v4692 = vld [vmem:[%s5 + $0x1a8] sm:$0xf]
        %v4693 = vld [vmem:[%s5 + $0x1ac] sm:$0xf]
        %v4694 = vld [vmem:[%s5 + $0x1b0] sm:$0xf]
        %v4695 = vld [vmem:[%s5 + $0x1b4] sm:$0xf]
        %v4696 = vld [vmem:[%s5 + $0x1b8] sm:$0xf]
        %v4697 = vld [vmem:[%s5 + $0x1bc] sm:$0xf]
        %v4698 = vld [vmem:[%s5 + $0x1c0] sm:$0xf]
        %v4699 = vld [vmem:[%s5 + $0x1c4] sm:$0xf]
        %v4700 = vld [vmem:[%s5 + $0x1c8] sm:$0xf]
        %v4701 = vld [vmem:[%s5 + $0x1cc] sm:$0xf]
        %v4702 = vld [vmem:[%s5 + $0x1d0] sm:$0xf]
        %v4703 = vld [vmem:[%s5 + $0x1d4] sm:$0xf]
        %v4704 = vld [vmem:[%s5 + $0x1d8] sm:$0xf]
        %v4705 = vld [vmem:[%s5 + $0x1dc] sm:$0xf]
        %v4706 = vld [vmem:[%s5 + $0x1e0] sm:$0xf]
        %v4707 = vld [vmem:[%s5 + $0x1e4] sm:$0xf]
        %v4708 = vld [vmem:[%s5 + $0x1e8] sm:$0xf]
        %v4709 = vld [vmem:[%s5 + $0x1ec] sm:$0xf]
        %v4710 = vld [vmem:[%s5 + $0x1f0] sm:$0xf]
        %v4711 = vld [vmem:[%s5 + $0x1f4] sm:$0xf]
        %v4712 = vld [vmem:[%s5 + $0x1f8] sm:$0xf]
        %v4713 = vld [vmem:[%s5 + $0x1fc] sm:$0xf]
        %v4714 = vld [vmem:[%s6] sm:$0x1]
        %v4716 = vlaneseq
        %v4717 = vshrl.u32 %v4716, 7
        %v4718 = vsub.s32 0, %v4717
        %v4719 = vrot.slane %v4714, %v4718
        %v4849 = vunpack.c.l.b16 %v4586
        %v4850 = vunpack.c.l.b16 %v4587
        %v4851 = vunpack.c.l.b16 %v4588
        %v4852 = vunpack.c.l.b16 %v4589
        %v4853 = vunpack.c.l.b16 %v4590
        %v4854 = vunpack.c.l.b16 %v4591
        %v4855 = vunpack.c.l.b16 %v4592
        %v4856 = vunpack.c.l.b16 %v4593
        %v4857 = vunpack.c.l.b16 %v4594
        %v4858 = vunpack.c.l.b16 %v4595
        %v4859 = vunpack.c.l.b16 %v4596
        %v4860 = vunpack.c.l.b16 %v4597
        %v4861 = vunpack.c.l.b16 %v4598
        %v4862 = vunpack.c.l.b16 %v4599
        %v4863 = vunpack.c.l.b16 %v4600
        %v4864 = vunpack.c.l.b16 %v4601
        %v4865 = vunpack.c.l.b16 %v4602
        %v4866 = vunpack.c.l.b16 %v4603
        %v4867 = vunpack.c.l.b16 %v4604
        %v4868 = vunpack.c.l.b16 %v4605
        %v4869 = vunpack.c.l.b16 %v4606
        %v4870 = vunpack.c.l.b16 %v4607
        %v4871 = vunpack.c.l.b16 %v4608
        %v4872 = vunpack.c.l.b16 %v4609
        %v4873 = vunpack.c.l.b16 %v4610
        %v4874 = vunpack.c.l.b16 %v4611
        %v4875 = vunpack.c.l.b16 %v4612
        %v4876 = vunpack.c.l.b16 %v4613
        %v4877 = vunpack.c.l.b16 %v4614
        %v4878 = vunpack.c.l.b16 %v4615
        %v4879 = vunpack.c.l.b16 %v4616
        %v4880 = vunpack.c.l.b16 %v4617
        %v4881 = vunpack.c.l.b16 %v4618
        %v4882 = vunpack.c.l.b16 %v4619
        %v4883 = vunpack.c.l.b16 %v4620
        %v4884 = vunpack.c.l.b16 %v4621
        %v4885 = vunpack.c.l.b16 %v4622
        %v4886 = vunpack.c.l.b16 %v4623
        %v4887 = vunpack.c.l.b16 %v4624
        %v4888 = vunpack.c.l.b16 %v4625
        %v4889 = vunpack.c.l.b16 %v4626
        %v4890 = vunpack.c.l.b16 %v4627
        %v4891 = vunpack.c.l.b16 %v4628
        %v4892 = vunpack.c.l.b16 %v4629
        %v4893 = vunpack.c.l.b16 %v4630
        %v4894 = vunpack.c.l.b16 %v4631
        %v4895 = vunpack.c.l.b16 %v4632
        %v4896 = vunpack.c.l.b16 %v4633
        %v4897 = vunpack.c.l.b16 %v4634
        %v4898 = vunpack.c.l.b16 %v4635
        %v4899 = vunpack.c.l.b16 %v4636
        %v4900 = vunpack.c.l.b16 %v4637
        %v4901 = vunpack.c.l.b16 %v4638
        %v4902 = vunpack.c.l.b16 %v4639
        %v4903 = vunpack.c.l.b16 %v4640
        %v4904 = vunpack.c.l.b16 %v4641
        %v4905 = vunpack.c.l.b16 %v4642
        %v4906 = vunpack.c.l.b16 %v4643
        %v4907 = vunpack.c.l.b16 %v4644
        %v4908 = vunpack.c.l.b16 %v4645
        %v4909 = vunpack.c.l.b16 %v4646
        %v4910 = vunpack.c.l.b16 %v4647
        %v4911 = vunpack.c.l.b16 %v4648
        %v4912 = vunpack.c.l.b16 %v4649
        %v4913 = vunpack.c.l.b16 %v4650
        %v4914 = vunpack.c.l.b16 %v4651
        %v4915 = vunpack.c.l.b16 %v4652
        %v4916 = vunpack.c.l.b16 %v4653
        %v4917 = vunpack.c.l.b16 %v4654
        %v4918 = vunpack.c.l.b16 %v4655
        %v4919 = vunpack.c.l.b16 %v4656
        %v4920 = vunpack.c.l.b16 %v4657
        %v4921 = vunpack.c.l.b16 %v4658
        %v4922 = vunpack.c.l.b16 %v4659
        %v4923 = vunpack.c.l.b16 %v4660
        %v4924 = vunpack.c.l.b16 %v4661
        %v4925 = vunpack.c.l.b16 %v4662
        %v4926 = vunpack.c.l.b16 %v4663
        %v4927 = vunpack.c.l.b16 %v4664
        %v4928 = vunpack.c.l.b16 %v4665
        %v4929 = vunpack.c.l.b16 %v4666
        %v4930 = vunpack.c.l.b16 %v4667
        %v4931 = vunpack.c.l.b16 %v4668
        %v4932 = vunpack.c.l.b16 %v4669
        %v4933 = vunpack.c.l.b16 %v4670
        %v4934 = vunpack.c.l.b16 %v4671
        %v4935 = vunpack.c.l.b16 %v4672
        %v4936 = vunpack.c.l.b16 %v4673
        %v4937 = vunpack.c.l.b16 %v4674
        %v4938 = vunpack.c.l.b16 %v4675
        %v4939 = vunpack.c.l.b16 %v4676
        %v4940 = vunpack.c.l.b16 %v4677
        %v4941 = vunpack.c.l.b16 %v4678
        %v4942 = vunpack.c.l.b16 %v4679
        %v4943 = vunpack.c.l.b16 %v4680
        %v4944 = vunpack.c.l.b16 %v4681
        %v4945 = vunpack.c.l.b16 %v4682
        %v4946 = vunpack.c.l.b16 %v4683
        %v4947 = vunpack.c.l.b16 %v4684
        %v4948 = vunpack.c.l.b16 %v4685
        %v4949 = vunpack.c.l.b16 %v4686
        %v4950 = vunpack.c.l.b16 %v4687
        %v4951 = vunpack.c.l.b16 %v4688
        %v4952 = vunpack.c.l.b16 %v4689
        %v4953 = vunpack.c.l.b16 %v4690
        %v4954 = vunpack.c.l.b16 %v4691
        %v4955 = vunpack.c.l.b16 %v4692
        %v4956 = vunpack.c.l.b16 %v4693
        %v4957 = vunpack.c.l.b16 %v4694
        %v4958 = vunpack.c.l.b16 %v4695
        %v4959 = vunpack.c.l.b16 %v4696
        %v4960 = vunpack.c.l.b16 %v4697
        %v4961 = vunpack.c.l.b16 %v4698
        %v4962 = vunpack.c.l.b16 %v4699
        %v4963 = vunpack.c.l.b16 %v4700
        %v4964 = vunpack.c.l.b16 %v4701
        %v4965 = vunpack.c.l.b16 %v4702
        %v4966 = vunpack.c.l.b16 %v4703
        %v4967 = vunpack.c.l.b16 %v4704
        %v4968 = vunpack.c.l.b16 %v4705
        %v4969 = vunpack.c.l.b16 %v4706
        %v4970 = vunpack.c.l.b16 %v4707
        %v4971 = vunpack.c.l.b16 %v4708
        %v4972 = vunpack.c.l.b16 %v4709
        %v4973 = vunpack.c.l.b16 %v4710
        %v4974 = vunpack.c.l.b16 %v4711
        %v4975 = vunpack.c.l.b16 %v4712
        %v4976 = vunpack.c.l.b16 %v4713
        %v4977 = vpack.c.b16 %v4850, %v4849
        %v4978 = vpack.c.b16 %v4852, %v4851
        %v4979 = vpack.c.b16 %v4854, %v4853
        %v4980 = vpack.c.b16 %v4856, %v4855
        %v4981 = vpack.c.b16 %v4858, %v4857
        %v4982 = vpack.c.b16 %v4860, %v4859
        %v4983 = vpack.c.b16 %v4862, %v4861
        %v4984 = vpack.c.b16 %v4864, %v4863
        %v4985 = vpack.c.b16 %v4866, %v4865
        %v4986 = vpack.c.b16 %v4868, %v4867
        %v4987 = vpack.c.b16 %v4870, %v4869
        %v4988 = vpack.c.b16 %v4872, %v4871
        %v4989 = vpack.c.b16 %v4874, %v4873
        %v4990 = vpack.c.b16 %v4876, %v4875
        %v4991 = vpack.c.b16 %v4878, %v4877
        %v4992 = vpack.c.b16 %v4880, %v4879
        %v4993 = vpack.c.b16 %v4882, %v4881
        %v4994 = vpack.c.b16 %v4884, %v4883
        %v4995 = vpack.c.b16 %v4886, %v4885
        %v4996 = vpack.c.b16 %v4888, %v4887
        %v4997 = vpack.c.b16 %v4890, %v4889
        %v4998 = vpack.c.b16 %v4892, %v4891
        %v4999 = vpack.c.b16 %v4894, %v4893
        %v5000 = vpack.c.b16 %v4896, %v4895
        %v5001 = vpack.c.b16 %v4898, %v4897
        %v5002 = vpack.c.b16 %v4900, %v4899
        %v5003 = vpack.c.b16 %v4902, %v4901
        %v5004 = vpack.c.b16 %v4904, %v4903
        %v5005 = vpack.c.b16 %v4906, %v4905
        %v5006 = vpack.c.b16 %v4908, %v4907
        %v5007 = vpack.c.b16 %v4910, %v4909
        %v5008 = vpack.c.b16 %v4912, %v4911
        %v5009 = vpack.c.b16 %v4914, %v4913
        %v5010 = vpack.c.b16 %v4916, %v4915
        %v5011 = vpack.c.b16 %v4918, %v4917
        %v5012 = vpack.c.b16 %v4920, %v4919
        %v5013 = vpack.c.b16 %v4922, %v4921
        %v5014 = vpack.c.b16 %v4924, %v4923
        %v5015 = vpack.c.b16 %v4926, %v4925
        %v5016 = vpack.c.b16 %v4928, %v4927
        %v5017 = vpack.c.b16 %v4930, %v4929
        %v5018 = vpack.c.b16 %v4932, %v4931
        %v5019 = vpack.c.b16 %v4934, %v4933
        %v5020 = vpack.c.b16 %v4936, %v4935
        %v5021 = vpack.c.b16 %v4938, %v4937
        %v5022 = vpack.c.b16 %v4940, %v4939
        %v5023 = vpack.c.b16 %v4942, %v4941
        %v5024 = vpack.c.b16 %v4944, %v4943
        %v5025 = vpack.c.b16 %v4946, %v4945
        %v5026 = vpack.c.b16 %v4948, %v4947
        %v5027 = vpack.c.b16 %v4950, %v4949
        %v5028 = vpack.c.b16 %v4952, %v4951
        %v5029 = vpack.c.b16 %v4954, %v4953
        %v5030 = vpack.c.b16 %v4956, %v4955
        %v5031 = vpack.c.b16 %v4958, %v4957
        %v5032 = vpack.c.b16 %v4960, %v4959
        %v5033 = vpack.c.b16 %v4962, %v4961
        %v5034 = vpack.c.b16 %v4964, %v4963
        %v5035 = vpack.c.b16 %v4966, %v4965
        %v5036 = vpack.c.b16 %v4968, %v4967
        %v5037 = vpack.c.b16 %v4970, %v4969
        %v5038 = vpack.c.b16 %v4972, %v4971
        %v5039 = vpack.c.b16 %v4974, %v4973
        %v5040 = vpack.c.b16 %v4976, %v4975
        %5105 = vmatprep.subr.bf16.mxu0 0
        %5106 = vmatpush1.bf16.msra.mxu0 %v4977
        %5107 = vmatprep.subr.bf16.mxu0 0
        %5108 = vmatpush1.bf16.msra.mxu0 %v4978
        %5109 = vmatprep.subr.bf16.mxu0 0
        %5110 = vmatpush1.bf16.msra.mxu0 %v4979
        %5111 = vmatprep.subr.bf16.mxu0 0
        %5112 = vmatpush1.bf16.msra.mxu0 %v4980
        %5113 = vmatprep.subr.bf16.mxu0 0
        %5114 = vmatpush1.bf16.msra.mxu0 %v4981
        %5115 = vmatprep.subr.bf16.mxu0 0
        %5116 = vmatpush1.bf16.msra.mxu0 %v4982
        %5117 = vmatprep.subr.bf16.mxu0 0
        %5118 = vmatpush1.bf16.msra.mxu0 %v4983
        %5119 = vmatprep.subr.bf16.mxu0 0
        %5120 = vmatpush1.bf16.msra.mxu0 %v4984
        %5121 = vmatprep.subr.bf16.mxu0 0
        %5122 = vmatpush1.bf16.msra.mxu0 %v4985
        %5123 = vmatprep.subr.bf16.mxu0 0
        %5124 = vmatpush1.bf16.msra.mxu0 %v4986
        %5125 = vmatprep.subr.bf16.mxu0 0
        %5126 = vmatpush1.bf16.msra.mxu0 %v4987
        %5127 = vmatprep.subr.bf16.mxu0 0
        %5128 = vmatpush1.bf16.msra.mxu0 %v4988
        %5129 = vmatprep.subr.bf16.mxu0 0
        %5130 = vmatpush1.bf16.msra.mxu0 %v4989
        %5131 = vmatprep.subr.bf16.mxu0 0
        %5132 = vmatpush1.bf16.msra.mxu0 %v4990
        %5133 = vmatprep.subr.bf16.mxu0 0
        %5134 = vmatpush1.bf16.msra.mxu0 %v4991
        %5135 = vmatprep.subr.bf16.mxu0 0
        %5136 = vmatpush1.bf16.msra.mxu0 %v4992
        %5137 = vmatprep.mubr.bf16.mxu0 %v4579
        %5138 = vmatmul.mubr.bf16.gmra.mrb[0].mxu0 %v4578
        %v5139 = vpop.f32.mrb[0].mxu0
        %v5140 = vadd.f32 %v4719, %v5139
        %v5141 = vpop.f32.mrb[0].mxu0
        %v5142 = vpop.f32.mrb[0].mxu0
        %v5143 = vpop.f32.mrb[0].mxu0
        %5144 = vdwg.mxu0
        %5145 = vmatprep.subr.bf16.mxu0 0
        %5146 = vmatpush1.bf16.msra.mxu0 %v4993
        %5147 = vmatprep.subr.bf16.mxu0 0
        %5148 = vmatpush1.bf16.msra.mxu0 %v4994
        %5149 = vmatprep.subr.bf16.mxu0 0
        %5150 = vmatpush1.bf16.msra.mxu0 %v4995
        %5151 = vmatprep.subr.bf16.mxu0 0
        %5152 = vmatpush1.bf16.msra.mxu0 %v4996
        %5153 = vmatprep.subr.bf16.mxu0 0
        %5154 = vmatpush1.bf16.msra.mxu0 %v4997
        %5155 = vmatprep.subr.bf16.mxu0 0
        %5156 = vmatpush1.bf16.msra.mxu0 %v4998
        %5157 = vmatprep.subr.bf16.mxu0 0
        %5158 = vmatpush1.bf16.msra.mxu0 %v4999
        %5159 = vmatprep.subr.bf16.mxu0 0
        %5160 = vmatpush1.bf16.msra.mxu0 %v5000
        %5161 = vmatprep.subr.bf16.mxu0 0
        %5162 = vmatpush1.bf16.msra.mxu0 %v5001
        %5163 = vmatprep.subr.bf16.mxu0 0
        %5164 = vmatpush1.bf16.msra.mxu0 %v5002
        %5165 = vmatprep.subr.bf16.mxu0 0
        %5166 = vmatpush1.bf16.msra.mxu0 %v5003
        %5167 = vmatprep.subr.bf16.mxu0 0
        %5168 = vmatpush1.bf16.msra.mxu0 %v5004
        %5169 = vmatprep.subr.bf16.mxu0 0
        %5170 = vmatpush1.bf16.msra.mxu0 %v5005
        %5171 = vmatprep.subr.bf16.mxu0 0
        %5172 = vmatpush1.bf16.msra.mxu0 %v5006
        %5173 = vmatprep.subr.bf16.mxu0 0
        %5174 = vmatpush1.bf16.msra.mxu0 %v5007
        %5175 = vmatprep.subr.bf16.mxu0 0
        %5176 = vmatpush1.bf16.msra.mxu0 %v5008
        %5177 = vmatprep.mubr.bf16.mxu0 %v4581
        %5178 = vmatmul.mubr.bf16.gmra.mrb[0].mxu0 %v4580
        %v5179 = vpop.f32.mrb[0].mxu0
        %v5180 = vadd.f32 %v5140, %v5179
        %v5181 = vpop.f32.mrb[0].mxu0
        %v5182 = vpop.f32.mrb[0].mxu0
        %v5183 = vpop.f32.mrb[0].mxu0
        %5184 = vdwg.mxu0
        %5185 = vmatprep.subr.bf16.mxu0 0
        %5186 = vmatpush1.bf16.msra.mxu0 %v5009
        %5187 = vmatprep.subr.bf16.mxu0 0
        %5188 = vmatpush1.bf16.msra.mxu0 %v5010
        %5189 = vmatprep.subr.bf16.mxu0 0
        %5190 = vmatpush1.bf16.msra.mxu0 %v5011
        %5191 = vmatprep.subr.bf16.mxu0 0
        %5192 = vmatpush1.bf16.msra.mxu0 %v5012
        %5193 = vmatprep.subr.bf16.mxu0 0
        %5194 = vmatpush1.bf16.msra.mxu0 %v5013
        %5195 = vmatprep.subr.bf16.mxu0 0
        %5196 = vmatpush1.bf16.msra.mxu0 %v5014
        %5197 = vmatprep.subr.bf16.mxu0 0
        %5198 = vmatpush1.bf16.msra.mxu0 %v5015
        %5199 = vmatprep.subr.bf16.mxu0 0
        %5200 = vmatpush1.bf16.msra.mxu0 %v5016
        %5201 = vmatprep.subr.bf16.mxu0 0
        %5202 = vmatpush1.bf16.msra.mxu0 %v5017
        %5203 = vmatprep.subr.bf16.mxu0 0
        %5204 = vmatpush1.bf16.msra.mxu0 %v5018
        %5205 = vmatprep.subr.bf16.mxu0 0
        %5206 = vmatpush1.bf16.msra.mxu0 %v5019
        %5207 = vmatprep.subr.bf16.mxu0 0
        %5208 = vmatpush1.bf16.msra.mxu0 %v5020
        %5209 = vmatprep.subr.bf16.mxu0 0
        %5210 = vmatpush1.bf16.msra.mxu0 %v5021
        %5211 = vmatprep.subr.bf16.mxu0 0
        %5212 = vmatpush1.bf16.msra.mxu0 %v5022
        %5213 = vmatprep.subr.bf16.mxu0 0
        %5214 = vmatpush1.bf16.msra.mxu0 %v5023
        %5215 = vmatprep.subr.bf16.mxu0 0
        %5216 = vmatpush1.bf16.msra.mxu0 %v5024
        %5217 = vmatprep.mubr.bf16.mxu0 %v4583
        %5218 = vmatmul.mubr.bf16.gmra.mrb[0].mxu0 %v4582
        %v5219 = vpop.f32.mrb[0].mxu0
        %v5220 = vadd.f32 %v5180, %v5219
        %v5221 = vpop.f32.mrb[0].mxu0
        %v5222 = vpop.f32.mrb[0].mxu0
        %v5223 = vpop.f32.mrb[0].mxu0
        %5224 = vdwg.mxu0
        %5225 = vmatprep.subr.bf16.mxu0 0
        %5226 = vmatpush1.bf16.msra.mxu0 %v5025
        %5227 = vmatprep.subr.bf16.mxu0 0
        %5228 = vmatpush1.bf16.msra.mxu0 %v5026
        %5229 = vmatprep.subr.bf16.mxu0 0
        %5230 = vmatpush1.bf16.msra.mxu0 %v5027
        %5231 = vmatprep.subr.bf16.mxu0 0
        %5232 = vmatpush1.bf16.msra.mxu0 %v5028
        %5233 = vmatprep.subr.bf16.mxu0 0
        %5234 = vmatpush1.bf16.msra.mxu0 %v5029
        %5235 = vmatprep.subr.bf16.mxu0 0
        %5236 = vmatpush1.bf16.msra.mxu0 %v5030
        %5237 = vmatprep.subr.bf16.mxu0 0
        %5238 = vmatpush1.bf16.msra.mxu0 %v5031
        %5239 = vmatprep.subr.bf16.mxu0 0
        %5240 = vmatpush1.bf16.msra.mxu0 %v5032
        %5241 = vmatprep.subr.bf16.mxu0 0
        %5242 = vmatpush1.bf16.msra.mxu0 %v5033
        %5243 = vmatprep.subr.bf16.mxu0 0
        %5244 = vmatpush1.bf16.msra.mxu0 %v5034
        %5245 = vmatprep.subr.bf16.mxu0 0
        %5246 = vmatpush1.bf16.msra.mxu0 %v5035
        %5247 = vmatprep.subr.bf16.mxu0 0
        %5248 = vmatpush1.bf16.msra.mxu0 %v5036
        %5249 = vmatprep.subr.bf16.mxu0 0
        %5250 = vmatpush1.bf16.msra.mxu0 %v5037
        %5251 = vmatprep.subr.bf16.mxu0 0
        %5252 = vmatpush1.bf16.msra.mxu0 %v5038
        %5253 = vmatprep.subr.bf16.mxu0 0
        %5254 = vmatpush1.bf16.msra.mxu0 %v5039
        %5255 = vmatprep.subr.bf16.mxu0 0
        %5256 = vmatpush1.bf16.msra.mxu0 %v5040
        %5257 = vmatprep.mubr.bf16.mxu0 %v4585
        %5258 = vmatmul.mubr.bf16.gmra.mrb[0].mxu0 %v4584
        %v5259 = vpop.f32.mrb[0].mxu0
        %v5260 = vadd.f32 %v5220, %v5259
        %v5261 = vpop.f32.mrb[0].mxu0
        %v5262 = vpop.f32.mrb[0].mxu0
        %v5263 = vpop.f32.mrb[0].mxu0
        %5264 = vdwg.mxu0
        %v5265 = vld [vmem:[%s7] sm:$0xff]
        %v5266 = vld [vmem:[%s7 + $0x8] sm:$0xff]
        %v5267 = vld [vmem:[%s7 + $0x10] sm:$0xff]
        %v5268 = vld [vmem:[%s7 + $0x18] sm:$0xff]
        %v5269 = vld [vmem:[%s7 + $0x20] sm:$0xff]
        %v5270 = vld [vmem:[%s7 + $0x28] sm:$0xff]
        %v5271 = vld [vmem:[%s7 + $0x30] sm:$0xff]
        %v5272 = vld [vmem:[%s7 + $0x38] sm:$0xff]
        %v5273 = vld [vmem:[%s7 + $0x40] sm:$0xff]
        %v5274 = vld [vmem:[%s7 + $0x48] sm:$0xff]
        %v5275 = vld [vmem:[%s7 + $0x50] sm:$0xff]
        %v5276 = vld [vmem:[%s7 + $0x58] sm:$0xff]
        %v5277 = vld [vmem:[%s7 + $0x60] sm:$0xff]
        %v5278 = vld [vmem:[%s7 + $0x68] sm:$0xff]
        %v5279 = vld [vmem:[%s7 + $0x70] sm:$0xff]
        %v5280 = vld [vmem:[%s7 + $0x78] sm:$0xff]
        %v5281 = vld [vmem:[%s7 + $0x80] sm:$0xff]
        %v5282 = vld [vmem:[%s7 + $0x88] sm:$0xff]
        %v5283 = vld [vmem:[%s7 + $0x90] sm:$0xff]
        %v5284 = vld [vmem:[%s7 + $0x98] sm:$0xff]
        %v5285 = vld [vmem:[%s7 + $0xa0] sm:$0xff]
        %v5286 = vld [vmem:[%s7 + $0xa8] sm:$0xff]
        %v5287 = vld [vmem:[%s7 + $0xb0] sm:$0xff]
        %v5288 = vld [vmem:[%s7 + $0xb8] sm:$0xff]
        %v5289 = vld [vmem:[%s7 + $0xc0] sm:$0xff]
        %v5290 = vld [vmem:[%s7 + $0xc8] sm:$0xff]
        %v5291 = vld [vmem:[%s7 + $0xd0] sm:$0xff]
        %v5292 = vld [vmem:[%s7 + $0xd8] sm:$0xff]
        %v5293 = vld [vmem:[%s7 + $0xe0] sm:$0xff]
        %v5294 = vld [vmem:[%s7 + $0xe8] sm:$0xff]
        %v5295 = vld [vmem:[%s7 + $0xf0] sm:$0xff]
        %v5296 = vld [vmem:[%s7 + $0xf8] sm:$0xff]
        %v5297 = vld [vmem:[%s7 + $0x100] sm:$0xff]
        %v5298 = vld [vmem:[%s7 + $0x108] sm:$0xff]
        %v5299 = vld [vmem:[%s7 + $0x110] sm:$0xff]
        %v5300 = vld [vmem:[%s7 + $0x118] sm:$0xff]
        %v5301 = vld [vmem:[%s7 + $0x120] sm:$0xff]
        %v5302 = vld [vmem:[%s7 + $0x128] sm:$0xff]
        %v5303 = vld [vmem:[%s7 + $0x130] sm:$0xff]
        %v5304 = vld [vmem:[%s7 + $0x138] sm:$0xff]
        %v5305 = vld [vmem:[%s7 + $0x140] sm:$0xff]
        %v5306 = vld [vmem:[%s7 + $0x148] sm:$0xff]
        %v5307 = vld [vmem:[%s7 + $0x150] sm:$0xff]
        %v5308 = vld [vmem:[%s7 + $0x158] sm:$0xff]
        %v5309 = vld [vmem:[%s7 + $0x160] sm:$0xff]
        %v5310 = vld [vmem:[%s7 + $0x168] sm:$0xff]
        %v5311 = vld [vmem:[%s7 + $0x170] sm:$0xff]
        %v5312 = vld [vmem:[%s7 + $0x178] sm:$0xff]
        %v5313 = vld [vmem:[%s7 + $0x180] sm:$0xff]
        %v5314 = vld [vmem:[%s7 + $0x188] sm:$0xff]
        %v5315 = vld [vmem:[%s7 + $0x190] sm:$0xff]
        %v5316 = vld [vmem:[%s7 + $0x198] sm:$0xff]
        %v5317 = vld [vmem:[%s7 + $0x1a0] sm:$0xff]
        %v5318 = vld [vmem:[%s7 + $0x1a8] sm:$0xff]
        %v5319 = vld [vmem:[%s7 + $0x1b0] sm:$0xff]
        %v5320 = vld [vmem:[%s7 + $0x1b8] sm:$0xff]
        %v5321 = vld [vmem:[%s7 + $0x1c0] sm:$0xff]
        %v5322 = vld [vmem:[%s7 + $0x1c8] sm:$0xff]
        %v5323 = vld [vmem:[%s7 + $0x1d0] sm:$0xff]
        %v5324 = vld [vmem:[%s7 + $0x1d8] sm:$0xff]
        %v5325 = vld [vmem:[%s7 + $0x1e0] sm:$0xff]
        %v5326 = vld [vmem:[%s7 + $0x1e8] sm:$0xff]
        %v5327 = vld [vmem:[%s7 + $0x1f0] sm:$0xff]
        %v5328 = vld [vmem:[%s7 + $0x1f8] sm:$0xff]
        %v5329 = vld [vmem:[%s7 + $0x200] sm:$0xff]
        %v5330 = vld [vmem:[%s7 + $0x208] sm:$0xff]
        %v5331 = vld [vmem:[%s7 + $0x210] sm:$0xff]
        %v5332 = vld [vmem:[%s7 + $0x218] sm:$0xff]
        %v5333 = vld [vmem:[%s7 + $0x220] sm:$0xff]
        %v5334 = vld [vmem:[%s7 + $0x228] sm:$0xff]
        %v5335 = vld [vmem:[%s7 + $0x230] sm:$0xff]
        %v5336 = vld [vmem:[%s7 + $0x238] sm:$0xff]
        %v5337 = vld [vmem:[%s7 + $0x240] sm:$0xff]
        %v5338 = vld [vmem:[%s7 + $0x248] sm:$0xff]
        %v5339 = vld [vmem:[%s7 + $0x250] sm:$0xff]
        %v5340 = vld [vmem:[%s7 + $0x258] sm:$0xff]
        %v5341 = vld [vmem:[%s7 + $0x260] sm:$0xff]
        %v5342 = vld [vmem:[%s7 + $0x268] sm:$0xff]
        %v5343 = vld [vmem:[%s7 + $0x270] sm:$0xff]
        %v5344 = vld [vmem:[%s7 + $0x278] sm:$0xff]
        %v5345 = vld [vmem:[%s7 + $0x280] sm:$0xff]
        %v5346 = vld [vmem:[%s7 + $0x288] sm:$0xff]
        %v5347 = vld [vmem:[%s7 + $0x290] sm:$0xff]
        %v5348 = vld [vmem:[%s7 + $0x298] sm:$0xff]
        %v5349 = vld [vmem:[%s7 + $0x2a0] sm:$0xff]
        %v5350 = vld [vmem:[%s7 + $0x2a8] sm:$0xff]
        %v5351 = vld [vmem:[%s7 + $0x2b0] sm:$0xff]
        %v5352 = vld [vmem:[%s7 + $0x2b8] sm:$0xff]
        %v5353 = vld [vmem:[%s7 + $0x2c0] sm:$0xff]
        %v5354 = vld [vmem:[%s7 + $0x2c8] sm:$0xff]
        %v5355 = vld [vmem:[%s7 + $0x2d0] sm:$0xff]
        %v5356 = vld [vmem:[%s7 + $0x2d8] sm:$0xff]
        %v5357 = vld [vmem:[%s7 + $0x2e0] sm:$0xff]
        %v5358 = vld [vmem:[%s7 + $0x2e8] sm:$0xff]
        %v5359 = vld [vmem:[%s7 + $0x2f0] sm:$0xff]
        %v5360 = vld [vmem:[%s7 + $0x2f8] sm:$0xff]
        %v5361 = vld [vmem:[%s7 + $0x300] sm:$0xff]
        %v5362 = vld [vmem:[%s7 + $0x308] sm:$0xff]
        %v5363 = vld [vmem:[%s7 + $0x310] sm:$0xff]
        %v5364 = vld [vmem:[%s7 + $0x318] sm:$0xff]
        %v5365 = vld [vmem:[%s7 + $0x320] sm:$0xff]
        %v5366 = vld [vmem:[%s7 + $0x328] sm:$0xff]
        %v5367 = vld [vmem:[%s7 + $0x330] sm:$0xff]
        %v5368 = vld [vmem:[%s7 + $0x338] sm:$0xff]
        %v5369 = vld [vmem:[%s7 + $0x340] sm:$0xff]
        %v5370 = vld [vmem:[%s7 + $0x348] sm:$0xff]
        %v5371 = vld [vmem:[%s7 + $0x350] sm:$0xff]
        %v5372 = vld [vmem:[%s7 + $0x358] sm:$0xff]
        %v5373 = vld [vmem:[%s7 + $0x360] sm:$0xff]
        %v5374 = vld [vmem:[%s7 + $0x368] sm:$0xff]
        %v5375 = vld [vmem:[%s7 + $0x370] sm:$0xff]
        %v5376 = vld [vmem:[%s7 + $0x378] sm:$0xff]
        %v5377 = vld [vmem:[%s7 + $0x380] sm:$0xff]
        %v5378 = vld [vmem:[%s7 + $0x388] sm:$0xff]
        %v5379 = vld [vmem:[%s7 + $0x390] sm:$0xff]
        %v5380 = vld [vmem:[%s7 + $0x398] sm:$0xff]
        %v5381 = vld [vmem:[%s7 + $0x3a0] sm:$0xff]
        %v5382 = vld [vmem:[%s7 + $0x3a8] sm:$0xff]
        %v5383 = vld [vmem:[%s7 + $0x3b0] sm:$0xff]
        %v5384 = vld [vmem:[%s7 + $0x3b8] sm:$0xff]
        %v5385 = vld [vmem:[%s7 + $0x3c0] sm:$0xff]
        %v5386 = vld [vmem:[%s7 + $0x3c8] sm:$0xff]
        %v5387 = vld [vmem:[%s7 + $0x3d0] sm:$0xff]
        %v5388 = vld [vmem:[%s7 + $0x3d8] sm:$0xff]
        %v5389 = vld [vmem:[%s7 + $0x3e0] sm:$0xff]
        %v5390 = vld [vmem:[%s7 + $0x3e8] sm:$0xff]
        %v5391 = vld [vmem:[%s7 + $0x3f0] sm:$0xff]
        %v5392 = vld [vmem:[%s7 + $0x3f8] sm:$0xff]
        %v5393 = vld [vmem:[%s7 + $0x400] sm:$0xff]
        %v5394 = vld [vmem:[%s7 + $0x408] sm:$0xff]
        %v5395 = vld [vmem:[%s7 + $0x410] sm:$0xff]
        %v5396 = vld [vmem:[%s7 + $0x418] sm:$0xff]
        %v5397 = vld [vmem:[%s7 + $0x420] sm:$0xff]
        %v5398 = vld [vmem:[%s7 + $0x428] sm:$0xff]
        %v5399 = vld [vmem:[%s7 + $0x430] sm:$0xff]
        %v5400 = vld [vmem:[%s7 + $0x438] sm:$0xff]
        %v5401 = vld [vmem:[%s7 + $0x440] sm:$0xff]
        %v5402 = vld [vmem:[%s7 + $0x448] sm:$0xff]
        %v5403 = vld [vmem:[%s7 + $0x450] sm:$0xff]
        %v5404 = vld [vmem:[%s7 + $0x458] sm:$0xff]
        %v5405 = vld [vmem:[%s7 + $0x460] sm:$0xff]
        %v5406 = vld [vmem:[%s7 + $0x468] sm:$0xff]
        %v5407 = vld [vmem:[%s7 + $0x470] sm:$0xff]
        %v5408 = vld [vmem:[%s7 + $0x478] sm:$0xff]
        %v5409 = vld [vmem:[%s7 + $0x480] sm:$0xff]
        %v5410 = vld [vmem:[%s7 + $0x488] sm:$0xff]
        %v5411 = vld [vmem:[%s7 + $0x490] sm:$0xff]
        %v5412 = vld [vmem:[%s7 + $0x498] sm:$0xff]
        %v5413 = vld [vmem:[%s7 + $0x4a0] sm:$0xff]
        %v5414 = vld [vmem:[%s7 + $0x4a8] sm:$0xff]
        %v5415 = vld [vmem:[%s7 + $0x4b0] sm:$0xff]
        %v5416 = vld [vmem:[%s7 + $0x4b8] sm:$0xff]
        %v5417 = vld [vmem:[%s7 + $0x4c0] sm:$0xff]
        %v5418 = vld [vmem:[%s7 + $0x4c8] sm:$0xff]
        %v5419 = vld [vmem:[%s7 + $0x4d0] sm:$0xff]
        %v5420 = vld [vmem:[%s7 + $0x4d8] sm:$0xff]
        %v5421 = vld [vmem:[%s7 + $0x4e0] sm:$0xff]
        %v5422 = vld [vmem:[%s7 + $0x4e8] sm:$0xff]
        %v5423 = vld [vmem:[%s7 + $0x4f0] sm:$0xff]
        %v5424 = vld [vmem:[%s7 + $0x4f8] sm:$0xff]
        %v5425 = vld [vmem:[%s7 + $0x500] sm:$0xff]
        %v5426 = vld [vmem:[%s7 + $0x508] sm:$0xff]
        %v5427 = vld [vmem:[%s7 + $0x510] sm:$0xff]
        %v5428 = vld [vmem:[%s7 + $0x518] sm:$0xff]
        %v5429 = vld [vmem:[%s7 + $0x520] sm:$0xff]
        %v5430 = vld [vmem:[%s7 + $0x528] sm:$0xff]
        %v5431 = vld [vmem:[%s7 + $0x530] sm:$0xff]
        %v5432 = vld [vmem:[%s7 + $0x538] sm:$0xff]
        %v5433 = vld [vmem:[%s7 + $0x540] sm:$0xff]
        %v5434 = vld [vmem:[%s7 + $0x548] sm:$0xff]
        %v5435 = vld [vmem:[%s7 + $0x550] sm:$0xff]
        %v5436 = vld [vmem:[%s7 + $0x558] sm:$0xff]
        %v5437 = vld [vmem:[%s7 + $0x560] sm:$0xff]
        %v5438 = vld [vmem:[%s7 + $0x568] sm:$0xff]
        %v5439 = vld [vmem:[%s7 + $0x570] sm:$0xff]
        %v5440 = vld [vmem:[%s7 + $0x578] sm:$0xff]
        %v5441 = vld [vmem:[%s7 + $0x580] sm:$0xff]
        %v5442 = vld [vmem:[%s7 + $0x588] sm:$0xff]
        %v5443 = vld [vmem:[%s7 + $0x590] sm:$0xff]
        %v5444 = vld [vmem:[%s7 + $0x598] sm:$0xff]
        %v5445 = vld [vmem:[%s7 + $0x5a0] sm:$0xff]
        %v5446 = vld [vmem:[%s7 + $0x5a8] sm:$0xff]
        %v5447 = vld [vmem:[%s7 + $0x5b0] sm:$0xff]
        %v5448 = vld [vmem:[%s7 + $0x5b8] sm:$0xff]
        %v5449 = vld [vmem:[%s7 + $0x5c0] sm:$0xff]
        %v5450 = vld [vmem:[%s7 + $0x5c8] sm:$0xff]
        %v5451 = vld [vmem:[%s7 + $0x5d0] sm:$0xff]
        %v5452 = vld [vmem:[%s7 + $0x5d8] sm:$0xff]
        %v5453 = vld [vmem:[%s7 + $0x5e0] sm:$0xff]
        %v5454 = vld [vmem:[%s7 + $0x5e8] sm:$0xff]
        %v5455 = vld [vmem:[%s7 + $0x5f0] sm:$0xff]
        %v5456 = vld [vmem:[%s7 + $0x5f8] sm:$0xff]
        %v5457 = vld [vmem:[%s7 + $0x600] sm:$0xff]
        %v5458 = vld [vmem:[%s7 + $0x608] sm:$0xff]
        %v5459 = vld [vmem:[%s7 + $0x610] sm:$0xff]
        %v5460 = vld [vmem:[%s7 + $0x618] sm:$0xff]
        %v5461 = vld [vmem:[%s7 + $0x620] sm:$0xff]
        %v5462 = vld [vmem:[%s7 + $0x628] sm:$0xff]
        %v5463 = vld [vmem:[%s7 + $0x630] sm:$0xff]
        %v5464 = vld [vmem:[%s7 + $0x638] sm:$0xff]
        %v5465 = vld [vmem:[%s7 + $0x640] sm:$0xff]
        %v5466 = vld [vmem:[%s7 + $0x648] sm:$0xff]
        %v5467 = vld [vmem:[%s7 + $0x650] sm:$0xff]
        %v5468 = vld [vmem:[%s7 + $0x658] sm:$0xff]
        %v5469 = vld [vmem:[%s7 + $0x660] sm:$0xff]
        %v5470 = vld [vmem:[%s7 + $0x668] sm:$0xff]
        %v5471 = vld [vmem:[%s7 + $0x670] sm:$0xff]
        %v5472 = vld [vmem:[%s7 + $0x678] sm:$0xff]
        %v5473 = vld [vmem:[%s7 + $0x680] sm:$0xff]
        %v5474 = vld [vmem:[%s7 + $0x688] sm:$0xff]
        %v5475 = vld [vmem:[%s7 + $0x690] sm:$0xff]
        %v5476 = vld [vmem:[%s7 + $0x698] sm:$0xff]
        %v5477 = vld [vmem:[%s7 + $0x6a0] sm:$0xff]
        %v5478 = vld [vmem:[%s7 + $0x6a8] sm:$0xff]
        %v5479 = vld [vmem:[%s7 + $0x6b0] sm:$0xff]
        %v5480 = vld [vmem:[%s7 + $0x6b8] sm:$0xff]
        %v5481 = vld [vmem:[%s7 + $0x6c0] sm:$0xff]
        %v5482 = vld [vmem:[%s7 + $0x6c8] sm:$0xff]
        %v5483 = vld [vmem:[%s7 + $0x6d0] sm:$0xff]
        %v5484 = vld [vmem:[%s7 + $0x6d8] sm:$0xff]
        %v5485 = vld [vmem:[%s7 + $0x6e0] sm:$0xff]
        %v5486 = vld [vmem:[%s7 + $0x6e8] sm:$0xff]
        %v5487 = vld [vmem:[%s7 + $0x6f0] sm:$0xff]
        %v5488 = vld [vmem:[%s7 + $0x6f8] sm:$0xff]
        %v5489 = vld [vmem:[%s7 + $0x700] sm:$0xff]
        %v5490 = vld [vmem:[%s7 + $0x708] sm:$0xff]
        %v5491 = vld [vmem:[%s7 + $0x710] sm:$0xff]
        %v5492 = vld [vmem:[%s7 + $0x718] sm:$0xff]
        %v5493 = vld [vmem:[%s7 + $0x720] sm:$0xff]
        %v5494 = vld [vmem:[%s7 + $0x728] sm:$0xff]
        %v5495 = vld [vmem:[%s7 + $0x730] sm:$0xff]
        %v5496 = vld [vmem:[%s7 + $0x738] sm:$0xff]
        %v5497 = vld [vmem:[%s7 + $0x740] sm:$0xff]
        %v5498 = vld [vmem:[%s7 + $0x748] sm:$0xff]
        %v5499 = vld [vmem:[%s7 + $0x750] sm:$0xff]
        %v5500 = vld [vmem:[%s7 + $0x758] sm:$0xff]
        %v5501 = vld [vmem:[%s7 + $0x760] sm:$0xff]
        %v5502 = vld [vmem:[%s7 + $0x768] sm:$0xff]
        %v5503 = vld [vmem:[%s7 + $0x770] sm:$0xff]
        %v5504 = vld [vmem:[%s7 + $0x778] sm:$0xff]
        %v5505 = vld [vmem:[%s7 + $0x780] sm:$0xff]
        %v5506 = vld [vmem:[%s7 + $0x788] sm:$0xff]
        %v5507 = vld [vmem:[%s7 + $0x790] sm:$0xff]
        %v5508 = vld [vmem:[%s7 + $0x798] sm:$0xff]
        %v5509 = vld [vmem:[%s7 + $0x7a0] sm:$0xff]
        %v5510 = vld [vmem:[%s7 + $0x7a8] sm:$0xff]
        %v5511 = vld [vmem:[%s7 + $0x7b0] sm:$0xff]
        %v5512 = vld [vmem:[%s7 + $0x7b8] sm:$0xff]
        %v5513 = vld [vmem:[%s7 + $0x7c0] sm:$0xff]
        %v5514 = vld [vmem:[%s7 + $0x7c8] sm:$0xff]
        %v5515 = vld [vmem:[%s7 + $0x7d0] sm:$0xff]
        %v5516 = vld [vmem:[%s7 + $0x7d8] sm:$0xff]
        %v5517 = vld [vmem:[%s7 + $0x7e0] sm:$0xff]
        %v5518 = vld [vmem:[%s7 + $0x7e8] sm:$0xff]
        %v5519 = vld [vmem:[%s7 + $0x7f0] sm:$0xff]
        %v5520 = vld [vmem:[%s7 + $0x7f8] sm:$0xff]
        %v5521 = vld [vmem:[%s8] sm:$0xff]
        %v5523 = vlaneseq
        %v5524 = vshrl.u32 %v5523, 7
        %v5525 = vsub.s32 0, %v5524
        %v5526 = vrot.slane %v5521, %v5525
        %v5527 = vlaneseq
        %v5528 = vshrl.u32 %v5527, 7
        %v5529 = vsub.s32 1, %v5528
        %v5530 = vrot.slane %v5521, %v5529
        %v5531 = vlaneseq
        %v5532 = vshrl.u32 %v5531, 7
        %v5533 = vsub.s32 2, %v5532
        %v5534 = vrot.slane %v5521, %v5533
        %v5535 = vlaneseq
        %v5536 = vshrl.u32 %v5535, 7
        %v5537 = vsub.s32 3, %v5536
        %v5538 = vrot.slane %v5521, %v5537
        %v5539 = vlaneseq
        %v5540 = vshrl.u32 %v5539, 7
        %v5541 = vsub.s32 4, %v5540
        %v5542 = vrot.slane %v5521, %v5541
        %v5543 = vlaneseq
        %v5544 = vshrl.u32 %v5543, 7
        %v5545 = vsub.s32 5, %v5544
        %v5546 = vrot.slane %v5521, %v5545
        %v5547 = vlaneseq
        %v5548 = vshrl.u32 %v5547, 7
        %v5549 = vsub.s32 6, %v5548
        %v5550 = vrot.slane %v5521, %v5549
        %v5551 = vlaneseq
        %v5552 = vshrl.u32 %v5551, 7
        %v5553 = vsub.s32 7, %v5552
        %v5554 = vrot.slane %v5521, %v5553
        %v5819 = vunpack.c.l.b16 %v5265
        %v5820 = vunpack.c.h.b16 %v5265
        %v5821 = vunpack.c.l.b16 %v5266
        %v5822 = vunpack.c.h.b16 %v5266
        %v5823 = vunpack.c.l.b16 %v5267
        %v5824 = vunpack.c.h.b16 %v5267
        %v5825 = vunpack.c.l.b16 %v5268
        %v5826 = vunpack.c.h.b16 %v5268
        %v5827 = vunpack.c.l.b16 %v5269
        %v5828 = vunpack.c.h.b16 %v5269
        %v5829 = vunpack.c.l.b16 %v5270
        %v5830 = vunpack.c.h.b16 %v5270
        %v5831 = vunpack.c.l.b16 %v5271
        %v5832 = vunpack.c.h.b16 %v5271
        %v5833 = vunpack.c.l.b16 %v5272
        %v5834 = vunpack.c.h.b16 %v5272
        %v5835 = vunpack.c.l.b16 %v5273
        %v5836 = vunpack.c.h.b16 %v5273
        %v5837 = vunpack.c.l.b16 %v5274
        %v5838 = vunpack.c.h.b16 %v5274
        %v5839 = vunpack.c.l.b16 %v5275
        %v5840 = vunpack.c.h.b16 %v5275
        %v5841 = vunpack.c.l.b16 %v5276
        %v5842 = vunpack.c.h.b16 %v5276
        %v5843 = vunpack.c.l.b16 %v5277
        %v5844 = vunpack.c.h.b16 %v5277
        %v5845 = vunpack.c.l.b16 %v5278
        %v5846 = vunpack.c.h.b16 %v5278
        %v5847 = vunpack.c.l.b16 %v5279
        %v5848 = vunpack.c.h.b16 %v5279
        %v5849 = vunpack.c.l.b16 %v5280
        %v5850 = vunpack.c.h.b16 %v5280
        %v5851 = vunpack.c.l.b16 %v5281
        %v5852 = vunpack.c.h.b16 %v5281
        %v5853 = vunpack.c.l.b16 %v5282
        %v5854 = vunpack.c.h.b16 %v5282
        %v5855 = vunpack.c.l.b16 %v5283
        %v5856 = vunpack.c.h.b16 %v5283
        %v5857 = vunpack.c.l.b16 %v5284
        %v5858 = vunpack.c.h.b16 %v5284
        %v5859 = vunpack.c.l.b16 %v5285
        %v5860 = vunpack.c.h.b16 %v5285
        %v5861 = vunpack.c.l.b16 %v5286
        %v5862 = vunpack.c.h.b16 %v5286
        %v5863 = vunpack.c.l.b16 %v5287
        %v5864 = vunpack.c.h.b16 %v5287
        %v5865 = vunpack.c.l.b16 %v5288
        %v5866 = vunpack.c.h.b16 %v5288
        %v5867 = vunpack.c.l.b16 %v5289
        %v5868 = vunpack.c.h.b16 %v5289
        %v5869 = vunpack.c.l.b16 %v5290
        %v5870 = vunpack.c.h.b16 %v5290
        %v5871 = vunpack.c.l.b16 %v5291
        %v5872 = vunpack.c.h.b16 %v5291
        %v5873 = vunpack.c.l.b16 %v5292
        %v5874 = vunpack.c.h.b16 %v5292
        %v5875 = vunpack.c.l.b16 %v5293
        %v5876 = vunpack.c.h.b16 %v5293
        %v5877 = vunpack.c.l.b16 %v5294
        %v5878 = vunpack.c.h.b16 %v5294
        %v5879 = vunpack.c.l.b16 %v5295
        %v5880 = vunpack.c.h.b16 %v5295
        %v5881 = vunpack.c.l.b16 %v5296
        %v5882 = vunpack.c.h.b16 %v5296
        %v5883 = vunpack.c.l.b16 %v5297
        %v5884 = vunpack.c.h.b16 %v5297
        %v5885 = vunpack.c.l.b16 %v5298
        %v5886 = vunpack.c.h.b16 %v5298
        %v5887 = vunpack.c.l.b16 %v5299
        %v5888 = vunpack.c.h.b16 %v5299
        %v5889 = vunpack.c.l.b16 %v5300
        %v5890 = vunpack.c.h.b16 %v5300
        %v5891 = vunpack.c.l.b16 %v5301
        %v5892 = vunpack.c.h.b16 %v5301
        %v5893 = vunpack.c.l.b16 %v5302
        %v5894 = vunpack.c.h.b16 %v5302
        %v5895 = vunpack.c.l.b16 %v5303
        %v5896 = vunpack.c.h.b16 %v5303
        %v5897 = vunpack.c.l.b16 %v5304
        %v5898 = vunpack.c.h.b16 %v5304
        %v5899 = vunpack.c.l.b16 %v5305
        %v5900 = vunpack.c.h.b16 %v5305
        %v5901 = vunpack.c.l.b16 %v5306
        %v5902 = vunpack.c.h.b16 %v5306
        %v5903 = vunpack.c.l.b16 %v5307
        %v5904 = vunpack.c.h.b16 %v5307
        %v5905 = vunpack.c.l.b16 %v5308
        %v5906 = vunpack.c.h.b16 %v5308
        %v5907 = vunpack.c.l.b16 %v5309
        %v5908 = vunpack.c.h.b16 %v5309
        %v5909 = vunpack.c.l.b16 %v5310
        %v5910 = vunpack.c.h.b16 %v5310
        %v5911 = vunpack.c.l.b16 %v5311
        %v5912 = vunpack.c.h.b16 %v5311
        %v5913 = vunpack.c.l.b16 %v5312
        %v5914 = vunpack.c.h.b16 %v5312
        %v5915 = vunpack.c.l.b16 %v5313
        %v5916 = vunpack.c.h.b16 %v5313
        %v5917 = vunpack.c.l.b16 %v5314
        %v5918 = vunpack.c.h.b16 %v5314
        %v5919 = vunpack.c.l.b16 %v5315
        %v5920 = vunpack.c.h.b16 %v5315
        %v5921 = vunpack.c.l.b16 %v5316
        %v5922 = vunpack.c.h.b16 %v5316
        %v5923 = vunpack.c.l.b16 %v5317
        %v5924 = vunpack.c.h.b16 %v5317
        %v5925 = vunpack.c.l.b16 %v5318
        %v5926 = vunpack.c.h.b16 %v5318
        %v5927 = vunpack.c.l.b16 %v5319
        %v5928 = vunpack.c.h.b16 %v5319
        %v5929 = vunpack.c.l.b16 %v5320
        %v5930 = vunpack.c.h.b16 %v5320
        %v5931 = vunpack.c.l.b16 %v5321
        %v5932 = vunpack.c.h.b16 %v5321
        %v5933 = vunpack.c.l.b16 %v5322
        %v5934 = vunpack.c.h.b16 %v5322
        %v5935 = vunpack.c.l.b16 %v5323
        %v5936 = vunpack.c.h.b16 %v5323
        %v5937 = vunpack.c.l.b16 %v5324
        %v5938 = vunpack.c.h.b16 %v5324
        %v5939 = vunpack.c.l.b16 %v5325
        %v5940 = vunpack.c.h.b16 %v5325
        %v5941 = vunpack.c.l.b16 %v5326
        %v5942 = vunpack.c.h.b16 %v5326
        %v5943 = vunpack.c.l.b16 %v5327
        %v5944 = vunpack.c.h.b16 %v5327
        %v5945 = vunpack.c.l.b16 %v5328
        %v5946 = vunpack.c.h.b16 %v5328
        %v5947 = vunpack.c.l.b16 %v5329
        %v5948 = vunpack.c.h.b16 %v5329
        %v5949 = vunpack.c.l.b16 %v5330
        %v5950 = vunpack.c.h.b16 %v5330
        %v5951 = vunpack.c.l.b16 %v5331
        %v5952 = vunpack.c.h.b16 %v5331
        %v5953 = vunpack.c.l.b16 %v5332
        %v5954 = vunpack.c.h.b16 %v5332
        %v5955 = vunpack.c.l.b16 %v5333
        %v5956 = vunpack.c.h.b16 %v5333
        %v5957 = vunpack.c.l.b16 %v5334
        %v5958 = vunpack.c.h.b16 %v5334
        %v5959 = vunpack.c.l.b16 %v5335
        %v5960 = vunpack.c.h.b16 %v5335
        %v5961 = vunpack.c.l.b16 %v5336
        %v5962 = vunpack.c.h.b16 %v5336
        %v5963 = vunpack.c.l.b16 %v5337
        %v5964 = vunpack.c.h.b16 %v5337
        %v5965 = vunpack.c.l.b16 %v5338
        %v5966 = vunpack.c.h.b16 %v5338
        %v5967 = vunpack.c.l.b16 %v5339
        %v5968 = vunpack.c.h.b16 %v5339
        %v5969 = vunpack.c.l.b16 %v5340
        %v5970 = vunpack.c.h.b16 %v5340
        %v5971 = vunpack.c.l.b16 %v5341
        %v5972 = vunpack.c.h.b16 %v5341
        %v5973 = vunpack.c.l.b16 %v5342
        %v5974 = vunpack.c.h.b16 %v5342
        %v5975 = vunpack.c.l.b16 %v5343
        %v5976 = vunpack.c.h.b16 %v5343
        %v5977 = vunpack.c.l.b16 %v5344
        %v5978 = vunpack.c.h.b16 %v5344
        %v5979 = vunpack.c.l.b16 %v5345
        %v5980 = vunpack.c.h.b16 %v5345
        %v5981 = vunpack.c.l.b16 %v5346
        %v5982 = vunpack.c.h.b16 %v5346
        %v5983 = vunpack.c.l.b16 %v5347
        %v5984 = vunpack.c.h.b16 %v5347
        %v5985 = vunpack.c.l.b16 %v5348
        %v5986 = vunpack.c.h.b16 %v5348
        %v5987 = vunpack.c.l.b16 %v5349
        %v5988 = vunpack.c.h.b16 %v5349
        %v5989 = vunpack.c.l.b16 %v5350
        %v5990 = vunpack.c.h.b16 %v5350
        %v5991 = vunpack.c.l.b16 %v5351
        %v5992 = vunpack.c.h.b16 %v5351
        %v5993 = vunpack.c.l.b16 %v5352
        %v5994 = vunpack.c.h.b16 %v5352
        %v5995 = vunpack.c.l.b16 %v5353
        %v5996 = vunpack.c.h.b16 %v5353
        %v5997 = vunpack.c.l.b16 %v5354
        %v5998 = vunpack.c.h.b16 %v5354
        %v5999 = vunpack.c.l.b16 %v5355
        %v6000 = vunpack.c.h.b16 %v5355
        %v6001 = vunpack.c.l.b16 %v5356
        %v6002 = vunpack.c.h.b16 %v5356
        %v6003 = vunpack.c.l.b16 %v5357
        %v6004 = vunpack.c.h.b16 %v5357
        %v6005 = vunpack.c.l.b16 %v5358
        %v6006 = vunpack.c.h.b16 %v5358
        %v6007 = vunpack.c.l.b16 %v5359
        %v6008 = vunpack.c.h.b16 %v5359
        %v6009 = vunpack.c.l.b16 %v5360
        %v6010 = vunpack.c.h.b16 %v5360
        %v6011 = vunpack.c.l.b16 %v5361
        %v6012 = vunpack.c.h.b16 %v5361
        %v6013 = vunpack.c.l.b16 %v5362
        %v6014 = vunpack.c.h.b16 %v5362
        %v6015 = vunpack.c.l.b16 %v5363
        %v6016 = vunpack.c.h.b16 %v5363
        %v6017 = vunpack.c.l.b16 %v5364
        %v6018 = vunpack.c.h.b16 %v5364
        %v6019 = vunpack.c.l.b16 %v5365
        %v6020 = vunpack.c.h.b16 %v5365
        %v6021 = vunpack.c.l.b16 %v5366
        %v6022 = vunpack.c.h.b16 %v5366
        %v6023 = vunpack.c.l.b16 %v5367
        %v6024 = vunpack.c.h.b16 %v5367
        %v6025 = vunpack.c.l.b16 %v5368
        %v6026 = vunpack.c.h.b16 %v5368
        %v6027 = vunpack.c.l.b16 %v5369
        %v6028 = vunpack.c.h.b16 %v5369
        %v6029 = vunpack.c.l.b16 %v5370
        %v6030 = vunpack.c.h.b16 %v5370
        %v6031 = vunpack.c.l.b16 %v5371
        %v6032 = vunpack.c.h.b16 %v5371
        %v6033 = vunpack.c.l.b16 %v5372
        %v6034 = vunpack.c.h.b16 %v5372
        %v6035 = vunpack.c.l.b16 %v5373
        %v6036 = vunpack.c.h.b16 %v5373
        %v6037 = vunpack.c.l.b16 %v5374
        %v6038 = vunpack.c.h.b16 %v5374
        %v6039 = vunpack.c.l.b16 %v5375
        %v6040 = vunpack.c.h.b16 %v5375
        %v6041 = vunpack.c.l.b16 %v5376
        %v6042 = vunpack.c.h.b16 %v5376
        %v6043 = vunpack.c.l.b16 %v5377
        %v6044 = vunpack.c.h.b16 %v5377
        %v6045 = vunpack.c.l.b16 %v5378
        %v6046 = vunpack.c.h.b16 %v5378
        %v6047 = vunpack.c.l.b16 %v5379
        %v6048 = vunpack.c.h.b16 %v5379
        %v6049 = vunpack.c.l.b16 %v5380
        %v6050 = vunpack.c.h.b16 %v5380
        %v6051 = vunpack.c.l.b16 %v5381
        %v6052 = vunpack.c.h.b16 %v5381
        %v6053 = vunpack.c.l.b16 %v5382
        %v6054 = vunpack.c.h.b16 %v5382
        %v6055 = vunpack.c.l.b16 %v5383
        %v6056 = vunpack.c.h.b16 %v5383
        %v6057 = vunpack.c.l.b16 %v5384
        %v6058 = vunpack.c.h.b16 %v5384
        %v6059 = vunpack.c.l.b16 %v5385
        %v6060 = vunpack.c.h.b16 %v5385
        %v6061 = vunpack.c.l.b16 %v5386
        %v6062 = vunpack.c.h.b16 %v5386
        %v6063 = vunpack.c.l.b16 %v5387
        %v6064 = vunpack.c.h.b16 %v5387
        %v6065 = vunpack.c.l.b16 %v5388
        %v6066 = vunpack.c.h.b16 %v5388
        %v6067 = vunpack.c.l.b16 %v5389
        %v6068 = vunpack.c.h.b16 %v5389
        %v6069 = vunpack.c.l.b16 %v5390
        %v6070 = vunpack.c.h.b16 %v5390
        %v6071 = vunpack.c.l.b16 %v5391
        %v6072 = vunpack.c.h.b16 %v5391
        %v6073 = vunpack.c.l.b16 %v5392
        %v6074 = vunpack.c.h.b16 %v5392
        %v6075 = vunpack.c.l.b16 %v5393
        %v6076 = vunpack.c.h.b16 %v5393
        %v6077 = vunpack.c.l.b16 %v5394
        %v6078 = vunpack.c.h.b16 %v5394
        %v6079 = vunpack.c.l.b16 %v5395
        %v6080 = vunpack.c.h.b16 %v5395
        %v6081 = vunpack.c.l.b16 %v5396
        %v6082 = vunpack.c.h.b16 %v5396
        %v6083 = vunpack.c.l.b16 %v5397
        %v6084 = vunpack.c.h.b16 %v5397
        %v6085 = vunpack.c.l.b16 %v5398
        %v6086 = vunpack.c.h.b16 %v5398
        %v6087 = vunpack.c.l.b16 %v5399
        %v6088 = vunpack.c.h.b16 %v5399
        %v6089 = vunpack.c.l.b16 %v5400
        %v6090 = vunpack.c.h.b16 %v5400
        %v6091 = vunpack.c.l.b16 %v5401
        %v6092 = vunpack.c.h.b16 %v5401
        %v6093 = vunpack.c.l.b16 %v5402
        %v6094 = vunpack.c.h.b16 %v5402
        %v6095 = vunpack.c.l.b16 %v5403
        %v6096 = vunpack.c.h.b16 %v5403
        %v6097 = vunpack.c.l.b16 %v5404
        %v6098 = vunpack.c.h.b16 %v5404
        %v6099 = vunpack.c.l.b16 %v5405
        %v6100 = vunpack.c.h.b16 %v5405
        %v6101 = vunpack.c.l.b16 %v5406
        %v6102 = vunpack.c.h.b16 %v5406
        %v6103 = vunpack.c.l.b16 %v5407
        %v6104 = vunpack.c.h.b16 %v5407
        %v6105 = vunpack.c.l.b16 %v5408
        %v6106 = vunpack.c.h.b16 %v5408
        %v6107 = vunpack.c.l.b16 %v5409
        %v6108 = vunpack.c.h.b16 %v5409
        %v6109 = vunpack.c.l.b16 %v5410
        %v6110 = vunpack.c.h.b16 %v5410
        %v6111 = vunpack.c.l.b16 %v5411
        %v6112 = vunpack.c.h.b16 %v5411
        %v6113 = vunpack.c.l.b16 %v5412
        %v6114 = vunpack.c.h.b16 %v5412
        %v6115 = vunpack.c.l.b16 %v5413
        %v6116 = vunpack.c.h.b16 %v5413
        %v6117 = vunpack.c.l.b16 %v5414
        %v6118 = vunpack.c.h.b16 %v5414
        %v6119 = vunpack.c.l.b16 %v5415
        %v6120 = vunpack.c.h.b16 %v5415
        %v6121 = vunpack.c.l.b16 %v5416
        %v6122 = vunpack.c.h.b16 %v5416
        %v6123 = vunpack.c.l.b16 %v5417
        %v6124 = vunpack.c.h.b16 %v5417
        %v6125 = vunpack.c.l.b16 %v5418
        %v6126 = vunpack.c.h.b16 %v5418
        %v6127 = vunpack.c.l.b16 %v5419
        %v6128 = vunpack.c.h.b16 %v5419
        %v6129 = vunpack.c.l.b16 %v5420
        %v6130 = vunpack.c.h.b16 %v5420
        %v6131 = vunpack.c.l.b16 %v5421
        %v6132 = vunpack.c.h.b16 %v5421
        %v6133 = vunpack.c.l.b16 %v5422
        %v6134 = vunpack.c.h.b16 %v5422
        %v6135 = vunpack.c.l.b16 %v5423
        %v6136 = vunpack.c.h.b16 %v5423
        %v6137 = vunpack.c.l.b16 %v5424
        %v6138 = vunpack.c.h.b16 %v5424
        %v6139 = vunpack.c.l.b16 %v5425
        %v6140 = vunpack.c.h.b16 %v5425
        %v6141 = vunpack.c.l.b16 %v5426
        %v6142 = vunpack.c.h.b16 %v5426
        %v6143 = vunpack.c.l.b16 %v5427
        %v6144 = vunpack.c.h.b16 %v5427
        %v6145 = vunpack.c.l.b16 %v5428
        %v6146 = vunpack.c.h.b16 %v5428
        %v6147 = vunpack.c.l.b16 %v5429
        %v6148 = vunpack.c.h.b16 %v5429
        %v6149 = vunpack.c.l.b16 %v5430
        %v6150 = vunpack.c.h.b16 %v5430
        %v6151 = vunpack.c.l.b16 %v5431
        %v6152 = vunpack.c.h.b16 %v5431
        %v6153 = vunpack.c.l.b16 %v5432
        %v6154 = vunpack.c.h.b16 %v5432
        %v6155 = vunpack.c.l.b16 %v5433
        %v6156 = vunpack.c.h.b16 %v5433
        %v6157 = vunpack.c.l.b16 %v5434
        %v6158 = vunpack.c.h.b16 %v5434
        %v6159 = vunpack.c.l.b16 %v5435
        %v6160 = vunpack.c.h.b16 %v5435
        %v6161 = vunpack.c.l.b16 %v5436
        %v6162 = vunpack.c.h.b16 %v5436
        %v6163 = vunpack.c.l.b16 %v5437
        %v6164 = vunpack.c.h.b16 %v5437
        %v6165 = vunpack.c.l.b16 %v5438
        %v6166 = vunpack.c.h.b16 %v5438
        %v6167 = vunpack.c.l.b16 %v5439
        %v6168 = vunpack.c.h.b16 %v5439
        %v6169 = vunpack.c.l.b16 %v5440
        %v6170 = vunpack.c.h.b16 %v5440
        %v6171 = vunpack.c.l.b16 %v5441
        %v6172 = vunpack.c.h.b16 %v5441
        %v6173 = vunpack.c.l.b16 %v5442
        %v6174 = vunpack.c.h.b16 %v5442
        %v6175 = vunpack.c.l.b16 %v5443
        %v6176 = vunpack.c.h.b16 %v5443
        %v6177 = vunpack.c.l.b16 %v5444
        %v6178 = vunpack.c.h.b16 %v5444
        %v6179 = vunpack.c.l.b16 %v5445
        %v6180 = vunpack.c.h.b16 %v5445
        %v6181 = vunpack.c.l.b16 %v5446
        %v6182 = vunpack.c.h.b16 %v5446
        %v6183 = vunpack.c.l.b16 %v5447
        %v6184 = vunpack.c.h.b16 %v5447
        %v6185 = vunpack.c.l.b16 %v5448
        %v6186 = vunpack.c.h.b16 %v5448
        %v6187 = vunpack.c.l.b16 %v5449
        %v6188 = vunpack.c.h.b16 %v5449
        %v6189 = vunpack.c.l.b16 %v5450
        %v6190 = vunpack.c.h.b16 %v5450
        %v6191 = vunpack.c.l.b16 %v5451
        %v6192 = vunpack.c.h.b16 %v5451
        %v6193 = vunpack.c.l.b16 %v5452
        %v6194 = vunpack.c.h.b16 %v5452
        %v6195 = vunpack.c.l.b16 %v5453
        %v6196 = vunpack.c.h.b16 %v5453
        %v6197 = vunpack.c.l.b16 %v5454
        %v6198 = vunpack.c.h.b16 %v5454
        %v6199 = vunpack.c.l.b16 %v5455
        %v6200 = vunpack.c.h.b16 %v5455
        %v6201 = vunpack.c.l.b16 %v5456
        %v6202 = vunpack.c.h.b16 %v5456
        %v6203 = vunpack.c.l.b16 %v5457
        %v6204 = vunpack.c.h.b16 %v5457
        %v6205 = vunpack.c.l.b16 %v5458
        %v6206 = vunpack.c.h.b16 %v5458
        %v6207 = vunpack.c.l.b16 %v5459
        %v6208 = vunpack.c.h.b16 %v5459
        %v6209 = vunpack.c.l.b16 %v5460
        %v6210 = vunpack.c.h.b16 %v5460
        %v6211 = vunpack.c.l.b16 %v5461
        %v6212 = vunpack.c.h.b16 %v5461
        %v6213 = vunpack.c.l.b16 %v5462
        %v6214 = vunpack.c.h.b16 %v5462
        %v6215 = vunpack.c.l.b16 %v5463
        %v6216 = vunpack.c.h.b16 %v5463
        %v6217 = vunpack.c.l.b16 %v5464
        %v6218 = vunpack.c.h.b16 %v5464
        %v6219 = vunpack.c.l.b16 %v5465
        %v6220 = vunpack.c.h.b16 %v5465
        %v6221 = vunpack.c.l.b16 %v5466
        %v6222 = vunpack.c.h.b16 %v5466
        %v6223 = vunpack.c.l.b16 %v5467
        %v6224 = vunpack.c.h.b16 %v5467
        %v6225 = vunpack.c.l.b16 %v5468
        %v6226 = vunpack.c.h.b16 %v5468
        %v6227 = vunpack.c.l.b16 %v5469
        %v6228 = vunpack.c.h.b16 %v5469
        %v6229 = vunpack.c.l.b16 %v5470
        %v6230 = vunpack.c.h.b16 %v5470
        %v6231 = vunpack.c.l.b16 %v5471
        %v6232 = vunpack.c.h.b16 %v5471
        %v6233 = vunpack.c.l.b16 %v5472
        %v6234 = vunpack.c.h.b16 %v5472
        %v6235 = vunpack.c.l.b16 %v5473
        %v6236 = vunpack.c.h.b16 %v5473
        %v6237 = vunpack.c.l.b16 %v5474
        %v6238 = vunpack.c.h.b16 %v5474
        %v6239 = vunpack.c.l.b16 %v5475
        %v6240 = vunpack.c.h.b16 %v5475
        %v6241 = vunpack.c.l.b16 %v5476
        %v6242 = vunpack.c.h.b16 %v5476
        %v6243 = vunpack.c.l.b16 %v5477
        %v6244 = vunpack.c.h.b16 %v5477
        %v6245 = vunpack.c.l.b16 %v5478
        %v6246 = vunpack.c.h.b16 %v5478
        %v6247 = vunpack.c.l.b16 %v5479
        %v6248 = vunpack.c.h.b16 %v5479
        %v6249 = vunpack.c.l.b16 %v5480
        %v6250 = vunpack.c.h.b16 %v5480
        %v6251 = vunpack.c.l.b16 %v5481
        %v6252 = vunpack.c.h.b16 %v5481
        %v6253 = vunpack.c.l.b16 %v5482
        %v6254 = vunpack.c.h.b16 %v5482
        %v6255 = vunpack.c.l.b16 %v5483
        %v6256 = vunpack.c.h.b16 %v5483
        %v6257 = vunpack.c.l.b16 %v5484
        %v6258 = vunpack.c.h.b16 %v5484
        %v6259 = vunpack.c.l.b16 %v5485
        %v6260 = vunpack.c.h.b16 %v5485
        %v6261 = vunpack.c.l.b16 %v5486
        %v6262 = vunpack.c.h.b16 %v5486
        %v6263 = vunpack.c.l.b16 %v5487
        %v6264 = vunpack.c.h.b16 %v5487
        %v6265 = vunpack.c.l.b16 %v5488
        %v6266 = vunpack.c.h.b16 %v5488
        %v6267 = vunpack.c.l.b16 %v5489
        %v6268 = vunpack.c.h.b16 %v5489
        %v6269 = vunpack.c.l.b16 %v5490
        %v6270 = vunpack.c.h.b16 %v5490
        %v6271 = vunpack.c.l.b16 %v5491
        %v6272 = vunpack.c.h.b16 %v5491
        %v6273 = vunpack.c.l.b16 %v5492
        %v6274 = vunpack.c.h.b16 %v5492
        %v6275 = vunpack.c.l.b16 %v5493
        %v6276 = vunpack.c.h.b16 %v5493
        %v6277 = vunpack.c.l.b16 %v5494
        %v6278 = vunpack.c.h.b16 %v5494
        %v6279 = vunpack.c.l.b16 %v5495
        %v6280 = vunpack.c.h.b16 %v5495
        %v6281 = vunpack.c.l.b16 %v5496
        %v6282 = vunpack.c.h.b16 %v5496
        %v6283 = vunpack.c.l.b16 %v5497
        %v6284 = vunpack.c.h.b16 %v5497
        %v6285 = vunpack.c.l.b16 %v5498
        %v6286 = vunpack.c.h.b16 %v5498
        %v6287 = vunpack.c.l.b16 %v5499
        %v6288 = vunpack.c.h.b16 %v5499
        %v6289 = vunpack.c.l.b16 %v5500
        %v6290 = vunpack.c.h.b16 %v5500
        %v6291 = vunpack.c.l.b16 %v5501
        %v6292 = vunpack.c.h.b16 %v5501
        %v6293 = vunpack.c.l.b16 %v5502
        %v6294 = vunpack.c.h.b16 %v5502
        %v6295 = vunpack.c.l.b16 %v5503
        %v6296 = vunpack.c.h.b16 %v5503
        %v6297 = vunpack.c.l.b16 %v5504
        %v6298 = vunpack.c.h.b16 %v5504
        %v6299 = vunpack.c.l.b16 %v5505
        %v6300 = vunpack.c.h.b16 %v5505
        %v6301 = vunpack.c.l.b16 %v5506
        %v6302 = vunpack.c.h.b16 %v5506
        %v6303 = vunpack.c.l.b16 %v5507
        %v6304 = vunpack.c.h.b16 %v5507
        %v6305 = vunpack.c.l.b16 %v5508
        %v6306 = vunpack.c.h.b16 %v5508
        %v6307 = vunpack.c.l.b16 %v5509
        %v6308 = vunpack.c.h.b16 %v5509
        %v6309 = vunpack.c.l.b16 %v5510
        %v6310 = vunpack.c.h.b16 %v5510
        %v6311 = vunpack.c.l.b16 %v5511
        %v6312 = vunpack.c.h.b16 %v5511
        %v6313 = vunpack.c.l.b16 %v5512
        %v6314 = vunpack.c.h.b16 %v5512
        %v6315 = vunpack.c.l.b16 %v5513
        %v6316 = vunpack.c.h.b16 %v5513
        %v6317 = vunpack.c.l.b16 %v5514
        %v6318 = vunpack.c.h.b16 %v5514
        %v6319 = vunpack.c.l.b16 %v5515
        %v6320 = vunpack.c.h.b16 %v5515
        %v6321 = vunpack.c.l.b16 %v5516
        %v6322 = vunpack.c.h.b16 %v5516
        %v6323 = vunpack.c.l.b16 %v5517
        %v6324 = vunpack.c.h.b16 %v5517
        %v6325 = vunpack.c.l.b16 %v5518
        %v6326 = vunpack.c.h.b16 %v5518
        %v6327 = vunpack.c.l.b16 %v5519
        %v6328 = vunpack.c.h.b16 %v5519
        %v6329 = vunpack.c.l.b16 %v5520
        %v6330 = vunpack.c.h.b16 %v5520
        %v6331 = vpack.c.b16 %v5827, %v5819
        %v6332 = vpack.c.b16 %v5828, %v5820
        %v6333 = vpack.c.b16 %v5829, %v5821
        %v6334 = vpack.c.b16 %v5830, %v5822
        %v6335 = vpack.c.b16 %v5831, %v5823
        %v6336 = vpack.c.b16 %v5832, %v5824
        %v6337 = vpack.c.b16 %v5833, %v5825
        %v6338 = vpack.c.b16 %v5834, %v5826
        %v6339 = vpack.c.b16 %v5843, %v5835
        %v6340 = vpack.c.b16 %v5844, %v5836
        %v6341 = vpack.c.b16 %v5845, %v5837
        %v6342 = vpack.c.b16 %v5846, %v5838
        %v6343 = vpack.c.b16 %v5847, %v5839
        %v6344 = vpack.c.b16 %v5848, %v5840
        %v6345 = vpack.c.b16 %v5849, %v5841
        %v6346 = vpack.c.b16 %v5850, %v5842
        %v6347 = vpack.c.b16 %v5859, %v5851
        %v6348 = vpack.c.b16 %v5860, %v5852
        %v6349 = vpack.c.b16 %v5861, %v5853
        %v6350 = vpack.c.b16 %v5862, %v5854
        %v6351 = vpack.c.b16 %v5863, %v5855
        %v6352 = vpack.c.b16 %v5864, %v5856
        %v6353 = vpack.c.b16 %v5865, %v5857
        %v6354 = vpack.c.b16 %v5866, %v5858
        %v6355 = vpack.c.b16 %v5875, %v5867
        %v6356 = vpack.c.b16 %v5876, %v5868
        %v6357 = vpack.c.b16 %v5877, %v5869
        %v6358 = vpack.c.b16 %v5878, %v5870
        %v6359 = vpack.c.b16 %v5879, %v5871
        %v6360 = vpack.c.b16 %v5880, %v5872
        %v6361 = vpack.c.b16 %v5881, %v5873
        %v6362 = vpack.c.b16 %v5882, %v5874
        %v6363 = vpack.c.b16 %v5891, %v5883
        %v6364 = vpack.c.b16 %v5892, %v5884
        %v6365 = vpack.c.b16 %v5893, %v5885
        %v6366 = vpack.c.b16 %v5894, %v5886
        %v6367 = vpack.c.b16 %v5895, %v5887
        %v6368 = vpack.c.b16 %v5896, %v5888
        %v6369 = vpack.c.b16 %v5897, %v5889
        %v6370 = vpack.c.b16 %v5898, %v5890
        %v6371 = vpack.c.b16 %v5907, %v5899
        %v6372 = vpack.c.b16 %v5908, %v5900
        %v6373 = vpack.c.b16 %v5909, %v5901
        %v6374 = vpack.c.b16 %v5910, %v5902
        %v6375 = vpack.c.b16 %v5911, %v5903
        %v6376 = vpack.c.b16 %v5912, %v5904
        %v6377 = vpack.c.b16 %v5913, %v5905
        %v6378 = vpack.c.b16 %v5914, %v5906
        %v6379 = vpack.c.b16 %v5923, %v5915
        %v6380 = vpack.c.b16 %v5924, %v5916
        %v6381 = vpack.c.b16 %v5925, %v5917
        %v6382 = vpack.c.b16 %v5926, %v5918
        %v6383 = vpack.c.b16 %v5927, %v5919
        %v6384 = vpack.c.b16 %v5928, %v5920
        %v6385 = vpack.c.b16 %v5929, %v5921
        %v6386 = vpack.c.b16 %v5930, %v5922
        %v6387 = vpack.c.b16 %v5939, %v5931
        %v6388 = vpack.c.b16 %v5940, %v5932
        %v6389 = vpack.c.b16 %v5941, %v5933
        %v6390 = vpack.c.b16 %v5942, %v5934
        %v6391 = vpack.c.b16 %v5943, %v5935
        %v6392 = vpack.c.b16 %v5944, %v5936
        %v6393 = vpack.c.b16 %v5945, %v5937
        %v6394 = vpack.c.b16 %v5946, %v5938
        %v6395 = vpack.c.b16 %v5955, %v5947
        %v6396 = vpack.c.b16 %v5956, %v5948
        %v6397 = vpack.c.b16 %v5957, %v5949
        %v6398 = vpack.c.b16 %v5958, %v5950
        %v6399 = vpack.c.b16 %v5959, %v5951
        %v6400 = vpack.c.b16 %v5960, %v5952
        %v6401 = vpack.c.b16 %v5961, %v5953
        %v6402 = vpack.c.b16 %v5962, %v5954
        %v6403 = vpack.c.b16 %v5971, %v5963
        %v6404 = vpack.c.b16 %v5972, %v5964
        %v6405 = vpack.c.b16 %v5973, %v5965
        %v6406 = vpack.c.b16 %v5974, %v5966
        %v6407 = vpack.c.b16 %v5975, %v5967
        %v6408 = vpack.c.b16 %v5976, %v5968
        %v6409 = vpack.c.b16 %v5977, %v5969
        %v6410 = vpack.c.b16 %v5978, %v5970
        %v6411 = vpack.c.b16 %v5987, %v5979
        %v6412 = vpack.c.b16 %v5988, %v5980
        %v6413 = vpack.c.b16 %v5989, %v5981
        %v6414 = vpack.c.b16 %v5990, %v5982
        %v6415 = vpack.c.b16 %v5991, %v5983
        %v6416 = vpack.c.b16 %v5992, %v5984
        %v6417 = vpack.c.b16 %v5993, %v5985
        %v6418 = vpack.c.b16 %v5994, %v5986
        %v6419 = vpack.c.b16 %v6003, %v5995
        %v6420 = vpack.c.b16 %v6004, %v5996
        %v6421 = vpack.c.b16 %v6005, %v5997
        %v6422 = vpack.c.b16 %v6006, %v5998
        %v6423 = vpack.c.b16 %v6007, %v5999
        %v6424 = vpack.c.b16 %v6008, %v6000
        %v6425 = vpack.c.b16 %v6009, %v6001
        %v6426 = vpack.c.b16 %v6010, %v6002
        %v6427 = vpack.c.b16 %v6019, %v6011
        %v6428 = vpack.c.b16 %v6020, %v6012
        %v6429 = vpack.c.b16 %v6021, %v6013
        %v6430 = vpack.c.b16 %v6022, %v6014
        %v6431 = vpack.c.b16 %v6023, %v6015
        %v6432 = vpack.c.b16 %v6024, %v6016
        %v6433 = vpack.c.b16 %v6025, %v6017
        %v6434 = vpack.c.b16 %v6026, %v6018
        %v6435 = vpack.c.b16 %v6035, %v6027
        %v6436 = vpack.c.b16 %v6036, %v6028
        %v6437 = vpack.c.b16 %v6037, %v6029
        %v6438 = vpack.c.b16 %v6038, %v6030
        %v6439 = vpack.c.b16 %v6039, %v6031
        %v6440 = vpack.c.b16 %v6040, %v6032
        %v6441 = vpack.c.b16 %v6041, %v6033
        %v6442 = vpack.c.b16 %v6042, %v6034
        %v6443 = vpack.c.b16 %v6051, %v6043
        %v6444 = vpack.c.b16 %v6052, %v6044
        %v6445 = vpack.c.b16 %v6053, %v6045
        %v6446 = vpack.c.b16 %v6054, %v6046
        %v6447 = vpack.c.b16 %v6055, %v6047
        %v6448 = vpack.c.b16 %v6056, %v6048
        %v6449 = vpack.c.b16 %v6057, %v6049
        %v6450 = vpack.c.b16 %v6058, %v6050
        %v6451 = vpack.c.b16 %v6067, %v6059
        %v6452 = vpack.c.b16 %v6068, %v6060
        %v6453 = vpack.c.b16 %v6069, %v6061
        %v6454 = vpack.c.b16 %v6070, %v6062
        %v6455 = vpack.c.b16 %v6071, %v6063
        %v6456 = vpack.c.b16 %v6072, %v6064
        %v6457 = vpack.c.b16 %v6073, %v6065
        %v6458 = vpack.c.b16 %v6074, %v6066
        %v6459 = vpack.c.b16 %v6083, %v6075
        %v6460 = vpack.c.b16 %v6084, %v6076
        %v6461 = vpack.c.b16 %v6085, %v6077
        %v6462 = vpack.c.b16 %v6086, %v6078
        %v6463 = vpack.c.b16 %v6087, %v6079
        %v6464 = vpack.c.b16 %v6088, %v6080
        %v6465 = vpack.c.b16 %v6089, %v6081
        %v6466 = vpack.c.b16 %v6090, %v6082
        %v6467 = vpack.c.b16 %v6099, %v6091
        %v6468 = vpack.c.b16 %v6100, %v6092
        %v6469 = vpack.c.b16 %v6101, %v6093
        %v6470 = vpack.c.b16 %v6102, %v6094
        %v6471 = vpack.c.b16 %v6103, %v6095
        %v6472 = vpack.c.b16 %v6104, %v6096
        %v6473 = vpack.c.b16 %v6105, %v6097
        %v6474 = vpack.c.b16 %v6106, %v6098
        %v6475 = vpack.c.b16 %v6115, %v6107
        %v6476 = vpack.c.b16 %v6116, %v6108
        %v6477 = vpack.c.b16 %v6117, %v6109
        %v6478 = vpack.c.b16 %v6118, %v6110
        %v6479 = vpack.c.b16 %v6119, %v6111
        %v6480 = vpack.c.b16 %v6120, %v6112
        %v6481 = vpack.c.b16 %v6121, %v6113
        %v6482 = vpack.c.b16 %v6122, %v6114
        %v6483 = vpack.c.b16 %v6131, %v6123
        %v6484 = vpack.c.b16 %v6132, %v6124
        %v6485 = vpack.c.b16 %v6133, %v6125
        %v6486 = vpack.c.b16 %v6134, %v6126
        %v6487 = vpack.c.b16 %v6135, %v6127
        %v6488 = vpack.c.b16 %v6136, %v6128
        %v6489 = vpack.c.b16 %v6137, %v6129
        %v6490 = vpack.c.b16 %v6138, %v6130
        %v6491 = vpack.c.b16 %v6147, %v6139
        %v6492 = vpack.c.b16 %v6148, %v6140
        %v6493 = vpack.c.b16 %v6149, %v6141
        %v6494 = vpack.c.b16 %v6150, %v6142
        %v6495 = vpack.c.b16 %v6151, %v6143
        %v6496 = vpack.c.b16 %v6152, %v6144
        %v6497 = vpack.c.b16 %v6153, %v6145
        %v6498 = vpack.c.b16 %v6154, %v6146
        %v6499 = vpack.c.b16 %v6163, %v6155
        %v6500 = vpack.c.b16 %v6164, %v6156
        %v6501 = vpack.c.b16 %v6165, %v6157
        %v6502 = vpack.c.b16 %v6166, %v6158
        %v6503 = vpack.c.b16 %v6167, %v6159
        %v6504 = vpack.c.b16 %v6168, %v6160
        %v6505 = vpack.c.b16 %v6169, %v6161
        %v6506 = vpack.c.b16 %v6170, %v6162
        %v6507 = vpack.c.b16 %v6179, %v6171
        %v6508 = vpack.c.b16 %v6180, %v6172
        %v6509 = vpack.c.b16 %v6181, %v6173
        %v6510 = vpack.c.b16 %v6182, %v6174
        %v6511 = vpack.c.b16 %v6183, %v6175
        %v6512 = vpack.c.b16 %v6184, %v6176
        %v6513 = vpack.c.b16 %v6185, %v6177
        %v6514 = vpack.c.b16 %v6186, %v6178
        %v6515 = vpack.c.b16 %v6195, %v6187
        %v6516 = vpack.c.b16 %v6196, %v6188
        %v6517 = vpack.c.b16 %v6197, %v6189
        %v6518 = vpack.c.b16 %v6198, %v6190
        %v6519 = vpack.c.b16 %v6199, %v6191
        %v6520 = vpack.c.b16 %v6200, %v6192
        %v6521 = vpack.c.b16 %v6201, %v6193
        %v6522 = vpack.c.b16 %v6202, %v6194
        %v6523 = vpack.c.b16 %v6211, %v6203
        %v6524 = vpack.c.b16 %v6212, %v6204
        %v6525 = vpack.c.b16 %v6213, %v6205
        %v6526 = vpack.c.b16 %v6214, %v6206
        %v6527 = vpack.c.b16 %v6215, %v6207
        %v6528 = vpack.c.b16 %v6216, %v6208
        %v6529 = vpack.c.b16 %v6217, %v6209
        %v6530 = vpack.c.b16 %v6218, %v6210
        %v6531 = vpack.c.b16 %v6227, %v6219
        %v6532 = vpack.c.b16 %v6228, %v6220
        %v6533 = vpack.c.b16 %v6229, %v6221
        %v6534 = vpack.c.b16 %v6230, %v6222
        %v6535 = vpack.c.b16 %v6231, %v6223
        %v6536 = vpack.c.b16 %v6232, %v6224
        %v6537 = vpack.c.b16 %v6233, %v6225
        %v6538 = vpack.c.b16 %v6234, %v6226
        %v6539 = vpack.c.b16 %v6243, %v6235
        %v6540 = vpack.c.b16 %v6244, %v6236
        %v6541 = vpack.c.b16 %v6245, %v6237
        %v6542 = vpack.c.b16 %v6246, %v6238
        %v6543 = vpack.c.b16 %v6247, %v6239
        %v6544 = vpack.c.b16 %v6248, %v6240
        %v6545 = vpack.c.b16 %v6249, %v6241
        %v6546 = vpack.c.b16 %v6250, %v6242
        %v6547 = vpack.c.b16 %v6259, %v6251
        %v6548 = vpack.c.b16 %v6260, %v6252
        %v6549 = vpack.c.b16 %v6261, %v6253
        %v6550 = vpack.c.b16 %v6262, %v6254
        %v6551 = vpack.c.b16 %v6263, %v6255
        %v6552 = vpack.c.b16 %v6264, %v6256
        %v6553 = vpack.c.b16 %v6265, %v6257
        %v6554 = vpack.c.b16 %v6266, %v6258
        %v6555 = vpack.c.b16 %v6275, %v6267
        %v6556 = vpack.c.b16 %v6276, %v6268
        %v6557 = vpack.c.b16 %v6277, %v6269
        %v6558 = vpack.c.b16 %v6278, %v6270
        %v6559 = vpack.c.b16 %v6279, %v6271
        %v6560 = vpack.c.b16 %v6280, %v6272
        %v6561 = vpack.c.b16 %v6281, %v6273
        %v6562 = vpack.c.b16 %v6282, %v6274
        %v6563 = vpack.c.b16 %v6291, %v6283
        %v6564 = vpack.c.b16 %v6292, %v6284
        %v6565 = vpack.c.b16 %v6293, %v6285
        %v6566 = vpack.c.b16 %v6294, %v6286
        %v6567 = vpack.c.b16 %v6295, %v6287
        %v6568 = vpack.c.b16 %v6296, %v6288
        %v6569 = vpack.c.b16 %v6297, %v6289
        %v6570 = vpack.c.b16 %v6298, %v6290
        %v6571 = vpack.c.b16 %v6307, %v6299
        %v6572 = vpack.c.b16 %v6308, %v6300
        %v6573 = vpack.c.b16 %v6309, %v6301
        %v6574 = vpack.c.b16 %v6310, %v6302
        %v6575 = vpack.c.b16 %v6311, %v6303
        %v6576 = vpack.c.b16 %v6312, %v6304
        %v6577 = vpack.c.b16 %v6313, %v6305
        %v6578 = vpack.c.b16 %v6314, %v6306
        %v6579 = vpack.c.b16 %v6323, %v6315
        %v6580 = vpack.c.b16 %v6324, %v6316
        %v6581 = vpack.c.b16 %v6325, %v6317
        %v6582 = vpack.c.b16 %v6326, %v6318
        %v6583 = vpack.c.b16 %v6327, %v6319
        %v6584 = vpack.c.b16 %v6328, %v6320
        %v6585 = vpack.c.b16 %v6329, %v6321
        %v6586 = vpack.c.b16 %v6330, %v6322
        %6843 = vmatprep.subr.bf16.mxu0 %v6332
        %6844 = vmatpush1.bf16.msra.mxu0 %v6331
        %6845 = vmatprep.subr.bf16.mxu0 %v6340
        %6846 = vmatpush1.bf16.msra.mxu0 %v6339
        %6847 = vmatprep.subr.bf16.mxu0 %v6348
        %6848 = vmatpush1.bf16.msra.mxu0 %v6347
        %6849 = vmatprep.subr.bf16.mxu0 %v6356
        %6850 = vmatpush1.bf16.msra.mxu0 %v6355
        %6851 = vmatprep.subr.bf16.mxu0 %v6364
        %6852 = vmatpush1.bf16.msra.mxu0 %v6363
        %6853 = vmatprep.subr.bf16.mxu0 %v6372
        %6854 = vmatpush1.bf16.msra.mxu0 %v6371
        %6855 = vmatprep.subr.bf16.mxu0 %v6380
        %6856 = vmatpush1.bf16.msra.mxu0 %v6379
        %6857 = vmatprep.subr.bf16.mxu0 %v6388
        %6858 = vmatpush1.bf16.msra.mxu0 %v6387
        %6859 = vmatprep.subr.bf16.mxu0 %v6396
        %6860 = vmatpush1.bf16.msra.mxu0 %v6395
        %6861 = vmatprep.subr.bf16.mxu0 %v6404
        %6862 = vmatpush1.bf16.msra.mxu0 %v6403
        %6863 = vmatprep.subr.bf16.mxu0 %v6412
        %6864 = vmatpush1.bf16.msra.mxu0 %v6411
        %6865 = vmatprep.subr.bf16.mxu0 %v6420
        %6866 = vmatpush1.bf16.msra.mxu0 %v6419
        %6867 = vmatprep.subr.bf16.mxu0 %v6428
        %6868 = vmatpush1.bf16.msra.mxu0 %v6427
        %6869 = vmatprep.subr.bf16.mxu0 %v6436
        %6870 = vmatpush1.bf16.msra.mxu0 %v6435
        %6871 = vmatprep.subr.bf16.mxu0 %v6444
        %6872 = vmatpush1.bf16.msra.mxu0 %v6443
        %6873 = vmatprep.subr.bf16.mxu0 %v6452
        %6874 = vmatpush1.bf16.msra.mxu0 %v6451
        %6875 = vmatprep.mubr.bf16.mxu0 %v2661
        %6876 = vmatmul.mubr.bf16.gmra.mrb[0].mxu0 %v2660
        %v6877 = vpop.f32.mrb[0].mxu0
        %v6878 = vadd.f32 %v5526, %v6877
        %v6879 = vpop.f32.mrb[0].mxu0
        %v6880 = vadd.f32 %v5530, %v6879
        %v6881 = vpop.f32.mrb[0].mxu0
        %v6882 = vpop.f32.mrb[0].mxu0
        %6883 = vdwg.mxu0
        %6884 = vmatprep.subr.bf16.mxu0 %v6460
        %6885 = vmatpush1.bf16.msra.mxu0 %v6459
        %6886 = vmatprep.subr.bf16.mxu0 %v6468
        %6887 = vmatpush1.bf16.msra.mxu0 %v6467
        %6888 = vmatprep.subr.bf16.mxu0 %v6476
        %6889 = vmatpush1.bf16.msra.mxu0 %v6475
        %6890 = vmatprep.subr.bf16.mxu0 %v6484
        %6891 = vmatpush1.bf16.msra.mxu0 %v6483
        %6892 = vmatprep.subr.bf16.mxu0 %v6492
        %6893 = vmatpush1.bf16.msra.mxu0 %v6491
        %6894 = vmatprep.subr.bf16.mxu0 %v6500
        %6895 = vmatpush1.bf16.msra.mxu0 %v6499
        %6896 = vmatprep.subr.bf16.mxu0 %v6508
        %6897 = vmatpush1.bf16.msra.mxu0 %v6507
        %6898 = vmatprep.subr.bf16.mxu0 %v6516
        %6899 = vmatpush1.bf16.msra.mxu0 %v6515
        %6900 = vmatprep.subr.bf16.mxu0 %v6524
        %6901 = vmatpush1.bf16.msra.mxu0 %v6523
        %6902 = vmatprep.subr.bf16.mxu0 %v6532
        %6903 = vmatpush1.bf16.msra.mxu0 %v6531
        %6904 = vmatprep.subr.bf16.mxu0 %v6540
        %6905 = vmatpush1.bf16.msra.mxu0 %v6539
        %6906 = vmatprep.subr.bf16.mxu0 %v6548
        %6907 = vmatpush1.bf16.msra.mxu0 %v6547
        %6908 = vmatprep.subr.bf16.mxu0 %v6556
        %6909 = vmatpush1.bf16.msra.mxu0 %v6555
        %6910 = vmatprep.subr.bf16.mxu0 %v6564
        %6911 = vmatpush1.bf16.msra.mxu0 %v6563
        %6912 = vmatprep.subr.bf16.mxu0 %v6572
        %6913 = vmatpush1.bf16.msra.mxu0 %v6571
        %6914 = vmatprep.subr.bf16.mxu0 %v6580
        %6915 = vmatpush1.bf16.msra.mxu0 %v6579
        %6916 = vmatprep.mubr.bf16.mxu0 %v2663
        %6917 = vmatmul.mubr.bf16.gmra.mrb[0].mxu0 %v2662
        %v6918 = vpop.f32.mrb[0].mxu0
        %v6919 = vadd.f32 %v6878, %v6918
        %v6920 = vpop.f32.mrb[0].mxu0
        %v6921 = vadd.f32 %v6880, %v6920
        %v6922 = vpop.f32.mrb[0].mxu0
        %v6923 = vpop.f32.mrb[0].mxu0
        %6924 = vdwg.mxu0
        %6925 = vmatprep.subr.bf16.mxu0 %v6334
        %6926 = vmatpush1.bf16.msra.mxu0 %v6333
        %6927 = vmatprep.subr.bf16.mxu0 %v6342
        %6928 = vmatpush1.bf16.msra.mxu0 %v6341
        %6929 = vmatprep.subr.bf16.mxu0 %v6350
        %6930 = vmatpush1.bf16.msra.mxu0 %v6349
        %6931 = vmatprep.subr.bf16.mxu0 %v6358
        %6932 = vmatpush1.bf16.msra.mxu0 %v6357
        %6933 = vmatprep.subr.bf16.mxu0 %v6366
        %6934 = vmatpush1.bf16.msra.mxu0 %v6365
        %6935 = vmatprep.subr.bf16.mxu0 %v6374
        %6936 = vmatpush1.bf16.msra.mxu0 %v6373
        %6937 = vmatprep.subr.bf16.mxu0 %v6382
        %6938 = vmatpush1.bf16.msra.mxu0 %v6381
        %6939 = vmatprep.subr.bf16.mxu0 %v6390
        %6940 = vmatpush1.bf16.msra.mxu0 %v6389
        %6941 = vmatprep.subr.bf16.mxu0 %v6398
        %6942 = vmatpush1.bf16.msra.mxu0 %v6397
        %6943 = vmatprep.subr.bf16.mxu0 %v6406
        %6944 = vmatpush1.bf16.msra.mxu0 %v6405
        %6945 = vmatprep.subr.bf16.mxu0 %v6414
        %6946 = vmatpush1.bf16.msra.mxu0 %v6413
        %6947 = vmatprep.subr.bf16.mxu0 %v6422
        %6948 = vmatpush1.bf16.msra.mxu0 %v6421
        %6949 = vmatprep.subr.bf16.mxu0 %v6430
        %6950 = vmatpush1.bf16.msra.mxu0 %v6429
        %6951 = vmatprep.subr.bf16.mxu0 %v6438
        %6952 = vmatpush1.bf16.msra.mxu0 %v6437
        %6953 = vmatprep.subr.bf16.mxu0 %v6446
        %6954 = vmatpush1.bf16.msra.mxu0 %v6445
        %6955 = vmatprep.subr.bf16.mxu0 %v6454
        %6956 = vmatpush1.bf16.msra.mxu0 %v6453
        %6957 = vmatprep.mubr.bf16.mxu0 %v2661
        %6958 = vmatmul.mubr.bf16.gmra.mrb[0].mxu0 %v2660
        %v6959 = vpop.f32.mrb[0].mxu0
        %v6960 = vadd.f32 %v5534, %v6959
        %v6961 = vpop.f32.mrb[0].mxu0
        %v6962 = vadd.f32 %v5538, %v6961
        %v6963 = vpop.f32.mrb[0].mxu0
        %v6964 = vpop.f32.mrb[0].mxu0
        %6965 = vdwg.mxu0
        %6966 = vmatprep.subr.bf16.mxu0 %v6462
        %6967 = vmatpush1.bf16.msra.mxu0 %v6461
        %6968 = vmatprep.subr.bf16.mxu0 %v6470
        %6969 = vmatpush1.bf16.msra.mxu0 %v6469
        %6970 = vmatprep.subr.bf16.mxu0 %v6478
        %6971 = vmatpush1.bf16.msra.mxu0 %v6477
        %6972 = vmatprep.subr.bf16.mxu0 %v6486
        %6973 = vmatpush1.bf16.msra.mxu0 %v6485
        %6974 = vmatprep.subr.bf16.mxu0 %v6494
        %6975 = vmatpush1.bf16.msra.mxu0 %v6493
        %6976 = vmatprep.subr.bf16.mxu0 %v6502
        %6977 = vmatpush1.bf16.msra.mxu0 %v6501
        %6978 = vmatprep.subr.bf16.mxu0 %v6510
        %6979 = vmatpush1.bf16.msra.mxu0 %v6509
        %6980 = vmatprep.subr.bf16.mxu0 %v6518
        %6981 = vmatpush1.bf16.msra.mxu0 %v6517
        %6982 = vmatprep.subr.bf16.mxu0 %v6526
        %6983 = vmatpush1.bf16.msra.mxu0 %v6525
        %6984 = vmatprep.subr.bf16.mxu0 %v6534
        %6985 = vmatpush1.bf16.msra.mxu0 %v6533
        %6986 = vmatprep.subr.bf16.mxu0 %v6542
        %6987 = vmatpush1.bf16.msra.mxu0 %v6541
        %6988 = vmatprep.subr.bf16.mxu0 %v6550
        %6989 = vmatpush1.bf16.msra.mxu0 %v6549
        %6990 = vmatprep.subr.bf16.mxu0 %v6558
        %6991 = vmatpush1.bf16.msra.mxu0 %v6557
        %6992 = vmatprep.subr.bf16.mxu0 %v6566
        %6993 = vmatpush1.bf16.msra.mxu0 %v6565
        %6994 = vmatprep.subr.bf16.mxu0 %v6574
        %6995 = vmatpush1.bf16.msra.mxu0 %v6573
        %6996 = vmatprep.subr.bf16.mxu0 %v6582
        %6997 = vmatpush1.bf16.msra.mxu0 %v6581
        %6998 = vmatprep.mubr.bf16.mxu0 %v2663
        %6999 = vmatmul.mubr.bf16.gmra.mrb[0].mxu0 %v2662
        %v7000 = vpop.f32.mrb[0].mxu0
        %v7001 = vadd.f32 %v6960, %v7000
        %v7002 = vpop.f32.mrb[0].mxu0
        %v7003 = vadd.f32 %v6962, %v7002
        %v7004 = vpop.f32.mrb[0].mxu0
        %v7005 = vpop.f32.mrb[0].mxu0
        %7006 = vdwg.mxu0
        %7007 = vmatprep.subr.bf16.mxu0 %v6336
        %7008 = vmatpush1.bf16.msra.mxu0 %v6335
        %7009 = vmatprep.subr.bf16.mxu0 %v6344
        %7010 = vmatpush1.bf16.msra.mxu0 %v6343
        %7011 = vmatprep.subr.bf16.mxu0 %v6352
        %7012 = vmatpush1.bf16.msra.mxu0 %v6351
        %7013 = vmatprep.subr.bf16.mxu0 %v6360
        %7014 = vmatpush1.bf16.msra.mxu0 %v6359
        %7015 = vmatprep.subr.bf16.mxu0 %v6368
        %7016 = vmatpush1.bf16.msra.mxu0 %v6367
        %7017 = vmatprep.subr.bf16.mxu0 %v6376
        %7018 = vmatpush1.bf16.msra.mxu0 %v6375
        %7019 = vmatprep.subr.bf16.mxu0 %v6384
        %7020 = vmatpush1.bf16.msra.mxu0 %v6383
        %7021 = vmatprep.subr.bf16.mxu0 %v6392
        %7022 = vmatpush1.bf16.msra.mxu0 %v6391
        %7023 = vmatprep.subr.bf16.mxu0 %v6400
        %7024 = vmatpush1.bf16.msra.mxu0 %v6399
        %7025 = vmatprep.subr.bf16.mxu0 %v6408
        %7026 = vmatpush1.bf16.msra.mxu0 %v6407
        %7027 = vmatprep.subr.bf16.mxu0 %v6416
        %7028 = vmatpush1.bf16.msra.mxu0 %v6415
        %7029 = vmatprep.subr.bf16.mxu0 %v6424
        %7030 = vmatpush1.bf16.msra.mxu0 %v6423
        %7031 = vmatprep.subr.bf16.mxu0 %v6432
        %7032 = vmatpush1.bf16.msra.mxu0 %v6431
        %7033 = vmatprep.subr.bf16.mxu0 %v6440
        %7034 = vmatpush1.bf16.msra.mxu0 %v6439
        %7035 = vmatprep.subr.bf16.mxu0 %v6448
        %7036 = vmatpush1.bf16.msra.mxu0 %v6447
        %7037 = vmatprep.subr.bf16.mxu0 %v6456
        %7038 = vmatpush1.bf16.msra.mxu0 %v6455
        %7039 = vmatprep.mubr.bf16.mxu0 %v2661
        %7040 = vmatmul.mubr.bf16.gmra.mrb[0].mxu0 %v2660
        %v7041 = vpop.f32.mrb[0].mxu0
        %v7042 = vadd.f32 %v5542, %v7041
        %v7043 = vpop.f32.mrb[0].mxu0
        %v7044 = vadd.f32 %v5546, %v7043
        %v7045 = vpop.f32.mrb[0].mxu0
        %v7046 = vpop.f32.mrb[0].mxu0
        %7047 = vdwg.mxu0
        %7048 = vmatprep.subr.bf16.mxu0 %v6464
        %7049 = vmatpush1.bf16.msra.mxu0 %v6463
        %7050 = vmatprep.subr.bf16.mxu0 %v6472
        %7051 = vmatpush1.bf16.msra.mxu0 %v6471
        %7052 = vmatprep.subr.bf16.mxu0 %v6480
        %7053 = vmatpush1.bf16.msra.mxu0 %v6479
        %7054 = vmatprep.subr.bf16.mxu0 %v6488
        %7055 = vmatpush1.bf16.msra.mxu0 %v6487
        %7056 = vmatprep.subr.bf16.mxu0 %v6496
        %7057 = vmatpush1.bf16.msra.mxu0 %v6495
        %7058 = vmatprep.subr.bf16.mxu0 %v6504
        %7059 = vmatpush1.bf16.msra.mxu0 %v6503
        %7060 = vmatprep.subr.bf16.mxu0 %v6512
        %7061 = vmatpush1.bf16.msra.mxu0 %v6511
        %7062 = vmatprep.subr.bf16.mxu0 %v6520
        %7063 = vmatpush1.bf16.msra.mxu0 %v6519
        %7064 = vmatprep.subr.bf16.mxu0 %v6528
        %7065 = vmatpush1.bf16.msra.mxu0 %v6527
        %7066 = vmatprep.subr.bf16.mxu0 %v6536
        %7067 = vmatpush1.bf16.msra.mxu0 %v6535
        %7068 = vmatprep.subr.bf16.mxu0 %v6544
        %7069 = vmatpush1.bf16.msra.mxu0 %v6543
        %7070 = vmatprep.subr.bf16.mxu0 %v6552
        %7071 = vmatpush1.bf16.msra.mxu0 %v6551
        %7072 = vmatprep.subr.bf16.mxu0 %v6560
        %7073 = vmatpush1.bf16.msra.mxu0 %v6559
        %7074 = vmatprep.subr.bf16.mxu0 %v6568
        %7075 = vmatpush1.bf16.msra.mxu0 %v6567
        %7076 = vmatprep.subr.bf16.mxu0 %v6576
        %7077 = vmatpush1.bf16.msra.mxu0 %v6575
        %7078 = vmatprep.subr.bf16.mxu0 %v6584
        %7079 = vmatpush1.bf16.msra.mxu0 %v6583
        %7080 = vmatprep.mubr.bf16.mxu0 %v2663
        %7081 = vmatmul.mubr.bf16.gmra.mrb[0].mxu0 %v2662
        %v7082 = vpop.f32.mrb[0].mxu0
        %v7083 = vadd.f32 %v7042, %v7082
        %v7084 = vpop.f32.mrb[0].mxu0
        %v7085 = vadd.f32 %v7044, %v7084
        %v7086 = vpop.f32.mrb[0].mxu0
        %v7087 = vpop.f32.mrb[0].mxu0
        %7088 = vdwg.mxu0
        %7089 = vmatprep.subr.bf16.mxu0 %v6338
        %7090 = vmatpush1.bf16.msra.mxu0 %v6337
        %7091 = vmatprep.subr.bf16.mxu0 %v6346
        %7092 = vmatpush1.bf16.msra.mxu0 %v6345
        %7093 = vmatprep.subr.bf16.mxu0 %v6354
        %7094 = vmatpush1.bf16.msra.mxu0 %v6353
        %7095 = vmatprep.subr.bf16.mxu0 %v6362
        %7096 = vmatpush1.bf16.msra.mxu0 %v6361
        %7097 = vmatprep.subr.bf16.mxu0 %v6370
        %7098 = vmatpush1.bf16.msra.mxu0 %v6369
        %7099 = vmatprep.subr.bf16.mxu0 %v6378
        %7100 = vmatpush1.bf16.msra.mxu0 %v6377
        %7101 = vmatprep.subr.bf16.mxu0 %v6386
        %7102 = vmatpush1.bf16.msra.mxu0 %v6385
        %7103 = vmatprep.subr.bf16.mxu0 %v6394
        %7104 = vmatpush1.bf16.msra.mxu0 %v6393
        %7105 = vmatprep.subr.bf16.mxu0 %v6402
        %7106 = vmatpush1.bf16.msra.mxu0 %v6401
        %7107 = vmatprep.subr.bf16.mxu0 %v6410
        %7108 = vmatpush1.bf16.msra.mxu0 %v6409
        %7109 = vmatprep.subr.bf16.mxu0 %v6418
        %7110 = vmatpush1.bf16.msra.mxu0 %v6417
        %7111 = vmatprep.subr.bf16.mxu0 %v6426
        %7112 = vmatpush1.bf16.msra.mxu0 %v6425
        %7113 = vmatprep.subr.bf16.mxu0 %v6434
        %7114 = vmatpush1.bf16.msra.mxu0 %v6433
        %7115 = vmatprep.subr.bf16.mxu0 %v6442
        %7116 = vmatpush1.bf16.msra.mxu0 %v6441
        %7117 = vmatprep.subr.bf16.mxu0 %v6450
        %7118 = vmatpush1.bf16.msra.mxu0 %v6449
        %7119 = vmatprep.subr.bf16.mxu0 %v6458
        %7120 = vmatpush1.bf16.msra.mxu0 %v6457
        %7121 = vmatprep.mubr.bf16.mxu0 %v2661
        %7122 = vmatmul.mubr.bf16.gmra.mrb[0].mxu0 %v2660
        %v7123 = vpop.f32.mrb[0].mxu0
        %v7124 = vadd.f32 %v5550, %v7123
        %v7125 = vpop.f32.mrb[0].mxu0
        %v7126 = vadd.f32 %v5554, %v7125
        %v7127 = vpop.f32.mrb[0].mxu0
        %v7128 = vpop.f32.mrb[0].mxu0
        %7129 = vdwg.mxu0
        %7130 = vmatprep.subr.bf16.mxu0 %v6466
        %7131 = vmatpush1.bf16.msra.mxu0 %v6465
        %7132 = vmatprep.subr.bf16.mxu0 %v6474
        %7133 = vmatpush1.bf16.msra.mxu0 %v6473
        %7134 = vmatprep.subr.bf16.mxu0 %v6482
        %7135 = vmatpush1.bf16.msra.mxu0 %v6481
        %7136 = vmatprep.subr.bf16.mxu0 %v6490
        %7137 = vmatpush1.bf16.msra.mxu0 %v6489
        %7138 = vmatprep.subr.bf16.mxu0 %v6498
        %7139 = vmatpush1.bf16.msra.mxu0 %v6497
        %7140 = vmatprep.subr.bf16.mxu0 %v6506
        %7141 = vmatpush1.bf16.msra.mxu0 %v6505
        %7142 = vmatprep.subr.bf16.mxu0 %v6514
        %7143 = vmatpush1.bf16.msra.mxu0 %v6513
        %7144 = vmatprep.subr.bf16.mxu0 %v6522
        %7145 = vmatpush1.bf16.msra.mxu0 %v6521
        %7146 = vmatprep.subr.bf16.mxu0 %v6530
        %7147 = vmatpush1.bf16.msra.mxu0 %v6529
        %7148 = vmatprep.subr.bf16.mxu0 %v6538
        %7149 = vmatpush1.bf16.msra.mxu0 %v6537
        %7150 = vmatprep.subr.bf16.mxu0 %v6546
        %7151 = vmatpush1.bf16.msra.mxu0 %v6545
        %7152 = vmatprep.subr.bf16.mxu0 %v6554
        %7153 = vmatpush1.bf16.msra.mxu0 %v6553
        %7154 = vmatprep.subr.bf16.mxu0 %v6562
        %7155 = vmatpush1.bf16.msra.mxu0 %v6561
        %7156 = vmatprep.subr.bf16.mxu0 %v6570
        %7157 = vmatpush1.bf16.msra.mxu0 %v6569
        %7158 = vmatprep.subr.bf16.mxu0 %v6578
        %7159 = vmatpush1.bf16.msra.mxu0 %v6577
        %7160 = vmatprep.subr.bf16.mxu0 %v6586
        %7161 = vmatpush1.bf16.msra.mxu0 %v6585
        %7162 = vmatprep.mubr.bf16.mxu0 %v2663
        %7163 = vmatmul.mubr.bf16.gmra.mrb[0].mxu0 %v2662
        %v7164 = vpop.f32.mrb[0].mxu0
        %v7165 = vadd.f32 %v7124, %v7164
        %v7166 = vpop.f32.mrb[0].mxu0
        %v7167 = vadd.f32 %v7126, %v7166
        %v7168 = vpop.f32.mrb[0].mxu0
        %v7169 = vpop.f32.mrb[0].mxu0
        %7170 = vdwg.mxu0
        %v7171 = vmax.f32 %v6919, 0.0
        %v7172 = vmax.f32 %v6921, 0.0
        %v7173 = vmax.f32 %v7001, 0.0
        %v7174 = vmax.f32 %v7003, 0.0
        %v7175 = vmax.f32 %v7083, 0.0
        %v7176 = vmax.f32 %v7085, 0.0
        %v7177 = vmax.f32 %v7165, 0.0
        %v7178 = vmax.f32 %v7167, 0.0
        %v7179 = vpack.c.bf16 %v7171, %v7171
        %v7180 = vpack.c.bf16 %v7172, %v7172
        %v7181 = vpack.c.bf16 %v7173, %v7173
        %v7182 = vpack.c.bf16 %v7174, %v7174
        %v7183 = vpack.c.bf16 %v7175, %v7175
        %v7184 = vpack.c.bf16 %v7176, %v7176
        %v7185 = vpack.c.bf16 %v7177, %v7177
        %v7186 = vpack.c.bf16 %v7178, %v7178
        %v7187 = vld [vmem:[%s9] sm:$0xf]
        %v7188 = vld [vmem:[%s9 + $0x4] sm:$0xf]
        %v7189 = vld [vmem:[%s9 + $0x8] sm:$0xf]
        %v7190 = vld [vmem:[%s9 + $0xc] sm:$0xf]
        %v7191 = vld [vmem:[%s9 + $0x10] sm:$0xf]
        %v7192 = vld [vmem:[%s9 + $0x14] sm:$0xf]
        %v7193 = vld [vmem:[%s9 + $0x18] sm:$0xf]
        %v7194 = vld [vmem:[%s9 + $0x1c] sm:$0xf]
        %v7195 = vld [vmem:[%s9 + $0x20] sm:$0xf]
        %v7196 = vld [vmem:[%s9 + $0x24] sm:$0xf]
        %v7197 = vld [vmem:[%s9 + $0x28] sm:$0xf]
        %v7198 = vld [vmem:[%s9 + $0x2c] sm:$0xf]
        %v7199 = vld [vmem:[%s9 + $0x30] sm:$0xf]
        %v7200 = vld [vmem:[%s9 + $0x34] sm:$0xf]
        %v7201 = vld [vmem:[%s9 + $0x38] sm:$0xf]
        %v7202 = vld [vmem:[%s9 + $0x3c] sm:$0xf]
        %v7203 = vld [vmem:[%s9 + $0x40] sm:$0xf]
        %v7204 = vld [vmem:[%s9 + $0x44] sm:$0xf]
        %v7205 = vld [vmem:[%s9 + $0x48] sm:$0xf]
        %v7206 = vld [vmem:[%s9 + $0x4c] sm:$0xf]
        %v7207 = vld [vmem:[%s9 + $0x50] sm:$0xf]
        %v7208 = vld [vmem:[%s9 + $0x54] sm:$0xf]
        %v7209 = vld [vmem:[%s9 + $0x58] sm:$0xf]
        %v7210 = vld [vmem:[%s9 + $0x5c] sm:$0xf]
        %v7211 = vld [vmem:[%s9 + $0x60] sm:$0xf]
        %v7212 = vld [vmem:[%s9 + $0x64] sm:$0xf]
        %v7213 = vld [vmem:[%s9 + $0x68] sm:$0xf]
        %v7214 = vld [vmem:[%s9 + $0x6c] sm:$0xf]
        %v7215 = vld [vmem:[%s9 + $0x70] sm:$0xf]
        %v7216 = vld [vmem:[%s9 + $0x74] sm:$0xf]
        %v7217 = vld [vmem:[%s9 + $0x78] sm:$0xf]
        %v7218 = vld [vmem:[%s9 + $0x7c] sm:$0xf]
        %v7219 = vld [vmem:[%s9 + $0x80] sm:$0xf]
        %v7220 = vld [vmem:[%s9 + $0x84] sm:$0xf]
        %v7221 = vld [vmem:[%s9 + $0x88] sm:$0xf]
        %v7222 = vld [vmem:[%s9 + $0x8c] sm:$0xf]
        %v7223 = vld [vmem:[%s9 + $0x90] sm:$0xf]
        %v7224 = vld [vmem:[%s9 + $0x94] sm:$0xf]
        %v7225 = vld [vmem:[%s9 + $0x98] sm:$0xf]
        %v7226 = vld [vmem:[%s9 + $0x9c] sm:$0xf]
        %v7227 = vld [vmem:[%s9 + $0xa0] sm:$0xf]
        %v7228 = vld [vmem:[%s9 + $0xa4] sm:$0xf]
        %v7229 = vld [vmem:[%s9 + $0xa8] sm:$0xf]
        %v7230 = vld [vmem:[%s9 + $0xac] sm:$0xf]
        %v7231 = vld [vmem:[%s9 + $0xb0] sm:$0xf]
        %v7232 = vld [vmem:[%s9 + $0xb4] sm:$0xf]
        %v7233 = vld [vmem:[%s9 + $0xb8] sm:$0xf]
        %v7234 = vld [vmem:[%s9 + $0xbc] sm:$0xf]
        %v7235 = vld [vmem:[%s9 + $0xc0] sm:$0xf]
        %v7236 = vld [vmem:[%s9 + $0xc4] sm:$0xf]
        %v7237 = vld [vmem:[%s9 + $0xc8] sm:$0xf]
        %v7238 = vld [vmem:[%s9 + $0xcc] sm:$0xf]
        %v7239 = vld [vmem:[%s9 + $0xd0] sm:$0xf]
        %v7240 = vld [vmem:[%s9 + $0xd4] sm:$0xf]
        %v7241 = vld [vmem:[%s9 + $0xd8] sm:$0xf]
        %v7242 = vld [vmem:[%s9 + $0xdc] sm:$0xf]
        %v7243 = vld [vmem:[%s9 + $0xe0] sm:$0xf]
        %v7244 = vld [vmem:[%s9 + $0xe4] sm:$0xf]
        %v7245 = vld [vmem:[%s9 + $0xe8] sm:$0xf]
        %v7246 = vld [vmem:[%s9 + $0xec] sm:$0xf]
        %v7247 = vld [vmem:[%s9 + $0xf0] sm:$0xf]
        %v7248 = vld [vmem:[%s9 + $0xf4] sm:$0xf]
        %v7249 = vld [vmem:[%s9 + $0xf8] sm:$0xf]
        %v7250 = vld [vmem:[%s9 + $0xfc] sm:$0xf]
        %v7251 = vld [vmem:[%s9 + $0x100] sm:$0xf]
        %v7252 = vld [vmem:[%s9 + $0x104] sm:$0xf]
        %v7253 = vld [vmem:[%s9 + $0x108] sm:$0xf]
        %v7254 = vld [vmem:[%s9 + $0x10c] sm:$0xf]
        %v7255 = vld [vmem:[%s9 + $0x110] sm:$0xf]
        %v7256 = vld [vmem:[%s9 + $0x114] sm:$0xf]
        %v7257 = vld [vmem:[%s9 + $0x118] sm:$0xf]
        %v7258 = vld [vmem:[%s9 + $0x11c] sm:$0xf]
        %v7259 = vld [vmem:[%s9 + $0x120] sm:$0xf]
        %v7260 = vld [vmem:[%s9 + $0x124] sm:$0xf]
        %v7261 = vld [vmem:[%s9 + $0x128] sm:$0xf]
        %v7262 = vld [vmem:[%s9 + $0x12c] sm:$0xf]
        %v7263 = vld [vmem:[%s9 + $0x130] sm:$0xf]
        %v7264 = vld [vmem:[%s9 + $0x134] sm:$0xf]
        %v7265 = vld [vmem:[%s9 + $0x138] sm:$0xf]
        %v7266 = vld [vmem:[%s9 + $0x13c] sm:$0xf]
        %v7267 = vld [vmem:[%s9 + $0x140] sm:$0xf]
        %v7268 = vld [vmem:[%s9 + $0x144] sm:$0xf]
        %v7269 = vld [vmem:[%s9 + $0x148] sm:$0xf]
        %v7270 = vld [vmem:[%s9 + $0x14c] sm:$0xf]
        %v7271 = vld [vmem:[%s9 + $0x150] sm:$0xf]
        %v7272 = vld [vmem:[%s9 + $0x154] sm:$0xf]
        %v7273 = vld [vmem:[%s9 + $0x158] sm:$0xf]
        %v7274 = vld [vmem:[%s9 + $0x15c] sm:$0xf]
        %v7275 = vld [vmem:[%s9 + $0x160] sm:$0xf]
        %v7276 = vld [vmem:[%s9 + $0x164] sm:$0xf]
        %v7277 = vld [vmem:[%s9 + $0x168] sm:$0xf]
        %v7278 = vld [vmem:[%s9 + $0x16c] sm:$0xf]
        %v7279 = vld [vmem:[%s9 + $0x170] sm:$0xf]
        %v7280 = vld [vmem:[%s9 + $0x174] sm:$0xf]
        %v7281 = vld [vmem:[%s9 + $0x178] sm:$0xf]
        %v7282 = vld [vmem:[%s9 + $0x17c] sm:$0xf]
        %v7283 = vld [vmem:[%s9 + $0x180] sm:$0xf]
        %v7284 = vld [vmem:[%s9 + $0x184] sm:$0xf]
        %v7285 = vld [vmem:[%s9 + $0x188] sm:$0xf]
        %v7286 = vld [vmem:[%s9 + $0x18c] sm:$0xf]
        %v7287 = vld [vmem:[%s9 + $0x190] sm:$0xf]
        %v7288 = vld [vmem:[%s9 + $0x194] sm:$0xf]
        %v7289 = vld [vmem:[%s9 + $0x198] sm:$0xf]
        %v7290 = vld [vmem:[%s9 + $0x19c] sm:$0xf]
        %v7291 = vld [vmem:[%s9 + $0x1a0] sm:$0xf]
        %v7292 = vld [vmem:[%s9 + $0x1a4] sm:$0xf]
        %v7293 = vld [vmem:[%s9 + $0x1a8] sm:$0xf]
        %v7294 = vld [vmem:[%s9 + $0x1ac] sm:$0xf]
        %v7295 = vld [vmem:[%s9 + $0x1b0] sm:$0xf]
        %v7296 = vld [vmem:[%s9 + $0x1b4] sm:$0xf]
        %v7297 = vld [vmem:[%s9 + $0x1b8] sm:$0xf]
        %v7298 = vld [vmem:[%s9 + $0x1bc] sm:$0xf]
        %v7299 = vld [vmem:[%s9 + $0x1c0] sm:$0xf]
        %v7300 = vld [vmem:[%s9 + $0x1c4] sm:$0xf]
        %v7301 = vld [vmem:[%s9 + $0x1c8] sm:$0xf]
        %v7302 = vld [vmem:[%s9 + $0x1cc] sm:$0xf]
        %v7303 = vld [vmem:[%s9 + $0x1d0] sm:$0xf]
        %v7304 = vld [vmem:[%s9 + $0x1d4] sm:$0xf]
        %v7305 = vld [vmem:[%s9 + $0x1d8] sm:$0xf]
        %v7306 = vld [vmem:[%s9 + $0x1dc] sm:$0xf]
        %v7307 = vld [vmem:[%s9 + $0x1e0] sm:$0xf]
        %v7308 = vld [vmem:[%s9 + $0x1e4] sm:$0xf]
        %v7309 = vld [vmem:[%s9 + $0x1e8] sm:$0xf]
        %v7310 = vld [vmem:[%s9 + $0x1ec] sm:$0xf]
        %v7311 = vld [vmem:[%s9 + $0x1f0] sm:$0xf]
        %v7312 = vld [vmem:[%s9 + $0x1f4] sm:$0xf]
        %v7313 = vld [vmem:[%s9 + $0x1f8] sm:$0xf]
        %v7314 = vld [vmem:[%s9 + $0x1fc] sm:$0xf]
        %v7315 = vld [vmem:[%s10] sm:$0x1]
        %v7317 = vlaneseq
        %v7318 = vshrl.u32 %v7317, 7
        %v7319 = vsub.s32 0, %v7318
        %v7320 = vrot.slane %v7315, %v7319
        %v7450 = vunpack.c.l.b16 %v7187
        %v7451 = vunpack.c.l.b16 %v7188
        %v7452 = vunpack.c.l.b16 %v7189
        %v7453 = vunpack.c.l.b16 %v7190
        %v7454 = vunpack.c.l.b16 %v7191
        %v7455 = vunpack.c.l.b16 %v7192
        %v7456 = vunpack.c.l.b16 %v7193
        %v7457 = vunpack.c.l.b16 %v7194
        %v7458 = vunpack.c.l.b16 %v7195
        %v7459 = vunpack.c.l.b16 %v7196
        %v7460 = vunpack.c.l.b16 %v7197
        %v7461 = vunpack.c.l.b16 %v7198
        %v7462 = vunpack.c.l.b16 %v7199
        %v7463 = vunpack.c.l.b16 %v7200
        %v7464 = vunpack.c.l.b16 %v7201
        %v7465 = vunpack.c.l.b16 %v7202
        %v7466 = vunpack.c.l.b16 %v7203
        %v7467 = vunpack.c.l.b16 %v7204
        %v7468 = vunpack.c.l.b16 %v7205
        %v7469 = vunpack.c.l.b16 %v7206
        %v7470 = vunpack.c.l.b16 %v7207
        %v7471 = vunpack.c.l.b16 %v7208
        %v7472 = vunpack.c.l.b16 %v7209
        %v7473 = vunpack.c.l.b16 %v7210
        %v7474 = vunpack.c.l.b16 %v7211
        %v7475 = vunpack.c.l.b16 %v7212
        %v7476 = vunpack.c.l.b16 %v7213
        %v7477 = vunpack.c.l.b16 %v7214
        %v7478 = vunpack.c.l.b16 %v7215
        %v7479 = vunpack.c.l.b16 %v7216
        %v7480 = vunpack.c.l.b16 %v7217
        %v7481 = vunpack.c.l.b16 %v7218
        %v7482 = vunpack.c.l.b16 %v7219
        %v7483 = vunpack.c.l.b16 %v7220
        %v7484 = vunpack.c.l.b16 %v7221
        %v7485 = vunpack.c.l.b16 %v7222
        %v7486 = vunpack.c.l.b16 %v7223
        %v7487 = vunpack.c.l.b16 %v7224
        %v7488 = vunpack.c.l.b16 %v7225
        %v7489 = vunpack.c.l.b16 %v7226
        %v7490 = vunpack.c.l.b16 %v7227
        %v7491 = vunpack.c.l.b16 %v7228
        %v7492 = vunpack.c.l.b16 %v7229
        %v7493 = vunpack.c.l.b16 %v7230
        %v7494 = vunpack.c.l.b16 %v7231
        %v7495 = vunpack.c.l.b16 %v7232
        %v7496 = vunpack.c.l.b16 %v7233
        %v7497 = vunpack.c.l.b16 %v7234
        %v7498 = vunpack.c.l.b16 %v7235
        %v7499 = vunpack.c.l.b16 %v7236
        %v7500 = vunpack.c.l.b16 %v7237
        %v7501 = vunpack.c.l.b16 %v7238
        %v7502 = vunpack.c.l.b16 %v7239
        %v7503 = vunpack.c.l.b16 %v7240
        %v7504 = vunpack.c.l.b16 %v7241
        %v7505 = vunpack.c.l.b16 %v7242
        %v7506 = vunpack.c.l.b16 %v7243
        %v7507 = vunpack.c.l.b16 %v7244
        %v7508 = vunpack.c.l.b16 %v7245
        %v7509 = vunpack.c.l.b16 %v7246
        %v7510 = vunpack.c.l.b16 %v7247
        %v7511 = vunpack.c.l.b16 %v7248
        %v7512 = vunpack.c.l.b16 %v7249
        %v7513 = vunpack.c.l.b16 %v7250
        %v7514 = vunpack.c.l.b16 %v7251
        %v7515 = vunpack.c.l.b16 %v7252
        %v7516 = vunpack.c.l.b16 %v7253
        %v7517 = vunpack.c.l.b16 %v7254
        %v7518 = vunpack.c.l.b16 %v7255
        %v7519 = vunpack.c.l.b16 %v7256
        %v7520 = vunpack.c.l.b16 %v7257
        %v7521 = vunpack.c.l.b16 %v7258
        %v7522 = vunpack.c.l.b16 %v7259
        %v7523 = vunpack.c.l.b16 %v7260
        %v7524 = vunpack.c.l.b16 %v7261
        %v7525 = vunpack.c.l.b16 %v7262
        %v7526 = vunpack.c.l.b16 %v7263
        %v7527 = vunpack.c.l.b16 %v7264
        %v7528 = vunpack.c.l.b16 %v7265
        %v7529 = vunpack.c.l.b16 %v7266
        %v7530 = vunpack.c.l.b16 %v7267
        %v7531 = vunpack.c.l.b16 %v7268
        %v7532 = vunpack.c.l.b16 %v7269
        %v7533 = vunpack.c.l.b16 %v7270
        %v7534 = vunpack.c.l.b16 %v7271
        %v7535 = vunpack.c.l.b16 %v7272
        %v7536 = vunpack.c.l.b16 %v7273
        %v7537 = vunpack.c.l.b16 %v7274
        %v7538 = vunpack.c.l.b16 %v7275
        %v7539 = vunpack.c.l.b16 %v7276
        %v7540 = vunpack.c.l.b16 %v7277
        %v7541 = vunpack.c.l.b16 %v7278
        %v7542 = vunpack.c.l.b16 %v7279
        %v7543 = vunpack.c.l.b16 %v7280
        %v7544 = vunpack.c.l.b16 %v7281
        %v7545 = vunpack.c.l.b16 %v7282
        %v7546 = vunpack.c.l.b16 %v7283
        %v7547 = vunpack.c.l.b16 %v7284
        %v7548 = vunpack.c.l.b16 %v7285
        %v7549 = vunpack.c.l.b16 %v7286
        %v7550 = vunpack.c.l.b16 %v7287
        %v7551 = vunpack.c.l.b16 %v7288
        %v7552 = vunpack.c.l.b16 %v7289
        %v7553 = vunpack.c.l.b16 %v7290
        %v7554 = vunpack.c.l.b16 %v7291
        %v7555 = vunpack.c.l.b16 %v7292
        %v7556 = vunpack.c.l.b16 %v7293
        %v7557 = vunpack.c.l.b16 %v7294
        %v7558 = vunpack.c.l.b16 %v7295
        %v7559 = vunpack.c.l.b16 %v7296
        %v7560 = vunpack.c.l.b16 %v7297
        %v7561 = vunpack.c.l.b16 %v7298
        %v7562 = vunpack.c.l.b16 %v7299
        %v7563 = vunpack.c.l.b16 %v7300
        %v7564 = vunpack.c.l.b16 %v7301
        %v7565 = vunpack.c.l.b16 %v7302
        %v7566 = vunpack.c.l.b16 %v7303
        %v7567 = vunpack.c.l.b16 %v7304
        %v7568 = vunpack.c.l.b16 %v7305
        %v7569 = vunpack.c.l.b16 %v7306
        %v7570 = vunpack.c.l.b16 %v7307
        %v7571 = vunpack.c.l.b16 %v7308
        %v7572 = vunpack.c.l.b16 %v7309
        %v7573 = vunpack.c.l.b16 %v7310
        %v7574 = vunpack.c.l.b16 %v7311
        %v7575 = vunpack.c.l.b16 %v7312
        %v7576 = vunpack.c.l.b16 %v7313
        %v7577 = vunpack.c.l.b16 %v7314
        %v7578 = vpack.c.b16 %v7451, %v7450
        %v7579 = vpack.c.b16 %v7453, %v7452
        %v7580 = vpack.c.b16 %v7455, %v7454
        %v7581 = vpack.c.b16 %v7457, %v7456
        %v7582 = vpack.c.b16 %v7459, %v7458
        %v7583 = vpack.c.b16 %v7461, %v7460
        %v7584 = vpack.c.b16 %v7463, %v7462
        %v7585 = vpack.c.b16 %v7465, %v7464
        %v7586 = vpack.c.b16 %v7467, %v7466
        %v7587 = vpack.c.b16 %v7469, %v7468
        %v7588 = vpack.c.b16 %v7471, %v7470
        %v7589 = vpack.c.b16 %v7473, %v7472
        %v7590 = vpack.c.b16 %v7475, %v7474
        %v7591 = vpack.c.b16 %v7477, %v7476
        %v7592 = vpack.c.b16 %v7479, %v7478
        %v7593 = vpack.c.b16 %v7481, %v7480
        %v7594 = vpack.c.b16 %v7483, %v7482
        %v7595 = vpack.c.b16 %v7485, %v7484
        %v7596 = vpack.c.b16 %v7487, %v7486
        %v7597 = vpack.c.b16 %v7489, %v7488
        %v7598 = vpack.c.b16 %v7491, %v7490
        %v7599 = vpack.c.b16 %v7493, %v7492
        %v7600 = vpack.c.b16 %v7495, %v7494
        %v7601 = vpack.c.b16 %v7497, %v7496
        %v7602 = vpack.c.b16 %v7499, %v7498
        %v7603 = vpack.c.b16 %v7501, %v7500
        %v7604 = vpack.c.b16 %v7503, %v7502
        %v7605 = vpack.c.b16 %v7505, %v7504
        %v7606 = vpack.c.b16 %v7507, %v7506
        %v7607 = vpack.c.b16 %v7509, %v7508
        %v7608 = vpack.c.b16 %v7511, %v7510
        %v7609 = vpack.c.b16 %v7513, %v7512
        %v7610 = vpack.c.b16 %v7515, %v7514
        %v7611 = vpack.c.b16 %v7517, %v7516
        %v7612 = vpack.c.b16 %v7519, %v7518
        %v7613 = vpack.c.b16 %v7521, %v7520
        %v7614 = vpack.c.b16 %v7523, %v7522
        %v7615 = vpack.c.b16 %v7525, %v7524
        %v7616 = vpack.c.b16 %v7527, %v7526
        %v7617 = vpack.c.b16 %v7529, %v7528
        %v7618 = vpack.c.b16 %v7531, %v7530
        %v7619 = vpack.c.b16 %v7533, %v7532
        %v7620 = vpack.c.b16 %v7535, %v7534
        %v7621 = vpack.c.b16 %v7537, %v7536
        %v7622 = vpack.c.b16 %v7539, %v7538
        %v7623 = vpack.c.b16 %v7541, %v7540
        %v7624 = vpack.c.b16 %v7543, %v7542
        %v7625 = vpack.c.b16 %v7545, %v7544
        %v7626 = vpack.c.b16 %v7547, %v7546
        %v7627 = vpack.c.b16 %v7549, %v7548
        %v7628 = vpack.c.b16 %v7551, %v7550
        %v7629 = vpack.c.b16 %v7553, %v7552
        %v7630 = vpack.c.b16 %v7555, %v7554
        %v7631 = vpack.c.b16 %v7557, %v7556
        %v7632 = vpack.c.b16 %v7559, %v7558
        %v7633 = vpack.c.b16 %v7561, %v7560
        %v7634 = vpack.c.b16 %v7563, %v7562
        %v7635 = vpack.c.b16 %v7565, %v7564
        %v7636 = vpack.c.b16 %v7567, %v7566
        %v7637 = vpack.c.b16 %v7569, %v7568
        %v7638 = vpack.c.b16 %v7571, %v7570
        %v7639 = vpack.c.b16 %v7573, %v7572
        %v7640 = vpack.c.b16 %v7575, %v7574
        %v7641 = vpack.c.b16 %v7577, %v7576
        %7706 = vmatprep.subr.bf16.mxu0 0
        %7707 = vmatpush1.bf16.msra.mxu0 %v7578
        %7708 = vmatprep.subr.bf16.mxu0 0
        %7709 = vmatpush1.bf16.msra.mxu0 %v7579
        %7710 = vmatprep.subr.bf16.mxu0 0
        %7711 = vmatpush1.bf16.msra.mxu0 %v7580
        %7712 = vmatprep.subr.bf16.mxu0 0
        %7713 = vmatpush1.bf16.msra.mxu0 %v7581
        %7714 = vmatprep.subr.bf16.mxu0 0
        %7715 = vmatpush1.bf16.msra.mxu0 %v7582
        %7716 = vmatprep.subr.bf16.mxu0 0
        %7717 = vmatpush1.bf16.msra.mxu0 %v7583
        %7718 = vmatprep.subr.bf16.mxu0 0
        %7719 = vmatpush1.bf16.msra.mxu0 %v7584
        %7720 = vmatprep.subr.bf16.mxu0 0
        %7721 = vmatpush1.bf16.msra.mxu0 %v7585
        %7722 = vmatprep.subr.bf16.mxu0 0
        %7723 = vmatpush1.bf16.msra.mxu0 %v7586
        %7724 = vmatprep.subr.bf16.mxu0 0
        %7725 = vmatpush1.bf16.msra.mxu0 %v7587
        %7726 = vmatprep.subr.bf16.mxu0 0
        %7727 = vmatpush1.bf16.msra.mxu0 %v7588
        %7728 = vmatprep.subr.bf16.mxu0 0
        %7729 = vmatpush1.bf16.msra.mxu0 %v7589
        %7730 = vmatprep.subr.bf16.mxu0 0
        %7731 = vmatpush1.bf16.msra.mxu0 %v7590
        %7732 = vmatprep.subr.bf16.mxu0 0
        %7733 = vmatpush1.bf16.msra.mxu0 %v7591
        %7734 = vmatprep.subr.bf16.mxu0 0
        %7735 = vmatpush1.bf16.msra.mxu0 %v7592
        %7736 = vmatprep.subr.bf16.mxu0 0
        %7737 = vmatpush1.bf16.msra.mxu0 %v7593
        %7738 = vmatprep.mubr.bf16.mxu0 %v7180
        %7739 = vmatmul.mubr.bf16.gmra.mrb[0].mxu0 %v7179
        %v7740 = vpop.f32.mrb[0].mxu0
        %v7741 = vadd.f32 %v7320, %v7740
        %v7742 = vpop.f32.mrb[0].mxu0
        %v7743 = vpop.f32.mrb[0].mxu0
        %v7744 = vpop.f32.mrb[0].mxu0
        %7745 = vdwg.mxu0
        %7746 = vmatprep.subr.bf16.mxu0 0
        %7747 = vmatpush1.bf16.msra.mxu0 %v7594
        %7748 = vmatprep.subr.bf16.mxu0 0
        %7749 = vmatpush1.bf16.msra.mxu0 %v7595
        %7750 = vmatprep.subr.bf16.mxu0 0
        %7751 = vmatpush1.bf16.msra.mxu0 %v7596
        %7752 = vmatprep.subr.bf16.mxu0 0
        %7753 = vmatpush1.bf16.msra.mxu0 %v7597
        %7754 = vmatprep.subr.bf16.mxu0 0
        %7755 = vmatpush1.bf16.msra.mxu0 %v7598
        %7756 = vmatprep.subr.bf16.mxu0 0
        %7757 = vmatpush1.bf16.msra.mxu0 %v7599
        %7758 = vmatprep.subr.bf16.mxu0 0
        %7759 = vmatpush1.bf16.msra.mxu0 %v7600
        %7760 = vmatprep.subr.bf16.mxu0 0
        %7761 = vmatpush1.bf16.msra.mxu0 %v7601
        %7762 = vmatprep.subr.bf16.mxu0 0
        %7763 = vmatpush1.bf16.msra.mxu0 %v7602
        %7764 = vmatprep.subr.bf16.mxu0 0
        %7765 = vmatpush1.bf16.msra.mxu0 %v7603
        %7766 = vmatprep.subr.bf16.mxu0 0
        %7767 = vmatpush1.bf16.msra.mxu0 %v7604
        %7768 = vmatprep.subr.bf16.mxu0 0
        %7769 = vmatpush1.bf16.msra.mxu0 %v7605
        %7770 = vmatprep.subr.bf16.mxu0 0
        %7771 = vmatpush1.bf16.msra.mxu0 %v7606
        %7772 = vmatprep.subr.bf16.mxu0 0
        %7773 = vmatpush1.bf16.msra.mxu0 %v7607
        %7774 = vmatprep.subr.bf16.mxu0 0
        %7775 = vmatpush1.bf16.msra.mxu0 %v7608
        %7776 = vmatprep.subr.bf16.mxu0 0
        %7777 = vmatpush1.bf16.msra.mxu0 %v7609
        %7778 = vmatprep.mubr.bf16.mxu0 %v7182
        %7779 = vmatmul.mubr.bf16.gmra.mrb[0].mxu0 %v7181
        %v7780 = vpop.f32.mrb[0].mxu0
        %v7781 = vadd.f32 %v7741, %v7780
        %v7782 = vpop.f32.mrb[0].mxu0
        %v7783 = vpop.f32.mrb[0].mxu0
        %v7784 = vpop.f32.mrb[0].mxu0
        %7785 = vdwg.mxu0
        %7786 = vmatprep.subr.bf16.mxu0 0
        %7787 = vmatpush1.bf16.msra.mxu0 %v7610
        %7788 = vmatprep.subr.bf16.mxu0 0
        %7789 = vmatpush1.bf16.msra.mxu0 %v7611
        %7790 = vmatprep.subr.bf16.mxu0 0
        %7791 = vmatpush1.bf16.msra.mxu0 %v7612
        %7792 = vmatprep.subr.bf16.mxu0 0
        %7793 = vmatpush1.bf16.msra.mxu0 %v7613
        %7794 = vmatprep.subr.bf16.mxu0 0
        %7795 = vmatpush1.bf16.msra.mxu0 %v7614
        %7796 = vmatprep.subr.bf16.mxu0 0
        %7797 = vmatpush1.bf16.msra.mxu0 %v7615
        %7798 = vmatprep.subr.bf16.mxu0 0
        %7799 = vmatpush1.bf16.msra.mxu0 %v7616
        %7800 = vmatprep.subr.bf16.mxu0 0
        %7801 = vmatpush1.bf16.msra.mxu0 %v7617
        %7802 = vmatprep.subr.bf16.mxu0 0
        %7803 = vmatpush1.bf16.msra.mxu0 %v7618
        %7804 = vmatprep.subr.bf16.mxu0 0
        %7805 = vmatpush1.bf16.msra.mxu0 %v7619
        %7806 = vmatprep.subr.bf16.mxu0 0
        %7807 = vmatpush1.bf16.msra.mxu0 %v7620
        %7808 = vmatprep.subr.bf16.mxu0 0
        %7809 = vmatpush1.bf16.msra.mxu0 %v7621
        %7810 = vmatprep.subr.bf16.mxu0 0
        %7811 = vmatpush1.bf16.msra.mxu0 %v7622
        %7812 = vmatprep.subr.bf16.mxu0 0
        %7813 = vmatpush1.bf16.msra.mxu0 %v7623
        %7814 = vmatprep.subr.bf16.mxu0 0
        %7815 = vmatpush1.bf16.msra.mxu0 %v7624
        %7816 = vmatprep.subr.bf16.mxu0 0
        %7817 = vmatpush1.bf16.msra.mxu0 %v7625
        %7818 = vmatprep.mubr.bf16.mxu0 %v7184
        %7819 = vmatmul.mubr.bf16.gmra.mrb[0].mxu0 %v7183
        %v7820 = vpop.f32.mrb[0].mxu0
        %v7821 = vadd.f32 %v7781, %v7820
        %v7822 = vpop.f32.mrb[0].mxu0
        %v7823 = vpop.f32.mrb[0].mxu0
        %v7824 = vpop.f32.mrb[0].mxu0
        %7825 = vdwg.mxu0
        %7826 = vmatprep.subr.bf16.mxu0 0
        %7827 = vmatpush1.bf16.msra.mxu0 %v7626
        %7828 = vmatprep.subr.bf16.mxu0 0
        %7829 = vmatpush1.bf16.msra.mxu0 %v7627
        %7830 = vmatprep.subr.bf16.mxu0 0
        %7831 = vmatpush1.bf16.msra.mxu0 %v7628
        %7832 = vmatprep.subr.bf16.mxu0 0
        %7833 = vmatpush1.bf16.msra.mxu0 %v7629
        %7834 = vmatprep.subr.bf16.mxu0 0
        %7835 = vmatpush1.bf16.msra.mxu0 %v7630
        %7836 = vmatprep.subr.bf16.mxu0 0
        %7837 = vmatpush1.bf16.msra.mxu0 %v7631
        %7838 = vmatprep.subr.bf16.mxu0 0
        %7839 = vmatpush1.bf16.msra.mxu0 %v7632
        %7840 = vmatprep.subr.bf16.mxu0 0
        %7841 = vmatpush1.bf16.msra.mxu0 %v7633
        %7842 = vmatprep.subr.bf16.mxu0 0
        %7843 = vmatpush1.bf16.msra.mxu0 %v7634
        %7844 = vmatprep.subr.bf16.mxu0 0
        %7845 = vmatpush1.bf16.msra.mxu0 %v7635
        %7846 = vmatprep.subr.bf16.mxu0 0
        %7847 = vmatpush1.bf16.msra.mxu0 %v7636
        %7848 = vmatprep.subr.bf16.mxu0 0
        %7849 = vmatpush1.bf16.msra.mxu0 %v7637
        %7850 = vmatprep.subr.bf16.mxu0 0
        %7851 = vmatpush1.bf16.msra.mxu0 %v7638
        %7852 = vmatprep.subr.bf16.mxu0 0
        %7853 = vmatpush1.bf16.msra.mxu0 %v7639
        %7854 = vmatprep.subr.bf16.mxu0 0
        %7855 = vmatpush1.bf16.msra.mxu0 %v7640
        %7856 = vmatprep.subr.bf16.mxu0 0
        %7857 = vmatpush1.bf16.msra.mxu0 %v7641
        %7858 = vmatprep.mubr.bf16.mxu0 %v7186
        %7859 = vmatmul.mubr.bf16.gmra.mrb[0].mxu0 %v7185
        %v7860 = vpop.f32.mrb[0].mxu0
        %v7861 = vadd.f32 %v7821, %v7860
        %v7862 = vpop.f32.mrb[0].mxu0
        %v7863 = vpop.f32.mrb[0].mxu0
        %v7864 = vpop.f32.mrb[0].mxu0
        %7865 = vdwg.mxu0
        %v7866 = vpack.c.bf16 %v7861, %v7861
        %v7867 = vld [vmem:[%s11] sm:$0xff]
        %v7868 = vld [vmem:[%s11 + $0x8] sm:$0xff]
        %v7869 = vld [vmem:[%s11 + $0x10] sm:$0xff]
        %v7870 = vld [vmem:[%s11 + $0x18] sm:$0xff]
        %v7871 = vld [vmem:[%s11 + $0x20] sm:$0xff]
        %v7872 = vld [vmem:[%s11 + $0x28] sm:$0xff]
        %v7873 = vld [vmem:[%s11 + $0x30] sm:$0xff]
        %v7874 = vld [vmem:[%s11 + $0x38] sm:$0xff]
        %v7875 = vld [vmem:[%s11 + $0x40] sm:$0xff]
        %v7876 = vld [vmem:[%s11 + $0x48] sm:$0xff]
        %v7877 = vld [vmem:[%s11 + $0x50] sm:$0xff]
        %v7878 = vld [vmem:[%s11 + $0x58] sm:$0xff]
        %v7879 = vld [vmem:[%s11 + $0x60] sm:$0xff]
        %v7880 = vld [vmem:[%s11 + $0x68] sm:$0xff]
        %v7881 = vld [vmem:[%s11 + $0x70] sm:$0xff]
        %v7882 = vld [vmem:[%s11 + $0x78] sm:$0xff]
        %v7883 = vld [vmem:[%s11 + $0x80] sm:$0xff]
        %v7884 = vld [vmem:[%s11 + $0x88] sm:$0xff]
        %v7885 = vld [vmem:[%s11 + $0x90] sm:$0xff]
        %v7886 = vld [vmem:[%s11 + $0x98] sm:$0xff]
        %v7887 = vld [vmem:[%s11 + $0xa0] sm:$0xff]
        %v7888 = vld [vmem:[%s11 + $0xa8] sm:$0xff]
        %v7889 = vld [vmem:[%s11 + $0xb0] sm:$0xff]
        %v7890 = vld [vmem:[%s11 + $0xb8] sm:$0xff]
        %v7891 = vld [vmem:[%s11 + $0xc0] sm:$0xff]
        %v7892 = vld [vmem:[%s11 + $0xc8] sm:$0xff]
        %v7893 = vld [vmem:[%s11 + $0xd0] sm:$0xff]
        %v7894 = vld [vmem:[%s11 + $0xd8] sm:$0xff]
        %v7895 = vld [vmem:[%s11 + $0xe0] sm:$0xff]
        %v7896 = vld [vmem:[%s11 + $0xe8] sm:$0xff]
        %v7897 = vld [vmem:[%s11 + $0xf0] sm:$0xff]
        %v7898 = vld [vmem:[%s11 + $0xf8] sm:$0xff]
        %v7899 = vld [vmem:[%s11 + $0x100] sm:$0xff]
        %v7900 = vld [vmem:[%s11 + $0x108] sm:$0xff]
        %v7901 = vld [vmem:[%s11 + $0x110] sm:$0xff]
        %v7902 = vld [vmem:[%s11 + $0x118] sm:$0xff]
        %v7903 = vld [vmem:[%s11 + $0x120] sm:$0xff]
        %v7904 = vld [vmem:[%s11 + $0x128] sm:$0xff]
        %v7905 = vld [vmem:[%s11 + $0x130] sm:$0xff]
        %v7906 = vld [vmem:[%s11 + $0x138] sm:$0xff]
        %v7907 = vld [vmem:[%s11 + $0x140] sm:$0xff]
        %v7908 = vld [vmem:[%s11 + $0x148] sm:$0xff]
        %v7909 = vld [vmem:[%s11 + $0x150] sm:$0xff]
        %v7910 = vld [vmem:[%s11 + $0x158] sm:$0xff]
        %v7911 = vld [vmem:[%s11 + $0x160] sm:$0xff]
        %v7912 = vld [vmem:[%s11 + $0x168] sm:$0xff]
        %v7913 = vld [vmem:[%s11 + $0x170] sm:$0xff]
        %v7914 = vld [vmem:[%s11 + $0x178] sm:$0xff]
        %v7915 = vld [vmem:[%s11 + $0x180] sm:$0xff]
        %v7916 = vld [vmem:[%s11 + $0x188] sm:$0xff]
        %v7917 = vld [vmem:[%s11 + $0x190] sm:$0xff]
        %v7918 = vld [vmem:[%s11 + $0x198] sm:$0xff]
        %v7919 = vld [vmem:[%s11 + $0x1a0] sm:$0xff]
        %v7920 = vld [vmem:[%s11 + $0x1a8] sm:$0xff]
        %v7921 = vld [vmem:[%s11 + $0x1b0] sm:$0xff]
        %v7922 = vld [vmem:[%s11 + $0x1b8] sm:$0xff]
        %v7923 = vld [vmem:[%s11 + $0x1c0] sm:$0xff]
        %v7924 = vld [vmem:[%s11 + $0x1c8] sm:$0xff]
        %v7925 = vld [vmem:[%s11 + $0x1d0] sm:$0xff]
        %v7926 = vld [vmem:[%s11 + $0x1d8] sm:$0xff]
        %v7927 = vld [vmem:[%s11 + $0x1e0] sm:$0xff]
        %v7928 = vld [vmem:[%s11 + $0x1e8] sm:$0xff]
        %v7929 = vld [vmem:[%s11 + $0x1f0] sm:$0xff]
        %v7930 = vld [vmem:[%s11 + $0x1f8] sm:$0xff]
        %v7931 = vld [vmem:[%s12] sm:$0xff]
        %v7933 = vlaneseq
        %v7934 = vshrl.u32 %v7933, 7
        %v7935 = vsub.s32 0, %v7934
        %v7936 = vrot.slane %v7931, %v7935
        %v7937 = vlaneseq
        %v7938 = vshrl.u32 %v7937, 7
        %v7939 = vsub.s32 1, %v7938
        %v7940 = vrot.slane %v7931, %v7939
        %v7941 = vlaneseq
        %v7942 = vshrl.u32 %v7941, 7
        %v7943 = vsub.s32 2, %v7942
        %v7944 = vrot.slane %v7931, %v7943
        %v7945 = vlaneseq
        %v7946 = vshrl.u32 %v7945, 7
        %v7947 = vsub.s32 3, %v7946
        %v7948 = vrot.slane %v7931, %v7947
        %v7949 = vlaneseq
        %v7950 = vshrl.u32 %v7949, 7
        %v7951 = vsub.s32 4, %v7950
        %v7952 = vrot.slane %v7931, %v7951
        %v7953 = vlaneseq
        %v7954 = vshrl.u32 %v7953, 7
        %v7955 = vsub.s32 5, %v7954
        %v7956 = vrot.slane %v7931, %v7955
        %v7957 = vlaneseq
        %v7958 = vshrl.u32 %v7957, 7
        %v7959 = vsub.s32 6, %v7958
        %v7960 = vrot.slane %v7931, %v7959
        %v7961 = vlaneseq
        %v7962 = vshrl.u32 %v7961, 7
        %v7963 = vsub.s32 7, %v7962
        %v7964 = vrot.slane %v7931, %v7963
        %v8037 = vunpack.c.l.b16 %v7867
        %v8038 = vunpack.c.h.b16 %v7867
        %v8039 = vunpack.c.l.b16 %v7868
        %v8040 = vunpack.c.h.b16 %v7868
        %v8041 = vunpack.c.l.b16 %v7869
        %v8042 = vunpack.c.h.b16 %v7869
        %v8043 = vunpack.c.l.b16 %v7870
        %v8044 = vunpack.c.h.b16 %v7870
        %v8045 = vunpack.c.l.b16 %v7871
        %v8046 = vunpack.c.h.b16 %v7871
        %v8047 = vunpack.c.l.b16 %v7872
        %v8048 = vunpack.c.h.b16 %v7872
        %v8049 = vunpack.c.l.b16 %v7873
        %v8050 = vunpack.c.h.b16 %v7873
        %v8051 = vunpack.c.l.b16 %v7874
        %v8052 = vunpack.c.h.b16 %v7874
        %v8053 = vunpack.c.l.b16 %v7875
        %v8054 = vunpack.c.h.b16 %v7875
        %v8055 = vunpack.c.l.b16 %v7876
        %v8056 = vunpack.c.h.b16 %v7876
        %v8057 = vunpack.c.l.b16 %v7877
        %v8058 = vunpack.c.h.b16 %v7877
        %v8059 = vunpack.c.l.b16 %v7878
        %v8060 = vunpack.c.h.b16 %v7878
        %v8061 = vunpack.c.l.b16 %v7879
        %v8062 = vunpack.c.h.b16 %v7879
        %v8063 = vunpack.c.l.b16 %v7880
        %v8064 = vunpack.c.h.b16 %v7880
        %v8065 = vunpack.c.l.b16 %v7881
        %v8066 = vunpack.c.h.b16 %v7881
        %v8067 = vunpack.c.l.b16 %v7882
        %v8068 = vunpack.c.h.b16 %v7882
        %v8069 = vunpack.c.l.b16 %v7883
        %v8070 = vunpack.c.h.b16 %v7883
        %v8071 = vunpack.c.l.b16 %v7884
        %v8072 = vunpack.c.h.b16 %v7884
        %v8073 = vunpack.c.l.b16 %v7885
        %v8074 = vunpack.c.h.b16 %v7885
        %v8075 = vunpack.c.l.b16 %v7886
        %v8076 = vunpack.c.h.b16 %v7886
        %v8077 = vunpack.c.l.b16 %v7887
        %v8078 = vunpack.c.h.b16 %v7887
        %v8079 = vunpack.c.l.b16 %v7888
        %v8080 = vunpack.c.h.b16 %v7888
        %v8081 = vunpack.c.l.b16 %v7889
        %v8082 = vunpack.c.h.b16 %v7889
        %v8083 = vunpack.c.l.b16 %v7890
        %v8084 = vunpack.c.h.b16 %v7890
        %v8085 = vunpack.c.l.b16 %v7891
        %v8086 = vunpack.c.h.b16 %v7891
        %v8087 = vunpack.c.l.b16 %v7892
        %v8088 = vunpack.c.h.b16 %v7892
        %v8089 = vunpack.c.l.b16 %v7893
        %v8090 = vunpack.c.h.b16 %v7893
        %v8091 = vunpack.c.l.b16 %v7894
        %v8092 = vunpack.c.h.b16 %v7894
        %v8093 = vunpack.c.l.b16 %v7895
        %v8094 = vunpack.c.h.b16 %v7895
        %v8095 = vunpack.c.l.b16 %v7896
        %v8096 = vunpack.c.h.b16 %v7896
        %v8097 = vunpack.c.l.b16 %v7897
        %v8098 = vunpack.c.h.b16 %v7897
        %v8099 = vunpack.c.l.b16 %v7898
        %v8100 = vunpack.c.h.b16 %v7898
        %v8101 = vunpack.c.l.b16 %v7899
        %v8102 = vunpack.c.h.b16 %v7899
        %v8103 = vunpack.c.l.b16 %v7900
        %v8104 = vunpack.c.h.b16 %v7900
        %v8105 = vunpack.c.l.b16 %v7901
        %v8106 = vunpack.c.h.b16 %v7901
        %v8107 = vunpack.c.l.b16 %v7902
        %v8108 = vunpack.c.h.b16 %v7902
        %v8109 = vunpack.c.l.b16 %v7903
        %v8110 = vunpack.c.h.b16 %v7903
        %v8111 = vunpack.c.l.b16 %v7904
        %v8112 = vunpack.c.h.b16 %v7904
        %v8113 = vunpack.c.l.b16 %v7905
        %v8114 = vunpack.c.h.b16 %v7905
        %v8115 = vunpack.c.l.b16 %v7906
        %v8116 = vunpack.c.h.b16 %v7906
        %v8117 = vunpack.c.l.b16 %v7907
        %v8118 = vunpack.c.h.b16 %v7907
        %v8119 = vunpack.c.l.b16 %v7908
        %v8120 = vunpack.c.h.b16 %v7908
        %v8121 = vunpack.c.l.b16 %v7909
        %v8122 = vunpack.c.h.b16 %v7909
        %v8123 = vunpack.c.l.b16 %v7910
        %v8124 = vunpack.c.h.b16 %v7910
        %v8125 = vunpack.c.l.b16 %v7911
        %v8126 = vunpack.c.h.b16 %v7911
        %v8127 = vunpack.c.l.b16 %v7912
        %v8128 = vunpack.c.h.b16 %v7912
        %v8129 = vunpack.c.l.b16 %v7913
        %v8130 = vunpack.c.h.b16 %v7913
        %v8131 = vunpack.c.l.b16 %v7914
        %v8132 = vunpack.c.h.b16 %v7914
        %v8133 = vunpack.c.l.b16 %v7915
        %v8134 = vunpack.c.h.b16 %v7915
        %v8135 = vunpack.c.l.b16 %v7916
        %v8136 = vunpack.c.h.b16 %v7916
        %v8137 = vunpack.c.l.b16 %v7917
        %v8138 = vunpack.c.h.b16 %v7917
        %v8139 = vunpack.c.l.b16 %v7918
        %v8140 = vunpack.c.h.b16 %v7918
        %v8141 = vunpack.c.l.b16 %v7919
        %v8142 = vunpack.c.h.b16 %v7919
        %v8143 = vunpack.c.l.b16 %v7920
        %v8144 = vunpack.c.h.b16 %v7920
        %v8145 = vunpack.c.l.b16 %v7921
        %v8146 = vunpack.c.h.b16 %v7921
        %v8147 = vunpack.c.l.b16 %v7922
        %v8148 = vunpack.c.h.b16 %v7922
        %v8149 = vunpack.c.l.b16 %v7923
        %v8150 = vunpack.c.h.b16 %v7923
        %v8151 = vunpack.c.l.b16 %v7924
        %v8152 = vunpack.c.h.b16 %v7924
        %v8153 = vunpack.c.l.b16 %v7925
        %v8154 = vunpack.c.h.b16 %v7925
        %v8155 = vunpack.c.l.b16 %v7926
        %v8156 = vunpack.c.h.b16 %v7926
        %v8157 = vunpack.c.l.b16 %v7927
        %v8158 = vunpack.c.h.b16 %v7927
        %v8159 = vunpack.c.l.b16 %v7928
        %v8160 = vunpack.c.h.b16 %v7928
        %v8161 = vunpack.c.l.b16 %v7929
        %v8162 = vunpack.c.h.b16 %v7929
        %v8163 = vunpack.c.l.b16 %v7930
        %v8164 = vunpack.c.h.b16 %v7930
        %v8165 = vpack.c.b16 %v8045, %v8037
        %v8166 = vpack.c.b16 %v8046, %v8038
        %v8167 = vpack.c.b16 %v8047, %v8039
        %v8168 = vpack.c.b16 %v8048, %v8040
        %v8169 = vpack.c.b16 %v8049, %v8041
        %v8170 = vpack.c.b16 %v8050, %v8042
        %v8171 = vpack.c.b16 %v8051, %v8043
        %v8172 = vpack.c.b16 %v8052, %v8044
        %v8173 = vpack.c.b16 %v8061, %v8053
        %v8174 = vpack.c.b16 %v8062, %v8054
        %v8175 = vpack.c.b16 %v8063, %v8055
        %v8176 = vpack.c.b16 %v8064, %v8056
        %v8177 = vpack.c.b16 %v8065, %v8057
        %v8178 = vpack.c.b16 %v8066, %v8058
        %v8179 = vpack.c.b16 %v8067, %v8059
        %v8180 = vpack.c.b16 %v8068, %v8060
        %v8181 = vpack.c.b16 %v8077, %v8069
        %v8182 = vpack.c.b16 %v8078, %v8070
        %v8183 = vpack.c.b16 %v8079, %v8071
        %v8184 = vpack.c.b16 %v8080, %v8072
        %v8185 = vpack.c.b16 %v8081, %v8073
        %v8186 = vpack.c.b16 %v8082, %v8074
        %v8187 = vpack.c.b16 %v8083, %v8075
        %v8188 = vpack.c.b16 %v8084, %v8076
        %v8189 = vpack.c.b16 %v8093, %v8085
        %v8190 = vpack.c.b16 %v8094, %v8086
        %v8191 = vpack.c.b16 %v8095, %v8087
        %v8192 = vpack.c.b16 %v8096, %v8088
        %v8193 = vpack.c.b16 %v8097, %v8089
        %v8194 = vpack.c.b16 %v8098, %v8090
        %v8195 = vpack.c.b16 %v8099, %v8091
        %v8196 = vpack.c.b16 %v8100, %v8092
        %v8197 = vpack.c.b16 %v8109, %v8101
        %v8198 = vpack.c.b16 %v8110, %v8102
        %v8199 = vpack.c.b16 %v8111, %v8103
        %v8200 = vpack.c.b16 %v8112, %v8104
        %v8201 = vpack.c.b16 %v8113, %v8105
        %v8202 = vpack.c.b16 %v8114, %v8106
        %v8203 = vpack.c.b16 %v8115, %v8107
        %v8204 = vpack.c.b16 %v8116, %v8108
        %v8205 = vpack.c.b16 %v8125, %v8117
        %v8206 = vpack.c.b16 %v8126, %v8118
        %v8207 = vpack.c.b16 %v8127, %v8119
        %v8208 = vpack.c.b16 %v8128, %v8120
        %v8209 = vpack.c.b16 %v8129, %v8121
        %v8210 = vpack.c.b16 %v8130, %v8122
        %v8211 = vpack.c.b16 %v8131, %v8123
        %v8212 = vpack.c.b16 %v8132, %v8124
        %v8213 = vpack.c.b16 %v8141, %v8133
        %v8214 = vpack.c.b16 %v8142, %v8134
        %v8215 = vpack.c.b16 %v8143, %v8135
        %v8216 = vpack.c.b16 %v8144, %v8136
        %v8217 = vpack.c.b16 %v8145, %v8137
        %v8218 = vpack.c.b16 %v8146, %v8138
        %v8219 = vpack.c.b16 %v8147, %v8139
        %v8220 = vpack.c.b16 %v8148, %v8140
        %v8221 = vpack.c.b16 %v8157, %v8149
        %v8222 = vpack.c.b16 %v8158, %v8150
        %v8223 = vpack.c.b16 %v8159, %v8151
        %v8224 = vpack.c.b16 %v8160, %v8152
        %v8225 = vpack.c.b16 %v8161, %v8153
        %v8226 = vpack.c.b16 %v8162, %v8154
        %v8227 = vpack.c.b16 %v8163, %v8155
        %v8228 = vpack.c.b16 %v8164, %v8156
        %8293 = vmatprep.subr.bf16.mxu0 %v8166
        %8294 = vmatpush1.bf16.msra.mxu0 %v8165
        %8295 = vmatprep.subr.bf16.mxu0 %v8174
        %8296 = vmatpush1.bf16.msra.mxu0 %v8173
        %8297 = vmatprep.subr.bf16.mxu0 %v8182
        %8298 = vmatpush1.bf16.msra.mxu0 %v8181
        %8299 = vmatprep.subr.bf16.mxu0 %v8190
        %8300 = vmatpush1.bf16.msra.mxu0 %v8189
        %8301 = vmatprep.subr.bf16.mxu0 %v8198
        %8302 = vmatpush1.bf16.msra.mxu0 %v8197
        %8303 = vmatprep.subr.bf16.mxu0 %v8206
        %8304 = vmatpush1.bf16.msra.mxu0 %v8205
        %8305 = vmatprep.subr.bf16.mxu0 %v8214
        %8306 = vmatpush1.bf16.msra.mxu0 %v8213
        %8307 = vmatprep.subr.bf16.mxu0 %v8222
        %8308 = vmatpush1.bf16.msra.mxu0 %v8221
        %8309 = vmatprep.subr.bf16.mxu0 0
        %8310 = vmatpush1.bf16.msra.mxu0 0
        %8311 = vmatprep.subr.bf16.mxu0 0
        %8312 = vmatpush1.bf16.msra.mxu0 0
        %8313 = vmatprep.subr.bf16.mxu0 0
        %8314 = vmatpush1.bf16.msra.mxu0 0
        %8315 = vmatprep.subr.bf16.mxu0 0
        %8316 = vmatpush1.bf16.msra.mxu0 0
        %8317 = vmatprep.subr.bf16.mxu0 0
        %8318 = vmatpush1.bf16.msra.mxu0 0
        %8319 = vmatprep.subr.bf16.mxu0 0
        %8320 = vmatpush1.bf16.msra.mxu0 0
        %8321 = vmatprep.subr.bf16.mxu0 0
        %8322 = vmatpush1.bf16.msra.mxu0 0
        %8323 = vmatprep.subr.bf16.mxu0 0
        %8324 = vmatpush1.bf16.msra.mxu0 0
        %8325 = vmatprep.mubr.bf16.mxu0 0
        %8326 = vmatmul.mubr.bf16.gmra.mrb[0].mxu0 %v7866
        %v8327 = vpop.f32.mrb[0].mxu0
        %v8328 = vadd.f32 %v7936, %v8327
        %v8329 = vpop.f32.mrb[0].mxu0
        %v8330 = vadd.f32 %v7940, %v8329
        %v8331 = vpop.f32.mrb[0].mxu0
        %v8332 = vpop.f32.mrb[0].mxu0
        %8333 = vdwg.mxu0
        %8334 = vmatprep.subr.bf16.mxu0 %v8168
        %8335 = vmatpush1.bf16.msra.mxu0 %v8167
        %8336 = vmatprep.subr.bf16.mxu0 %v8176
        %8337 = vmatpush1.bf16.msra.mxu0 %v8175
        %8338 = vmatprep.subr.bf16.mxu0 %v8184
        %8339 = vmatpush1.bf16.msra.mxu0 %v8183
        %8340 = vmatprep.subr.bf16.mxu0 %v8192
        %8341 = vmatpush1.bf16.msra.mxu0 %v8191
        %8342 = vmatprep.subr.bf16.mxu0 %v8200
        %8343 = vmatpush1.bf16.msra.mxu0 %v8199
        %8344 = vmatprep.subr.bf16.mxu0 %v8208
        %8345 = vmatpush1.bf16.msra.mxu0 %v8207
        %8346 = vmatprep.subr.bf16.mxu0 %v8216
        %8347 = vmatpush1.bf16.msra.mxu0 %v8215
        %8348 = vmatprep.subr.bf16.mxu0 %v8224
        %8349 = vmatpush1.bf16.msra.mxu0 %v8223
        %8350 = vmatprep.subr.bf16.mxu0 0
        %8351 = vmatpush1.bf16.msra.mxu0 0
        %8352 = vmatprep.subr.bf16.mxu0 0
        %8353 = vmatpush1.bf16.msra.mxu0 0
        %8354 = vmatprep.subr.bf16.mxu0 0
        %8355 = vmatpush1.bf16.msra.mxu0 0
        %8356 = vmatprep.subr.bf16.mxu0 0
        %8357 = vmatpush1.bf16.msra.mxu0 0
        %8358 = vmatprep.subr.bf16.mxu0 0
        %8359 = vmatpush1.bf16.msra.mxu0 0
        %8360 = vmatprep.subr.bf16.mxu0 0
        %8361 = vmatpush1.bf16.msra.mxu0 0
        %8362 = vmatprep.subr.bf16.mxu0 0
        %8363 = vmatpush1.bf16.msra.mxu0 0
        %8364 = vmatprep.subr.bf16.mxu0 0
        %8365 = vmatpush1.bf16.msra.mxu0 0
        %8366 = vmatprep.mubr.bf16.mxu0 0
        %8367 = vmatmul.mubr.bf16.gmra.mrb[0].mxu0 %v7866
        %v8368 = vpop.f32.mrb[0].mxu0
        %v8369 = vadd.f32 %v7944, %v8368
        %v8370 = vpop.f32.mrb[0].mxu0
        %v8371 = vadd.f32 %v7948, %v8370
        %v8372 = vpop.f32.mrb[0].mxu0
        %v8373 = vpop.f32.mrb[0].mxu0
        %8374 = vdwg.mxu0
        %8375 = vmatprep.subr.bf16.mxu0 %v8170
        %8376 = vmatpush1.bf16.msra.mxu0 %v8169
        %8377 = vmatprep.subr.bf16.mxu0 %v8178
        %8378 = vmatpush1.bf16.msra.mxu0 %v8177
        %8379 = vmatprep.subr.bf16.mxu0 %v8186
        %8380 = vmatpush1.bf16.msra.mxu0 %v8185
        %8381 = vmatprep.subr.bf16.mxu0 %v8194
        %8382 = vmatpush1.bf16.msra.mxu0 %v8193
        %8383 = vmatprep.subr.bf16.mxu0 %v8202
        %8384 = vmatpush1.bf16.msra.mxu0 %v8201
        %8385 = vmatprep.subr.bf16.mxu0 %v8210
        %8386 = vmatpush1.bf16.msra.mxu0 %v8209
        %8387 = vmatprep.subr.bf16.mxu0 %v8218
        %8388 = vmatpush1.bf16.msra.mxu0 %v8217
        %8389 = vmatprep.subr.bf16.mxu0 %v8226
        %8390 = vmatpush1.bf16.msra.mxu0 %v8225
        %8391 = vmatprep.subr.bf16.mxu0 0
        %8392 = vmatpush1.bf16.msra.mxu0 0
        %8393 = vmatprep.subr.bf16.mxu0 0
        %8394 = vmatpush1.bf16.msra.mxu0 0
        %8395 = vmatprep.subr.bf16.mxu0 0
        %8396 = vmatpush1.bf16.msra.mxu0 0
        %8397 = vmatprep.subr.bf16.mxu0 0
        %8398 = vmatpush1.bf16.msra.mxu0 0
        %8399 = vmatprep.subr.bf16.mxu0 0
        %8400 = vmatpush1.bf16.msra.mxu0 0
        %8401 = vmatprep.subr.bf16.mxu0 0
        %8402 = vmatpush1.bf16.msra.mxu0 0
        %8403 = vmatprep.subr.bf16.mxu0 0
        %8404 = vmatpush1.bf16.msra.mxu0 0
        %8405 = vmatprep.subr.bf16.mxu0 0
        %8406 = vmatpush1.bf16.msra.mxu0 0
        %8407 = vmatprep.mubr.bf16.mxu0 0
        %8408 = vmatmul.mubr.bf16.gmra.mrb[0].mxu0 %v7866
        %v8409 = vpop.f32.mrb[0].mxu0
        %v8410 = vadd.f32 %v7952, %v8409
        %v8411 = vpop.f32.mrb[0].mxu0
        %v8412 = vadd.f32 %v7956, %v8411
        %v8413 = vpop.f32.mrb[0].mxu0
        %v8414 = vpop.f32.mrb[0].mxu0
        %8415 = vdwg.mxu0
        %8416 = vmatprep.subr.bf16.mxu0 %v8172
        %8417 = vmatpush1.bf16.msra.mxu0 %v8171
        %8418 = vmatprep.subr.bf16.mxu0 %v8180
        %8419 = vmatpush1.bf16.msra.mxu0 %v8179
        %8420 = vmatprep.subr.bf16.mxu0 %v8188
        %8421 = vmatpush1.bf16.msra.mxu0 %v8187
        %8422 = vmatprep.subr.bf16.mxu0 %v8196
        %8423 = vmatpush1.bf16.msra.mxu0 %v8195
        %8424 = vmatprep.subr.bf16.mxu0 %v8204
        %8425 = vmatpush1.bf16.msra.mxu0 %v8203
        %8426 = vmatprep.subr.bf16.mxu0 %v8212
        %8427 = vmatpush1.bf16.msra.mxu0 %v8211
        %8428 = vmatprep.subr.bf16.mxu0 %v8220
        %8429 = vmatpush1.bf16.msra.mxu0 %v8219
        %8430 = vmatprep.subr.bf16.mxu0 %v8228
        %8431 = vmatpush1.bf16.msra.mxu0 %v8227
        %8432 = vmatprep.subr.bf16.mxu0 0
        %8433 = vmatpush1.bf16.msra.mxu0 0
        %8434 = vmatprep.subr.bf16.mxu0 0
        %8435 = vmatpush1.bf16.msra.mxu0 0
        %8436 = vmatprep.subr.bf16.mxu0 0
        %8437 = vmatpush1.bf16.msra.mxu0 0
        %8438 = vmatprep.subr.bf16.mxu0 0
        %8439 = vmatpush1.bf16.msra.mxu0 0
        %8440 = vmatprep.subr.bf16.mxu0 0
        %8441 = vmatpush1.bf16.msra.mxu0 0
        %8442 = vmatprep.subr.bf16.mxu0 0
        %8443 = vmatpush1.bf16.msra.mxu0 0
        %8444 = vmatprep.subr.bf16.mxu0 0
        %8445 = vmatpush1.bf16.msra.mxu0 0
        %8446 = vmatprep.subr.bf16.mxu0 0
        %8447 = vmatpush1.bf16.msra.mxu0 0
        %8448 = vmatprep.mubr.bf16.mxu0 0
        %8449 = vmatmul.mubr.bf16.gmra.mrb[0].mxu0 %v7866
        %v8450 = vpop.f32.mrb[0].mxu0
        %v8451 = vadd.f32 %v7960, %v8450
        %v8452 = vpop.f32.mrb[0].mxu0
        %v8453 = vadd.f32 %v7964, %v8452
        %v8454 = vpop.f32.mrb[0].mxu0
        %v8455 = vpop.f32.mrb[0].mxu0
        %8456 = vdwg.mxu0
        %v8457 = vmax.f32 %v8328, 0.0
        %v8458 = vmax.f32 %v8330, 0.0
        %v8459 = vmax.f32 %v8369, 0.0
        %v8460 = vmax.f32 %v8371, 0.0
        %v8461 = vmax.f32 %v8410, 0.0
        %v8462 = vmax.f32 %v8412, 0.0
        %v8463 = vmax.f32 %v8451, 0.0
        %v8464 = vmax.f32 %v8453, 0.0
        %v8465 = vpack.c.bf16 %v8457, %v8457
        %v8466 = vpack.c.bf16 %v8458, %v8458
        %v8467 = vpack.c.bf16 %v8459, %v8459
        %v8468 = vpack.c.bf16 %v8460, %v8460
        %v8469 = vpack.c.bf16 %v8461, %v8461
        %v8470 = vpack.c.bf16 %v8462, %v8462
        %v8471 = vpack.c.bf16 %v8463, %v8463
        %v8472 = vpack.c.bf16 %v8464, %v8464
        %v8473 = vld [vmem:[%s13] sm:$0xf]
        %v8474 = vld [vmem:[%s13 + $0x4] sm:$0xf]
        %v8475 = vld [vmem:[%s13 + $0x8] sm:$0xf]
        %v8476 = vld [vmem:[%s13 + $0xc] sm:$0xf]
        %v8477 = vld [vmem:[%s13 + $0x10] sm:$0xf]
        %v8478 = vld [vmem:[%s13 + $0x14] sm:$0xf]
        %v8479 = vld [vmem:[%s13 + $0x18] sm:$0xf]
        %v8480 = vld [vmem:[%s13 + $0x1c] sm:$0xf]
        %v8481 = vld [vmem:[%s13 + $0x20] sm:$0xf]
        %v8482 = vld [vmem:[%s13 + $0x24] sm:$0xf]
        %v8483 = vld [vmem:[%s13 + $0x28] sm:$0xf]
        %v8484 = vld [vmem:[%s13 + $0x2c] sm:$0xf]
        %v8485 = vld [vmem:[%s13 + $0x30] sm:$0xf]
        %v8486 = vld [vmem:[%s13 + $0x34] sm:$0xf]
        %v8487 = vld [vmem:[%s13 + $0x38] sm:$0xf]
        %v8488 = vld [vmem:[%s13 + $0x3c] sm:$0xf]
        %v8489 = vld [vmem:[%s13 + $0x40] sm:$0xf]
        %v8490 = vld [vmem:[%s13 + $0x44] sm:$0xf]
        %v8491 = vld [vmem:[%s13 + $0x48] sm:$0xf]
        %v8492 = vld [vmem:[%s13 + $0x4c] sm:$0xf]
        %v8493 = vld [vmem:[%s13 + $0x50] sm:$0xf]
        %v8494 = vld [vmem:[%s13 + $0x54] sm:$0xf]
        %v8495 = vld [vmem:[%s13 + $0x58] sm:$0xf]
        %v8496 = vld [vmem:[%s13 + $0x5c] sm:$0xf]
        %v8497 = vld [vmem:[%s13 + $0x60] sm:$0xf]
        %v8498 = vld [vmem:[%s13 + $0x64] sm:$0xf]
        %v8499 = vld [vmem:[%s13 + $0x68] sm:$0xf]
        %v8500 = vld [vmem:[%s13 + $0x6c] sm:$0xf]
        %v8501 = vld [vmem:[%s13 + $0x70] sm:$0xf]
        %v8502 = vld [vmem:[%s13 + $0x74] sm:$0xf]
        %v8503 = vld [vmem:[%s13 + $0x78] sm:$0xf]
        %v8504 = vld [vmem:[%s13 + $0x7c] sm:$0xf]
        %v8505 = vld [vmem:[%s13 + $0x80] sm:$0xf]
        %v8506 = vld [vmem:[%s13 + $0x84] sm:$0xf]
        %v8507 = vld [vmem:[%s13 + $0x88] sm:$0xf]
        %v8508 = vld [vmem:[%s13 + $0x8c] sm:$0xf]
        %v8509 = vld [vmem:[%s13 + $0x90] sm:$0xf]
        %v8510 = vld [vmem:[%s13 + $0x94] sm:$0xf]
        %v8511 = vld [vmem:[%s13 + $0x98] sm:$0xf]
        %v8512 = vld [vmem:[%s13 + $0x9c] sm:$0xf]
        %v8513 = vld [vmem:[%s13 + $0xa0] sm:$0xf]
        %v8514 = vld [vmem:[%s13 + $0xa4] sm:$0xf]
        %v8515 = vld [vmem:[%s13 + $0xa8] sm:$0xf]
        %v8516 = vld [vmem:[%s13 + $0xac] sm:$0xf]
        %v8517 = vld [vmem:[%s13 + $0xb0] sm:$0xf]
        %v8518 = vld [vmem:[%s13 + $0xb4] sm:$0xf]
        %v8519 = vld [vmem:[%s13 + $0xb8] sm:$0xf]
        %v8520 = vld [vmem:[%s13 + $0xbc] sm:$0xf]
        %v8521 = vld [vmem:[%s13 + $0xc0] sm:$0xf]
        %v8522 = vld [vmem:[%s13 + $0xc4] sm:$0xf]
        %v8523 = vld [vmem:[%s13 + $0xc8] sm:$0xf]
        %v8524 = vld [vmem:[%s13 + $0xcc] sm:$0xf]
        %v8525 = vld [vmem:[%s13 + $0xd0] sm:$0xf]
        %v8526 = vld [vmem:[%s13 + $0xd4] sm:$0xf]
        %v8527 = vld [vmem:[%s13 + $0xd8] sm:$0xf]
        %v8528 = vld [vmem:[%s13 + $0xdc] sm:$0xf]
        %v8529 = vld [vmem:[%s13 + $0xe0] sm:$0xf]
        %v8530 = vld [vmem:[%s13 + $0xe4] sm:$0xf]
        %v8531 = vld [vmem:[%s13 + $0xe8] sm:$0xf]
        %v8532 = vld [vmem:[%s13 + $0xec] sm:$0xf]
        %v8533 = vld [vmem:[%s13 + $0xf0] sm:$0xf]
        %v8534 = vld [vmem:[%s13 + $0xf4] sm:$0xf]
        %v8535 = vld [vmem:[%s13 + $0xf8] sm:$0xf]
        %v8536 = vld [vmem:[%s13 + $0xfc] sm:$0xf]
        %v8537 = vld [vmem:[%s13 + $0x100] sm:$0xf]
        %v8538 = vld [vmem:[%s13 + $0x104] sm:$0xf]
        %v8539 = vld [vmem:[%s13 + $0x108] sm:$0xf]
        %v8540 = vld [vmem:[%s13 + $0x10c] sm:$0xf]
        %v8541 = vld [vmem:[%s13 + $0x110] sm:$0xf]
        %v8542 = vld [vmem:[%s13 + $0x114] sm:$0xf]
        %v8543 = vld [vmem:[%s13 + $0x118] sm:$0xf]
        %v8544 = vld [vmem:[%s13 + $0x11c] sm:$0xf]
        %v8545 = vld [vmem:[%s13 + $0x120] sm:$0xf]
        %v8546 = vld [vmem:[%s13 + $0x124] sm:$0xf]
        %v8547 = vld [vmem:[%s13 + $0x128] sm:$0xf]
        %v8548 = vld [vmem:[%s13 + $0x12c] sm:$0xf]
        %v8549 = vld [vmem:[%s13 + $0x130] sm:$0xf]
        %v8550 = vld [vmem:[%s13 + $0x134] sm:$0xf]
        %v8551 = vld [vmem:[%s13 + $0x138] sm:$0xf]
        %v8552 = vld [vmem:[%s13 + $0x13c] sm:$0xf]
        %v8553 = vld [vmem:[%s13 + $0x140] sm:$0xf]
        %v8554 = vld [vmem:[%s13 + $0x144] sm:$0xf]
        %v8555 = vld [vmem:[%s13 + $0x148] sm:$0xf]
        %v8556 = vld [vmem:[%s13 + $0x14c] sm:$0xf]
        %v8557 = vld [vmem:[%s13 + $0x150] sm:$0xf]
        %v8558 = vld [vmem:[%s13 + $0x154] sm:$0xf]
        %v8559 = vld [vmem:[%s13 + $0x158] sm:$0xf]
        %v8560 = vld [vmem:[%s13 + $0x15c] sm:$0xf]
        %v8561 = vld [vmem:[%s13 + $0x160] sm:$0xf]
        %v8562 = vld [vmem:[%s13 + $0x164] sm:$0xf]
        %v8563 = vld [vmem:[%s13 + $0x168] sm:$0xf]
        %v8564 = vld [vmem:[%s13 + $0x16c] sm:$0xf]
        %v8565 = vld [vmem:[%s13 + $0x170] sm:$0xf]
        %v8566 = vld [vmem:[%s13 + $0x174] sm:$0xf]
        %v8567 = vld [vmem:[%s13 + $0x178] sm:$0xf]
        %v8568 = vld [vmem:[%s13 + $0x17c] sm:$0xf]
        %v8569 = vld [vmem:[%s13 + $0x180] sm:$0xf]
        %v8570 = vld [vmem:[%s13 + $0x184] sm:$0xf]
        %v8571 = vld [vmem:[%s13 + $0x188] sm:$0xf]
        %v8572 = vld [vmem:[%s13 + $0x18c] sm:$0xf]
        %v8573 = vld [vmem:[%s13 + $0x190] sm:$0xf]
        %v8574 = vld [vmem:[%s13 + $0x194] sm:$0xf]
        %v8575 = vld [vmem:[%s13 + $0x198] sm:$0xf]
        %v8576 = vld [vmem:[%s13 + $0x19c] sm:$0xf]
        %v8577 = vld [vmem:[%s13 + $0x1a0] sm:$0xf]
        %v8578 = vld [vmem:[%s13 + $0x1a4] sm:$0xf]
        %v8579 = vld [vmem:[%s13 + $0x1a8] sm:$0xf]
        %v8580 = vld [vmem:[%s13 + $0x1ac] sm:$0xf]
        %v8581 = vld [vmem:[%s13 + $0x1b0] sm:$0xf]
        %v8582 = vld [vmem:[%s13 + $0x1b4] sm:$0xf]
        %v8583 = vld [vmem:[%s13 + $0x1b8] sm:$0xf]
        %v8584 = vld [vmem:[%s13 + $0x1bc] sm:$0xf]
        %v8585 = vld [vmem:[%s13 + $0x1c0] sm:$0xf]
        %v8586 = vld [vmem:[%s13 + $0x1c4] sm:$0xf]
        %v8587 = vld [vmem:[%s13 + $0x1c8] sm:$0xf]
        %v8588 = vld [vmem:[%s13 + $0x1cc] sm:$0xf]
        %v8589 = vld [vmem:[%s13 + $0x1d0] sm:$0xf]
        %v8590 = vld [vmem:[%s13 + $0x1d4] sm:$0xf]
        %v8591 = vld [vmem:[%s13 + $0x1d8] sm:$0xf]
        %v8592 = vld [vmem:[%s13 + $0x1dc] sm:$0xf]
        %v8593 = vld [vmem:[%s13 + $0x1e0] sm:$0xf]
        %v8594 = vld [vmem:[%s13 + $0x1e4] sm:$0xf]
        %v8595 = vld [vmem:[%s13 + $0x1e8] sm:$0xf]
        %v8596 = vld [vmem:[%s13 + $0x1ec] sm:$0xf]
        %v8597 = vld [vmem:[%s13 + $0x1f0] sm:$0xf]
        %v8598 = vld [vmem:[%s13 + $0x1f4] sm:$0xf]
        %v8599 = vld [vmem:[%s13 + $0x1f8] sm:$0xf]
        %v8600 = vld [vmem:[%s13 + $0x1fc] sm:$0xf]
        %v8601 = vld [vmem:[%s14] sm:$0x1]
        %v8603 = vlaneseq
        %v8604 = vshrl.u32 %v8603, 7
        %v8605 = vsub.s32 0, %v8604
        %v8606 = vrot.slane %v8601, %v8605
        %v8736 = vunpack.c.l.b16 %v8473
        %v8737 = vunpack.c.l.b16 %v8474
        %v8738 = vunpack.c.l.b16 %v8475
        %v8739 = vunpack.c.l.b16 %v8476
        %v8740 = vunpack.c.l.b16 %v8477
        %v8741 = vunpack.c.l.b16 %v8478
        %v8742 = vunpack.c.l.b16 %v8479
        %v8743 = vunpack.c.l.b16 %v8480
        %v8744 = vunpack.c.l.b16 %v8481
        %v8745 = vunpack.c.l.b16 %v8482
        %v8746 = vunpack.c.l.b16 %v8483
        %v8747 = vunpack.c.l.b16 %v8484
        %v8748 = vunpack.c.l.b16 %v8485
        %v8749 = vunpack.c.l.b16 %v8486
        %v8750 = vunpack.c.l.b16 %v8487
        %v8751 = vunpack.c.l.b16 %v8488
        %v8752 = vunpack.c.l.b16 %v8489
        %v8753 = vunpack.c.l.b16 %v8490
        %v8754 = vunpack.c.l.b16 %v8491
        %v8755 = vunpack.c.l.b16 %v8492
        %v8756 = vunpack.c.l.b16 %v8493
        %v8757 = vunpack.c.l.b16 %v8494
        %v8758 = vunpack.c.l.b16 %v8495
        %v8759 = vunpack.c.l.b16 %v8496
        %v8760 = vunpack.c.l.b16 %v8497
        %v8761 = vunpack.c.l.b16 %v8498
        %v8762 = vunpack.c.l.b16 %v8499
        %v8763 = vunpack.c.l.b16 %v8500
        %v8764 = vunpack.c.l.b16 %v8501
        %v8765 = vunpack.c.l.b16 %v8502
        %v8766 = vunpack.c.l.b16 %v8503
        %v8767 = vunpack.c.l.b16 %v8504
        %v8768 = vunpack.c.l.b16 %v8505
        %v8769 = vunpack.c.l.b16 %v8506
        %v8770 = vunpack.c.l.b16 %v8507
        %v8771 = vunpack.c.l.b16 %v8508
        %v8772 = vunpack.c.l.b16 %v8509
        %v8773 = vunpack.c.l.b16 %v8510
        %v8774 = vunpack.c.l.b16 %v8511
        %v8775 = vunpack.c.l.b16 %v8512
        %v8776 = vunpack.c.l.b16 %v8513
        %v8777 = vunpack.c.l.b16 %v8514
        %v8778 = vunpack.c.l.b16 %v8515
        %v8779 = vunpack.c.l.b16 %v8516
        %v8780 = vunpack.c.l.b16 %v8517
        %v8781 = vunpack.c.l.b16 %v8518
        %v8782 = vunpack.c.l.b16 %v8519
        %v8783 = vunpack.c.l.b16 %v8520
        %v8784 = vunpack.c.l.b16 %v8521
        %v8785 = vunpack.c.l.b16 %v8522
        %v8786 = vunpack.c.l.b16 %v8523
        %v8787 = vunpack.c.l.b16 %v8524
        %v8788 = vunpack.c.l.b16 %v8525
        %v8789 = vunpack.c.l.b16 %v8526
        %v8790 = vunpack.c.l.b16 %v8527
        %v8791 = vunpack.c.l.b16 %v8528
        %v8792 = vunpack.c.l.b16 %v8529
        %v8793 = vunpack.c.l.b16 %v8530
        %v8794 = vunpack.c.l.b16 %v8531
        %v8795 = vunpack.c.l.b16 %v8532
        %v8796 = vunpack.c.l.b16 %v8533
        %v8797 = vunpack.c.l.b16 %v8534
        %v8798 = vunpack.c.l.b16 %v8535
        %v8799 = vunpack.c.l.b16 %v8536
        %v8800 = vunpack.c.l.b16 %v8537
        %v8801 = vunpack.c.l.b16 %v8538
        %v8802 = vunpack.c.l.b16 %v8539
        %v8803 = vunpack.c.l.b16 %v8540
        %v8804 = vunpack.c.l.b16 %v8541
        %v8805 = vunpack.c.l.b16 %v8542
        %v8806 = vunpack.c.l.b16 %v8543
        %v8807 = vunpack.c.l.b16 %v8544
        %v8808 = vunpack.c.l.b16 %v8545
        %v8809 = vunpack.c.l.b16 %v8546
        %v8810 = vunpack.c.l.b16 %v8547
        %v8811 = vunpack.c.l.b16 %v8548
        %v8812 = vunpack.c.l.b16 %v8549
        %v8813 = vunpack.c.l.b16 %v8550
        %v8814 = vunpack.c.l.b16 %v8551
        %v8815 = vunpack.c.l.b16 %v8552
        %v8816 = vunpack.c.l.b16 %v8553
        %v8817 = vunpack.c.l.b16 %v8554
        %v8818 = vunpack.c.l.b16 %v8555
        %v8819 = vunpack.c.l.b16 %v8556
        %v8820 = vunpack.c.l.b16 %v8557
        %v8821 = vunpack.c.l.b16 %v8558
        %v8822 = vunpack.c.l.b16 %v8559
        %v8823 = vunpack.c.l.b16 %v8560
        %v8824 = vunpack.c.l.b16 %v8561
        %v8825 = vunpack.c.l.b16 %v8562
        %v8826 = vunpack.c.l.b16 %v8563
        %v8827 = vunpack.c.l.b16 %v8564
        %v8828 = vunpack.c.l.b16 %v8565
        %v8829 = vunpack.c.l.b16 %v8566
        %v8830 = vunpack.c.l.b16 %v8567
        %v8831 = vunpack.c.l.b16 %v8568
        %v8832 = vunpack.c.l.b16 %v8569
        %v8833 = vunpack.c.l.b16 %v8570
        %v8834 = vunpack.c.l.b16 %v8571
        %v8835 = vunpack.c.l.b16 %v8572
        %v8836 = vunpack.c.l.b16 %v8573
        %v8837 = vunpack.c.l.b16 %v8574
        %v8838 = vunpack.c.l.b16 %v8575
        %v8839 = vunpack.c.l.b16 %v8576
        %v8840 = vunpack.c.l.b16 %v8577
        %v8841 = vunpack.c.l.b16 %v8578
        %v8842 = vunpack.c.l.b16 %v8579
        %v8843 = vunpack.c.l.b16 %v8580
        %v8844 = vunpack.c.l.b16 %v8581
        %v8845 = vunpack.c.l.b16 %v8582
        %v8846 = vunpack.c.l.b16 %v8583
        %v8847 = vunpack.c.l.b16 %v8584
        %v8848 = vunpack.c.l.b16 %v8585
        %v8849 = vunpack.c.l.b16 %v8586
        %v8850 = vunpack.c.l.b16 %v8587
        %v8851 = vunpack.c.l.b16 %v8588
        %v8852 = vunpack.c.l.b16 %v8589
        %v8853 = vunpack.c.l.b16 %v8590
        %v8854 = vunpack.c.l.b16 %v8591
        %v8855 = vunpack.c.l.b16 %v8592
        %v8856 = vunpack.c.l.b16 %v8593
        %v8857 = vunpack.c.l.b16 %v8594
        %v8858 = vunpack.c.l.b16 %v8595
        %v8859 = vunpack.c.l.b16 %v8596
        %v8860 = vunpack.c.l.b16 %v8597
        %v8861 = vunpack.c.l.b16 %v8598
        %v8862 = vunpack.c.l.b16 %v8599
        %v8863 = vunpack.c.l.b16 %v8600
        %v8864 = vpack.c.b16 %v8737, %v8736
        %v8865 = vpack.c.b16 %v8739, %v8738
        %v8866 = vpack.c.b16 %v8741, %v8740
        %v8867 = vpack.c.b16 %v8743, %v8742
        %v8868 = vpack.c.b16 %v8745, %v8744
        %v8869 = vpack.c.b16 %v8747, %v8746
        %v8870 = vpack.c.b16 %v8749, %v8748
        %v8871 = vpack.c.b16 %v8751, %v8750
        %v8872 = vpack.c.b16 %v8753, %v8752
        %v8873 = vpack.c.b16 %v8755, %v8754
        %v8874 = vpack.c.b16 %v8757, %v8756
        %v8875 = vpack.c.b16 %v8759, %v8758
        %v8876 = vpack.c.b16 %v8761, %v8760
        %v8877 = vpack.c.b16 %v8763, %v8762
        %v8878 = vpack.c.b16 %v8765, %v8764
        %v8879 = vpack.c.b16 %v8767, %v8766
        %v8880 = vpack.c.b16 %v8769, %v8768
        %v8881 = vpack.c.b16 %v8771, %v8770
        %v8882 = vpack.c.b16 %v8773, %v8772
        %v8883 = vpack.c.b16 %v8775, %v8774
        %v8884 = vpack.c.b16 %v8777, %v8776
        %v8885 = vpack.c.b16 %v8779, %v8778
        %v8886 = vpack.c.b16 %v8781, %v8780
        %v8887 = vpack.c.b16 %v8783, %v8782
        %v8888 = vpack.c.b16 %v8785, %v8784
        %v8889 = vpack.c.b16 %v8787, %v8786
        %v8890 = vpack.c.b16 %v8789, %v8788
        %v8891 = vpack.c.b16 %v8791, %v8790
        %v8892 = vpack.c.b16 %v8793, %v8792
        %v8893 = vpack.c.b16 %v8795, %v8794
        %v8894 = vpack.c.b16 %v8797, %v8796
        %v8895 = vpack.c.b16 %v8799, %v8798
        %v8896 = vpack.c.b16 %v8801, %v8800
        %v8897 = vpack.c.b16 %v8803, %v8802
        %v8898 = vpack.c.b16 %v8805, %v8804
        %v8899 = vpack.c.b16 %v8807, %v8806
        %v8900 = vpack.c.b16 %v8809, %v8808
        %v8901 = vpack.c.b16 %v8811, %v8810
        %v8902 = vpack.c.b16 %v8813, %v8812
        %v8903 = vpack.c.b16 %v8815, %v8814
        %v8904 = vpack.c.b16 %v8817, %v8816
        %v8905 = vpack.c.b16 %v8819, %v8818
        %v8906 = vpack.c.b16 %v8821, %v8820
        %v8907 = vpack.c.b16 %v8823, %v8822
        %v8908 = vpack.c.b16 %v8825, %v8824
        %v8909 = vpack.c.b16 %v8827, %v8826
        %v8910 = vpack.c.b16 %v8829, %v8828
        %v8911 = vpack.c.b16 %v8831, %v8830
        %v8912 = vpack.c.b16 %v8833, %v8832
        %v8913 = vpack.c.b16 %v8835, %v8834
        %v8914 = vpack.c.b16 %v8837, %v8836
        %v8915 = vpack.c.b16 %v8839, %v8838
        %v8916 = vpack.c.b16 %v8841, %v8840
        %v8917 = vpack.c.b16 %v8843, %v8842
        %v8918 = vpack.c.b16 %v8845, %v8844
        %v8919 = vpack.c.b16 %v8847, %v8846
        %v8920 = vpack.c.b16 %v8849, %v8848
        %v8921 = vpack.c.b16 %v8851, %v8850
        %v8922 = vpack.c.b16 %v8853, %v8852
        %v8923 = vpack.c.b16 %v8855, %v8854
        %v8924 = vpack.c.b16 %v8857, %v8856
        %v8925 = vpack.c.b16 %v8859, %v8858
        %v8926 = vpack.c.b16 %v8861, %v8860
        %v8927 = vpack.c.b16 %v8863, %v8862
        %8992 = vmatprep.subr.bf16.mxu0 0
        %8993 = vmatpush1.bf16.msra.mxu0 %v8864
        %8994 = vmatprep.subr.bf16.mxu0 0
        %8995 = vmatpush1.bf16.msra.mxu0 %v8865
        %8996 = vmatprep.subr.bf16.mxu0 0
        %8997 = vmatpush1.bf16.msra.mxu0 %v8866
        %8998 = vmatprep.subr.bf16.mxu0 0
        %8999 = vmatpush1.bf16.msra.mxu0 %v8867
        %9000 = vmatprep.subr.bf16.mxu0 0
        %9001 = vmatpush1.bf16.msra.mxu0 %v8868
        %9002 = vmatprep.subr.bf16.mxu0 0
        %9003 = vmatpush1.bf16.msra.mxu0 %v8869
        %9004 = vmatprep.subr.bf16.mxu0 0
        %9005 = vmatpush1.bf16.msra.mxu0 %v8870
        %9006 = vmatprep.subr.bf16.mxu0 0
        %9007 = vmatpush1.bf16.msra.mxu0 %v8871
        %9008 = vmatprep.subr.bf16.mxu0 0
        %9009 = vmatpush1.bf16.msra.mxu0 %v8872
        %9010 = vmatprep.subr.bf16.mxu0 0
        %9011 = vmatpush1.bf16.msra.mxu0 %v8873
        %9012 = vmatprep.subr.bf16.mxu0 0
        %9013 = vmatpush1.bf16.msra.mxu0 %v8874
        %9014 = vmatprep.subr.bf16.mxu0 0
        %9015 = vmatpush1.bf16.msra.mxu0 %v8875
        %9016 = vmatprep.subr.bf16.mxu0 0
        %9017 = vmatpush1.bf16.msra.mxu0 %v8876
        %9018 = vmatprep.subr.bf16.mxu0 0
        %9019 = vmatpush1.bf16.msra.mxu0 %v8877
        %9020 = vmatprep.subr.bf16.mxu0 0
        %9021 = vmatpush1.bf16.msra.mxu0 %v8878
        %9022 = vmatprep.subr.bf16.mxu0 0
        %9023 = vmatpush1.bf16.msra.mxu0 %v8879
        %9024 = vmatprep.mubr.bf16.mxu0 %v8466
        %9025 = vmatmul.mubr.bf16.gmra.mrb[0].mxu0 %v8465
        %v9026 = vpop.f32.mrb[0].mxu0
        %v9027 = vadd.f32 %v8606, %v9026
        %v9028 = vpop.f32.mrb[0].mxu0
        %v9029 = vpop.f32.mrb[0].mxu0
        %v9030 = vpop.f32.mrb[0].mxu0
        %9031 = vdwg.mxu0
        %9032 = vmatprep.subr.bf16.mxu0 0
        %9033 = vmatpush1.bf16.msra.mxu0 %v8880
        %9034 = vmatprep.subr.bf16.mxu0 0
        %9035 = vmatpush1.bf16.msra.mxu0 %v8881
        %9036 = vmatprep.subr.bf16.mxu0 0
        %9037 = vmatpush1.bf16.msra.mxu0 %v8882
        %9038 = vmatprep.subr.bf16.mxu0 0
        %9039 = vmatpush1.bf16.msra.mxu0 %v8883
        %9040 = vmatprep.subr.bf16.mxu0 0
        %9041 = vmatpush1.bf16.msra.mxu0 %v8884
        %9042 = vmatprep.subr.bf16.mxu0 0
        %9043 = vmatpush1.bf16.msra.mxu0 %v8885
        %9044 = vmatprep.subr.bf16.mxu0 0
        %9045 = vmatpush1.bf16.msra.mxu0 %v8886
        %9046 = vmatprep.subr.bf16.mxu0 0
        %9047 = vmatpush1.bf16.msra.mxu0 %v8887
        %9048 = vmatprep.subr.bf16.mxu0 0
        %9049 = vmatpush1.bf16.msra.mxu0 %v8888
        %9050 = vmatprep.subr.bf16.mxu0 0
        %9051 = vmatpush1.bf16.msra.mxu0 %v8889
        %9052 = vmatprep.subr.bf16.mxu0 0
        %9053 = vmatpush1.bf16.msra.mxu0 %v8890
        %9054 = vmatprep.subr.bf16.mxu0 0
        %9055 = vmatpush1.bf16.msra.mxu0 %v8891
        %9056 = vmatprep.subr.bf16.mxu0 0
        %9057 = vmatpush1.bf16.msra.mxu0 %v8892
        %9058 = vmatprep.subr.bf16.mxu0 0
        %9059 = vmatpush1.bf16.msra.mxu0 %v8893
        %9060 = vmatprep.subr.bf16.mxu0 0
        %9061 = vmatpush1.bf16.msra.mxu0 %v8894
        %9062 = vmatprep.subr.bf16.mxu0 0
        %9063 = vmatpush1.bf16.msra.mxu0 %v8895
        %9064 = vmatprep.mubr.bf16.mxu0 %v8468
        %9065 = vmatmul.mubr.bf16.gmra.mrb[0].mxu0 %v8467
        %v9066 = vpop.f32.mrb[0].mxu0
        %v9067 = vadd.f32 %v9027, %v9066
        %v9068 = vpop.f32.mrb[0].mxu0
        %v9069 = vpop.f32.mrb[0].mxu0
        %v9070 = vpop.f32.mrb[0].mxu0
        %9071 = vdwg.mxu0
        %9072 = vmatprep.subr.bf16.mxu0 0
        %9073 = vmatpush1.bf16.msra.mxu0 %v8896
        %9074 = vmatprep.subr.bf16.mxu0 0
        %9075 = vmatpush1.bf16.msra.mxu0 %v8897
        %9076 = vmatprep.subr.bf16.mxu0 0
        %9077 = vmatpush1.bf16.msra.mxu0 %v8898
        %9078 = vmatprep.subr.bf16.mxu0 0
        %9079 = vmatpush1.bf16.msra.mxu0 %v8899
        %9080 = vmatprep.subr.bf16.mxu0 0
        %9081 = vmatpush1.bf16.msra.mxu0 %v8900
        %9082 = vmatprep.subr.bf16.mxu0 0
        %9083 = vmatpush1.bf16.msra.mxu0 %v8901
        %9084 = vmatprep.subr.bf16.mxu0 0
        %9085 = vmatpush1.bf16.msra.mxu0 %v8902
        %9086 = vmatprep.subr.bf16.mxu0 0
        %9087 = vmatpush1.bf16.msra.mxu0 %v8903
        %9088 = vmatprep.subr.bf16.mxu0 0
        %9089 = vmatpush1.bf16.msra.mxu0 %v8904
        %9090 = vmatprep.subr.bf16.mxu0 0
        %9091 = vmatpush1.bf16.msra.mxu0 %v8905
        %9092 = vmatprep.subr.bf16.mxu0 0
        %9093 = vmatpush1.bf16.msra.mxu0 %v8906
        %9094 = vmatprep.subr.bf16.mxu0 0
        %9095 = vmatpush1.bf16.msra.mxu0 %v8907
        %9096 = vmatprep.subr.bf16.mxu0 0
        %9097 = vmatpush1.bf16.msra.mxu0 %v8908
        %9098 = vmatprep.subr.bf16.mxu0 0
        %9099 = vmatpush1.bf16.msra.mxu0 %v8909
        %9100 = vmatprep.subr.bf16.mxu0 0
        %9101 = vmatpush1.bf16.msra.mxu0 %v8910
        %9102 = vmatprep.subr.bf16.mxu0 0
        %9103 = vmatpush1.bf16.msra.mxu0 %v8911
        %9104 = vmatprep.mubr.bf16.mxu0 %v8470
        %9105 = vmatmul.mubr.bf16.gmra.mrb[0].mxu0 %v8469
        %v9106 = vpop.f32.mrb[0].mxu0
        %v9107 = vadd.f32 %v9067, %v9106
        %v9108 = vpop.f32.mrb[0].mxu0
        %v9109 = vpop.f32.mrb[0].mxu0
        %v9110 = vpop.f32.mrb[0].mxu0
        %9111 = vdwg.mxu0
        %9112 = vmatprep.subr.bf16.mxu0 0
        %9113 = vmatpush1.bf16.msra.mxu0 %v8912
        %9114 = vmatprep.subr.bf16.mxu0 0
        %9115 = vmatpush1.bf16.msra.mxu0 %v8913
        %9116 = vmatprep.subr.bf16.mxu0 0
        %9117 = vmatpush1.bf16.msra.mxu0 %v8914
        %9118 = vmatprep.subr.bf16.mxu0 0
        %9119 = vmatpush1.bf16.msra.mxu0 %v8915
        %9120 = vmatprep.subr.bf16.mxu0 0
        %9121 = vmatpush1.bf16.msra.mxu0 %v8916
        %9122 = vmatprep.subr.bf16.mxu0 0
        %9123 = vmatpush1.bf16.msra.mxu0 %v8917
        %9124 = vmatprep.subr.bf16.mxu0 0
        %9125 = vmatpush1.bf16.msra.mxu0 %v8918
        %9126 = vmatprep.subr.bf16.mxu0 0
        %9127 = vmatpush1.bf16.msra.mxu0 %v8919
        %9128 = vmatprep.subr.bf16.mxu0 0
        %9129 = vmatpush1.bf16.msra.mxu0 %v8920
        %9130 = vmatprep.subr.bf16.mxu0 0
        %9131 = vmatpush1.bf16.msra.mxu0 %v8921
        %9132 = vmatprep.subr.bf16.mxu0 0
        %9133 = vmatpush1.bf16.msra.mxu0 %v8922
        %9134 = vmatprep.subr.bf16.mxu0 0
        %9135 = vmatpush1.bf16.msra.mxu0 %v8923
        %9136 = vmatprep.subr.bf16.mxu0 0
        %9137 = vmatpush1.bf16.msra.mxu0 %v8924
        %9138 = vmatprep.subr.bf16.mxu0 0
        %9139 = vmatpush1.bf16.msra.mxu0 %v8925
        %9140 = vmatprep.subr.bf16.mxu0 0
        %9141 = vmatpush1.bf16.msra.mxu0 %v8926
        %9142 = vmatprep.subr.bf16.mxu0 0
        %9143 = vmatpush1.bf16.msra.mxu0 %v8927
        %9144 = vmatprep.mubr.bf16.mxu0 %v8472
        %9145 = vmatmul.mubr.bf16.gmra.mrb[0].mxu0 %v8471
        %v9146 = vpop.f32.mrb[0].mxu0
        %v9147 = vadd.f32 %v9107, %v9146
        %v9148 = vpop.f32.mrb[0].mxu0
        %v9149 = vpop.f32.mrb[0].mxu0
        %v9150 = vpop.f32.mrb[0].mxu0
        %9151 = vdwg.mxu0
        %v9152 = vmul.f32 %v5260, %v5260
        %vm9153 = vcmask 1041408
        %v9154 = vsel %vm9153, %v9152, 0.0
        %9155 = vadd.xlane.f32.xlu0 %v9154
        %v9156 = vpop.xlane.xlu0 %9155
        %v9157 = vrsqrt.pop %v9156
        %v9158 = vmul.f32 %v9156, %v9157
        %vm9159 = vcmp.eq.f32.partialorder %v9156, inf
        %v9160 = vsel %vm9159, %v9156, %v9158
        %vm9161 = vcmp.eq.f32.partialorder %v9156, 0.0
        %v9162 = vand.u32 %v9156, 2147483648
        %v9163 = vsel %vm9161, %v9162, %v9160
        %v9164 = vmax.f32 %v9163, 1e-12
        %v9165 = vmul.f32 %v9147, %v9147
        %v9166 = vsel %vm9153, %v9165, 0.0
        %9167 = vadd.xlane.f32.xlu0 %v9166
        %v9168 = vpop.xlane.xlu0 %9167
        %v9169 = vrsqrt.pop %v9168
        %v9170 = vmul.f32 %v9168, %v9169
        %vm9171 = vcmp.eq.f32.partialorder %v9168, inf
        %v9172 = vsel %vm9171, %v9168, %v9170
        %vm9173 = vcmp.eq.f32.partialorder %v9168, 0.0
        %v9174 = vand.u32 %v9168, 2147483648
        %v9175 = vsel %vm9173, %v9174, %v9172
        %v9176 = vmax.f32 %v9175, 1e-12
        %v9177 = vrcp.pop %v9164
        %v9178 = vmul.f32 %v5260, %v9177
        %9179 = vst [vmem:[%s576] sm:$0x3] %v9178
        %v9180 = vrcp.pop %v9176
        %v9181 = vmul.f32 %v9147, %v9180
        %9182 = vst [vmem:[%s580] sm:$0x3] %v9181
      $region88: #{seed_forward.2} parent=79 // pred_fallthru
        _
      %p9183 = scmp.lt.s32.totalorder %s32, 0
      %s9184 = scalar_select %p9183, %s32, 0
      %s9185 = smul.addr %s9184, 2
      %s9186 = scalar_lea.vmem %s15, %s9185
      %p9187 = scmp.lt.s32.totalorder %s32, 0
      %s9188 = scalar_select %p9187, %s32, 0
      %s9189 = smul.addr %s9188, 2
      %s9190 = scalar_lea.vmem %s16, %s9189
      // Predicated region
      $region89: #{seed_forward.2} parent=79 // pred_check
        %p9191 = pneg %p385
      $region90: #{seed_forward.2} parent=79 // pred_check_branch
        %9193 = sbr.rel (%p9191) target = $region92
      $region91: #{seed_forward.2} parent=79 // pred_region
        _
      $region92: #{seed_forward.2} parent=79 // pred_fallthru
        _
      // Predicated region
      $region93: #{seed_forward.2} parent=79 // pred_check
        %p9194 = pneg %p411
      $region94: #{seed_forward.2} parent=79 // pred_check_branch
        %9196 = sbr.rel (%p9194) target = $region96
      $region95: #{seed_forward.2} parent=79 // pred_region
        _
      $region96: #{seed_forward.2} parent=79 // pred_fallthru
        _
      // Predicated region
      $region97: #{seed_forward.2} parent=79 // pred_check
        %p9197 = pneg %p385
      $region98: #{seed_forward.2} parent=79 // pred_check_branch
        %9199 = sbr.rel (%p9197) target = $region100
      $region99: #{seed_forward.2} parent=79 // pred_region
        %p9200 = scmp.lt.s32.totalorder %s32, 0
        %s9201 = scalar_select %p9200, %s32, 0
        %s9202 = smul.addr %s9201, 2
        %s9203 = scalar_lea.vmem %s15, %s9202
      $region100: #{seed_forward.2} parent=79 // pred_fallthru
        _
      // Predicated region
      $region101: #{seed_forward.2} parent=79 // pred_check
        %p9204 = pneg %p411
      $region102: #{seed_forward.2} parent=79 // pred_check_branch
        %9206 = sbr.rel (%p9204) target = $region104
      $region103: #{seed_forward.2} parent=79 // pred_region
        %p9207 = scmp.lt.s32.totalorder %s32, 0
        %s9208 = scalar_select %p9207, %s32, 0
        %s9209 = smul.addr %s9208, 2
        %s9210 = scalar_lea.vmem %s16, %s9209
      $region104: #{seed_forward.2} parent=79 // pred_fallthru
        _
    $region80: #{seed_forward.2} parent=5 // pred_fallthru
      _
    %p9211 = scmp.le.s32.totalorder 2, %s23
    // Predicated region
    $region105: #{seed_forward.2} parent=5 // pred_check
      %p9212 = pneg %p9211
    $region106: #{seed_forward.2} parent=5 // pred_check_branch
      %9214 = sbr.rel (%p9212) target = $region108
    $region107: #{seed_forward.2} parent=5 // pred_region
      %s9215 = ssub.s32 %s23, 2
    $region108: #{seed_forward.2} parent=5 // pred_fallthru
      _
  $region6: #{seed_forward.2} parent=0 // loop_footer
    %s27 = sadd.s32 1, %s23
  $region7: #{seed_forward.2} parent=0 // loop_footer_branch
    %22 = sbr.rel target = $region3
  $region8: #{seed_forward.2} parent=0 // loop_exit
    _

</llo_original>
